<compile_context>
chip_gen: v5e
topology: v5e:2x2
jax: 0.10.0
libtpu: 0.0.40
codegen_flags: <defaults>
</compile_context>

<pallas_src>
from functools import partial

import numpy as np
import jax
import jax.numpy as jnp
from jax.experimental import pallas as pl
from jax.experimental.pallas import tpu as pltpu


# ---------------------------------------------------------------------------
# Device-dependent tuning helpers.
# ---------------------------------------------------------------------------

def _vmem_capacity_bytes():
    try:
        return int(pltpu.get_tpu_info().vmem_capacity_bytes)
    except Exception:
        return 64 * 1024 * 1024          # conservative: v7x per-core physical VMEM


def _elu_act_dtype():
    """bf16 bias/ELU epilogue on v6e/v7x; f32 on <=v5 (no bf16 VPU/EUP there)."""
    try:
        kind = jax.devices()[0].device_kind.lower()
    except Exception:
        return jnp.float32
    if any(tag in kind for tag in ("v2", "v3", "v4", "v5")):
        return jnp.float32
    return jnp.bfloat16


def _pick_edge_tile(hidden, vmem_cap_bytes):
    """Largest edge tile (lanes) in {256, 512, 1024} whose worst-case footprint
    (double-buffered weights + double-buffered streamed tiles) fits in half the
    device VMEM, leaving headroom for intermediates / compiler scratch."""
    budget = vmem_cap_bytes // 2
    weight_bytes = 2 * 19 * hidden * hidden + 4 * 8 * hidden       # bf16 W + f32 b
    te = 256
    for cand in (512, 1024):
        stream = cand * (4 * hidden + 2 * hidden + 4 + 4)          # x, w5 bf16; b5, v f32
        if 2 * weight_bytes + 2 * stream + (2 << 20) <= budget:
            te = cand
    return te


# ---------------------------------------------------------------------------
# Kernel 1: fused edge_action_rep_generator + edge_action_prob_generator.
# ---------------------------------------------------------------------------

def mlp_v_kernel(x_ref, w1_ref, b1_ref, w2_ref, b2_ref, w3_ref, b3_ref,
                 w4_ref, b4_ref, w5s_ref, b5s_ref, v_ref, *, act_dtype):
    """Transposed layout: activations are [features, TE] with edges on lanes;
    weights are nn.Linear layout [out, in] in bf16; biases are f32 columns [out, 1].
    Linear(H, L) + label gather is folded into w5s/b5s (per-edge gathered W5 column
    / b5 entry), so the output is the lane-dense per-edge label logit v = [1, TE]."""
    one = jnp.array(1, dtype=act_dtype)
    zero = jnp.array(0, dtype=act_dtype)

    def lin(w_ref, b_ref, h_bf16):
        return jnp.dot(w_ref[...], h_bf16,
                       preferred_element_type=jnp.float32) + b_ref[...]

    def elu_bf16(z_f32):
        # ELU(alpha=1). Clamp before exp so the untaken branch stays finite.
        z = z_f32.astype(act_dtype)
        a = jnp.where(z > zero, z, jnp.exp(jnp.minimum(z, zero)) - one)
        return a.astype(jnp.bfloat16)

    x = x_ref[...]                                        # [2H, TE] bf16
    h = elu_bf16(lin(w1_ref, b1_ref, x))                  # [4H, TE]
    h = elu_bf16(lin(w2_ref, b2_ref, h))                  # [2H, TE]
    h = lin(w3_ref, b3_ref, h).astype(jnp.bfloat16)       # [H,  TE] (no ELU)
    g = elu_bf16(lin(w4_ref, b4_ref, h))                  # [H,  TE]
    v_ref[...] = (jnp.sum(g.astype(jnp.float32) * w5s_ref[...].astype(jnp.float32),
                          axis=0, keepdims=True)
                  + b5s_ref[...])                         # [1, TE] f32


# ---------------------------------------------------------------------------
# Kernel 2a: online segment softmax stats + scatter_max (per-graph reduce).
# ---------------------------------------------------------------------------

def seg_reduce_kernel(v_ref, sid_ref, m_ref, addp_ref, addi_ref, l_sc):
    t = pl.program_id(0)
    nt = pl.num_programs(0)
    B = m_ref.shape[0]
    Tl = v_ref.shape[1]

    @pl.when(t == 0)
    def _init():
        m_ref[...] = jnp.full(m_ref.shape, -1e30, dtype=m_ref.dtype)
        l_sc[...] = jnp.zeros(l_sc.shape, dtype=l_sc.dtype)
        addi_ref[...] = jnp.zeros(addi_ref.shape, dtype=addi_ref.dtype)
        addp_ref[...] = jnp.zeros(addp_ref.shape, dtype=addp_ref.dtype)

    v = v_ref[...]                                                  # [1, Tl] f32
    sid = sid_ref[...]                                              # [1, Tl] i32
    row = jax.lax.broadcasted_iota(jnp.int32, (B, Tl), 0)
    member = sid == row                                             # [B, Tl] in-register

    vb = jnp.where(member, v, -1e30)                                # [B, Tl]
    tile_max = jnp.max(vb, axis=1, keepdims=True)                   # [B, 1]
    m_old = m_ref[...]
    m_new = jnp.maximum(m_old, tile_max)

    # Running argmax (absolute available-edge index); earlier tiles win ties.
    eidx = t * Tl + jax.lax.broadcasted_iota(jnp.int32, (B, Tl), 1)
    big = jnp.array(np.iinfo(np.int32).max, jnp.int32)
    tile_arg = jnp.min(jnp.where(vb >= tile_max, eidx, big), axis=1, keepdims=True)
    addi_ref[...] = jnp.where(tile_max > m_old, tile_arg, addi_ref[...]).astype(jnp.int32)

    # Online softmax denominator: only Tl EUP exps per tile (gather m per edge).
    edge_m = jnp.sum(jnp.where(member, m_new, 0.0), axis=0, keepdims=True)   # [1, Tl]
    e = jnp.where(sid < B, jnp.exp(v - edge_m), 0.0)                         # [1, Tl]
    tile_sum = jnp.sum(jnp.where(member, e, 0.0), axis=1, keepdims=True)     # [B, 1]
    l_sc[...] = jnp.exp(m_old - m_new) * l_sc[...] + tile_sum
    m_ref[...] = m_new

    @pl.when(t == nt - 1)
    def _fin():
        # Max prob of each graph = exp(m - m) / l = 1 / l (exact divide).
        # Graphs with zero available edges get addp = 0 (addi stays 0).
        l = l_sc[...]
        addp_ref[...] = jnp.where(l > 0.0, 1.0 / jnp.maximum(l, 1e-30), 0.0)


# ---------------------------------------------------------------------------
# Kernel 2b: per-edge softmax normalization.
# ---------------------------------------------------------------------------

def seg_norm_kernel(v_ref, sid_ref, m_ref, invl_ref, probs_ref):
    v = v_ref[...]                                                  # [1, Tl]
    sid = sid_ref[...]                                              # [1, Tl]
    B = m_ref.shape[0]
    Tl = v.shape[1]
    row = jax.lax.broadcasted_iota(jnp.int32, (B, Tl), 0)
    member = sid == row
    edge_m = jnp.sum(jnp.where(member, m_ref[...], 0.0), axis=0, keepdims=True)
    edge_invl = jnp.sum(jnp.where(member, invl_ref[...], 0.0), axis=0, keepdims=True)
    probs_ref[...] = jnp.where(sid < B, jnp.exp(v - edge_m) * edge_invl, 0.0)


# ---------------------------------------------------------------------------
# Parameters & forward wrapper.
# ---------------------------------------------------------------------------

def init_params(key, hidden, num_labels):
    """Parameters of the two MLPs in PyTorch nn.Linear layout: W [out, in], b [out, 1]."""
    dims = [(4 * hidden, 2 * hidden),   # rep gen L1
            (2 * hidden, 4 * hidden),   # rep gen L2
            (hidden, 2 * hidden),       # rep gen L3
            (hidden, hidden),           # prob gen L1
            (num_labels, hidden)]       # prob gen L2
    params = {}
    for i, (dout, din) in enumerate(dims, start=1):
        key, k1, k2 = jax.random.split(key, 3)
        params[f"w{i}"] = jax.random.normal(k1, (dout, din), jnp.float32) / np.sqrt(din)
        params[f"b{i}"] = jax.random.normal(k2, (dout, 1), jnp.float32) * 0.01
    return params


def rc_explainer_forward(node_reps_0, node_reps_1, edge_index, state, batch, y,
                         params, num_labels):
    """Returns (ava_action_probs, added_action_probs, added_actions) — the
    train_flag=False branch of RC_Explainer_Batch.forward."""
    del num_labels                       # folded into the per-edge W5/b5 gather below

    state = np.asarray(state, dtype=bool)
    edge_index = np.asarray(edge_index)
    ava_edge_index = edge_index[:, ~state]                 # [2, E_ava] (shape-defining: host)
    E_ava = int(ava_edge_index.shape[1])
    B = int(np.asarray(y).shape[0])
    H = int(node_reps_0.shape[1])

    act_dtype = _elu_act_dtype()
    vmem_cap = _vmem_capacity_bytes()
    TE = _pick_edge_tile(H, vmem_cap)
    vmem_limit = int(min(0.9 * vmem_cap, 100 * 1024 * 1024))

    # Bucket the edge count to a tile multiple so the Mosaic compile only changes
    # per bucket (not per distinct E_ava) and the grid tiles exactly.
    E_pad = TE * max(1, -(-E_ava // TE))
    n_tiles = E_pad // TE
    pad_e = E_pad - E_ava
    # TODO(synk): for realistic sizes on v7x, make sure n_tiles >= 2 (shrink TE for
    # tiny graphs) so both TensorCores get work on the 'parallel' edge axis.

    src = jnp.asarray(ava_edge_index[0])
    dst = jnp.asarray(ava_edge_index[1])
    batch_j = jnp.asarray(batch)
    y_j = jnp.asarray(y)

    # On-device prep. Transpose the small [N, H] node reps once and gather columns,
    # building x directly in the [2H, E] kernel layout (no [E, 2H] transpose pass).
    reps_t = (node_reps_0 - node_reps_1).T.astype(jnp.bfloat16)              # [H, N]
    x_t = jnp.concatenate([jnp.take(reps_t, src, axis=1),
                           jnp.take(reps_t, dst, axis=1)], axis=0)           # [2H, E_ava]
    x_t = jnp.pad(x_t, ((0, 0), (0, pad_e)))                                 # [2H, E_pad]

    ava_action_batch = batch_j[src].astype(jnp.int32)                        # [E_ava]
    ava_y = y_j[ava_action_batch]                                            # [E_ava]

    # Fold Linear(H, num_labels) + .gather(1, target_y): per-edge W5 column / b5 entry.
    w5_t = params["w5"].T.astype(jnp.bfloat16)                               # [H, L]
    w5_sel = jnp.pad(jnp.take(w5_t, ava_y, axis=1), ((0, 0), (0, pad_e)))    # [H, E_pad] bf16
    b5_sel = jnp.pad(params["b5"][ava_y, 0][None, :], ((0, 0), (0, pad_e)))  # [1, E_pad] f32

    # Per-edge graph id row; padded lanes carry the sentinel B (never matches a graph).
    sid = jnp.pad(ava_action_batch, (0, pad_e), constant_values=B)[None, :]  # [1, E_pad] i32

    wb = lambda k: params[k].astype(jnp.bfloat16)                            # bf16 MXU operands

    # ---- Kernel 1: fused 5-layer MLP -> per-edge label logit v --------------
    def run_mlp(single_buffer_weights):
        col = lambda shape: pl.BlockSpec(shape, lambda i: (0, i))
        if single_buffer_weights:
            # Invariant (VMEM-resident) weight blocks gain nothing from double buffering.
            res = lambda shape: pl.BlockSpec(shape, lambda i: (0, 0),
                                             pipeline_mode=pl.Buffered(1))
        else:
            res = lambda shape: pl.BlockSpec(shape, lambda i: (0, 0))
        return pl.pallas_call(
            partial(mlp_v_kernel, act_dtype=act_dtype),
            out_shape=jax.ShapeDtypeStruct((1, E_pad), jnp.float32),
            grid=(n_tiles,),
            in_specs=[
                col((2 * H, TE)),
                res((4 * H, 2 * H)), res((4 * H, 1)),
                res((2 * H, 4 * H)), res((2 * H, 1)),
                res((H, 2 * H)), res((H, 1)),
                res((H, H)), res((H, 1)),
                col((H, TE)), col((1, TE)),
            ],
            out_specs=col((1, TE)),
            compiler_params=pltpu.CompilerParams(
                dimension_semantics=("parallel",),
                vmem_limit_bytes=vmem_limit),
        )(x_t,
          wb("w1"), params["b1"], wb("w2"), params["b2"],
          wb("w3"), params["b3"], wb("w4"), params["b4"],
          w5_sel, b5_sel)

    if hasattr(pl, "Buffered"):
        try:
            v = run_mlp(True)
        except Exception:
            v = run_mlp(False)       # fall back to default double buffering
    else:
        v = run_mlp(False)

    # ---- Kernel 2a: segment-softmax stats + scatter_max (sequential reduce) --
    row_spec = pl.BlockSpec((B, 1), lambda t: (0, 0))
    edge_spec = pl.BlockSpec((1, TE), lambda t: (0, t))
    m, addp, addi = pl.pallas_call(
        seg_reduce_kernel,
        out_shape=(jax.ShapeDtypeStruct((B, 1), jnp.float32),
                   jax.ShapeDtypeStruct((B, 1), jnp.float32),
                   jax.ShapeDtypeStruct((B, 1), jnp.int32)),
        grid=(n_tiles,),
        in_specs=[edge_spec, edge_spec],
        out_specs=(row_spec, row_spec, row_spec),
        scratch_shapes=[pltpu.VMEM((B, 1), jnp.float32)],
        compiler_params=pltpu.CompilerParams(
            dimension_semantics=("arbitrary",),
            vmem_limit_bytes=vmem_limit),
    )(v, sid)

    # ---- Kernel 2b: per-edge normalization (parallel map) --------------------
    probs = pl.pallas_call(
        seg_norm_kernel,
        out_shape=jax.ShapeDtypeStruct((1, E_pad), jnp.float32),
        grid=(n_tiles,),
        in_specs=[edge_spec, edge_spec, row_spec, row_spec],
        out_specs=edge_spec,
        compiler_params=pltpu.CompilerParams(
            dimension_semantics=("parallel",),
            vmem_limit_bytes=vmem_limit),
    )(v, sid, m, addp)

    return probs[0, :E_ava], addp[:, 0], addi[:, 0]


# ---------------------------------------------------------------------------
# Pure-JAX / numpy reference (mirrors the PyTorch forward, train_flag=False),
# using the same bf16 matmul-operand + act_dtype epilogue policy as the kernel.
# ---------------------------------------------------------------------------

def reference_forward(node_reps_0, node_reps_1, edge_index, state, batch, y,
                      params, act_dtype):
    state = np.asarray(state, dtype=bool)
    ava_ei = np.asarray(edge_index)[:, ~state]
    reps = node_reps_0 - node_reps_1
    src = jnp.asarray(ava_ei[0])
    dst = jnp.asarray(ava_ei[1])
    x = jnp.concatenate([reps[src], reps[dst]], axis=1)          # [E, 2H]

    one = jnp.array(1, dtype=act_dtype)
    zero = jnp.array(0, dtype=act_dtype)

    def lin(h, w, b):    # w [out, in], b [out, 1]
        return (jnp.dot(h.astype(jnp.bfloat16), w.T.astype(jnp.bfloat16),
                        preferred_element_type=jnp.float32) + b[:, 0])

    def elu_act(z):
        z = z.astype(act_dtype)
        a = jnp.where(z > zero, z, jnp.exp(jnp.minimum(z, zero)) - one)
        return a.astype(jnp.bfloat16).astype(jnp.float32)

    h = elu_act(lin(x, params["w1"], params["b1"]))
    h = elu_act(lin(h, params["w2"], params["b2"]))
    h = lin(h, params["w3"], params["b3"])
    g = elu_act(lin(h, params["w4"], params["b4"]))

    ab = np.asarray(batch)[ava_ei[0]]
    yb = np.asarray(y)[ab]
    w5_sel = params["w5"].astype(jnp.bfloat16).astype(jnp.float32)[jnp.asarray(yb)]   # [E, H]
    v = jnp.sum(g * w5_sel, axis=1) + params["b5"][jnp.asarray(yb), 0]
    v = np.asarray(v, dtype=np.float64)

    B = int(np.asarray(y).shape[0])
    probs = np.zeros_like(v)
    for b in range(B):
        mask = ab == b
        e = np.exp(v[mask] - v[mask].max())
        probs[mask] = e / e.sum()
    addp = np.zeros(B)
    addi = np.zeros(B, np.int64)
    for b in range(B):
        idxs = np.where(ab == b)[0]
        addi[b] = idxs[np.argmax(probs[idxs])]
        addp[b] = probs[addi[b]]
    return probs, addp, addi


if __name__ == "__main__":
    key = jax.random.PRNGKey(0)
    B, H, L = 2, 32, 4                 # graphs, hidden_size, num_labels
    nodes_per_graph = 6
    N = B * nodes_per_graph

    # Small deterministic batched graph: a bidirectional ring per graph.
    src_l, dst_l, batch_l = [], [], []
    for b in range(B):
        base = b * nodes_per_graph
        for i in range(nodes_per_graph):
            j = (i + 1) % nodes_per_graph
            src_l += [base + i, base + j]
            dst_l += [base + j, base + i]
        batch_l += [b] * nodes_per_graph
    edge_index = np.array([src_l, dst_l], np.int32)        # [2, 24]
    E = edge_index.shape[1]
    batch = np.array(batch_l, np.int32)                    # [12]
    y = np.array([1, 3], np.int32)                         # graph labels, < num_labels

    # state: which edges are already selected (deterministic).
    state = np.zeros(E, bool)
    state[::4] = True

    key, k0, k1, kp = jax.random.split(key, 4)
    node_reps_0 = jax.random.normal(k0, (N, H), jnp.float32)   # model.get_node_reps(full graph)
    node_reps_1 = jax.random.normal(k1, (N, H), jnp.float32)   # model.get_node_reps(occupied subgraph)
    params = init_params(kp, H, L)

    probs, added_probs, added_actions = rc_explainer_forward(
        node_reps_0, node_reps_1, edge_index, state, batch, y, params, L)
    jax.block_until_ready((probs, added_probs, added_actions))

    act_dtype = _elu_act_dtype()
    ref_probs, ref_addp, ref_addi = reference_forward(
        node_reps_0, node_reps_1, edge_index, state, batch, y, params, act_dtype)

    np.testing.assert_allclose(np.asarray(probs), ref_probs, rtol=2e-2, atol=2e-3)
    np.testing.assert_allclose(np.asarray(added_probs), ref_addp, rtol=2e-2, atol=2e-3)
    # Tie-tolerant argmax check: chosen edge belongs to its graph and its reference
    # prob matches the reference per-graph max.
    addi_np = np.asarray(added_actions)
    ab = np.asarray(batch)[np.asarray(edge_index)[0, ~state]]
    for b in range(B):
        assert 0 <= addi_np[b] < len(ref_probs) and ab[addi_np[b]] == b
        assert ref_probs[addi_np[b]] >= ref_addp[b] - 1e-3

    print("KERNEL_OK")
</pallas_src>

<mosaic_0001>
module attributes {stable_mosaic.version = 11 : i64} {
  func.func @mlp_v_kernel(%arg0: i32, %arg1: memref<64x1024xbf16, #tpu.memory_space<vmem>>, %arg2: memref<128x64xbf16, #tpu.memory_space<vmem>>, %arg3: memref<128x1xf32, #tpu.memory_space<vmem>>, %arg4: memref<64x128xbf16, #tpu.memory_space<vmem>>, %arg5: memref<64x1xf32, #tpu.memory_space<vmem>>, %arg6: memref<32x64xbf16, #tpu.memory_space<vmem>>, %arg7: memref<32x1xf32, #tpu.memory_space<vmem>>, %arg8: memref<32x32xbf16, #tpu.memory_space<vmem>>, %arg9: memref<32x1xf32, #tpu.memory_space<vmem>>, %arg10: memref<32x1024xbf16, #tpu.memory_space<vmem>>, %arg11: memref<1x1024xf32, #tpu.memory_space<vmem>>, %arg12: memref<1x1024xf32, #tpu.memory_space<vmem>>) attributes {dimension_semantics = [#tpu.dimension_semantics<parallel>], iteration_bounds = array<i64: 1>, scalar_prefetch = 0 : i64, scratch_operands = 0 : i64, tpu.core_type = #tpu.core_type<tc>, window_params = [{transform_indices = @transform_0, window_bounds = array<i64: 64, 1024>}, {pipeline_mode = #tpu.pipeline_mode<synchronous>, transform_indices = @transform_1, window_bounds = array<i64: 128, 64>}, {pipeline_mode = #tpu.pipeline_mode<synchronous>, transform_indices = @transform_2, window_bounds = array<i64: 128, 1>}, {pipeline_mode = #tpu.pipeline_mode<synchronous>, transform_indices = @transform_3, window_bounds = array<i64: 64, 128>}, {pipeline_mode = #tpu.pipeline_mode<synchronous>, transform_indices = @transform_4, window_bounds = array<i64: 64, 1>}, {pipeline_mode = #tpu.pipeline_mode<synchronous>, transform_indices = @transform_5, window_bounds = array<i64: 32, 64>}, {pipeline_mode = #tpu.pipeline_mode<synchronous>, transform_indices = @transform_6, window_bounds = array<i64: 32, 1>}, {pipeline_mode = #tpu.pipeline_mode<synchronous>, transform_indices = @transform_7, window_bounds = array<i64: 32, 32>}, {pipeline_mode = #tpu.pipeline_mode<synchronous>, transform_indices = @transform_8, window_bounds = array<i64: 32, 1>}, {transform_indices = @transform_9, window_bounds = array<i64: 32, 1024>}, {transform_indices = @transform_10, window_bounds = array<i64: 1, 1024>}, {transform_indices = @transform_11, window_bounds = array<i64: 1, 1024>}]} {
    %c0 = arith.constant 0 : index
    %c0_0 = arith.constant 0 : index
    %0 = vector.load %arg1[%c0, %c0_0] : memref<64x1024xbf16, #tpu.memory_space<vmem>>, vector<64x1024xbf16>
    %c0_1 = arith.constant 0 : index
    %c0_2 = arith.constant 0 : index
    %1 = vector.load %arg2[%c0_1, %c0_2] : memref<128x64xbf16, #tpu.memory_space<vmem>>, vector<128x64xbf16>
    %cst = arith.constant dense<0.000000e+00> : vector<128x1024xf32>
    %2 = tpu.matmul %1, %0, %cst {dimension_numbers = #tpu.dot_dimension_numbers<[1], [0], [0], [1], [0, 0, 1, 1], [], []>} : vector<128x64xbf16>, vector<64x1024xbf16>, vector<128x1024xf32> -> vector<128x1024xf32>
    %c0_3 = arith.constant 0 : index
    %c0_4 = arith.constant 0 : index
    %3 = vector.load %arg3[%c0_3, %c0_4] : memref<128x1xf32, #tpu.memory_space<vmem>>, vector<128x1xf32>
    %4 = vector.broadcast %3 : vector<128x1xf32> to vector<128x1024xf32>
    %5 = arith.addf %2, %4 : vector<128x1024xf32>
    %6 = arith.truncf %5 : vector<128x1024xf32> to vector<128x1024xbf16>
    %cst_5 = arith.constant 0.000000e+00 : bf16
    %7 = vector.broadcast %cst_5 : bf16 to vector<128x1024xbf16>
    %8 = arith.cmpf ogt, %6, %7 : vector<128x1024xbf16>
    %cst_6 = arith.constant 0.000000e+00 : bf16
    %9 = vector.broadcast %cst_6 : bf16 to vector<128x1024xbf16>
    %10 = arith.minimumf %6, %9 : vector<128x1024xbf16>
    %11 = math.exp %10 : vector<128x1024xbf16>
    %cst_7 = arith.constant 1.000000e+00 : bf16
    %12 = vector.broadcast %cst_7 : bf16 to vector<128x1024xbf16>
    %13 = arith.subf %11, %12 : vector<128x1024xbf16>
    %14 = arith.select %8, %6, %13 : vector<128x1024xi1>, vector<128x1024xbf16>
    %c0_8 = arith.constant 0 : index
    %c0_9 = arith.constant 0 : index
    %15 = vector.load %arg4[%c0_8, %c0_9] : memref<64x128xbf16, #tpu.memory_space<vmem>>, vector<64x128xbf16>
    %cst_10 = arith.constant dense<0.000000e+00> : vector<64x1024xf32>
    %16 = tpu.matmul %15, %14, %cst_10 {dimension_numbers = #tpu.dot_dimension_numbers<[1], [0], [0], [1], [0, 0, 1, 1], [], []>} : vector<64x128xbf16>, vector<128x1024xbf16>, vector<64x1024xf32> -> vector<64x1024xf32>
    %c0_11 = arith.constant 0 : index
    %c0_12 = arith.constant 0 : index
    %17 = vector.load %arg5[%c0_11, %c0_12] : memref<64x1xf32, #tpu.memory_space<vmem>>, vector<64x1xf32>
    %18 = vector.broadcast %17 : vector<64x1xf32> to vector<64x1024xf32>
    %19 = arith.addf %16, %18 : vector<64x1024xf32>
    %20 = arith.truncf %19 : vector<64x1024xf32> to vector<64x1024xbf16>
    %cst_13 = arith.constant 0.000000e+00 : bf16
    %21 = vector.broadcast %cst_13 : bf16 to vector<64x1024xbf16>
    %22 = arith.cmpf ogt, %20, %21 : vector<64x1024xbf16>
    %cst_14 = arith.constant 0.000000e+00 : bf16
    %23 = vector.broadcast %cst_14 : bf16 to vector<64x1024xbf16>
    %24 = arith.minimumf %20, %23 : vector<64x1024xbf16>
    %25 = math.exp %24 : vector<64x1024xbf16>
    %cst_15 = arith.constant 1.000000e+00 : bf16
    %26 = vector.broadcast %cst_15 : bf16 to vector<64x1024xbf16>
    %27 = arith.subf %25, %26 : vector<64x1024xbf16>
    %28 = arith.select %22, %20, %27 : vector<64x1024xi1>, vector<64x1024xbf16>
    %c0_16 = arith.constant 0 : index
    %c0_17 = arith.constant 0 : index
    %29 = vector.load %arg6[%c0_16, %c0_17] : memref<32x64xbf16, #tpu.memory_space<vmem>>, vector<32x64xbf16>
    %cst_18 = arith.constant dense<0.000000e+00> : vector<32x1024xf32>
    %30 = tpu.matmul %29, %28, %cst_18 {dimension_numbers = #tpu.dot_dimension_numbers<[1], [0], [0], [1], [0, 0, 1, 1], [], []>} : vector<32x64xbf16>, vector<64x1024xbf16>, vector<32x1024xf32> -> vector<32x1024xf32>
    %c0_19 = arith.constant 0 : index
    %c0_20 = arith.constant 0 : index
    %31 = vector.load %arg7[%c0_19, %c0_20] : memref<32x1xf32, #tpu.memory_space<vmem>>, vector<32x1xf32>
    %32 = vector.broadcast %31 : vector<32x1xf32> to vector<32x1024xf32>
    %33 = arith.addf %30, %32 : vector<32x1024xf32>
    %34 = arith.truncf %33 : vector<32x1024xf32> to vector<32x1024xbf16>
    %c0_21 = arith.constant 0 : index
    %c0_22 = arith.constant 0 : index
    %35 = vector.load %arg8[%c0_21, %c0_22] : memref<32x32xbf16, #tpu.memory_space<vmem>>, vector<32x32xbf16>
    %cst_23 = arith.constant dense<0.000000e+00> : vector<32x1024xf32>
    %36 = tpu.matmul %35, %34, %cst_23 {dimension_numbers = #tpu.dot_dimension_numbers<[1], [0], [0], [1], [0, 0, 1, 1], [], []>} : vector<32x32xbf16>, vector<32x1024xbf16>, vector<32x1024xf32> -> vector<32x1024xf32>
    %c0_24 = arith.constant 0 : index
    %c0_25 = arith.constant 0 : index
    %37 = vector.load %arg9[%c0_24, %c0_25] : memref<32x1xf32, #tpu.memory_space<vmem>>, vector<32x1xf32>
    %38 = vector.broadcast %37 : vector<32x1xf32> to vector<32x1024xf32>
    %39 = arith.addf %36, %38 : vector<32x1024xf32>
    %40 = arith.truncf %39 : vector<32x1024xf32> to vector<32x1024xbf16>
    %cst_26 = arith.constant 0.000000e+00 : bf16
    %41 = vector.broadcast %cst_26 : bf16 to vector<32x1024xbf16>
    %42 = arith.cmpf ogt, %40, %41 : vector<32x1024xbf16>
    %cst_27 = arith.constant 0.000000e+00 : bf16
    %43 = vector.broadcast %cst_27 : bf16 to vector<32x1024xbf16>
    %44 = arith.minimumf %40, %43 : vector<32x1024xbf16>
    %45 = math.exp %44 : vector<32x1024xbf16>
    %cst_28 = arith.constant 1.000000e+00 : bf16
    %46 = vector.broadcast %cst_28 : bf16 to vector<32x1024xbf16>
    %47 = arith.subf %45, %46 : vector<32x1024xbf16>
    %48 = arith.select %42, %40, %47 : vector<32x1024xi1>, vector<32x1024xbf16>
    %49 = arith.extf %48 : vector<32x1024xbf16> to vector<32x1024xf32>
    %c0_29 = arith.constant 0 : index
    %c0_30 = arith.constant 0 : index
    %50 = vector.load %arg10[%c0_29, %c0_30] : memref<32x1024xbf16, #tpu.memory_space<vmem>>, vector<32x1024xbf16>
    %51 = arith.extf %50 : vector<32x1024xbf16> to vector<32x1024xf32>
    %52 = arith.mulf %49, %51 : vector<32x1024xf32>
    %cst_31 = arith.constant dense<0.000000e+00> : vector<1024xf32>
    %53 = vector.multi_reduction <add>, %52, %cst_31 [0] : vector<32x1024xf32> to vector<1024xf32>
    %54 = vector.shape_cast %53 : vector<1024xf32> to vector<1x1024xf32>
    %c0_32 = arith.constant 0 : index
    %c0_33 = arith.constant 0 : index
    %55 = vector.load %arg11[%c0_32, %c0_33] : memref<1x1024xf32, #tpu.memory_space<vmem>>, vector<1x1024xf32>
    %56 = arith.addf %54, %55 : vector<1x1024xf32>
    %c0_34 = arith.constant 0 : index
    %c0_35 = arith.constant 0 : index
    %57 = vector.load %arg12[%c0_34, %c0_35] : memref<1x1024xf32, #tpu.memory_space<vmem>>, vector<1x1024xf32>
    tpu.vector_store %arg12[%c0_34, %c0_35], %56 {strides = array<i32>} : memref<1x1024xf32, #tpu.memory_space<vmem>>, vector<1x1024xf32>,
    return
  }
  func.func @transform_0(%arg0: i32) -> (i32, i32) {
    %c0_i32 = arith.constant 0 : i32
    %c0_i32_0 = arith.constant 0 : i32
    return %c0_i32, %arg0 : i32, i32
  }
  func.func @transform_1(%arg0: i32) -> (i32, i32) {
    %c0_i32 = arith.constant 0 : i32
    %c0_i32_0 = arith.constant 0 : i32
    %c0_i32_1 = arith.constant 0 : i32
    return %c0_i32, %c0_i32_0 : i32, i32
  }
  func.func @transform_2(%arg0: i32) -> (i32, i32) {
    %c0_i32 = arith.constant 0 : i32
    %c0_i32_0 = arith.constant 0 : i32
    %c0_i32_1 = arith.constant 0 : i32
    return %c0_i32, %c0_i32_0 : i32, i32
  }
  func.func @transform_3(%arg0: i32) -> (i32, i32) {
    %c0_i32 = arith.constant 0 : i32
    %c0_i32_0 = arith.constant 0 : i32
    %c0_i32_1 = arith.constant 0 : i32
    return %c0_i32, %c0_i32_0 : i32, i32
  }
  func.func @transform_4(%arg0: i32) -> (i32, i32) {
    %c0_i32 = arith.constant 0 : i32
    %c0_i32_0 = arith.constant 0 : i32
    %c0_i32_1 = arith.constant 0 : i32
    return %c0_i32, %c0_i32_0 : i32, i32
  }
  func.func @transform_5(%arg0: i32) -> (i32, i32) {
    %c0_i32 = arith.constant 0 : i32
    %c0_i32_0 = arith.constant 0 : i32
    %c0_i32_1 = arith.constant 0 : i32
    return %c0_i32, %c0_i32_0 : i32, i32
  }
  func.func @transform_6(%arg0: i32) -> (i32, i32) {
    %c0_i32 = arith.constant 0 : i32
    %c0_i32_0 = arith.constant 0 : i32
    %c0_i32_1 = arith.constant 0 : i32
    return %c0_i32, %c0_i32_0 : i32, i32
  }
  func.func @transform_7(%arg0: i32) -> (i32, i32) {
    %c0_i32 = arith.constant 0 : i32
    %c0_i32_0 = arith.constant 0 : i32
    %c0_i32_1 = arith.constant 0 : i32
    return %c0_i32, %c0_i32_0 : i32, i32
  }
  func.func @transform_8(%arg0: i32) -> (i32, i32) {
    %c0_i32 = arith.constant 0 : i32
    %c0_i32_0 = arith.constant 0 : i32
    %c0_i32_1 = arith.constant 0 : i32
    return %c0_i32, %c0_i32_0 : i32, i32
  }
  func.func @transform_9(%arg0: i32) -> (i32, i32) {
    %c0_i32 = arith.constant 0 : i32
    %c0_i32_0 = arith.constant 0 : i32
    return %c0_i32, %arg0 : i32, i32
  }
  func.func @transform_10(%arg0: i32) -> (i32, i32) {
    %c0_i32 = arith.constant 0 : i32
    %c0_i32_0 = arith.constant 0 : i32
    return %c0_i32, %arg0 : i32, i32
  }
  func.func @transform_11(%arg0: i32) -> (i32, i32) {
    %c0_i32 = arith.constant 0 : i32
    %c0_i32_0 = arith.constant 0 : i32
    return %c0_i32, %arg0 : i32, i32
  }
}

module attributes {stable_mosaic.version = 11 : i64} {
  func.func @mlp_v_kernel(%arg0: i32, %arg1: memref<64x1024xbf16, #tpu.memory_space<vmem>>, %arg2: memref<128x64xbf16, #tpu.memory_space<vmem>>, %arg3: memref<128x1xf32, #tpu.memory_space<vmem>>, %arg4: memref<64x128xbf16, #tpu.memory_space<vmem>>, %arg5: memref<64x1xf32, #tpu.memory_space<vmem>>, %arg6: memref<32x64xbf16, #tpu.memory_space<vmem>>, %arg7: memref<32x1xf32, #tpu.memory_space<vmem>>, %arg8: memref<32x32xbf16, #tpu.memory_space<vmem>>, %arg9: memref<32x1xf32, #tpu.memory_space<vmem>>, %arg10: memref<32x1024xbf16, #tpu.memory_space<vmem>>, %arg11: memref<1x1024xf32, #tpu.memory_space<vmem>>, %arg12: memref<1x1024xf32, #tpu.memory_space<vmem>>) attributes {dimension_semantics = [#tpu.dimension_semantics<parallel>], iteration_bounds = array<i64: 1>, scalar_prefetch = 0 : i64, scratch_operands = 0 : i64, tpu.core_type = #tpu.core_type<tc>, window_params = [{transform_indices = @transform_0, window_bounds = array<i64: 64, 1024>}, {pipeline_mode = #tpu.pipeline_mode<synchronous>, transform_indices = @transform_1, window_bounds = array<i64: 128, 64>}, {pipeline_mode = #tpu.pipeline_mode<synchronous>, transform_indices = @transform_2, window_bounds = array<i64: 128, 1>}, {pipeline_mode = #tpu.pipeline_mode<synchronous>, transform_indices = @transform_3, window_bounds = array<i64: 64, 128>}, {pipeline_mode = #tpu.pipeline_mode<synchronous>, transform_indices = @transform_4, window_bounds = array<i64: 64, 1>}, {pipeline_mode = #tpu.pipeline_mode<synchronous>, transform_indices = @transform_5, window_bounds = array<i64: 32, 64>}, {pipeline_mode = #tpu.pipeline_mode<synchronous>, transform_indices = @transform_6, window_bounds = array<i64: 32, 1>}, {pipeline_mode = #tpu.pipeline_mode<synchronous>, transform_indices = @transform_7, window_bounds = array<i64: 32, 32>}, {pipeline_mode = #tpu.pipeline_mode<synchronous>, transform_indices = @transform_8, window_bounds = array<i64: 32, 1>}, {transform_indices = @transform_9, window_bounds = array<i64: 32, 1024>}, {transform_indices = @transform_10, window_bounds = array<i64: 1, 1024>}, {transform_indices = @transform_11, window_bounds = array<i64: 1, 1024>}]} {
    %c0 = arith.constant 0 : index
    %c0_0 = arith.constant 0 : index
    %0 = vector.load %arg1[%c0, %c0_0] : memref<64x1024xbf16, #tpu.memory_space<vmem>>, vector<64x1024xbf16>
    %c0_1 = arith.constant 0 : index
    %c0_2 = arith.constant 0 : index
    %1 = vector.load %arg2[%c0_1, %c0_2] : memref<128x64xbf16, #tpu.memory_space<vmem>>, vector<128x64xbf16>
    %cst = arith.constant dense<0.000000e+00> : vector<128x1024xf32>
    %2 = tpu.matmul %1, %0, %cst {dimension_numbers = #tpu.dot_dimension_numbers<[1], [0], [0], [1], [0, 0, 1, 1], [], []>} : vector<128x64xbf16>, vector<64x1024xbf16>, vector<128x1024xf32> -> vector<128x1024xf32>
    %c0_3 = arith.constant 0 : index
    %c0_4 = arith.constant 0 : index
    %3 = vector.load %arg3[%c0_3, %c0_4] : memref<128x1xf32, #tpu.memory_space<vmem>>, vector<128x1xf32>
    %4 = vector.broadcast %3 : vector<128x1xf32> to vector<128x1024xf32>
    %5 = arith.addf %2, %4 : vector<128x1024xf32>
    %6 = arith.truncf %5 : vector<128x1024xf32> to vector<128x1024xbf16>
    %cst_5 = arith.constant 0.000000e+00 : bf16
    %7 = vector.broadcast %cst_5 : bf16 to vector<128x1024xbf16>
    %8 = arith.cmpf ogt, %6, %7 : vector<128x1024xbf16>
    %cst_6 = arith.constant 0.000000e+00 : bf16
    %9 = vector.broadcast %cst_6 : bf16 to vector<128x1024xbf16>
    %10 = arith.minimumf %6, %9 : vector<128x1024xbf16>
    %11 = math.exp %10 : vector<128x1024xbf16>
    %cst_7 = arith.constant 1.000000e+00 : bf16
    %12 = vector.broadcast %cst_7 : bf16 to vector<128x1024xbf16>
    %13 = arith.subf %11, %12 : vector<128x1024xbf16>
    %14 = arith.select %8, %6, %13 : vector<128x1024xi1>, vector<128x1024xbf16>
    %c0_8 = arith.constant 0 : index
    %c0_9 = arith.constant 0 : index
    %15 = vector.load %arg4[%c0_8, %c0_9] : memref<64x128xbf16, #tpu.memory_space<vmem>>, vector<64x128xbf16>
    %cst_10 = arith.constant dense<0.000000e+00> : vector<64x1024xf32>
    %16 = tpu.matmul %15, %14, %cst_10 {dimension_numbers = #tpu.dot_dimension_numbers<[1], [0], [0], [1], [0, 0, 1, 1], [], []>} : vector<64x128xbf16>, vector<128x1024xbf16>, vector<64x1024xf32> -> vector<64x1024xf32>
    %c0_11 = arith.constant 0 : index
    %c0_12 = arith.constant 0 : index
    %17 = vector.load %arg5[%c0_11, %c0_12] : memref<64x1xf32, #tpu.memory_space<vmem>>, vector<64x1xf32>
    %18 = vector.broadcast %17 : vector<64x1xf32> to vector<64x1024xf32>
    %19 = arith.addf %16, %18 : vector<64x1024xf32>
    %20 = arith.truncf %19 : vector<64x1024xf32> to vector<64x1024xbf16>
    %cst_13 = arith.constant 0.000000e+00 : bf16
    %21 = vector.broadcast %cst_13 : bf16 to vector<64x1024xbf16>
    %22 = arith.cmpf ogt, %20, %21 : vector<64x1024xbf16>
    %cst_14 = arith.constant 0.000000e+00 : bf16
    %23 = vector.broadcast %cst_14 : bf16 to vector<64x1024xbf16>
    %24 = arith.minimumf %20, %23 : vector<64x1024xbf16>
    %25 = math.exp %24 : vector<64x1024xbf16>
    %cst_15 = arith.constant 1.000000e+00 : bf16
    %26 = vector.broadcast %cst_15 : bf16 to vector<64x1024xbf16>
    %27 = arith.subf %25, %26 : vector<64x1024xbf16>
    %28 = arith.select %22, %20, %27 : vector<64x1024xi1>, vector<64x1024xbf16>
    %c0_16 = arith.constant 0 : index
    %c0_17 = arith.constant 0 : index
    %29 = vector.load %arg6[%c0_16, %c0_17] : memref<32x64xbf16, #tpu.memory_space<vmem>>, vector<32x64xbf16>
    %cst_18 = arith.constant dense<0.000000e+00> : vector<32x1024xf32>
    %30 = tpu.matmul %29, %28, %cst_18 {dimension_numbers = #tpu.dot_dimension_numbers<[1], [0], [0], [1], [0, 0, 1, 1], [], []>} : vector<32x64xbf16>, vector<64x1024xbf16>, vector<32x1024xf32> -> vector<32x1024xf32>
    %c0_19 = arith.constant 0 : index
    %c0_20 = arith.constant 0 : index
    %31 = vector.load %arg7[%c0_19, %c0_20] : memref<32x1xf32, #tpu.memory_space<vmem>>, vector<32x1xf32>
    %32 = vector.broadcast %31 : vector<32x1xf32> to vector<32x1024xf32>
    %33 = arith.addf %30, %32 : vector<32x1024xf32>
    %34 = arith.truncf %33 : vector<32x1024xf32> to vector<32x1024xbf16>
    %c0_21 = arith.constant 0 : index
    %c0_22 = arith.constant 0 : index
    %35 = vector.load %arg8[%c0_21, %c0_22] : memref<32x32xbf16, #tpu.memory_space<vmem>>, vector<32x32xbf16>
    %cst_23 = arith.constant dense<0.000000e+00> : vector<32x1024xf32>
    %36 = tpu.matmul %35, %34, %cst_23 {dimension_numbers = #tpu.dot_dimension_numbers<[1], [0], [0], [1], [0, 0, 1, 1], [], []>} : vector<32x32xbf16>, vector<32x1024xbf16>, vector<32x1024xf32> -> vector<32x1024xf32>
    %c0_24 = arith.constant 0 : index
    %c0_25 = arith.constant 0 : index
    %37 = vector.load %arg9[%c0_24, %c0_25] : memref<32x1xf32, #tpu.memory_space<vmem>>, vector<32x1xf32>
    %38 = vector.broadcast %37 : vector<32x1xf32> to vector<32x1024xf32>
    %39 = arith.addf %36, %38 : vector<32x1024xf32>
    %40 = arith.truncf %39 : vector<32x1024xf32> to vector<32x1024xbf16>
    %cst_26 = arith.constant 0.000000e+00 : bf16
    %41 = vector.broadcast %cst_26 : bf16 to vector<32x1024xbf16>
    %42 = arith.cmpf ogt, %40, %41 : vector<32x1024xbf16>
    %cst_27 = arith.constant 0.000000e+00 : bf16
    %43 = vector.broadcast %cst_27 : bf16 to vector<32x1024xbf16>
    %44 = arith.minimumf %40, %43 : vector<32x1024xbf16>
    %45 = math.exp %44 : vector<32x1024xbf16>
    %cst_28 = arith.constant 1.000000e+00 : bf16
    %46 = vector.broadcast %cst_28 : bf16 to vector<32x1024xbf16>
    %47 = arith.subf %45, %46 : vector<32x1024xbf16>
    %48 = arith.select %42, %40, %47 : vector<32x1024xi1>, vector<32x1024xbf16>
    %49 = arith.extf %48 : vector<32x1024xbf16> to vector<32x1024xf32>
    %c0_29 = arith.constant 0 : index
    %c0_30 = arith.constant 0 : index
    %50 = vector.load %arg10[%c0_29, %c0_30] : memref<32x1024xbf16, #tpu.memory_space<vmem>>, vector<32x1024xbf16>
    %51 = arith.extf %50 : vector<32x1024xbf16> to vector<32x1024xf32>
    %52 = arith.mulf %49, %51 : vector<32x1024xf32>
    %cst_31 = arith.constant dense<0.000000e+00> : vector<1024xf32>
    %53 = vector.multi_reduction <add>, %52, %cst_31 [0] : vector<32x1024xf32> to vector<1024xf32>
    %54 = vector.shape_cast %53 : vector<1024xf32> to vector<1x1024xf32>
    %c0_32 = arith.constant 0 : index
    %c0_33 = arith.constant 0 : index
    %55 = vector.load %arg11[%c0_32, %c0_33] : memref<1x1024xf32, #tpu.memory_space<vmem>>, vector<1x1024xf32>
    %56 = arith.addf %54, %55 : vector<1x1024xf32>
    %c0_34 = arith.constant 0 : index
    %c0_35 = arith.constant 0 : index
    %57 = vector.load %arg12[%c0_34, %c0_35] : memref<1x1024xf32, #tpu.memory_space<vmem>>, vector<1x1024xf32>
    tpu.vector_store %arg12[%c0_34, %c0_35], %56 {strides = array<i32>} : memref<1x1024xf32, #tpu.memory_space<vmem>>, vector<1x1024xf32>,
    return
  }
  func.func @transform_0(%arg0: i32) -> (i32, i32) {
    %c0_i32 = arith.constant 0 : i32
    %c0_i32_0 = arith.constant 0 : i32
    return %c0_i32, %arg0 : i32, i32
  }
  func.func @transform_1(%arg0: i32) -> (i32, i32) {
    %c0_i32 = arith.constant 0 : i32
    %c0_i32_0 = arith.constant 0 : i32
    %c0_i32_1 = arith.constant 0 : i32
    return %c0_i32, %c0_i32_0 : i32, i32
  }
  func.func @transform_2(%arg0: i32) -> (i32, i32) {
    %c0_i32 = arith.constant 0 : i32
    %c0_i32_0 = arith.constant 0 : i32
    %c0_i32_1 = arith.constant 0 : i32
    return %c0_i32, %c0_i32_0 : i32, i32
  }
  func.func @transform_3(%arg0: i32) -> (i32, i32) {
    %c0_i32 = arith.constant 0 : i32
    %c0_i32_0 = arith.constant 0 : i32
    %c0_i32_1 = arith.constant 0 : i32
    return %c0_i32, %c0_i32_0 : i32, i32
  }
  func.func @transform_4(%arg0: i32) -> (i32, i32) {
    %c0_i32 = arith.constant 0 : i32
    %c0_i32_0 = arith.constant 0 : i32
    %c0_i32_1 = arith.constant 0 : i32
    return %c0_i32, %c0_i32_0 : i32, i32
  }
  func.func @transform_5(%arg0: i32) -> (i32, i32) {
    %c0_i32 = arith.constant 0 : i32
    %c0_i32_0 = arith.constant 0 : i32
    %c0_i32_1 = arith.constant 0 : i32
    return %c0_i32, %c0_i32_0 : i32, i32
  }
  func.func @transform_6(%arg0: i32) -> (i32, i32) {
    %c0_i32 = arith.constant 0 : i32
    %c0_i32_0 = arith.constant 0 : i32
    %c0_i32_1 = arith.constant 0 : i32
    return %c0_i32, %c0_i32_0 : i32, i32
  }
  func.func @transform_7(%arg0: i32) -> (i32, i32) {
    %c0_i32 = arith.constant 0 : i32
    %c0_i32_0 = arith.constant 0 : i32
    %c0_i32_1 = arith.constant 0 : i32
    return %c0_i32, %c0_i32_0 : i32, i32
  }
  func.func @transform_8(%arg0: i32) -> (i32, i32) {
    %c0_i32 = arith.constant 0 : i32
    %c0_i32_0 = arith.constant 0 : i32
    %c0_i32_1 = arith.constant 0 : i32
    return %c0_i32, %c0_i32_0 : i32, i32
  }
  func.func @transform_9(%arg0: i32) -> (i32, i32) {
    %c0_i32 = arith.constant 0 : i32
    %c0_i32_0 = arith.constant 0 : i32
    return %c0_i32, %arg0 : i32, i32
  }
  func.func @transform_10(%arg0: i32) -> (i32, i32) {
    %c0_i32 = arith.constant 0 : i32
    %c0_i32_0 = arith.constant 0 : i32
    return %c0_i32, %arg0 : i32, i32
  }
  func.func @transform_11(%arg0: i32) -> (i32, i32) {
    %c0_i32 = arith.constant 0 : i32
    %c0_i32_0 = arith.constant 0 : i32
    return %c0_i32, %arg0 : i32, i32
  }
}

</mosaic_0001>

<llo_original>
// kernel: tpu_custom_call.1
$region0: #{tpu_custom_call.1}
  #allocation0 [shape = 'u32[]', space=smem, size = 0x4, offset = 0x4, fixed_abs, tag = 'smem constant byte address 0x4 - core index']
  #allocation1 [shape = 'u32[72,128]{1,0:T(1,128)}', space=vmem, size = 0x9000, scoped, tag = 'internal scratch']
  %s0 = inlined_call_operand.hbm [shape: bf16[64,1024], index: 0, kind: input, shape index: {}]
  %s1 = inlined_call_operand.vmem [shape: bf16[128,64], index: 1, kind: input, shape index: {}]
  %s2 = inlined_call_operand.vmem [shape: f32[128,1], index: 2, kind: input, shape index: {}]
  %s3 = inlined_call_operand.vmem [shape: bf16[64,128], index: 3, kind: input, shape index: {}]
  %s4 = inlined_call_operand.vmem [shape: f32[64,1], index: 4, kind: input, shape index: {}]
  %s5 = inlined_call_operand.vmem [shape: bf16[32,64], index: 5, kind: input, shape index: {}]
  %s6 = inlined_call_operand.vmem [shape: f32[32,1], index: 6, kind: input, shape index: {}]
  %s7 = inlined_call_operand.vmem [shape: bf16[32,32], index: 7, kind: input, shape index: {}]
  %s8 = inlined_call_operand.vmem [shape: f32[32,1], index: 8, kind: input, shape index: {}]
  %s9 = inlined_call_operand.vmem [shape: bf16[32,1024], index: 9, kind: input, shape index: {}]
  %s10 = inlined_call_operand.vmem [shape: f32[1,1024], index: 10, kind: input, shape index: {}]
  %s11 = inlined_call_operand.hbm [shape: f32[1,1024], index: 11, kind: output, shape index: {}]
  %s12 = sld [smem:[#allocation0]]
  $region58: #{tpu_custom_call.1} parent=0
    _
  %s14 = ssub.s32 1, %s12
  %s15 = scalar_select 0, %s14, %s12
  $region1: #{tpu_custom_call.1} parent=0
    #allocation2 [shape = 'u8[131072]{0}', space=vmem, size = 0x20000, scoped, tag = 'input window, operand 0, single buffered']
    #allocation3 [shape = 's32[1]{0}', space=sflag, size = 0x4, scoped, tag = 'scoped memory for tpu_custom_call.1']
    #allocation4 [shape = 's32[1]{0}', space=sflag, size = 0x4, scoped, tag = 'scoped memory for tpu_custom_call.1']
    #allocation5 [shape = 'u8[4096]{0}', space=vmem, size = 0x1000, scoped, tag = 'output window, operand 0, single buffered']
    %16 = vsyncpa [#allocation3], 0
    %17 = vsyncpa [#allocation4], 0
    // Predicated region
    $region2: #{tpu_custom_call.1} parent=1 // pred_check
      _
    $region3: #{tpu_custom_call.1} parent=1 // pred_check_branch
      %19 = sbr.rel (0) target = $region5
    $region4: #{tpu_custom_call.1} parent=1 // pred_region
      %21 = vsyncadd [#allocation3], 0
      %s22 = sshll.u32 %s0, 4
      %s23 = int_to_ptr.hbm [resolvable:$true] %s22
      %s24 = sshll.u32 [#allocation2], 4
      %s25 = int_to_ptr.vmem [resolvable:$true] %s24
      %30 = dma.hbm_to_vmem [thread:$0]  %s23, 4096, %s25, [#allocation3], 512, 512, 32
    $region5: #{tpu_custom_call.1} parent=1 // pred_fallthru
      _
    // Predicated region
    $region6: #{tpu_custom_call.1} parent=1 // pred_check
      _
    $region7: #{tpu_custom_call.1} parent=1 // pred_check_branch
      %32 = sbr.rel (0) target = $region9
    $region8: #{tpu_custom_call.1} parent=1 // pred_region
      _
    $region9: #{tpu_custom_call.1} parent=1 // pred_fallthru
      _
    // Predicated region
    $region10: #{tpu_custom_call.1} parent=1 // pred_check
      _
    $region11: #{tpu_custom_call.1} parent=1 // pred_check_branch
      %34 = sbr.rel (0) target = $region13
    $region12: #{tpu_custom_call.1} parent=1 // pred_region
      _
    $region13: #{tpu_custom_call.1} parent=1 // pred_fallthru
      _
    // Predicated region
    $region14: #{tpu_custom_call.1} parent=1 // pred_check
      _
    $region15: #{tpu_custom_call.1} parent=1 // pred_check_branch
      %36 = sbr.rel (0) target = $region17
    $region16: #{tpu_custom_call.1} parent=1 // pred_region
      _
    $region17: #{tpu_custom_call.1} parent=1 // pred_fallthru
      _
    // Predicated region
    $region18: #{tpu_custom_call.1} parent=1 // pred_check
      _
    $region19: #{tpu_custom_call.1} parent=1 // pred_check_branch
      %38 = sbr.rel (0) target = $region21
    $region20: #{tpu_custom_call.1} parent=1 // pred_region
      _
    $region21: #{tpu_custom_call.1} parent=1 // pred_fallthru
      _
    // Predicated region
    $region22: #{tpu_custom_call.1} parent=1 // pred_check
      _
    $region23: #{tpu_custom_call.1} parent=1 // pred_check_branch
      %40 = sbr.rel (0) target = $region25
    $region24: #{tpu_custom_call.1} parent=1 // pred_region
      _
    $region25: #{tpu_custom_call.1} parent=1 // pred_fallthru
      _
    // Predicated region
    $region26: #{tpu_custom_call.1} parent=1 // pred_check
      _
    $region27: #{tpu_custom_call.1} parent=1 // pred_check_branch
      %42 = sbr.rel (0) target = $region29
    $region28: #{tpu_custom_call.1} parent=1 // pred_region
      _
    $region29: #{tpu_custom_call.1} parent=1 // pred_fallthru
      _
    // Predicated region
    $region30: #{tpu_custom_call.1} parent=1 // pred_check
      _
    $region31: #{tpu_custom_call.1} parent=1 // pred_check_branch
      %44 = sbr.rel (0) target = $region33
    $region32: #{tpu_custom_call.1} parent=1 // pred_region
      _
    $region33: #{tpu_custom_call.1} parent=1 // pred_fallthru
      _
    // Predicated region
    $region34: #{tpu_custom_call.1} parent=1 // pred_check
      _
    $region35: #{tpu_custom_call.1} parent=1 // pred_check_branch
      %46 = sbr.rel (0) target = $region37
    $region36: #{tpu_custom_call.1} parent=1 // pred_region
      _
    $region37: #{tpu_custom_call.1} parent=1 // pred_fallthru
      _
    // Predicated region
    $region38: #{tpu_custom_call.1} parent=1 // pred_check
      _
    $region39: #{tpu_custom_call.1} parent=1 // pred_check_branch
      %48 = sbr.rel (0) target = $region41
    $region40: #{tpu_custom_call.1} parent=1 // pred_region
      _
    $region41: #{tpu_custom_call.1} parent=1 // pred_fallthru
      _
    // Predicated region
    $region42: #{tpu_custom_call.1} parent=1 // pred_check
      _
    $region43: #{tpu_custom_call.1} parent=1 // pred_check_branch
      %50 = sbr.rel (0) target = $region45
    $region44: #{tpu_custom_call.1} parent=1 // pred_region
      _
    $region45: #{tpu_custom_call.1} parent=1 // pred_fallthru
      _
    // Predicated region
    $region46: #{tpu_custom_call.1} parent=1 // pred_check
      _
    $region47: #{tpu_custom_call.1} parent=1 // pred_check_branch
      %52 = sbr.rel (0) target = $region49
    $region48: #{tpu_custom_call.1} parent=1 // pred_region
      %54 = dma.done [#allocation3], 4096
    $region49: #{tpu_custom_call.1} parent=1 // pred_fallthru
      _
    %v56 = vld [vmem:[#allocation2] sm:$0xff]
    %v57 = vld [vmem:[#allocation2 + $0x8] sm:$0xff]
    %v58 = vld [vmem:[#allocation2 + $0x10] sm:$0xff]
    %v59 = vld [vmem:[#allocation2 + $0x18] sm:$0xff]
    %v60 = vld [vmem:[#allocation2 + $0x20] sm:$0xff]
    %v61 = vld [vmem:[#allocation2 + $0x28] sm:$0xff]
    %v62 = vld [vmem:[#allocation2 + $0x30] sm:$0xff]
    %v63 = vld [vmem:[#allocation2 + $0x38] sm:$0xff]
    %v64 = vld [vmem:[#allocation2 + $0x40] sm:$0xff]
    %v65 = vld [vmem:[#allocation2 + $0x48] sm:$0xff]
    %v66 = vld [vmem:[#allocation2 + $0x50] sm:$0xff]
    %v67 = vld [vmem:[#allocation2 + $0x58] sm:$0xff]
    %v68 = vld [vmem:[#allocation2 + $0x60] sm:$0xff]
    %v69 = vld [vmem:[#allocation2 + $0x68] sm:$0xff]
    %v70 = vld [vmem:[#allocation2 + $0x70] sm:$0xff]
    %v71 = vld [vmem:[#allocation2 + $0x78] sm:$0xff]
    %v72 = vld [vmem:[#allocation2 + $0x80] sm:$0xff]
    %v73 = vld [vmem:[#allocation2 + $0x88] sm:$0xff]
    %v74 = vld [vmem:[#allocation2 + $0x90] sm:$0xff]
    %v75 = vld [vmem:[#allocation2 + $0x98] sm:$0xff]
    %v76 = vld [vmem:[#allocation2 + $0xa0] sm:$0xff]
    %v77 = vld [vmem:[#allocation2 + $0xa8] sm:$0xff]
    %v78 = vld [vmem:[#allocation2 + $0xb0] sm:$0xff]
    %v79 = vld [vmem:[#allocation2 + $0xb8] sm:$0xff]
    %v80 = vld [vmem:[#allocation2 + $0xc0] sm:$0xff]
    %v81 = vld [vmem:[#allocation2 + $0xc8] sm:$0xff]
    %v82 = vld [vmem:[#allocation2 + $0xd0] sm:$0xff]
    %v83 = vld [vmem:[#allocation2 + $0xd8] sm:$0xff]
    %v84 = vld [vmem:[#allocation2 + $0xe0] sm:$0xff]
    %v85 = vld [vmem:[#allocation2 + $0xe8] sm:$0xff]
    %v86 = vld [vmem:[#allocation2 + $0xf0] sm:$0xff]
    %v87 = vld [vmem:[#allocation2 + $0xf8] sm:$0xff]
    %v88 = vld [vmem:[%s1] sm:$0xf]
    %v89 = vld [vmem:[%s1 + $0x4] sm:$0xf]
    %v90 = vld [vmem:[%s1 + $0x8] sm:$0xf]
    %v91 = vld [vmem:[%s1 + $0xc] sm:$0xf]
    %v92 = vld [vmem:[%s1 + $0x10] sm:$0xf]
    %v93 = vld [vmem:[%s1 + $0x14] sm:$0xf]
    %v94 = vld [vmem:[%s1 + $0x18] sm:$0xf]
    %v95 = vld [vmem:[%s1 + $0x1c] sm:$0xf]
    %v96 = vld [vmem:[%s1 + $0x20] sm:$0xf]
    %v97 = vld [vmem:[%s1 + $0x24] sm:$0xf]
    %v98 = vld [vmem:[%s1 + $0x28] sm:$0xf]
    %v99 = vld [vmem:[%s1 + $0x2c] sm:$0xf]
    %v100 = vld [vmem:[%s1 + $0x30] sm:$0xf]
    %v101 = vld [vmem:[%s1 + $0x34] sm:$0xf]
    %v102 = vld [vmem:[%s1 + $0x38] sm:$0xf]
    %v103 = vld [vmem:[%s1 + $0x3c] sm:$0xf]
    %v104 = vld [vmem:[%s2] sm:$0xff]
    %v105 = vld [vmem:[%s2 + $0x8] sm:$0xff]
    %v106 = vld [vmem:[%s2 + $0x10] sm:$0xff]
    %v107 = vld [vmem:[%s2 + $0x18] sm:$0xff]
    %v108 = vld [vmem:[%s2 + $0x20] sm:$0xff]
    %v109 = vld [vmem:[%s2 + $0x28] sm:$0xff]
    %v110 = vld [vmem:[%s2 + $0x30] sm:$0xff]
    %v111 = vld [vmem:[%s2 + $0x38] sm:$0xff]
    %v112 = vld [vmem:[%s2 + $0x40] sm:$0xff]
    %v113 = vld [vmem:[%s2 + $0x48] sm:$0xff]
    %v114 = vld [vmem:[%s2 + $0x50] sm:$0xff]
    %v115 = vld [vmem:[%s2 + $0x58] sm:$0xff]
    %v116 = vld [vmem:[%s2 + $0x60] sm:$0xff]
    %v117 = vld [vmem:[%s2 + $0x68] sm:$0xff]
    %v118 = vld [vmem:[%s2 + $0x70] sm:$0xff]
    %v119 = vld [vmem:[%s2 + $0x78] sm:$0xff]
    %121 = vset.pattern.permute.xlu0 0
    %122 = vperm.xlu0 %121, %v104
    %v123 = vpop.permute.xlu0 %122
    %126 = vset.pattern.permute.xlu0 0
    %127 = vperm.xlu0 %126, %v105
    %v128 = vpop.permute.xlu0 %127
    %131 = vset.pattern.permute.xlu0 0
    %132 = vperm.xlu0 %131, %v106
    %v133 = vpop.permute.xlu0 %132
    %136 = vset.pattern.permute.xlu0 0
    %137 = vperm.xlu0 %136, %v107
    %v138 = vpop.permute.xlu0 %137
    %141 = vset.pattern.permute.xlu0 0
    %142 = vperm.xlu0 %141, %v108
    %v143 = vpop.permute.xlu0 %142
    %146 = vset.pattern.permute.xlu0 0
    %147 = vperm.xlu0 %146, %v109
    %v148 = vpop.permute.xlu0 %147
    %151 = vset.pattern.permute.xlu0 0
    %152 = vperm.xlu0 %151, %v110
    %v153 = vpop.permute.xlu0 %152
    %156 = vset.pattern.permute.xlu0 0
    %157 = vperm.xlu0 %156, %v111
    %v158 = vpop.permute.xlu0 %157
    %161 = vset.pattern.permute.xlu0 0
    %162 = vperm.xlu0 %161, %v112
    %v163 = vpop.permute.xlu0 %162
    %166 = vset.pattern.permute.xlu0 0
    %167 = vperm.xlu0 %166, %v113
    %v168 = vpop.permute.xlu0 %167
    %171 = vset.pattern.permute.xlu0 0
    %172 = vperm.xlu0 %171, %v114
    %v173 = vpop.permute.xlu0 %172
    %176 = vset.pattern.permute.xlu0 0
    %177 = vperm.xlu0 %176, %v115
    %v178 = vpop.permute.xlu0 %177
    %181 = vset.pattern.permute.xlu0 0
    %182 = vperm.xlu0 %181, %v116
    %v183 = vpop.permute.xlu0 %182
    %186 = vset.pattern.permute.xlu0 0
    %187 = vperm.xlu0 %186, %v117
    %v188 = vpop.permute.xlu0 %187
    %191 = vset.pattern.permute.xlu0 0
    %192 = vperm.xlu0 %191, %v118
    %v193 = vpop.permute.xlu0 %192
    %196 = vset.pattern.permute.xlu0 0
    %197 = vperm.xlu0 %196, %v119
    %v198 = vpop.permute.xlu0 %197
    %v216 = vunpack.c.l.b16 %v88
    %v217 = vunpack.c.l.b16 %v89
    %v218 = vunpack.c.l.b16 %v90
    %v219 = vunpack.c.l.b16 %v91
    %v220 = vunpack.c.l.b16 %v92
    %v221 = vunpack.c.l.b16 %v93
    %v222 = vunpack.c.l.b16 %v94
    %v223 = vunpack.c.l.b16 %v95
    %v224 = vunpack.c.l.b16 %v96
    %v225 = vunpack.c.l.b16 %v97
    %v226 = vunpack.c.l.b16 %v98
    %v227 = vunpack.c.l.b16 %v99
    %v228 = vunpack.c.l.b16 %v100
    %v229 = vunpack.c.l.b16 %v101
    %v230 = vunpack.c.l.b16 %v102
    %v231 = vunpack.c.l.b16 %v103
    %v232 = vpack.c.b16 %v217, %v216
    %v233 = vpack.c.b16 %v219, %v218
    %v234 = vpack.c.b16 %v221, %v220
    %v235 = vpack.c.b16 %v223, %v222
    %v236 = vpack.c.b16 %v225, %v224
    %v237 = vpack.c.b16 %v227, %v226
    %v238 = vpack.c.b16 %v229, %v228
    %v239 = vpack.c.b16 %v231, %v230
    %v272 = vunpack.c.l.b16 %v56
    %v273 = vunpack.c.h.b16 %v56
    %v274 = vunpack.c.l.b16 %v57
    %v275 = vunpack.c.h.b16 %v57
    %v276 = vunpack.c.l.b16 %v58
    %v277 = vunpack.c.h.b16 %v58
    %v278 = vunpack.c.l.b16 %v59
    %v279 = vunpack.c.h.b16 %v59
    %v280 = vunpack.c.l.b16 %v60
    %v281 = vunpack.c.h.b16 %v60
    %v282 = vunpack.c.l.b16 %v61
    %v283 = vunpack.c.h.b16 %v61
    %v284 = vunpack.c.l.b16 %v62
    %v285 = vunpack.c.h.b16 %v62
    %v286 = vunpack.c.l.b16 %v63
    %v287 = vunpack.c.h.b16 %v63
    %v288 = vunpack.c.l.b16 %v64
    %v289 = vunpack.c.h.b16 %v64
    %v290 = vunpack.c.l.b16 %v65
    %v291 = vunpack.c.h.b16 %v65
    %v292 = vunpack.c.l.b16 %v66
    %v293 = vunpack.c.h.b16 %v66
    %v294 = vunpack.c.l.b16 %v67
    %v295 = vunpack.c.h.b16 %v67
    %v296 = vunpack.c.l.b16 %v68
    %v297 = vunpack.c.h.b16 %v68
    %v298 = vunpack.c.l.b16 %v69
    %v299 = vunpack.c.h.b16 %v69
    %v300 = vunpack.c.l.b16 %v70
    %v301 = vunpack.c.h.b16 %v70
    %v302 = vunpack.c.l.b16 %v71
    %v303 = vunpack.c.h.b16 %v71
    %v304 = vunpack.c.l.b16 %v72
    %v305 = vunpack.c.h.b16 %v72
    %v306 = vunpack.c.l.b16 %v73
    %v307 = vunpack.c.h.b16 %v73
    %v308 = vunpack.c.l.b16 %v74
    %v309 = vunpack.c.h.b16 %v74
    %v310 = vunpack.c.l.b16 %v75
    %v311 = vunpack.c.h.b16 %v75
    %v312 = vunpack.c.l.b16 %v76
    %v313 = vunpack.c.h.b16 %v76
    %v314 = vunpack.c.l.b16 %v77
    %v315 = vunpack.c.h.b16 %v77
    %v316 = vunpack.c.l.b16 %v78
    %v317 = vunpack.c.h.b16 %v78
    %v318 = vunpack.c.l.b16 %v79
    %v319 = vunpack.c.h.b16 %v79
    %v320 = vunpack.c.l.b16 %v80
    %v321 = vunpack.c.h.b16 %v80
    %v322 = vunpack.c.l.b16 %v81
    %v323 = vunpack.c.h.b16 %v81
    %v324 = vunpack.c.l.b16 %v82
    %v325 = vunpack.c.h.b16 %v82
    %v326 = vunpack.c.l.b16 %v83
    %v327 = vunpack.c.h.b16 %v83
    %v328 = vunpack.c.l.b16 %v84
    %v329 = vunpack.c.h.b16 %v84
    %v330 = vunpack.c.l.b16 %v85
    %v331 = vunpack.c.h.b16 %v85
    %v332 = vunpack.c.l.b16 %v86
    %v333 = vunpack.c.h.b16 %v86
    %v334 = vunpack.c.l.b16 %v87
    %v335 = vunpack.c.h.b16 %v87
    %v336 = vpack.c.b16 %v280, %v272
    %v337 = vpack.c.b16 %v281, %v273
    %v338 = vpack.c.b16 %v282, %v274
    %v339 = vpack.c.b16 %v283, %v275
    %v340 = vpack.c.b16 %v284, %v276
    %v341 = vpack.c.b16 %v285, %v277
    %v342 = vpack.c.b16 %v286, %v278
    %v343 = vpack.c.b16 %v287, %v279
    %v344 = vpack.c.b16 %v296, %v288
    %v345 = vpack.c.b16 %v297, %v289
    %v346 = vpack.c.b16 %v298, %v290
    %v347 = vpack.c.b16 %v299, %v291
    %v348 = vpack.c.b16 %v300, %v292
    %v349 = vpack.c.b16 %v301, %v293
    %v350 = vpack.c.b16 %v302, %v294
    %v351 = vpack.c.b16 %v303, %v295
    %v352 = vpack.c.b16 %v312, %v304
    %v353 = vpack.c.b16 %v313, %v305
    %v354 = vpack.c.b16 %v314, %v306
    %v355 = vpack.c.b16 %v315, %v307
    %v356 = vpack.c.b16 %v316, %v308
    %v357 = vpack.c.b16 %v317, %v309
    %v358 = vpack.c.b16 %v318, %v310
    %v359 = vpack.c.b16 %v319, %v311
    %v360 = vpack.c.b16 %v328, %v320
    %v361 = vpack.c.b16 %v329, %v321
    %v362 = vpack.c.b16 %v330, %v322
    %v363 = vpack.c.b16 %v331, %v323
    %v364 = vpack.c.b16 %v332, %v324
    %v365 = vpack.c.b16 %v333, %v325
    %v366 = vpack.c.b16 %v334, %v326
    %v367 = vpack.c.b16 %v335, %v327
    %vm400 = vcmask 523264
    %v402 = vsel %vm400, %v232, 0
    %v405 = vsel %vm400, %v233, 0
    %v408 = vsel %vm400, %v234, 0
    %v411 = vsel %vm400, %v235, 0
    %v414 = vsel %vm400, %v236, 0
    %v417 = vsel %vm400, %v237, 0
    %v420 = vsel %vm400, %v238, 0
    %v423 = vsel %vm400, %v239, 0
    %425 = vmatpush.bf16.msra.mxu0 0
    %426 = vmatpush.bf16.msra.mxu0 0
    %427 = vmatpush.bf16.msra.mxu0 0
    %428 = vmatpush.bf16.msra.mxu0 0
    %429 = vmatpush.bf16.msra.mxu0 %v360
    %430 = vmatpush.bf16.msra.mxu0 %v352
    %431 = vmatpush.bf16.msra.mxu0 %v344
    %432 = vmatpush.bf16.msra.mxu0 %v336
    %433 = vmatmul.bf16.gmra.mxu0 %v402
    %v434 = vpop.f32.mrf.mxu0
    %v435 = vadd.f32 %v123, %v434
    %v436 = vpop.f32.mrf.mxu0
    %v437 = vadd.f32 %v128, %v436
    %438 = vmatmul.bf16.gmra.mxu0 %v405
    %v439 = vpop.f32.mrf.mxu0
    %v440 = vadd.f32 %v133, %v439
    %v441 = vpop.f32.mrf.mxu0
    %v442 = vadd.f32 %v138, %v441
    %443 = vmatmul.bf16.gmra.mxu0 %v408
    %v444 = vpop.f32.mrf.mxu0
    %v445 = vadd.f32 %v143, %v444
    %v446 = vpop.f32.mrf.mxu0
    %v447 = vadd.f32 %v148, %v446
    %448 = vmatmul.bf16.gmra.mxu0 %v411
    %v449 = vpop.f32.mrf.mxu0
    %v450 = vadd.f32 %v153, %v449
    %v451 = vpop.f32.mrf.mxu0
    %v452 = vadd.f32 %v158, %v451
    %453 = vmatmul.bf16.gmra.mxu0 %v414
    %v454 = vpop.f32.mrf.mxu0
    %v455 = vadd.f32 %v163, %v454
    %v456 = vpop.f32.mrf.mxu0
    %v457 = vadd.f32 %v168, %v456
    %458 = vmatmul.bf16.gmra.mxu0 %v417
    %v459 = vpop.f32.mrf.mxu0
    %v460 = vadd.f32 %v173, %v459
    %v461 = vpop.f32.mrf.mxu0
    %v462 = vadd.f32 %v178, %v461
    %463 = vmatmul.bf16.gmra.mxu0 %v420
    %v464 = vpop.f32.mrf.mxu0
    %v465 = vadd.f32 %v183, %v464
    %v466 = vpop.f32.mrf.mxu0
    %v467 = vadd.f32 %v188, %v466
    %468 = vmatmul.bf16.gmra.mxu0 %v423
    %v469 = vpop.f32.mrf.mxu0
    %v470 = vadd.f32 %v193, %v469
    %v471 = vpop.f32.mrf.mxu0
    %v472 = vadd.f32 %v198, %v471
    %473 = vdwg.mxu0
    %474 = vmatpush.bf16.msra.mxu0 0
    %475 = vmatpush.bf16.msra.mxu0 0
    %476 = vmatpush.bf16.msra.mxu0 0
    %477 = vmatpush.bf16.msra.mxu0 0
    %478 = vmatpush.bf16.msra.mxu0 %v361
    %479 = vmatpush.bf16.msra.mxu0 %v353
    %480 = vmatpush.bf16.msra.mxu0 %v345
    %481 = vmatpush.bf16.msra.mxu0 %v337
    %482 = vmatmul.bf16.gmra.mxu0 %v402
    %v483 = vpop.f32.mrf.mxu0
    %v484 = vadd.f32 %v123, %v483
    %v485 = vpop.f32.mrf.mxu0
    %v486 = vadd.f32 %v128, %v485
    %487 = vmatmul.bf16.gmra.mxu0 %v405
    %v488 = vpop.f32.mrf.mxu0
    %v489 = vadd.f32 %v133, %v488
    %v490 = vpop.f32.mrf.mxu0
    %v491 = vadd.f32 %v138, %v490
    %492 = vmatmul.bf16.gmra.mxu0 %v408
    %v493 = vpop.f32.mrf.mxu0
    %v494 = vadd.f32 %v143, %v493
    %v495 = vpop.f32.mrf.mxu0
    %v496 = vadd.f32 %v148, %v495
    %497 = vmatmul.bf16.gmra.mxu0 %v411
    %v498 = vpop.f32.mrf.mxu0
    %v499 = vadd.f32 %v153, %v498
    %v500 = vpop.f32.mrf.mxu0
    %v501 = vadd.f32 %v158, %v500
    %502 = vmatmul.bf16.gmra.mxu0 %v414
    %v503 = vpop.f32.mrf.mxu0
    %v504 = vadd.f32 %v163, %v503
    %v505 = vpop.f32.mrf.mxu0
    %v506 = vadd.f32 %v168, %v505
    %507 = vmatmul.bf16.gmra.mxu0 %v417
    %v508 = vpop.f32.mrf.mxu0
    %v509 = vadd.f32 %v173, %v508
    %v510 = vpop.f32.mrf.mxu0
    %v511 = vadd.f32 %v178, %v510
    %512 = vmatmul.bf16.gmra.mxu0 %v420
    %v513 = vpop.f32.mrf.mxu0
    %v514 = vadd.f32 %v183, %v513
    %v515 = vpop.f32.mrf.mxu0
    %v516 = vadd.f32 %v188, %v515
    %517 = vmatmul.bf16.gmra.mxu0 %v423
    %v518 = vpop.f32.mrf.mxu0
    %v519 = vadd.f32 %v193, %v518
    %v520 = vpop.f32.mrf.mxu0
    %v521 = vadd.f32 %v198, %v520
    %522 = vdwg.mxu0
    %523 = vmatpush.bf16.msra.mxu0 0
    %524 = vmatpush.bf16.msra.mxu0 0
    %525 = vmatpush.bf16.msra.mxu0 0
    %526 = vmatpush.bf16.msra.mxu0 0
    %527 = vmatpush.bf16.msra.mxu0 %v362
    %528 = vmatpush.bf16.msra.mxu0 %v354
    %529 = vmatpush.bf16.msra.mxu0 %v346
    %530 = vmatpush.bf16.msra.mxu0 %v338
    %531 = vmatmul.bf16.gmra.mxu0 %v402
    %v532 = vpop.f32.mrf.mxu0
    %v533 = vadd.f32 %v123, %v532
    %v534 = vpop.f32.mrf.mxu0
    %v535 = vadd.f32 %v128, %v534
    %536 = vmatmul.bf16.gmra.mxu0 %v405
    %v537 = vpop.f32.mrf.mxu0
    %v538 = vadd.f32 %v133, %v537
    %v539 = vpop.f32.mrf.mxu0
    %v540 = vadd.f32 %v138, %v539
    %541 = vmatmul.bf16.gmra.mxu0 %v408
    %v542 = vpop.f32.mrf.mxu0
    %v543 = vadd.f32 %v143, %v542
    %v544 = vpop.f32.mrf.mxu0
    %v545 = vadd.f32 %v148, %v544
    %546 = vmatmul.bf16.gmra.mxu0 %v411
    %v547 = vpop.f32.mrf.mxu0
    %v548 = vadd.f32 %v153, %v547
    %v549 = vpop.f32.mrf.mxu0
    %v550 = vadd.f32 %v158, %v549
    %551 = vmatmul.bf16.gmra.mxu0 %v414
    %v552 = vpop.f32.mrf.mxu0
    %v553 = vadd.f32 %v163, %v552
    %v554 = vpop.f32.mrf.mxu0
    %v555 = vadd.f32 %v168, %v554
    %556 = vmatmul.bf16.gmra.mxu0 %v417
    %v557 = vpop.f32.mrf.mxu0
    %v558 = vadd.f32 %v173, %v557
    %v559 = vpop.f32.mrf.mxu0
    %v560 = vadd.f32 %v178, %v559
    %561 = vmatmul.bf16.gmra.mxu0 %v420
    %v562 = vpop.f32.mrf.mxu0
    %v563 = vadd.f32 %v183, %v562
    %v564 = vpop.f32.mrf.mxu0
    %v565 = vadd.f32 %v188, %v564
    %566 = vmatmul.bf16.gmra.mxu0 %v423
    %v567 = vpop.f32.mrf.mxu0
    %v568 = vadd.f32 %v193, %v567
    %v569 = vpop.f32.mrf.mxu0
    %v570 = vadd.f32 %v198, %v569
    %571 = vdwg.mxu0
    %572 = vmatpush.bf16.msra.mxu0 0
    %573 = vmatpush.bf16.msra.mxu0 0
    %574 = vmatpush.bf16.msra.mxu0 0
    %575 = vmatpush.bf16.msra.mxu0 0
    %576 = vmatpush.bf16.msra.mxu0 %v363
    %577 = vmatpush.bf16.msra.mxu0 %v355
    %578 = vmatpush.bf16.msra.mxu0 %v347
    %579 = vmatpush.bf16.msra.mxu0 %v339
    %580 = vmatmul.bf16.gmra.mxu0 %v402
    %v581 = vpop.f32.mrf.mxu0
    %v582 = vadd.f32 %v123, %v581
    %v583 = vpop.f32.mrf.mxu0
    %v584 = vadd.f32 %v128, %v583
    %585 = vmatmul.bf16.gmra.mxu0 %v405
    %v586 = vpop.f32.mrf.mxu0
    %v587 = vadd.f32 %v133, %v586
    %v588 = vpop.f32.mrf.mxu0
    %v589 = vadd.f32 %v138, %v588
    %590 = vmatmul.bf16.gmra.mxu0 %v408
    %v591 = vpop.f32.mrf.mxu0
    %v592 = vadd.f32 %v143, %v591
    %v593 = vpop.f32.mrf.mxu0
    %v594 = vadd.f32 %v148, %v593
    %595 = vmatmul.bf16.gmra.mxu0 %v411
    %v596 = vpop.f32.mrf.mxu0
    %v597 = vadd.f32 %v153, %v596
    %v598 = vpop.f32.mrf.mxu0
    %v599 = vadd.f32 %v158, %v598
    %600 = vmatmul.bf16.gmra.mxu0 %v414
    %v601 = vpop.f32.mrf.mxu0
    %v602 = vadd.f32 %v163, %v601
    %v603 = vpop.f32.mrf.mxu0
    %v604 = vadd.f32 %v168, %v603
    %605 = vmatmul.bf16.gmra.mxu0 %v417
    %v606 = vpop.f32.mrf.mxu0
    %v607 = vadd.f32 %v173, %v606
    %v608 = vpop.f32.mrf.mxu0
    %v609 = vadd.f32 %v178, %v608
    %610 = vmatmul.bf16.gmra.mxu0 %v420
    %v611 = vpop.f32.mrf.mxu0
    %v612 = vadd.f32 %v183, %v611
    %v613 = vpop.f32.mrf.mxu0
    %v614 = vadd.f32 %v188, %v613
    %615 = vmatmul.bf16.gmra.mxu0 %v423
    %v616 = vpop.f32.mrf.mxu0
    %v617 = vadd.f32 %v193, %v616
    %v618 = vpop.f32.mrf.mxu0
    %v619 = vadd.f32 %v198, %v618
    %620 = vdwg.mxu0
    %621 = vmatpush.bf16.msra.mxu0 0
    %622 = vmatpush.bf16.msra.mxu0 0
    %623 = vmatpush.bf16.msra.mxu0 0
    %624 = vmatpush.bf16.msra.mxu0 0
    %625 = vmatpush.bf16.msra.mxu0 %v364
    %626 = vmatpush.bf16.msra.mxu0 %v356
    %627 = vmatpush.bf16.msra.mxu0 %v348
    %628 = vmatpush.bf16.msra.mxu0 %v340
    %629 = vmatmul.bf16.gmra.mxu0 %v402
    %v630 = vpop.f32.mrf.mxu0
    %v631 = vadd.f32 %v123, %v630
    %v632 = vpop.f32.mrf.mxu0
    %v633 = vadd.f32 %v128, %v632
    %634 = vmatmul.bf16.gmra.mxu0 %v405
    %v635 = vpop.f32.mrf.mxu0
    %v636 = vadd.f32 %v133, %v635
    %v637 = vpop.f32.mrf.mxu0
    %v638 = vadd.f32 %v138, %v637
    %639 = vmatmul.bf16.gmra.mxu0 %v408
    %v640 = vpop.f32.mrf.mxu0
    %v641 = vadd.f32 %v143, %v640
    %v642 = vpop.f32.mrf.mxu0
    %v643 = vadd.f32 %v148, %v642
    %644 = vmatmul.bf16.gmra.mxu0 %v411
    %v645 = vpop.f32.mrf.mxu0
    %v646 = vadd.f32 %v153, %v645
    %v647 = vpop.f32.mrf.mxu0
    %v648 = vadd.f32 %v158, %v647
    %649 = vmatmul.bf16.gmra.mxu0 %v414
    %v650 = vpop.f32.mrf.mxu0
    %v651 = vadd.f32 %v163, %v650
    %v652 = vpop.f32.mrf.mxu0
    %v653 = vadd.f32 %v168, %v652
    %654 = vmatmul.bf16.gmra.mxu0 %v417
    %v655 = vpop.f32.mrf.mxu0
    %v656 = vadd.f32 %v173, %v655
    %v657 = vpop.f32.mrf.mxu0
    %v658 = vadd.f32 %v178, %v657
    %659 = vmatmul.bf16.gmra.mxu0 %v420
    %v660 = vpop.f32.mrf.mxu0
    %v661 = vadd.f32 %v183, %v660
    %v662 = vpop.f32.mrf.mxu0
    %v663 = vadd.f32 %v188, %v662
    %664 = vmatmul.bf16.gmra.mxu0 %v423
    %v665 = vpop.f32.mrf.mxu0
    %v666 = vadd.f32 %v193, %v665
    %v667 = vpop.f32.mrf.mxu0
    %v668 = vadd.f32 %v198, %v667
    %669 = vdwg.mxu0
    %670 = vmatpush.bf16.msra.mxu0 0
    %671 = vmatpush.bf16.msra.mxu0 0
    %672 = vmatpush.bf16.msra.mxu0 0
    %673 = vmatpush.bf16.msra.mxu0 0
    %674 = vmatpush.bf16.msra.mxu0 %v365
    %675 = vmatpush.bf16.msra.mxu0 %v357
    %676 = vmatpush.bf16.msra.mxu0 %v349
    %677 = vmatpush.bf16.msra.mxu0 %v341
    %678 = vmatmul.bf16.gmra.mxu0 %v402
    %v679 = vpop.f32.mrf.mxu0
    %v680 = vadd.f32 %v123, %v679
    %v681 = vpop.f32.mrf.mxu0
    %v682 = vadd.f32 %v128, %v681
    %683 = vmatmul.bf16.gmra.mxu0 %v405
    %v684 = vpop.f32.mrf.mxu0
    %v685 = vadd.f32 %v133, %v684
    %v686 = vpop.f32.mrf.mxu0
    %v687 = vadd.f32 %v138, %v686
    %688 = vmatmul.bf16.gmra.mxu0 %v408
    %v689 = vpop.f32.mrf.mxu0
    %v690 = vadd.f32 %v143, %v689
    %v691 = vpop.f32.mrf.mxu0
    %v692 = vadd.f32 %v148, %v691
    %693 = vmatmul.bf16.gmra.mxu0 %v411
    %v694 = vpop.f32.mrf.mxu0
    %v695 = vadd.f32 %v153, %v694
    %v696 = vpop.f32.mrf.mxu0
    %v697 = vadd.f32 %v158, %v696
    %698 = vmatmul.bf16.gmra.mxu0 %v414
    %v699 = vpop.f32.mrf.mxu0
    %v700 = vadd.f32 %v163, %v699
    %v701 = vpop.f32.mrf.mxu0
    %v702 = vadd.f32 %v168, %v701
    %703 = vmatmul.bf16.gmra.mxu0 %v417
    %v704 = vpop.f32.mrf.mxu0
    %v705 = vadd.f32 %v173, %v704
    %v706 = vpop.f32.mrf.mxu0
    %v707 = vadd.f32 %v178, %v706
    %708 = vmatmul.bf16.gmra.mxu0 %v420
    %v709 = vpop.f32.mrf.mxu0
    %v710 = vadd.f32 %v183, %v709
    %v711 = vpop.f32.mrf.mxu0
    %v712 = vadd.f32 %v188, %v711
    %713 = vmatmul.bf16.gmra.mxu0 %v423
    %v714 = vpop.f32.mrf.mxu0
    %v715 = vadd.f32 %v193, %v714
    %v716 = vpop.f32.mrf.mxu0
    %v717 = vadd.f32 %v198, %v716
    %718 = vdwg.mxu0
    %719 = vmatpush.bf16.msra.mxu0 0
    %720 = vmatpush.bf16.msra.mxu0 0
    %721 = vmatpush.bf16.msra.mxu0 0
    %722 = vmatpush.bf16.msra.mxu0 0
    %723 = vmatpush.bf16.msra.mxu0 %v366
    %724 = vmatpush.bf16.msra.mxu0 %v358
    %725 = vmatpush.bf16.msra.mxu0 %v350
    %726 = vmatpush.bf16.msra.mxu0 %v342
    %727 = vmatmul.bf16.gmra.mxu0 %v402
    %v728 = vpop.f32.mrf.mxu0
    %v729 = vadd.f32 %v123, %v728
    %v730 = vpop.f32.mrf.mxu0
    %v731 = vadd.f32 %v128, %v730
    %732 = vmatmul.bf16.gmra.mxu0 %v405
    %v733 = vpop.f32.mrf.mxu0
    %v734 = vadd.f32 %v133, %v733
    %v735 = vpop.f32.mrf.mxu0
    %v736 = vadd.f32 %v138, %v735
    %737 = vmatmul.bf16.gmra.mxu0 %v408
    %v738 = vpop.f32.mrf.mxu0
    %v739 = vadd.f32 %v143, %v738
    %v740 = vpop.f32.mrf.mxu0
    %v741 = vadd.f32 %v148, %v740
    %742 = vmatmul.bf16.gmra.mxu0 %v411
    %v743 = vpop.f32.mrf.mxu0
    %v744 = vadd.f32 %v153, %v743
    %v745 = vpop.f32.mrf.mxu0
    %v746 = vadd.f32 %v158, %v745
    %747 = vmatmul.bf16.gmra.mxu0 %v414
    %v748 = vpop.f32.mrf.mxu0
    %v749 = vadd.f32 %v163, %v748
    %v750 = vpop.f32.mrf.mxu0
    %v751 = vadd.f32 %v168, %v750
    %752 = vmatmul.bf16.gmra.mxu0 %v417
    %v753 = vpop.f32.mrf.mxu0
    %v754 = vadd.f32 %v173, %v753
    %v755 = vpop.f32.mrf.mxu0
    %v756 = vadd.f32 %v178, %v755
    %757 = vmatmul.bf16.gmra.mxu0 %v420
    %v758 = vpop.f32.mrf.mxu0
    %v759 = vadd.f32 %v183, %v758
    %v760 = vpop.f32.mrf.mxu0
    %v761 = vadd.f32 %v188, %v760
    %762 = vmatmul.bf16.gmra.mxu0 %v423
    %v763 = vpop.f32.mrf.mxu0
    %v764 = vadd.f32 %v193, %v763
    %v765 = vpop.f32.mrf.mxu0
    %v766 = vadd.f32 %v198, %v765
    %767 = vdwg.mxu0
    %768 = vmatpush.bf16.msra.mxu0 0
    %769 = vmatpush.bf16.msra.mxu0 0
    %770 = vmatpush.bf16.msra.mxu0 0
    %771 = vmatpush.bf16.msra.mxu0 0
    %772 = vmatpush.bf16.msra.mxu0 %v367
    %773 = vmatpush.bf16.msra.mxu0 %v359
    %774 = vmatpush.bf16.msra.mxu0 %v351
    %775 = vmatpush.bf16.msra.mxu0 %v343
    %776 = vmatmul.bf16.gmra.mxu0 %v402
    %v777 = vpop.f32.mrf.mxu0
    %v778 = vadd.f32 %v123, %v777
    %v779 = vpop.f32.mrf.mxu0
    %v780 = vadd.f32 %v128, %v779
    %781 = vmatmul.bf16.gmra.mxu0 %v405
    %v782 = vpop.f32.mrf.mxu0
    %v783 = vadd.f32 %v133, %v782
    %v784 = vpop.f32.mrf.mxu0
    %v785 = vadd.f32 %v138, %v784
    %786 = vmatmul.bf16.gmra.mxu0 %v408
    %v787 = vpop.f32.mrf.mxu0
    %v788 = vadd.f32 %v143, %v787
    %v789 = vpop.f32.mrf.mxu0
    %v790 = vadd.f32 %v148, %v789
    %791 = vmatmul.bf16.gmra.mxu0 %v411
    %v792 = vpop.f32.mrf.mxu0
    %v793 = vadd.f32 %v153, %v792
    %v794 = vpop.f32.mrf.mxu0
    %v795 = vadd.f32 %v158, %v794
    %796 = vmatmul.bf16.gmra.mxu0 %v414
    %v797 = vpop.f32.mrf.mxu0
    %v798 = vadd.f32 %v163, %v797
    %v799 = vpop.f32.mrf.mxu0
    %v800 = vadd.f32 %v168, %v799
    %801 = vmatmul.bf16.gmra.mxu0 %v417
    %v802 = vpop.f32.mrf.mxu0
    %v803 = vadd.f32 %v173, %v802
    %v804 = vpop.f32.mrf.mxu0
    %v805 = vadd.f32 %v178, %v804
    %806 = vmatmul.bf16.gmra.mxu0 %v420
    %v807 = vpop.f32.mrf.mxu0
    %v808 = vadd.f32 %v183, %v807
    %v809 = vpop.f32.mrf.mxu0
    %v810 = vadd.f32 %v188, %v809
    %811 = vmatmul.bf16.gmra.mxu0 %v423
    %v812 = vpop.f32.mrf.mxu0
    %v813 = vadd.f32 %v193, %v812
    %v814 = vpop.f32.mrf.mxu0
    %v815 = vadd.f32 %v198, %v814
    %816 = vdwg.mxu0
    %v817 = vpack.c.bf16 %v484, %v435
    %v818 = vpack.c.bf16 %v582, %v533
    %v819 = vpack.c.bf16 %v680, %v631
    %v820 = vpack.c.bf16 %v778, %v729
    %v821 = vpack.c.bf16 %v486, %v437
    %v822 = vpack.c.bf16 %v584, %v535
    %v823 = vpack.c.bf16 %v682, %v633
    %v824 = vpack.c.bf16 %v780, %v731
    %v825 = vpack.c.bf16 %v489, %v440
    %v826 = vpack.c.bf16 %v587, %v538
    %v827 = vpack.c.bf16 %v685, %v636
    %v828 = vpack.c.bf16 %v783, %v734
    %v829 = vpack.c.bf16 %v491, %v442
    %v830 = vpack.c.bf16 %v589, %v540
    %v831 = vpack.c.bf16 %v687, %v638
    %v832 = vpack.c.bf16 %v785, %v736
    %v833 = vpack.c.bf16 %v494, %v445
    %v834 = vpack.c.bf16 %v592, %v543
    %v835 = vpack.c.bf16 %v690, %v641
    %v836 = vpack.c.bf16 %v788, %v739
    %v837 = vpack.c.bf16 %v496, %v447
    %v838 = vpack.c.bf16 %v594, %v545
    %v839 = vpack.c.bf16 %v692, %v643
    %v840 = vpack.c.bf16 %v790, %v741
    %v841 = vpack.c.bf16 %v499, %v450
    %v842 = vpack.c.bf16 %v597, %v548
    %v843 = vpack.c.bf16 %v695, %v646
    %v844 = vpack.c.bf16 %v793, %v744
    %v845 = vpack.c.bf16 %v501, %v452
    %v846 = vpack.c.bf16 %v599, %v550
    %v847 = vpack.c.bf16 %v697, %v648
    %v848 = vpack.c.bf16 %v795, %v746
    %v849 = vpack.c.bf16 %v504, %v455
    %v850 = vpack.c.bf16 %v602, %v553
    %v851 = vpack.c.bf16 %v700, %v651
    %v852 = vpack.c.bf16 %v798, %v749
    %v853 = vpack.c.bf16 %v506, %v457
    %v854 = vpack.c.bf16 %v604, %v555
    %v855 = vpack.c.bf16 %v702, %v653
    %v856 = vpack.c.bf16 %v800, %v751
    %v857 = vpack.c.bf16 %v509, %v460
    %v858 = vpack.c.bf16 %v607, %v558
    %v859 = vpack.c.bf16 %v705, %v656
    %v860 = vpack.c.bf16 %v803, %v754
    %v861 = vpack.c.bf16 %v511, %v462
    %v862 = vpack.c.bf16 %v609, %v560
    %v863 = vpack.c.bf16 %v707, %v658
    %v864 = vpack.c.bf16 %v805, %v756
    %v865 = vpack.c.bf16 %v514, %v465
    %v866 = vpack.c.bf16 %v612, %v563
    %v867 = vpack.c.bf16 %v710, %v661
    %v868 = vpack.c.bf16 %v808, %v759
    %v869 = vpack.c.bf16 %v516, %v467
    %v870 = vpack.c.bf16 %v614, %v565
    %v871 = vpack.c.bf16 %v712, %v663
    %v872 = vpack.c.bf16 %v810, %v761
    %v873 = vpack.c.bf16 %v519, %v470
    %v874 = vpack.c.bf16 %v617, %v568
    %v875 = vpack.c.bf16 %v715, %v666
    %v876 = vpack.c.bf16 %v813, %v764
    %v877 = vpack.c.bf16 %v521, %v472
    %v878 = vpack.c.bf16 %v619, %v570
    %v879 = vpack.c.bf16 %v717, %v668
    %v880 = vpack.c.bf16 %v815, %v766
    %v881 = vunpack.c.l.bf16 %v817
    %v882 = vunpack.c.h.bf16 %v817
    %v883 = vunpack.c.l.bf16 %v818
    %v884 = vunpack.c.h.bf16 %v818
    %v885 = vunpack.c.l.bf16 %v819
    %v886 = vunpack.c.h.bf16 %v819
    %v887 = vunpack.c.l.bf16 %v820
    %v888 = vunpack.c.h.bf16 %v820
    %v889 = vunpack.c.l.bf16 %v821
    %v890 = vunpack.c.h.bf16 %v821
    %v891 = vunpack.c.l.bf16 %v822
    %v892 = vunpack.c.h.bf16 %v822
    %v893 = vunpack.c.l.bf16 %v823
    %v894 = vunpack.c.h.bf16 %v823
    %v895 = vunpack.c.l.bf16 %v824
    %v896 = vunpack.c.h.bf16 %v824
    %v897 = vunpack.c.l.bf16 %v825
    %v898 = vunpack.c.h.bf16 %v825
    %v899 = vunpack.c.l.bf16 %v826
    %v900 = vunpack.c.h.bf16 %v826
    %v901 = vunpack.c.l.bf16 %v827
    %v902 = vunpack.c.h.bf16 %v827
    %v903 = vunpack.c.l.bf16 %v828
    %v904 = vunpack.c.h.bf16 %v828
    %v905 = vunpack.c.l.bf16 %v829
    %v906 = vunpack.c.h.bf16 %v829
    %v907 = vunpack.c.l.bf16 %v830
    %v908 = vunpack.c.h.bf16 %v830
    %v909 = vunpack.c.l.bf16 %v831
    %v910 = vunpack.c.h.bf16 %v831
    %v911 = vunpack.c.l.bf16 %v832
    %v912 = vunpack.c.h.bf16 %v832
    %v913 = vunpack.c.l.bf16 %v833
    %v914 = vunpack.c.h.bf16 %v833
    %v915 = vunpack.c.l.bf16 %v834
    %v916 = vunpack.c.h.bf16 %v834
    %v917 = vunpack.c.l.bf16 %v835
    %v918 = vunpack.c.h.bf16 %v835
    %v919 = vunpack.c.l.bf16 %v836
    %v920 = vunpack.c.h.bf16 %v836
    %v921 = vunpack.c.l.bf16 %v837
    %v922 = vunpack.c.h.bf16 %v837
    %v923 = vunpack.c.l.bf16 %v838
    %v924 = vunpack.c.h.bf16 %v838
    %v925 = vunpack.c.l.bf16 %v839
    %v926 = vunpack.c.h.bf16 %v839
    %v927 = vunpack.c.l.bf16 %v840
    %v928 = vunpack.c.h.bf16 %v840
    %v929 = vunpack.c.l.bf16 %v841
    %v930 = vunpack.c.h.bf16 %v841
    %v931 = vunpack.c.l.bf16 %v842
    %v932 = vunpack.c.h.bf16 %v842
    %v933 = vunpack.c.l.bf16 %v843
    %v934 = vunpack.c.h.bf16 %v843
    %v935 = vunpack.c.l.bf16 %v844
    %v936 = vunpack.c.h.bf16 %v844
    %v937 = vunpack.c.l.bf16 %v845
    %v938 = vunpack.c.h.bf16 %v845
    %v939 = vunpack.c.l.bf16 %v846
    %v940 = vunpack.c.h.bf16 %v846
    %v941 = vunpack.c.l.bf16 %v847
    %v942 = vunpack.c.h.bf16 %v847
    %v943 = vunpack.c.l.bf16 %v848
    %v944 = vunpack.c.h.bf16 %v848
    %v945 = vunpack.c.l.bf16 %v849
    %v946 = vunpack.c.h.bf16 %v849
    %v947 = vunpack.c.l.bf16 %v850
    %v948 = vunpack.c.h.bf16 %v850
    %v949 = vunpack.c.l.bf16 %v851
    %v950 = vunpack.c.h.bf16 %v851
    %v951 = vunpack.c.l.bf16 %v852
    %v952 = vunpack.c.h.bf16 %v852
    %v953 = vunpack.c.l.bf16 %v853
    %v954 = vunpack.c.h.bf16 %v853
    %v955 = vunpack.c.l.bf16 %v854
    %v956 = vunpack.c.h.bf16 %v854
    %v957 = vunpack.c.l.bf16 %v855
    %v958 = vunpack.c.h.bf16 %v855
    %v959 = vunpack.c.l.bf16 %v856
    %v960 = vunpack.c.h.bf16 %v856
    %v961 = vunpack.c.l.bf16 %v857
    %v962 = vunpack.c.h.bf16 %v857
    %v963 = vunpack.c.l.bf16 %v858
    %v964 = vunpack.c.h.bf16 %v858
    %v965 = vunpack.c.l.bf16 %v859
    %v966 = vunpack.c.h.bf16 %v859
    %v967 = vunpack.c.l.bf16 %v860
    %v968 = vunpack.c.h.bf16 %v860
    %v969 = vunpack.c.l.bf16 %v861
    %v970 = vunpack.c.h.bf16 %v861
    %v971 = vunpack.c.l.bf16 %v862
    %v972 = vunpack.c.h.bf16 %v862
    %v973 = vunpack.c.l.bf16 %v863
    %v974 = vunpack.c.h.bf16 %v863
    %v975 = vunpack.c.l.bf16 %v864
    %v976 = vunpack.c.h.bf16 %v864
    %v977 = vunpack.c.l.bf16 %v865
    %v978 = vunpack.c.h.bf16 %v865
    %v979 = vunpack.c.l.bf16 %v866
    %v980 = vunpack.c.h.bf16 %v866
    %v981 = vunpack.c.l.bf16 %v867
    %v982 = vunpack.c.h.bf16 %v867
    %v983 = vunpack.c.l.bf16 %v868
    %v984 = vunpack.c.h.bf16 %v868
    %v985 = vunpack.c.l.bf16 %v869
    %v986 = vunpack.c.h.bf16 %v869
    %v987 = vunpack.c.l.bf16 %v870
    %v988 = vunpack.c.h.bf16 %v870
    %v989 = vunpack.c.l.bf16 %v871
    %v990 = vunpack.c.h.bf16 %v871
    %v991 = vunpack.c.l.bf16 %v872
    %v992 = vunpack.c.h.bf16 %v872
    %v993 = vunpack.c.l.bf16 %v873
    %v994 = vunpack.c.h.bf16 %v873
    %v995 = vunpack.c.l.bf16 %v874
    %v996 = vunpack.c.h.bf16 %v874
    %v997 = vunpack.c.l.bf16 %v875
    %v998 = vunpack.c.h.bf16 %v875
    %v999 = vunpack.c.l.bf16 %v876
    %v1000 = vunpack.c.h.bf16 %v876
    %v1001 = vunpack.c.l.bf16 %v877
    %v1002 = vunpack.c.h.bf16 %v877
    %v1003 = vunpack.c.l.bf16 %v878
    %v1004 = vunpack.c.h.bf16 %v878
    %v1005 = vunpack.c.l.bf16 %v879
    %v1006 = vunpack.c.h.bf16 %v879
    %v1007 = vunpack.c.l.bf16 %v880
    %v1008 = vunpack.c.h.bf16 %v880
    %vm1009 = vcmp.gt.f32.partialorder %v881, 0.0
    %vm1010 = vcmp.gt.f32.partialorder %v882, 0.0
    %vm1011 = vcmp.gt.f32.partialorder %v883, 0.0
    %vm1012 = vcmp.gt.f32.partialorder %v884, 0.0
    %vm1013 = vcmp.gt.f32.partialorder %v885, 0.0
    %vm1014 = vcmp.gt.f32.partialorder %v886, 0.0
    %vm1015 = vcmp.gt.f32.partialorder %v887, 0.0
    %vm1016 = vcmp.gt.f32.partialorder %v888, 0.0
    %vm1017 = vcmp.gt.f32.partialorder %v889, 0.0
    %vm1018 = vcmp.gt.f32.partialorder %v890, 0.0
    %vm1019 = vcmp.gt.f32.partialorder %v891, 0.0
    %vm1020 = vcmp.gt.f32.partialorder %v892, 0.0
    %vm1021 = vcmp.gt.f32.partialorder %v893, 0.0
    %vm1022 = vcmp.gt.f32.partialorder %v894, 0.0
    %vm1023 = vcmp.gt.f32.partialorder %v895, 0.0
    %vm1024 = vcmp.gt.f32.partialorder %v896, 0.0
    %vm1025 = vcmp.gt.f32.partialorder %v897, 0.0
    %vm1026 = vcmp.gt.f32.partialorder %v898, 0.0
    %vm1027 = vcmp.gt.f32.partialorder %v899, 0.0
    %vm1028 = vcmp.gt.f32.partialorder %v900, 0.0
    %vm1029 = vcmp.gt.f32.partialorder %v901, 0.0
    %vm1030 = vcmp.gt.f32.partialorder %v902, 0.0
    %vm1031 = vcmp.gt.f32.partialorder %v903, 0.0
    %vm1032 = vcmp.gt.f32.partialorder %v904, 0.0
    %vm1033 = vcmp.gt.f32.partialorder %v905, 0.0
    %vm1034 = vcmp.gt.f32.partialorder %v906, 0.0
    %vm1035 = vcmp.gt.f32.partialorder %v907, 0.0
    %vm1036 = vcmp.gt.f32.partialorder %v908, 0.0
    %vm1037 = vcmp.gt.f32.partialorder %v909, 0.0
    %vm1038 = vcmp.gt.f32.partialorder %v910, 0.0
    %vm1039 = vcmp.gt.f32.partialorder %v911, 0.0
    %vm1040 = vcmp.gt.f32.partialorder %v912, 0.0
    %vm1041 = vcmp.gt.f32.partialorder %v913, 0.0
    %vm1042 = vcmp.gt.f32.partialorder %v914, 0.0
    %vm1043 = vcmp.gt.f32.partialorder %v915, 0.0
    %vm1044 = vcmp.gt.f32.partialorder %v916, 0.0
    %vm1045 = vcmp.gt.f32.partialorder %v917, 0.0
    %vm1046 = vcmp.gt.f32.partialorder %v918, 0.0
    %vm1047 = vcmp.gt.f32.partialorder %v919, 0.0
    %vm1048 = vcmp.gt.f32.partialorder %v920, 0.0
    %vm1049 = vcmp.gt.f32.partialorder %v921, 0.0
    %vm1050 = vcmp.gt.f32.partialorder %v922, 0.0
    %vm1051 = vcmp.gt.f32.partialorder %v923, 0.0
    %vm1052 = vcmp.gt.f32.partialorder %v924, 0.0
    %vm1053 = vcmp.gt.f32.partialorder %v925, 0.0
    %vm1054 = vcmp.gt.f32.partialorder %v926, 0.0
    %vm1055 = vcmp.gt.f32.partialorder %v927, 0.0
    %vm1056 = vcmp.gt.f32.partialorder %v928, 0.0
    %vm1057 = vcmp.gt.f32.partialorder %v929, 0.0
    %vm1058 = vcmp.gt.f32.partialorder %v930, 0.0
    %vm1059 = vcmp.gt.f32.partialorder %v931, 0.0
    %vm1060 = vcmp.gt.f32.partialorder %v932, 0.0
    %vm1061 = vcmp.gt.f32.partialorder %v933, 0.0
    %vm1062 = vcmp.gt.f32.partialorder %v934, 0.0
    %vm1063 = vcmp.gt.f32.partialorder %v935, 0.0
    %vm1064 = vcmp.gt.f32.partialorder %v936, 0.0
    %vm1065 = vcmp.gt.f32.partialorder %v937, 0.0
    %vm1066 = vcmp.gt.f32.partialorder %v938, 0.0
    %vm1067 = vcmp.gt.f32.partialorder %v939, 0.0
    %vm1068 = vcmp.gt.f32.partialorder %v940, 0.0
    %vm1069 = vcmp.gt.f32.partialorder %v941, 0.0
    %vm1070 = vcmp.gt.f32.partialorder %v942, 0.0
    %vm1071 = vcmp.gt.f32.partialorder %v943, 0.0
    %vm1072 = vcmp.gt.f32.partialorder %v944, 0.0
    %vm1073 = vcmp.gt.f32.partialorder %v945, 0.0
    %vm1074 = vcmp.gt.f32.partialorder %v946, 0.0
    %vm1075 = vcmp.gt.f32.partialorder %v947, 0.0
    %vm1076 = vcmp.gt.f32.partialorder %v948, 0.0
    %vm1077 = vcmp.gt.f32.partialorder %v949, 0.0
    %vm1078 = vcmp.gt.f32.partialorder %v950, 0.0
    %vm1079 = vcmp.gt.f32.partialorder %v951, 0.0
    %vm1080 = vcmp.gt.f32.partialorder %v952, 0.0
    %vm1081 = vcmp.gt.f32.partialorder %v953, 0.0
    %vm1082 = vcmp.gt.f32.partialorder %v954, 0.0
    %vm1083 = vcmp.gt.f32.partialorder %v955, 0.0
    %vm1084 = vcmp.gt.f32.partialorder %v956, 0.0
    %vm1085 = vcmp.gt.f32.partialorder %v957, 0.0
    %vm1086 = vcmp.gt.f32.partialorder %v958, 0.0
    %vm1087 = vcmp.gt.f32.partialorder %v959, 0.0
    %vm1088 = vcmp.gt.f32.partialorder %v960, 0.0
    %vm1089 = vcmp.gt.f32.partialorder %v961, 0.0
    %vm1090 = vcmp.gt.f32.partialorder %v962, 0.0
    %vm1091 = vcmp.gt.f32.partialorder %v963, 0.0
    %vm1092 = vcmp.gt.f32.partialorder %v964, 0.0
    %vm1093 = vcmp.gt.f32.partialorder %v965, 0.0
    %vm1094 = vcmp.gt.f32.partialorder %v966, 0.0
    %vm1095 = vcmp.gt.f32.partialorder %v967, 0.0
    %vm1096 = vcmp.gt.f32.partialorder %v968, 0.0
    %vm1097 = vcmp.gt.f32.partialorder %v969, 0.0
    %vm1098 = vcmp.gt.f32.partialorder %v970, 0.0
    %vm1099 = vcmp.gt.f32.partialorder %v971, 0.0
    %vm1100 = vcmp.gt.f32.partialorder %v972, 0.0
    %vm1101 = vcmp.gt.f32.partialorder %v973, 0.0
    %vm1102 = vcmp.gt.f32.partialorder %v974, 0.0
    %vm1103 = vcmp.gt.f32.partialorder %v975, 0.0
    %vm1104 = vcmp.gt.f32.partialorder %v976, 0.0
    %vm1105 = vcmp.gt.f32.partialorder %v977, 0.0
    %vm1106 = vcmp.gt.f32.partialorder %v978, 0.0
    %vm1107 = vcmp.gt.f32.partialorder %v979, 0.0
    %vm1108 = vcmp.gt.f32.partialorder %v980, 0.0
    %vm1109 = vcmp.gt.f32.partialorder %v981, 0.0
    %vm1110 = vcmp.gt.f32.partialorder %v982, 0.0
    %vm1111 = vcmp.gt.f32.partialorder %v983, 0.0
    %vm1112 = vcmp.gt.f32.partialorder %v984, 0.0
    %vm1113 = vcmp.gt.f32.partialorder %v985, 0.0
    %vm1114 = vcmp.gt.f32.partialorder %v986, 0.0
    %vm1115 = vcmp.gt.f32.partialorder %v987, 0.0
    %vm1116 = vcmp.gt.f32.partialorder %v988, 0.0
    %vm1117 = vcmp.gt.f32.partialorder %v989, 0.0
    %vm1118 = vcmp.gt.f32.partialorder %v990, 0.0
    %vm1119 = vcmp.gt.f32.partialorder %v991, 0.0
    %vm1120 = vcmp.gt.f32.partialorder %v992, 0.0
    %vm1121 = vcmp.gt.f32.partialorder %v993, 0.0
    %vm1122 = vcmp.gt.f32.partialorder %v994, 0.0
    %vm1123 = vcmp.gt.f32.partialorder %v995, 0.0
    %vm1124 = vcmp.gt.f32.partialorder %v996, 0.0
    %vm1125 = vcmp.gt.f32.partialorder %v997, 0.0
    %vm1126 = vcmp.gt.f32.partialorder %v998, 0.0
    %vm1127 = vcmp.gt.f32.partialorder %v999, 0.0
    %vm1128 = vcmp.gt.f32.partialorder %v1000, 0.0
    %vm1129 = vcmp.gt.f32.partialorder %v1001, 0.0
    %vm1130 = vcmp.gt.f32.partialorder %v1002, 0.0
    %vm1131 = vcmp.gt.f32.partialorder %v1003, 0.0
    %vm1132 = vcmp.gt.f32.partialorder %v1004, 0.0
    %vm1133 = vcmp.gt.f32.partialorder %v1005, 0.0
    %vm1134 = vcmp.gt.f32.partialorder %v1006, 0.0
    %vm1135 = vcmp.gt.f32.partialorder %v1007, 0.0
    %vm1136 = vcmp.gt.f32.partialorder %v1008, 0.0
    %v1137 = vmin.f32 %v881, 0.0
    %v1138 = vmin.f32 %v882, 0.0
    %v1139 = vmin.f32 %v883, 0.0
    %v1140 = vmin.f32 %v884, 0.0
    %v1141 = vmin.f32 %v885, 0.0
    %v1142 = vmin.f32 %v886, 0.0
    %v1143 = vmin.f32 %v887, 0.0
    %v1144 = vmin.f32 %v888, 0.0
    %v1145 = vmin.f32 %v889, 0.0
    %v1146 = vmin.f32 %v890, 0.0
    %v1147 = vmin.f32 %v891, 0.0
    %v1148 = vmin.f32 %v892, 0.0
    %v1149 = vmin.f32 %v893, 0.0
    %v1150 = vmin.f32 %v894, 0.0
    %v1151 = vmin.f32 %v895, 0.0
    %v1152 = vmin.f32 %v896, 0.0
    %v1153 = vmin.f32 %v897, 0.0
    %v1154 = vmin.f32 %v898, 0.0
    %v1155 = vmin.f32 %v899, 0.0
    %v1156 = vmin.f32 %v900, 0.0
    %v1157 = vmin.f32 %v901, 0.0
    %v1158 = vmin.f32 %v902, 0.0
    %v1159 = vmin.f32 %v903, 0.0
    %v1160 = vmin.f32 %v904, 0.0
    %v1161 = vmin.f32 %v905, 0.0
    %v1162 = vmin.f32 %v906, 0.0
    %v1163 = vmin.f32 %v907, 0.0
    %v1164 = vmin.f32 %v908, 0.0
    %v1165 = vmin.f32 %v909, 0.0
    %v1166 = vmin.f32 %v910, 0.0
    %v1167 = vmin.f32 %v911, 0.0
    %v1168 = vmin.f32 %v912, 0.0
    %v1169 = vmin.f32 %v913, 0.0
    %v1170 = vmin.f32 %v914, 0.0
    %v1171 = vmin.f32 %v915, 0.0
    %v1172 = vmin.f32 %v916, 0.0
    %v1173 = vmin.f32 %v917, 0.0
    %v1174 = vmin.f32 %v918, 0.0
    %v1175 = vmin.f32 %v919, 0.0
    %v1176 = vmin.f32 %v920, 0.0
    %v1177 = vmin.f32 %v921, 0.0
    %v1178 = vmin.f32 %v922, 0.0
    %v1179 = vmin.f32 %v923, 0.0
    %v1180 = vmin.f32 %v924, 0.0
    %v1181 = vmin.f32 %v925, 0.0
    %v1182 = vmin.f32 %v926, 0.0
    %v1183 = vmin.f32 %v927, 0.0
    %v1184 = vmin.f32 %v928, 0.0
    %v1185 = vmin.f32 %v929, 0.0
    %v1186 = vmin.f32 %v930, 0.0
    %v1187 = vmin.f32 %v931, 0.0
    %v1188 = vmin.f32 %v932, 0.0
    %v1189 = vmin.f32 %v933, 0.0
    %v1190 = vmin.f32 %v934, 0.0
    %v1191 = vmin.f32 %v935, 0.0
    %v1192 = vmin.f32 %v936, 0.0
    %v1193 = vmin.f32 %v937, 0.0
    %v1194 = vmin.f32 %v938, 0.0
    %v1195 = vmin.f32 %v939, 0.0
    %v1196 = vmin.f32 %v940, 0.0
    %v1197 = vmin.f32 %v941, 0.0
    %v1198 = vmin.f32 %v942, 0.0
    %v1199 = vmin.f32 %v943, 0.0
    %v1200 = vmin.f32 %v944, 0.0
    %v1201 = vmin.f32 %v945, 0.0
    %v1202 = vmin.f32 %v946, 0.0
    %v1203 = vmin.f32 %v947, 0.0
    %v1204 = vmin.f32 %v948, 0.0
    %v1205 = vmin.f32 %v949, 0.0
    %v1206 = vmin.f32 %v950, 0.0
    %v1207 = vmin.f32 %v951, 0.0
    %v1208 = vmin.f32 %v952, 0.0
    %v1209 = vmin.f32 %v953, 0.0
    %v1210 = vmin.f32 %v954, 0.0
    %v1211 = vmin.f32 %v955, 0.0
    %v1212 = vmin.f32 %v956, 0.0
    %v1213 = vmin.f32 %v957, 0.0
    %v1214 = vmin.f32 %v958, 0.0
    %v1215 = vmin.f32 %v959, 0.0
    %v1216 = vmin.f32 %v960, 0.0
    %v1217 = vmin.f32 %v961, 0.0
    %v1218 = vmin.f32 %v962, 0.0
    %v1219 = vmin.f32 %v963, 0.0
    %v1220 = vmin.f32 %v964, 0.0
    %v1221 = vmin.f32 %v965, 0.0
    %v1222 = vmin.f32 %v966, 0.0
    %v1223 = vmin.f32 %v967, 0.0
    %v1224 = vmin.f32 %v968, 0.0
    %v1225 = vmin.f32 %v969, 0.0
    %v1226 = vmin.f32 %v970, 0.0
    %v1227 = vmin.f32 %v971, 0.0
    %v1228 = vmin.f32 %v972, 0.0
    %v1229 = vmin.f32 %v973, 0.0
    %v1230 = vmin.f32 %v974, 0.0
    %v1231 = vmin.f32 %v975, 0.0
    %v1232 = vmin.f32 %v976, 0.0
    %v1233 = vmin.f32 %v977, 0.0
    %v1234 = vmin.f32 %v978, 0.0
    %v1235 = vmin.f32 %v979, 0.0
    %v1236 = vmin.f32 %v980, 0.0
    %v1237 = vmin.f32 %v981, 0.0
    %v1238 = vmin.f32 %v982, 0.0
    %v1239 = vmin.f32 %v983, 0.0
    %v1240 = vmin.f32 %v984, 0.0
    %v1241 = vmin.f32 %v985, 0.0
    %v1242 = vmin.f32 %v986, 0.0
    %v1243 = vmin.f32 %v987, 0.0
    %v1244 = vmin.f32 %v988, 0.0
    %v1245 = vmin.f32 %v989, 0.0
    %v1246 = vmin.f32 %v990, 0.0
    %v1247 = vmin.f32 %v991, 0.0
    %v1248 = vmin.f32 %v992, 0.0
    %v1249 = vmin.f32 %v993, 0.0
    %v1250 = vmin.f32 %v994, 0.0
    %v1251 = vmin.f32 %v995, 0.0
    %v1252 = vmin.f32 %v996, 0.0
    %v1253 = vmin.f32 %v997, 0.0
    %v1254 = vmin.f32 %v998, 0.0
    %v1255 = vmin.f32 %v999, 0.0
    %v1256 = vmin.f32 %v1000, 0.0
    %v1257 = vmin.f32 %v1001, 0.0
    %v1258 = vmin.f32 %v1002, 0.0
    %v1259 = vmin.f32 %v1003, 0.0
    %v1260 = vmin.f32 %v1004, 0.0
    %v1261 = vmin.f32 %v1005, 0.0
    %v1262 = vmin.f32 %v1006, 0.0
    %v1263 = vmin.f32 %v1007, 0.0
    %v1264 = vmin.f32 %v1008, 0.0
    %v1265 = vpack.c.bf16 %v1138, %v1137
    %v1266 = vpack.c.bf16 %v1140, %v1139
    %v1267 = vpack.c.bf16 %v1142, %v1141
    %v1268 = vpack.c.bf16 %v1144, %v1143
    %v1269 = vpack.c.bf16 %v1146, %v1145
    %v1270 = vpack.c.bf16 %v1148, %v1147
    %v1271 = vpack.c.bf16 %v1150, %v1149
    %v1272 = vpack.c.bf16 %v1152, %v1151
    %v1273 = vpack.c.bf16 %v1154, %v1153
    %v1274 = vpack.c.bf16 %v1156, %v1155
    %v1275 = vpack.c.bf16 %v1158, %v1157
    %v1276 = vpack.c.bf16 %v1160, %v1159
    %v1277 = vpack.c.bf16 %v1162, %v1161
    %v1278 = vpack.c.bf16 %v1164, %v1163
    %v1279 = vpack.c.bf16 %v1166, %v1165
    %v1280 = vpack.c.bf16 %v1168, %v1167
    %v1281 = vpack.c.bf16 %v1170, %v1169
    %v1282 = vpack.c.bf16 %v1172, %v1171
    %v1283 = vpack.c.bf16 %v1174, %v1173
    %v1284 = vpack.c.bf16 %v1176, %v1175
    %v1285 = vpack.c.bf16 %v1178, %v1177
    %v1286 = vpack.c.bf16 %v1180, %v1179
    %v1287 = vpack.c.bf16 %v1182, %v1181
    %v1288 = vpack.c.bf16 %v1184, %v1183
    %v1289 = vpack.c.bf16 %v1186, %v1185
    %v1290 = vpack.c.bf16 %v1188, %v1187
    %v1291 = vpack.c.bf16 %v1190, %v1189
    %v1292 = vpack.c.bf16 %v1192, %v1191
    %v1293 = vpack.c.bf16 %v1194, %v1193
    %v1294 = vpack.c.bf16 %v1196, %v1195
    %v1295 = vpack.c.bf16 %v1198, %v1197
    %v1296 = vpack.c.bf16 %v1200, %v1199
    %v1297 = vpack.c.bf16 %v1202, %v1201
    %v1298 = vpack.c.bf16 %v1204, %v1203
    %v1299 = vpack.c.bf16 %v1206, %v1205
    %v1300 = vpack.c.bf16 %v1208, %v1207
    %v1301 = vpack.c.bf16 %v1210, %v1209
    %v1302 = vpack.c.bf16 %v1212, %v1211
    %v1303 = vpack.c.bf16 %v1214, %v1213
    %v1304 = vpack.c.bf16 %v1216, %v1215
    %v1305 = vpack.c.bf16 %v1218, %v1217
    %v1306 = vpack.c.bf16 %v1220, %v1219
    %v1307 = vpack.c.bf16 %v1222, %v1221
    %v1308 = vpack.c.bf16 %v1224, %v1223
    %v1309 = vpack.c.bf16 %v1226, %v1225
    %v1310 = vpack.c.bf16 %v1228, %v1227
    %v1311 = vpack.c.bf16 %v1230, %v1229
    %v1312 = vpack.c.bf16 %v1232, %v1231
    %v1313 = vpack.c.bf16 %v1234, %v1233
    %v1314 = vpack.c.bf16 %v1236, %v1235
    %v1315 = vpack.c.bf16 %v1238, %v1237
    %v1316 = vpack.c.bf16 %v1240, %v1239
    %v1317 = vpack.c.bf16 %v1242, %v1241
    %v1318 = vpack.c.bf16 %v1244, %v1243
    %v1319 = vpack.c.bf16 %v1246, %v1245
    %v1320 = vpack.c.bf16 %v1248, %v1247
    %v1321 = vpack.c.bf16 %v1250, %v1249
    %v1322 = vpack.c.bf16 %v1252, %v1251
    %v1323 = vpack.c.bf16 %v1254, %v1253
    %v1324 = vpack.c.bf16 %v1256, %v1255
    %v1325 = vpack.c.bf16 %v1258, %v1257
    %v1326 = vpack.c.bf16 %v1260, %v1259
    %v1327 = vpack.c.bf16 %v1262, %v1261
    %v1328 = vpack.c.bf16 %v1264, %v1263
    %v1329 = vunpack.c.l.bf16 %v1265
    %v1330 = vunpack.c.h.bf16 %v1265
    %v1331 = vunpack.c.l.bf16 %v1266
    %v1332 = vunpack.c.h.bf16 %v1266
    %v1333 = vunpack.c.l.bf16 %v1267
    %v1334 = vunpack.c.h.bf16 %v1267
    %v1335 = vunpack.c.l.bf16 %v1268
    %v1336 = vunpack.c.h.bf16 %v1268
    %v1337 = vunpack.c.l.bf16 %v1269
    %v1338 = vunpack.c.h.bf16 %v1269
    %v1339 = vunpack.c.l.bf16 %v1270
    %v1340 = vunpack.c.h.bf16 %v1270
    %v1341 = vunpack.c.l.bf16 %v1271
    %v1342 = vunpack.c.h.bf16 %v1271
    %v1343 = vunpack.c.l.bf16 %v1272
    %v1344 = vunpack.c.h.bf16 %v1272
    %v1345 = vunpack.c.l.bf16 %v1273
    %v1346 = vunpack.c.h.bf16 %v1273
    %v1347 = vunpack.c.l.bf16 %v1274
    %v1348 = vunpack.c.h.bf16 %v1274
    %v1349 = vunpack.c.l.bf16 %v1275
    %v1350 = vunpack.c.h.bf16 %v1275
    %v1351 = vunpack.c.l.bf16 %v1276
    %v1352 = vunpack.c.h.bf16 %v1276
    %v1353 = vunpack.c.l.bf16 %v1277
    %v1354 = vunpack.c.h.bf16 %v1277
    %v1355 = vunpack.c.l.bf16 %v1278
    %v1356 = vunpack.c.h.bf16 %v1278
    %v1357 = vunpack.c.l.bf16 %v1279
    %v1358 = vunpack.c.h.bf16 %v1279
    %v1359 = vunpack.c.l.bf16 %v1280
    %v1360 = vunpack.c.h.bf16 %v1280
    %v1361 = vunpack.c.l.bf16 %v1281
    %v1362 = vunpack.c.h.bf16 %v1281
    %v1363 = vunpack.c.l.bf16 %v1282
    %v1364 = vunpack.c.h.bf16 %v1282
    %v1365 = vunpack.c.l.bf16 %v1283
    %v1366 = vunpack.c.h.bf16 %v1283
    %v1367 = vunpack.c.l.bf16 %v1284
    %v1368 = vunpack.c.h.bf16 %v1284
    %v1369 = vunpack.c.l.bf16 %v1285
    %v1370 = vunpack.c.h.bf16 %v1285
    %v1371 = vunpack.c.l.bf16 %v1286
    %v1372 = vunpack.c.h.bf16 %v1286
    %v1373 = vunpack.c.l.bf16 %v1287
    %v1374 = vunpack.c.h.bf16 %v1287
    %v1375 = vunpack.c.l.bf16 %v1288
    %v1376 = vunpack.c.h.bf16 %v1288
    %v1377 = vunpack.c.l.bf16 %v1289
    %v1378 = vunpack.c.h.bf16 %v1289
    %v1379 = vunpack.c.l.bf16 %v1290
    %v1380 = vunpack.c.h.bf16 %v1290
    %v1381 = vunpack.c.l.bf16 %v1291
    %v1382 = vunpack.c.h.bf16 %v1291
    %v1383 = vunpack.c.l.bf16 %v1292
    %v1384 = vunpack.c.h.bf16 %v1292
    %v1385 = vunpack.c.l.bf16 %v1293
    %v1386 = vunpack.c.h.bf16 %v1293
    %v1387 = vunpack.c.l.bf16 %v1294
    %v1388 = vunpack.c.h.bf16 %v1294
    %v1389 = vunpack.c.l.bf16 %v1295
    %v1390 = vunpack.c.h.bf16 %v1295
    %v1391 = vunpack.c.l.bf16 %v1296
    %v1392 = vunpack.c.h.bf16 %v1296
    %v1393 = vunpack.c.l.bf16 %v1297
    %v1394 = vunpack.c.h.bf16 %v1297
    %v1395 = vunpack.c.l.bf16 %v1298
    %v1396 = vunpack.c.h.bf16 %v1298
    %v1397 = vunpack.c.l.bf16 %v1299
    %v1398 = vunpack.c.h.bf16 %v1299
    %v1399 = vunpack.c.l.bf16 %v1300
    %v1400 = vunpack.c.h.bf16 %v1300
    %v1401 = vunpack.c.l.bf16 %v1301
    %v1402 = vunpack.c.h.bf16 %v1301
    %v1403 = vunpack.c.l.bf16 %v1302
    %v1404 = vunpack.c.h.bf16 %v1302
    %v1405 = vunpack.c.l.bf16 %v1303
    %v1406 = vunpack.c.h.bf16 %v1303
    %v1407 = vunpack.c.l.bf16 %v1304
    %v1408 = vunpack.c.h.bf16 %v1304
    %v1409 = vunpack.c.l.bf16 %v1305
    %v1410 = vunpack.c.h.bf16 %v1305
    %v1411 = vunpack.c.l.bf16 %v1306
    %v1412 = vunpack.c.h.bf16 %v1306
    %v1413 = vunpack.c.l.bf16 %v1307
    %v1414 = vunpack.c.h.bf16 %v1307
    %v1415 = vunpack.c.l.bf16 %v1308
    %v1416 = vunpack.c.h.bf16 %v1308
    %v1417 = vunpack.c.l.bf16 %v1309
    %v1418 = vunpack.c.h.bf16 %v1309
    %v1419 = vunpack.c.l.bf16 %v1310
    %v1420 = vunpack.c.h.bf16 %v1310
    %v1421 = vunpack.c.l.bf16 %v1311
    %v1422 = vunpack.c.h.bf16 %v1311
    %v1423 = vunpack.c.l.bf16 %v1312
    %v1424 = vunpack.c.h.bf16 %v1312
    %v1425 = vunpack.c.l.bf16 %v1313
    %v1426 = vunpack.c.h.bf16 %v1313
    %v1427 = vunpack.c.l.bf16 %v1314
    %v1428 = vunpack.c.h.bf16 %v1314
    %v1429 = vunpack.c.l.bf16 %v1315
    %v1430 = vunpack.c.h.bf16 %v1315
    %v1431 = vunpack.c.l.bf16 %v1316
    %v1432 = vunpack.c.h.bf16 %v1316
    %v1433 = vunpack.c.l.bf16 %v1317
    %v1434 = vunpack.c.h.bf16 %v1317
    %v1435 = vunpack.c.l.bf16 %v1318
    %v1436 = vunpack.c.h.bf16 %v1318
    %v1437 = vunpack.c.l.bf16 %v1319
    %v1438 = vunpack.c.h.bf16 %v1319
    %v1439 = vunpack.c.l.bf16 %v1320
    %v1440 = vunpack.c.h.bf16 %v1320
    %v1441 = vunpack.c.l.bf16 %v1321
    %v1442 = vunpack.c.h.bf16 %v1321
    %v1443 = vunpack.c.l.bf16 %v1322
    %v1444 = vunpack.c.h.bf16 %v1322
    %v1445 = vunpack.c.l.bf16 %v1323
    %v1446 = vunpack.c.h.bf16 %v1323
    %v1447 = vunpack.c.l.bf16 %v1324
    %v1448 = vunpack.c.h.bf16 %v1324
    %v1449 = vunpack.c.l.bf16 %v1325
    %v1450 = vunpack.c.h.bf16 %v1325
    %v1451 = vunpack.c.l.bf16 %v1326
    %v1452 = vunpack.c.h.bf16 %v1326
    %v1453 = vunpack.c.l.bf16 %v1327
    %v1454 = vunpack.c.h.bf16 %v1327
    %v1455 = vunpack.c.l.bf16 %v1328
    %v1456 = vunpack.c.h.bf16 %v1328
    %v1457 = vmul.f32 %v1329, 1.442695
    %v1458 = vpow.pop %v1457
    %v1459 = vmul.f32 %v1330, 1.442695
    %v1460 = vpow.pop %v1459
    %v1461 = vmul.f32 %v1331, 1.442695
    %v1462 = vpow.pop %v1461
    %v1463 = vmul.f32 %v1332, 1.442695
    %v1464 = vpow.pop %v1463
    %v1465 = vmul.f32 %v1333, 1.442695
    %v1466 = vpow.pop %v1465
    %v1467 = vmul.f32 %v1334, 1.442695
    %v1468 = vpow.pop %v1467
    %v1469 = vmul.f32 %v1335, 1.442695
    %v1470 = vpow.pop %v1469
    %v1471 = vmul.f32 %v1336, 1.442695
    %v1472 = vpow.pop %v1471
    %v1473 = vmul.f32 %v1337, 1.442695
    %v1474 = vpow.pop %v1473
    %v1475 = vmul.f32 %v1338, 1.442695
    %v1476 = vpow.pop %v1475
    %v1477 = vmul.f32 %v1339, 1.442695
    %v1478 = vpow.pop %v1477
    %v1479 = vmul.f32 %v1340, 1.442695
    %v1480 = vpow.pop %v1479
    %v1481 = vmul.f32 %v1341, 1.442695
    %v1482 = vpow.pop %v1481
    %v1483 = vmul.f32 %v1342, 1.442695
    %v1484 = vpow.pop %v1483
    %v1485 = vmul.f32 %v1343, 1.442695
    %v1486 = vpow.pop %v1485
    %v1487 = vmul.f32 %v1344, 1.442695
    %v1488 = vpow.pop %v1487
    %v1489 = vmul.f32 %v1345, 1.442695
    %v1490 = vpow.pop %v1489
    %v1491 = vmul.f32 %v1346, 1.442695
    %v1492 = vpow.pop %v1491
    %v1493 = vmul.f32 %v1347, 1.442695
    %v1494 = vpow.pop %v1493
    %v1495 = vmul.f32 %v1348, 1.442695
    %v1496 = vpow.pop %v1495
    %v1497 = vmul.f32 %v1349, 1.442695
    %v1498 = vpow.pop %v1497
    %v1499 = vmul.f32 %v1350, 1.442695
    %v1500 = vpow.pop %v1499
    %v1501 = vmul.f32 %v1351, 1.442695
    %v1502 = vpow.pop %v1501
    %v1503 = vmul.f32 %v1352, 1.442695
    %v1504 = vpow.pop %v1503
    %v1505 = vmul.f32 %v1353, 1.442695
    %v1506 = vpow.pop %v1505
    %v1507 = vmul.f32 %v1354, 1.442695
    %v1508 = vpow.pop %v1507
    %v1509 = vmul.f32 %v1355, 1.442695
    %v1510 = vpow.pop %v1509
    %v1511 = vmul.f32 %v1356, 1.442695
    %v1512 = vpow.pop %v1511
    %v1513 = vmul.f32 %v1357, 1.442695
    %v1514 = vpow.pop %v1513
    %v1515 = vmul.f32 %v1358, 1.442695
    %v1516 = vpow.pop %v1515
    %v1517 = vmul.f32 %v1359, 1.442695
    %v1518 = vpow.pop %v1517
    %v1519 = vmul.f32 %v1360, 1.442695
    %v1520 = vpow.pop %v1519
    %v1521 = vmul.f32 %v1361, 1.442695
    %v1522 = vpow.pop %v1521
    %v1523 = vmul.f32 %v1362, 1.442695
    %v1524 = vpow.pop %v1523
    %v1525 = vmul.f32 %v1363, 1.442695
    %v1526 = vpow.pop %v1525
    %v1527 = vmul.f32 %v1364, 1.442695
    %v1528 = vpow.pop %v1527
    %v1529 = vmul.f32 %v1365, 1.442695
    %v1530 = vpow.pop %v1529
    %v1531 = vmul.f32 %v1366, 1.442695
    %v1532 = vpow.pop %v1531
    %v1533 = vmul.f32 %v1367, 1.442695
    %v1534 = vpow.pop %v1533
    %v1535 = vmul.f32 %v1368, 1.442695
    %v1536 = vpow.pop %v1535
    %v1537 = vmul.f32 %v1369, 1.442695
    %v1538 = vpow.pop %v1537
    %v1539 = vmul.f32 %v1370, 1.442695
    %v1540 = vpow.pop %v1539
    %v1541 = vmul.f32 %v1371, 1.442695
    %v1542 = vpow.pop %v1541
    %v1543 = vmul.f32 %v1372, 1.442695
    %v1544 = vpow.pop %v1543
    %v1545 = vmul.f32 %v1373, 1.442695
    %v1546 = vpow.pop %v1545
    %v1547 = vmul.f32 %v1374, 1.442695
    %v1548 = vpow.pop %v1547
    %v1549 = vmul.f32 %v1375, 1.442695
    %v1550 = vpow.pop %v1549
    %v1551 = vmul.f32 %v1376, 1.442695
    %v1552 = vpow.pop %v1551
    %v1553 = vmul.f32 %v1377, 1.442695
    %v1554 = vpow.pop %v1553
    %v1555 = vmul.f32 %v1378, 1.442695
    %v1556 = vpow.pop %v1555
    %v1557 = vmul.f32 %v1379, 1.442695
    %v1558 = vpow.pop %v1557
    %v1559 = vmul.f32 %v1380, 1.442695
    %v1560 = vpow.pop %v1559
    %v1561 = vmul.f32 %v1381, 1.442695
    %v1562 = vpow.pop %v1561
    %v1563 = vmul.f32 %v1382, 1.442695
    %v1564 = vpow.pop %v1563
    %v1565 = vmul.f32 %v1383, 1.442695
    %v1566 = vpow.pop %v1565
    %v1567 = vmul.f32 %v1384, 1.442695
    %v1568 = vpow.pop %v1567
    %v1569 = vmul.f32 %v1385, 1.442695
    %v1570 = vpow.pop %v1569
    %v1571 = vmul.f32 %v1386, 1.442695
    %v1572 = vpow.pop %v1571
    %v1573 = vmul.f32 %v1387, 1.442695
    %v1574 = vpow.pop %v1573
    %v1575 = vmul.f32 %v1388, 1.442695
    %v1576 = vpow.pop %v1575
    %v1577 = vmul.f32 %v1389, 1.442695
    %v1578 = vpow.pop %v1577
    %v1579 = vmul.f32 %v1390, 1.442695
    %v1580 = vpow.pop %v1579
    %v1581 = vmul.f32 %v1391, 1.442695
    %v1582 = vpow.pop %v1581
    %v1583 = vmul.f32 %v1392, 1.442695
    %v1584 = vpow.pop %v1583
    %v1585 = vmul.f32 %v1393, 1.442695
    %v1586 = vpow.pop %v1585
    %v1587 = vmul.f32 %v1394, 1.442695
    %v1588 = vpow.pop %v1587
    %v1589 = vmul.f32 %v1395, 1.442695
    %v1590 = vpow.pop %v1589
    %v1591 = vmul.f32 %v1396, 1.442695
    %v1592 = vpow.pop %v1591
    %v1593 = vmul.f32 %v1397, 1.442695
    %v1594 = vpow.pop %v1593
    %v1595 = vmul.f32 %v1398, 1.442695
    %v1596 = vpow.pop %v1595
    %v1597 = vmul.f32 %v1399, 1.442695
    %v1598 = vpow.pop %v1597
    %v1599 = vmul.f32 %v1400, 1.442695
    %v1600 = vpow.pop %v1599
    %v1601 = vmul.f32 %v1401, 1.442695
    %v1602 = vpow.pop %v1601
    %v1603 = vmul.f32 %v1402, 1.442695
    %v1604 = vpow.pop %v1603
    %v1605 = vmul.f32 %v1403, 1.442695
    %v1606 = vpow.pop %v1605
    %v1607 = vmul.f32 %v1404, 1.442695
    %v1608 = vpow.pop %v1607
    %v1609 = vmul.f32 %v1405, 1.442695
    %v1610 = vpow.pop %v1609
    %v1611 = vmul.f32 %v1406, 1.442695
    %v1612 = vpow.pop %v1611
    %v1613 = vmul.f32 %v1407, 1.442695
    %v1614 = vpow.pop %v1613
    %v1615 = vmul.f32 %v1408, 1.442695
    %v1616 = vpow.pop %v1615
    %v1617 = vmul.f32 %v1409, 1.442695
    %v1618 = vpow.pop %v1617
    %v1619 = vmul.f32 %v1410, 1.442695
    %v1620 = vpow.pop %v1619
    %v1621 = vmul.f32 %v1411, 1.442695
    %v1622 = vpow.pop %v1621
    %v1623 = vmul.f32 %v1412, 1.442695
    %v1624 = vpow.pop %v1623
    %v1625 = vmul.f32 %v1413, 1.442695
    %v1626 = vpow.pop %v1625
    %v1627 = vmul.f32 %v1414, 1.442695
    %v1628 = vpow.pop %v1627
    %v1629 = vmul.f32 %v1415, 1.442695
    %v1630 = vpow.pop %v1629
    %v1631 = vmul.f32 %v1416, 1.442695
    %v1632 = vpow.pop %v1631
    %v1633 = vmul.f32 %v1417, 1.442695
    %v1634 = vpow.pop %v1633
    %v1635 = vmul.f32 %v1418, 1.442695
    %v1636 = vpow.pop %v1635
    %v1637 = vmul.f32 %v1419, 1.442695
    %v1638 = vpow.pop %v1637
    %v1639 = vmul.f32 %v1420, 1.442695
    %v1640 = vpow.pop %v1639
    %v1641 = vmul.f32 %v1421, 1.442695
    %v1642 = vpow.pop %v1641
    %v1643 = vmul.f32 %v1422, 1.442695
    %v1644 = vpow.pop %v1643
    %v1645 = vmul.f32 %v1423, 1.442695
    %v1646 = vpow.pop %v1645
    %v1647 = vmul.f32 %v1424, 1.442695
    %v1648 = vpow.pop %v1647
    %v1649 = vmul.f32 %v1425, 1.442695
    %v1650 = vpow.pop %v1649
    %v1651 = vmul.f32 %v1426, 1.442695
    %v1652 = vpow.pop %v1651
    %v1653 = vmul.f32 %v1427, 1.442695
    %v1654 = vpow.pop %v1653
    %v1655 = vmul.f32 %v1428, 1.442695
    %v1656 = vpow.pop %v1655
    %v1657 = vmul.f32 %v1429, 1.442695
    %v1658 = vpow.pop %v1657
    %v1659 = vmul.f32 %v1430, 1.442695
    %v1660 = vpow.pop %v1659
    %v1661 = vmul.f32 %v1431, 1.442695
    %v1662 = vpow.pop %v1661
    %v1663 = vmul.f32 %v1432, 1.442695
    %v1664 = vpow.pop %v1663
    %v1665 = vmul.f32 %v1433, 1.442695
    %v1666 = vpow.pop %v1665
    %v1667 = vmul.f32 %v1434, 1.442695
    %v1668 = vpow.pop %v1667
    %v1669 = vmul.f32 %v1435, 1.442695
    %v1670 = vpow.pop %v1669
    %v1671 = vmul.f32 %v1436, 1.442695
    %v1672 = vpow.pop %v1671
    %v1673 = vmul.f32 %v1437, 1.442695
    %v1674 = vpow.pop %v1673
    %v1675 = vmul.f32 %v1438, 1.442695
    %v1676 = vpow.pop %v1675
    %v1677 = vmul.f32 %v1439, 1.442695
    %v1678 = vpow.pop %v1677
    %v1679 = vmul.f32 %v1440, 1.442695
    %v1680 = vpow.pop %v1679
    %v1681 = vmul.f32 %v1441, 1.442695
    %v1682 = vpow.pop %v1681
    %v1683 = vmul.f32 %v1442, 1.442695
    %v1684 = vpow.pop %v1683
    %v1685 = vmul.f32 %v1443, 1.442695
    %v1686 = vpow.pop %v1685
    %v1687 = vmul.f32 %v1444, 1.442695
    %v1688 = vpow.pop %v1687
    %v1689 = vmul.f32 %v1445, 1.442695
    %v1690 = vpow.pop %v1689
    %v1691 = vmul.f32 %v1446, 1.442695
    %v1692 = vpow.pop %v1691
    %v1693 = vmul.f32 %v1447, 1.442695
    %v1694 = vpow.pop %v1693
    %v1695 = vmul.f32 %v1448, 1.442695
    %v1696 = vpow.pop %v1695
    %v1697 = vmul.f32 %v1449, 1.442695
    %v1698 = vpow.pop %v1697
    %v1699 = vmul.f32 %v1450, 1.442695
    %v1700 = vpow.pop %v1699
    %v1701 = vmul.f32 %v1451, 1.442695
    %v1702 = vpow.pop %v1701
    %v1703 = vmul.f32 %v1452, 1.442695
    %v1704 = vpow.pop %v1703
    %v1705 = vmul.f32 %v1453, 1.442695
    %v1706 = vpow.pop %v1705
    %v1707 = vmul.f32 %v1454, 1.442695
    %v1708 = vpow.pop %v1707
    %v1709 = vmul.f32 %v1455, 1.442695
    %v1710 = vpow.pop %v1709
    %v1711 = vmul.f32 %v1456, 1.442695
    %v1712 = vpow.pop %v1711
    %v1713 = vpack.c.bf16 %v1460, %v1458
    %v1714 = vpack.c.bf16 %v1464, %v1462
    %v1715 = vpack.c.bf16 %v1468, %v1466
    %v1716 = vpack.c.bf16 %v1472, %v1470
    %v1717 = vpack.c.bf16 %v1476, %v1474
    %v1718 = vpack.c.bf16 %v1480, %v1478
    %v1719 = vpack.c.bf16 %v1484, %v1482
    %v1720 = vpack.c.bf16 %v1488, %v1486
    %v1721 = vpack.c.bf16 %v1492, %v1490
    %v1722 = vpack.c.bf16 %v1496, %v1494
    %v1723 = vpack.c.bf16 %v1500, %v1498
    %v1724 = vpack.c.bf16 %v1504, %v1502
    %v1725 = vpack.c.bf16 %v1508, %v1506
    %v1726 = vpack.c.bf16 %v1512, %v1510
    %v1727 = vpack.c.bf16 %v1516, %v1514
    %v1728 = vpack.c.bf16 %v1520, %v1518
    %v1729 = vpack.c.bf16 %v1524, %v1522
    %v1730 = vpack.c.bf16 %v1528, %v1526
    %v1731 = vpack.c.bf16 %v1532, %v1530
    %v1732 = vpack.c.bf16 %v1536, %v1534
    %v1733 = vpack.c.bf16 %v1540, %v1538
    %v1734 = vpack.c.bf16 %v1544, %v1542
    %v1735 = vpack.c.bf16 %v1548, %v1546
    %v1736 = vpack.c.bf16 %v1552, %v1550
    %v1737 = vpack.c.bf16 %v1556, %v1554
    %v1738 = vpack.c.bf16 %v1560, %v1558
    %v1739 = vpack.c.bf16 %v1564, %v1562
    %v1740 = vpack.c.bf16 %v1568, %v1566
    %v1741 = vpack.c.bf16 %v1572, %v1570
    %v1742 = vpack.c.bf16 %v1576, %v1574
    %v1743 = vpack.c.bf16 %v1580, %v1578
    %v1744 = vpack.c.bf16 %v1584, %v1582
    %v1745 = vpack.c.bf16 %v1588, %v1586
    %v1746 = vpack.c.bf16 %v1592, %v1590
    %v1747 = vpack.c.bf16 %v1596, %v1594
    %v1748 = vpack.c.bf16 %v1600, %v1598
    %v1749 = vpack.c.bf16 %v1604, %v1602
    %v1750 = vpack.c.bf16 %v1608, %v1606
    %v1751 = vpack.c.bf16 %v1612, %v1610
    %v1752 = vpack.c.bf16 %v1616, %v1614
    %v1753 = vpack.c.bf16 %v1620, %v1618
    %v1754 = vpack.c.bf16 %v1624, %v1622
    %v1755 = vpack.c.bf16 %v1628, %v1626
    %v1756 = vpack.c.bf16 %v1632, %v1630
    %v1757 = vpack.c.bf16 %v1636, %v1634
    %v1758 = vpack.c.bf16 %v1640, %v1638
    %v1759 = vpack.c.bf16 %v1644, %v1642
    %v1760 = vpack.c.bf16 %v1648, %v1646
    %v1761 = vpack.c.bf16 %v1652, %v1650
    %v1762 = vpack.c.bf16 %v1656, %v1654
    %v1763 = vpack.c.bf16 %v1660, %v1658
    %v1764 = vpack.c.bf16 %v1664, %v1662
    %v1765 = vpack.c.bf16 %v1668, %v1666
    %v1766 = vpack.c.bf16 %v1672, %v1670
    %v1767 = vpack.c.bf16 %v1676, %v1674
    %v1768 = vpack.c.bf16 %v1680, %v1678
    %v1769 = vpack.c.bf16 %v1684, %v1682
    %v1770 = vpack.c.bf16 %v1688, %v1686
    %v1771 = vpack.c.bf16 %v1692, %v1690
    %v1772 = vpack.c.bf16 %v1696, %v1694
    %v1773 = vpack.c.bf16 %v1700, %v1698
    %v1774 = vpack.c.bf16 %v1704, %v1702
    %v1775 = vpack.c.bf16 %v1708, %v1706
    %v1776 = vpack.c.bf16 %v1712, %v1710
    %v1777 = vunpack.c.l.bf16 %v1713
    %v1778 = vunpack.c.h.bf16 %v1713
    %v1779 = vunpack.c.l.bf16 %v1714
    %v1780 = vunpack.c.h.bf16 %v1714
    %v1781 = vunpack.c.l.bf16 %v1715
    %v1782 = vunpack.c.h.bf16 %v1715
    %v1783 = vunpack.c.l.bf16 %v1716
    %v1784 = vunpack.c.h.bf16 %v1716
    %v1785 = vunpack.c.l.bf16 %v1717
    %v1786 = vunpack.c.h.bf16 %v1717
    %v1787 = vunpack.c.l.bf16 %v1718
    %v1788 = vunpack.c.h.bf16 %v1718
    %v1789 = vunpack.c.l.bf16 %v1719
    %v1790 = vunpack.c.h.bf16 %v1719
    %v1791 = vunpack.c.l.bf16 %v1720
    %v1792 = vunpack.c.h.bf16 %v1720
    %v1793 = vunpack.c.l.bf16 %v1721
    %v1794 = vunpack.c.h.bf16 %v1721
    %v1795 = vunpack.c.l.bf16 %v1722
    %v1796 = vunpack.c.h.bf16 %v1722
    %v1797 = vunpack.c.l.bf16 %v1723
    %v1798 = vunpack.c.h.bf16 %v1723
    %v1799 = vunpack.c.l.bf16 %v1724
    %v1800 = vunpack.c.h.bf16 %v1724
    %v1801 = vunpack.c.l.bf16 %v1725
    %v1802 = vunpack.c.h.bf16 %v1725
    %v1803 = vunpack.c.l.bf16 %v1726
    %v1804 = vunpack.c.h.bf16 %v1726
    %v1805 = vunpack.c.l.bf16 %v1727
    %v1806 = vunpack.c.h.bf16 %v1727
    %v1807 = vunpack.c.l.bf16 %v1728
    %v1808 = vunpack.c.h.bf16 %v1728
    %v1809 = vunpack.c.l.bf16 %v1729
    %v1810 = vunpack.c.h.bf16 %v1729
    %v1811 = vunpack.c.l.bf16 %v1730
    %v1812 = vunpack.c.h.bf16 %v1730
    %v1813 = vunpack.c.l.bf16 %v1731
    %v1814 = vunpack.c.h.bf16 %v1731
    %v1815 = vunpack.c.l.bf16 %v1732
    %v1816 = vunpack.c.h.bf16 %v1732
    %v1817 = vunpack.c.l.bf16 %v1733
    %v1818 = vunpack.c.h.bf16 %v1733
    %v1819 = vunpack.c.l.bf16 %v1734
    %v1820 = vunpack.c.h.bf16 %v1734
    %v1821 = vunpack.c.l.bf16 %v1735
    %v1822 = vunpack.c.h.bf16 %v1735
    %v1823 = vunpack.c.l.bf16 %v1736
    %v1824 = vunpack.c.h.bf16 %v1736
    %v1825 = vunpack.c.l.bf16 %v1737
    %v1826 = vunpack.c.h.bf16 %v1737
    %v1827 = vunpack.c.l.bf16 %v1738
    %v1828 = vunpack.c.h.bf16 %v1738
    %v1829 = vunpack.c.l.bf16 %v1739
    %v1830 = vunpack.c.h.bf16 %v1739
    %v1831 = vunpack.c.l.bf16 %v1740
    %v1832 = vunpack.c.h.bf16 %v1740
    %v1833 = vunpack.c.l.bf16 %v1741
    %v1834 = vunpack.c.h.bf16 %v1741
    %v1835 = vunpack.c.l.bf16 %v1742
    %v1836 = vunpack.c.h.bf16 %v1742
    %v1837 = vunpack.c.l.bf16 %v1743
    %v1838 = vunpack.c.h.bf16 %v1743
    %v1839 = vunpack.c.l.bf16 %v1744
    %v1840 = vunpack.c.h.bf16 %v1744
    %v1841 = vunpack.c.l.bf16 %v1745
    %v1842 = vunpack.c.h.bf16 %v1745
    %v1843 = vunpack.c.l.bf16 %v1746
    %v1844 = vunpack.c.h.bf16 %v1746
    %v1845 = vunpack.c.l.bf16 %v1747
    %v1846 = vunpack.c.h.bf16 %v1747
    %v1847 = vunpack.c.l.bf16 %v1748
    %v1848 = vunpack.c.h.bf16 %v1748
    %v1849 = vunpack.c.l.bf16 %v1749
    %v1850 = vunpack.c.h.bf16 %v1749
    %v1851 = vunpack.c.l.bf16 %v1750
    %v1852 = vunpack.c.h.bf16 %v1750
    %v1853 = vunpack.c.l.bf16 %v1751
    %v1854 = vunpack.c.h.bf16 %v1751
    %v1855 = vunpack.c.l.bf16 %v1752
    %v1856 = vunpack.c.h.bf16 %v1752
    %v1857 = vunpack.c.l.bf16 %v1753
    %v1858 = vunpack.c.h.bf16 %v1753
    %v1859 = vunpack.c.l.bf16 %v1754
    %v1860 = vunpack.c.h.bf16 %v1754
    %v1861 = vunpack.c.l.bf16 %v1755
    %v1862 = vunpack.c.h.bf16 %v1755
    %v1863 = vunpack.c.l.bf16 %v1756
    %v1864 = vunpack.c.h.bf16 %v1756
    %v1865 = vunpack.c.l.bf16 %v1757
    %v1866 = vunpack.c.h.bf16 %v1757
    %v1867 = vunpack.c.l.bf16 %v1758
    %v1868 = vunpack.c.h.bf16 %v1758
    %v1869 = vunpack.c.l.bf16 %v1759
    %v1870 = vunpack.c.h.bf16 %v1759
    %v1871 = vunpack.c.l.bf16 %v1760
    %v1872 = vunpack.c.h.bf16 %v1760
    %v1873 = vunpack.c.l.bf16 %v1761
    %v1874 = vunpack.c.h.bf16 %v1761
    %v1875 = vunpack.c.l.bf16 %v1762
    %v1876 = vunpack.c.h.bf16 %v1762
    %v1877 = vunpack.c.l.bf16 %v1763
    %v1878 = vunpack.c.h.bf16 %v1763
    %v1879 = vunpack.c.l.bf16 %v1764
    %v1880 = vunpack.c.h.bf16 %v1764
    %v1881 = vunpack.c.l.bf16 %v1765
    %v1882 = vunpack.c.h.bf16 %v1765
    %v1883 = vunpack.c.l.bf16 %v1766
    %v1884 = vunpack.c.h.bf16 %v1766
    %v1885 = vunpack.c.l.bf16 %v1767
    %v1886 = vunpack.c.h.bf16 %v1767
    %v1887 = vunpack.c.l.bf16 %v1768
    %v1888 = vunpack.c.h.bf16 %v1768
    %v1889 = vunpack.c.l.bf16 %v1769
    %v1890 = vunpack.c.h.bf16 %v1769
    %v1891 = vunpack.c.l.bf16 %v1770
    %v1892 = vunpack.c.h.bf16 %v1770
    %v1893 = vunpack.c.l.bf16 %v1771
    %v1894 = vunpack.c.h.bf16 %v1771
    %v1895 = vunpack.c.l.bf16 %v1772
    %v1896 = vunpack.c.h.bf16 %v1772
    %v1897 = vunpack.c.l.bf16 %v1773
    %v1898 = vunpack.c.h.bf16 %v1773
    %v1899 = vunpack.c.l.bf16 %v1774
    %v1900 = vunpack.c.h.bf16 %v1774
    %v1901 = vunpack.c.l.bf16 %v1775
    %v1902 = vunpack.c.h.bf16 %v1775
    %v1903 = vunpack.c.l.bf16 %v1776
    %v1904 = vunpack.c.h.bf16 %v1776
    %v1905 = vsub.f32 %v1777, 1.0
    %v1906 = vsub.f32 %v1778, 1.0
    %v1907 = vsub.f32 %v1779, 1.0
    %v1908 = vsub.f32 %v1780, 1.0
    %v1909 = vsub.f32 %v1781, 1.0
    %v1910 = vsub.f32 %v1782, 1.0
    %v1911 = vsub.f32 %v1783, 1.0
    %v1912 = vsub.f32 %v1784, 1.0
    %v1913 = vsub.f32 %v1785, 1.0
    %v1914 = vsub.f32 %v1786, 1.0
    %v1915 = vsub.f32 %v1787, 1.0
    %v1916 = vsub.f32 %v1788, 1.0
    %v1917 = vsub.f32 %v1789, 1.0
    %v1918 = vsub.f32 %v1790, 1.0
    %v1919 = vsub.f32 %v1791, 1.0
    %v1920 = vsub.f32 %v1792, 1.0
    %v1921 = vsub.f32 %v1793, 1.0
    %v1922 = vsub.f32 %v1794, 1.0
    %v1923 = vsub.f32 %v1795, 1.0
    %v1924 = vsub.f32 %v1796, 1.0
    %v1925 = vsub.f32 %v1797, 1.0
    %v1926 = vsub.f32 %v1798, 1.0
    %v1927 = vsub.f32 %v1799, 1.0
    %v1928 = vsub.f32 %v1800, 1.0
    %v1929 = vsub.f32 %v1801, 1.0
    %v1930 = vsub.f32 %v1802, 1.0
    %v1931 = vsub.f32 %v1803, 1.0
    %v1932 = vsub.f32 %v1804, 1.0
    %v1933 = vsub.f32 %v1805, 1.0
    %v1934 = vsub.f32 %v1806, 1.0
    %v1935 = vsub.f32 %v1807, 1.0
    %v1936 = vsub.f32 %v1808, 1.0
    %v1937 = vsub.f32 %v1809, 1.0
    %v1938 = vsub.f32 %v1810, 1.0
    %v1939 = vsub.f32 %v1811, 1.0
    %v1940 = vsub.f32 %v1812, 1.0
    %v1941 = vsub.f32 %v1813, 1.0
    %v1942 = vsub.f32 %v1814, 1.0
    %v1943 = vsub.f32 %v1815, 1.0
    %v1944 = vsub.f32 %v1816, 1.0
    %v1945 = vsub.f32 %v1817, 1.0
    %v1946 = vsub.f32 %v1818, 1.0
    %v1947 = vsub.f32 %v1819, 1.0
    %v1948 = vsub.f32 %v1820, 1.0
    %v1949 = vsub.f32 %v1821, 1.0
    %v1950 = vsub.f32 %v1822, 1.0
    %v1951 = vsub.f32 %v1823, 1.0
    %v1952 = vsub.f32 %v1824, 1.0
    %v1953 = vsub.f32 %v1825, 1.0
    %v1954 = vsub.f32 %v1826, 1.0
    %v1955 = vsub.f32 %v1827, 1.0
    %v1956 = vsub.f32 %v1828, 1.0
    %v1957 = vsub.f32 %v1829, 1.0
    %v1958 = vsub.f32 %v1830, 1.0
    %v1959 = vsub.f32 %v1831, 1.0
    %v1960 = vsub.f32 %v1832, 1.0
    %v1961 = vsub.f32 %v1833, 1.0
    %v1962 = vsub.f32 %v1834, 1.0
    %v1963 = vsub.f32 %v1835, 1.0
    %v1964 = vsub.f32 %v1836, 1.0
    %v1965 = vsub.f32 %v1837, 1.0
    %v1966 = vsub.f32 %v1838, 1.0
    %v1967 = vsub.f32 %v1839, 1.0
    %v1968 = vsub.f32 %v1840, 1.0
    %v1969 = vsub.f32 %v1841, 1.0
    %v1970 = vsub.f32 %v1842, 1.0
    %v1971 = vsub.f32 %v1843, 1.0
    %v1972 = vsub.f32 %v1844, 1.0
    %v1973 = vsub.f32 %v1845, 1.0
    %v1974 = vsub.f32 %v1846, 1.0
    %v1975 = vsub.f32 %v1847, 1.0
    %v1976 = vsub.f32 %v1848, 1.0
    %v1977 = vsub.f32 %v1849, 1.0
    %v1978 = vsub.f32 %v1850, 1.0
    %v1979 = vsub.f32 %v1851, 1.0
    %v1980 = vsub.f32 %v1852, 1.0
    %v1981 = vsub.f32 %v1853, 1.0
    %v1982 = vsub.f32 %v1854, 1.0
    %v1983 = vsub.f32 %v1855, 1.0
    %v1984 = vsub.f32 %v1856, 1.0
    %v1985 = vsub.f32 %v1857, 1.0
    %v1986 = vsub.f32 %v1858, 1.0
    %v1987 = vsub.f32 %v1859, 1.0
    %v1988 = vsub.f32 %v1860, 1.0
    %v1989 = vsub.f32 %v1861, 1.0
    %v1990 = vsub.f32 %v1862, 1.0
    %v1991 = vsub.f32 %v1863, 1.0
    %v1992 = vsub.f32 %v1864, 1.0
    %v1993 = vsub.f32 %v1865, 1.0
    %v1994 = vsub.f32 %v1866, 1.0
    %v1995 = vsub.f32 %v1867, 1.0
    %v1996 = vsub.f32 %v1868, 1.0
    %v1997 = vsub.f32 %v1869, 1.0
    %v1998 = vsub.f32 %v1870, 1.0
    %v1999 = vsub.f32 %v1871, 1.0
    %v2000 = vsub.f32 %v1872, 1.0
    %v2001 = vsub.f32 %v1873, 1.0
    %v2002 = vsub.f32 %v1874, 1.0
    %v2003 = vsub.f32 %v1875, 1.0
    %v2004 = vsub.f32 %v1876, 1.0
    %v2005 = vsub.f32 %v1877, 1.0
    %v2006 = vsub.f32 %v1878, 1.0
    %v2007 = vsub.f32 %v1879, 1.0
    %v2008 = vsub.f32 %v1880, 1.0
    %v2009 = vsub.f32 %v1881, 1.0
    %v2010 = vsub.f32 %v1882, 1.0
    %v2011 = vsub.f32 %v1883, 1.0
    %v2012 = vsub.f32 %v1884, 1.0
    %v2013 = vsub.f32 %v1885, 1.0
    %v2014 = vsub.f32 %v1886, 1.0
    %v2015 = vsub.f32 %v1887, 1.0
    %v2016 = vsub.f32 %v1888, 1.0
    %v2017 = vsub.f32 %v1889, 1.0
    %v2018 = vsub.f32 %v1890, 1.0
    %v2019 = vsub.f32 %v1891, 1.0
    %v2020 = vsub.f32 %v1892, 1.0
    %v2021 = vsub.f32 %v1893, 1.0
    %v2022 = vsub.f32 %v1894, 1.0
    %v2023 = vsub.f32 %v1895, 1.0
    %v2024 = vsub.f32 %v1896, 1.0
    %v2025 = vsub.f32 %v1897, 1.0
    %v2026 = vsub.f32 %v1898, 1.0
    %v2027 = vsub.f32 %v1899, 1.0
    %v2028 = vsub.f32 %v1900, 1.0
    %v2029 = vsub.f32 %v1901, 1.0
    %v2030 = vsub.f32 %v1902, 1.0
    %v2031 = vsub.f32 %v1903, 1.0
    %v2032 = vsub.f32 %v1904, 1.0
    %v2033 = vpack.c.bf16 %v1906, %v1905
    %v2034 = vpack.c.bf16 %v1908, %v1907
    %v2035 = vpack.c.bf16 %v1910, %v1909
    %v2036 = vpack.c.bf16 %v1912, %v1911
    %v2037 = vpack.c.bf16 %v1914, %v1913
    %v2038 = vpack.c.bf16 %v1916, %v1915
    %v2039 = vpack.c.bf16 %v1918, %v1917
    %v2040 = vpack.c.bf16 %v1920, %v1919
    %v2041 = vpack.c.bf16 %v1922, %v1921
    %v2042 = vpack.c.bf16 %v1924, %v1923
    %v2043 = vpack.c.bf16 %v1926, %v1925
    %v2044 = vpack.c.bf16 %v1928, %v1927
    %v2045 = vpack.c.bf16 %v1930, %v1929
    %v2046 = vpack.c.bf16 %v1932, %v1931
    %v2047 = vpack.c.bf16 %v1934, %v1933
    %v2048 = vpack.c.bf16 %v1936, %v1935
    %v2049 = vpack.c.bf16 %v1938, %v1937
    %v2050 = vpack.c.bf16 %v1940, %v1939
    %v2051 = vpack.c.bf16 %v1942, %v1941
    %v2052 = vpack.c.bf16 %v1944, %v1943
    %v2053 = vpack.c.bf16 %v1946, %v1945
    %v2054 = vpack.c.bf16 %v1948, %v1947
    %v2055 = vpack.c.bf16 %v1950, %v1949
    %v2056 = vpack.c.bf16 %v1952, %v1951
    %v2057 = vpack.c.bf16 %v1954, %v1953
    %v2058 = vpack.c.bf16 %v1956, %v1955
    %v2059 = vpack.c.bf16 %v1958, %v1957
    %v2060 = vpack.c.bf16 %v1960, %v1959
    %v2061 = vpack.c.bf16 %v1962, %v1961
    %v2062 = vpack.c.bf16 %v1964, %v1963
    %v2063 = vpack.c.bf16 %v1966, %v1965
    %v2064 = vpack.c.bf16 %v1968, %v1967
    %v2065 = vpack.c.bf16 %v1970, %v1969
    %v2066 = vpack.c.bf16 %v1972, %v1971
    %v2067 = vpack.c.bf16 %v1974, %v1973
    %v2068 = vpack.c.bf16 %v1976, %v1975
    %v2069 = vpack.c.bf16 %v1978, %v1977
    %v2070 = vpack.c.bf16 %v1980, %v1979
    %v2071 = vpack.c.bf16 %v1982, %v1981
    %v2072 = vpack.c.bf16 %v1984, %v1983
    %v2073 = vpack.c.bf16 %v1986, %v1985
    %v2074 = vpack.c.bf16 %v1988, %v1987
    %v2075 = vpack.c.bf16 %v1990, %v1989
    %v2076 = vpack.c.bf16 %v1992, %v1991
    %v2077 = vpack.c.bf16 %v1994, %v1993
    %v2078 = vpack.c.bf16 %v1996, %v1995
    %v2079 = vpack.c.bf16 %v1998, %v1997
    %v2080 = vpack.c.bf16 %v2000, %v1999
    %v2081 = vpack.c.bf16 %v2002, %v2001
    %v2082 = vpack.c.bf16 %v2004, %v2003
    %v2083 = vpack.c.bf16 %v2006, %v2005
    %v2084 = vpack.c.bf16 %v2008, %v2007
    %v2085 = vpack.c.bf16 %v2010, %v2009
    %v2086 = vpack.c.bf16 %v2012, %v2011
    %v2087 = vpack.c.bf16 %v2014, %v2013
    %v2088 = vpack.c.bf16 %v2016, %v2015
    %v2089 = vpack.c.bf16 %v2018, %v2017
    %v2090 = vpack.c.bf16 %v2020, %v2019
    %v2091 = vpack.c.bf16 %v2022, %v2021
    %v2092 = vpack.c.bf16 %v2024, %v2023
    %v2093 = vpack.c.bf16 %v2026, %v2025
    %v2094 = vpack.c.bf16 %v2028, %v2027
    %v2095 = vpack.c.bf16 %v2030, %v2029
    %v2096 = vpack.c.bf16 %v2032, %v2031
    %vm2097 = vmpackc.low %vm1010, %vm1009
    %vm2098 = vmpackc.low %vm1012, %vm1011
    %vm2099 = vmpackc.low %vm1014, %vm1013
    %vm2100 = vmpackc.low %vm1016, %vm1015
    %vm2101 = vmpackc.low %vm1018, %vm1017
    %vm2102 = vmpackc.low %vm1020, %vm1019
    %vm2103 = vmpackc.low %vm1022, %vm1021
    %vm2104 = vmpackc.low %vm1024, %vm1023
    %vm2105 = vmpackc.low %vm1026, %vm1025
    %vm2106 = vmpackc.low %vm1028, %vm1027
    %vm2107 = vmpackc.low %vm1030, %vm1029
    %vm2108 = vmpackc.low %vm1032, %vm1031
    %vm2109 = vmpackc.low %vm1034, %vm1033
    %vm2110 = vmpackc.low %vm1036, %vm1035
    %vm2111 = vmpackc.low %vm1038, %vm1037
    %vm2112 = vmpackc.low %vm1040, %vm1039
    %vm2113 = vmpackc.low %vm1042, %vm1041
    %vm2114 = vmpackc.low %vm1044, %vm1043
    %vm2115 = vmpackc.low %vm1046, %vm1045
    %vm2116 = vmpackc.low %vm1048, %vm1047
    %vm2117 = vmpackc.low %vm1050, %vm1049
    %vm2118 = vmpackc.low %vm1052, %vm1051
    %vm2119 = vmpackc.low %vm1054, %vm1053
    %vm2120 = vmpackc.low %vm1056, %vm1055
    %vm2121 = vmpackc.low %vm1058, %vm1057
    %vm2122 = vmpackc.low %vm1060, %vm1059
    %vm2123 = vmpackc.low %vm1062, %vm1061
    %vm2124 = vmpackc.low %vm1064, %vm1063
    %vm2125 = vmpackc.low %vm1066, %vm1065
    %vm2126 = vmpackc.low %vm1068, %vm1067
    %vm2127 = vmpackc.low %vm1070, %vm1069
    %vm2128 = vmpackc.low %vm1072, %vm1071
    %vm2129 = vmpackc.low %vm1074, %vm1073
    %vm2130 = vmpackc.low %vm1076, %vm1075
    %vm2131 = vmpackc.low %vm1078, %vm1077
    %vm2132 = vmpackc.low %vm1080, %vm1079
    %vm2133 = vmpackc.low %vm1082, %vm1081
    %vm2134 = vmpackc.low %vm1084, %vm1083
    %vm2135 = vmpackc.low %vm1086, %vm1085
    %vm2136 = vmpackc.low %vm1088, %vm1087
    %vm2137 = vmpackc.low %vm1090, %vm1089
    %vm2138 = vmpackc.low %vm1092, %vm1091
    %vm2139 = vmpackc.low %vm1094, %vm1093
    %vm2140 = vmpackc.low %vm1096, %vm1095
    %vm2141 = vmpackc.low %vm1098, %vm1097
    %vm2142 = vmpackc.low %vm1100, %vm1099
    %vm2143 = vmpackc.low %vm1102, %vm1101
    %vm2144 = vmpackc.low %vm1104, %vm1103
    %vm2145 = vmpackc.low %vm1106, %vm1105
    %vm2146 = vmpackc.low %vm1108, %vm1107
    %vm2147 = vmpackc.low %vm1110, %vm1109
    %vm2148 = vmpackc.low %vm1112, %vm1111
    %vm2149 = vmpackc.low %vm1114, %vm1113
    %vm2150 = vmpackc.low %vm1116, %vm1115
    %vm2151 = vmpackc.low %vm1118, %vm1117
    %vm2152 = vmpackc.low %vm1120, %vm1119
    %vm2153 = vmpackc.low %vm1122, %vm1121
    %vm2154 = vmpackc.low %vm1124, %vm1123
    %vm2155 = vmpackc.low %vm1126, %vm1125
    %vm2156 = vmpackc.low %vm1128, %vm1127
    %vm2157 = vmpackc.low %vm1130, %vm1129
    %vm2158 = vmpackc.low %vm1132, %vm1131
    %vm2159 = vmpackc.low %vm1134, %vm1133
    %vm2160 = vmpackc.low %vm1136, %vm1135
    %v2161 = vsel %vm2097, %v817, %v2033
    %v2162 = vsel %vm2098, %v818, %v2034
    %v2163 = vsel %vm2099, %v819, %v2035
    %v2164 = vsel %vm2100, %v820, %v2036
    %v2165 = vsel %vm2101, %v821, %v2037
    %v2166 = vsel %vm2102, %v822, %v2038
    %v2167 = vsel %vm2103, %v823, %v2039
    %v2168 = vsel %vm2104, %v824, %v2040
    %v2169 = vsel %vm2105, %v825, %v2041
    %v2170 = vsel %vm2106, %v826, %v2042
    %v2171 = vsel %vm2107, %v827, %v2043
    %v2172 = vsel %vm2108, %v828, %v2044
    %v2173 = vsel %vm2109, %v829, %v2045
    %v2174 = vsel %vm2110, %v830, %v2046
    %v2175 = vsel %vm2111, %v831, %v2047
    %v2176 = vsel %vm2112, %v832, %v2048
    %v2177 = vsel %vm2113, %v833, %v2049
    %v2178 = vsel %vm2114, %v834, %v2050
    %v2179 = vsel %vm2115, %v835, %v2051
    %v2180 = vsel %vm2116, %v836, %v2052
    %v2181 = vsel %vm2117, %v837, %v2053
    %v2182 = vsel %vm2118, %v838, %v2054
    %v2183 = vsel %vm2119, %v839, %v2055
    %v2184 = vsel %vm2120, %v840, %v2056
    %v2185 = vsel %vm2121, %v841, %v2057
    %v2186 = vsel %vm2122, %v842, %v2058
    %v2187 = vsel %vm2123, %v843, %v2059
    %v2188 = vsel %vm2124, %v844, %v2060
    %v2189 = vsel %vm2125, %v845, %v2061
    %v2190 = vsel %vm2126, %v846, %v2062
    %v2191 = vsel %vm2127, %v847, %v2063
    %v2192 = vsel %vm2128, %v848, %v2064
    %v2193 = vsel %vm2129, %v849, %v2065
    %v2194 = vsel %vm2130, %v850, %v2066
    %v2195 = vsel %vm2131, %v851, %v2067
    %v2196 = vsel %vm2132, %v852, %v2068
    %v2197 = vsel %vm2133, %v853, %v2069
    %v2198 = vsel %vm2134, %v854, %v2070
    %v2199 = vsel %vm2135, %v855, %v2071
    %v2200 = vsel %vm2136, %v856, %v2072
    %v2201 = vsel %vm2137, %v857, %v2073
    %v2202 = vsel %vm2138, %v858, %v2074
    %v2203 = vsel %vm2139, %v859, %v2075
    %v2204 = vsel %vm2140, %v860, %v2076
    %v2205 = vsel %vm2141, %v861, %v2077
    %v2206 = vsel %vm2142, %v862, %v2078
    %v2207 = vsel %vm2143, %v863, %v2079
    %v2208 = vsel %vm2144, %v864, %v2080
    %v2209 = vsel %vm2145, %v865, %v2081
    %v2210 = vsel %vm2146, %v866, %v2082
    %v2211 = vsel %vm2147, %v867, %v2083
    %v2212 = vsel %vm2148, %v868, %v2084
    %v2213 = vsel %vm2149, %v869, %v2085
    %v2214 = vsel %vm2150, %v870, %v2086
    %v2215 = vsel %vm2151, %v871, %v2087
    %v2216 = vsel %vm2152, %v872, %v2088
    %v2217 = vsel %vm2153, %v873, %v2089
    %v2218 = vsel %vm2154, %v874, %v2090
    %v2219 = vsel %vm2155, %v875, %v2091
    %v2220 = vsel %vm2156, %v876, %v2092
    %v2221 = vsel %vm2157, %v877, %v2093
    %v2222 = vsel %vm2158, %v878, %v2094
    %v2223 = vsel %vm2159, %v879, %v2095
    %v2224 = vsel %vm2160, %v880, %v2096
    %v2225 = vld [vmem:[%s3] sm:$0xf]
    %v2226 = vld [vmem:[%s3 + $0x4] sm:$0xf]
    %v2227 = vld [vmem:[%s3 + $0x8] sm:$0xf]
    %v2228 = vld [vmem:[%s3 + $0xc] sm:$0xf]
    %v2229 = vld [vmem:[%s3 + $0x10] sm:$0xf]
    %v2230 = vld [vmem:[%s3 + $0x14] sm:$0xf]
    %v2231 = vld [vmem:[%s3 + $0x18] sm:$0xf]
    %v2232 = vld [vmem:[%s3 + $0x1c] sm:$0xf]
    %v2233 = vld [vmem:[%s4] sm:$0xff]
    %v2234 = vld [vmem:[%s4 + $0x8] sm:$0xff]
    %v2235 = vld [vmem:[%s4 + $0x10] sm:$0xff]
    %v2236 = vld [vmem:[%s4 + $0x18] sm:$0xff]
    %v2237 = vld [vmem:[%s4 + $0x20] sm:$0xff]
    %v2238 = vld [vmem:[%s4 + $0x28] sm:$0xff]
    %v2239 = vld [vmem:[%s4 + $0x30] sm:$0xff]
    %v2240 = vld [vmem:[%s4 + $0x38] sm:$0xff]
    %2242 = vset.pattern.permute.xlu0 0
    %2243 = vperm.xlu0 %2242, %v2233
    %v2244 = vpop.permute.xlu0 %2243
    %2247 = vset.pattern.permute.xlu0 0
    %2248 = vperm.xlu0 %2247, %v2234
    %v2249 = vpop.permute.xlu0 %2248
    %2252 = vset.pattern.permute.xlu0 0
    %2253 = vperm.xlu0 %2252, %v2235
    %v2254 = vpop.permute.xlu0 %2253
    %2257 = vset.pattern.permute.xlu0 0
    %2258 = vperm.xlu0 %2257, %v2236
    %v2259 = vpop.permute.xlu0 %2258
    %2262 = vset.pattern.permute.xlu0 0
    %2263 = vperm.xlu0 %2262, %v2237
    %v2264 = vpop.permute.xlu0 %2263
    %2267 = vset.pattern.permute.xlu0 0
    %2268 = vperm.xlu0 %2267, %v2238
    %v2269 = vpop.permute.xlu0 %2268
    %2272 = vset.pattern.permute.xlu0 0
    %2273 = vperm.xlu0 %2272, %v2239
    %v2274 = vpop.permute.xlu0 %2273
    %2277 = vset.pattern.permute.xlu0 0
    %2278 = vperm.xlu0 %2277, %v2240
    %v2279 = vpop.permute.xlu0 %2278
    %v2289 = vunpack.c.l.b16 %v2225
    %v2290 = vunpack.c.l.b16 %v2226
    %v2291 = vunpack.c.l.b16 %v2227
    %v2292 = vunpack.c.l.b16 %v2228
    %v2293 = vunpack.c.l.b16 %v2229
    %v2294 = vunpack.c.l.b16 %v2230
    %v2295 = vunpack.c.l.b16 %v2231
    %v2296 = vunpack.c.l.b16 %v2232
    %v2297 = vpack.c.b16 %v2290, %v2289
    %v2298 = vpack.c.b16 %v2292, %v2291
    %v2299 = vpack.c.b16 %v2294, %v2293
    %v2300 = vpack.c.b16 %v2296, %v2295
    %v2369 = vunpack.c.l.b16 %v2161
    %v2370 = vunpack.c.h.b16 %v2161
    %v2371 = vunpack.c.l.b16 %v2162
    %v2372 = vunpack.c.h.b16 %v2162
    %v2373 = vunpack.c.l.b16 %v2163
    %v2374 = vunpack.c.h.b16 %v2163
    %v2375 = vunpack.c.l.b16 %v2164
    %v2376 = vunpack.c.h.b16 %v2164
    %v2377 = vunpack.c.l.b16 %v2165
    %v2378 = vunpack.c.h.b16 %v2165
    %v2379 = vunpack.c.l.b16 %v2166
    %v2380 = vunpack.c.h.b16 %v2166
    %v2381 = vunpack.c.l.b16 %v2167
    %v2382 = vunpack.c.h.b16 %v2167
    %v2383 = vunpack.c.l.b16 %v2168
    %v2384 = vunpack.c.h.b16 %v2168
    %v2385 = vunpack.c.l.b16 %v2169
    %v2386 = vunpack.c.h.b16 %v2169
    %v2387 = vunpack.c.l.b16 %v2170
    %v2388 = vunpack.c.h.b16 %v2170
    %v2389 = vunpack.c.l.b16 %v2171
    %v2390 = vunpack.c.h.b16 %v2171
    %v2391 = vunpack.c.l.b16 %v2172
    %v2392 = vunpack.c.h.b16 %v2172
    %v2393 = vunpack.c.l.b16 %v2173
    %v2394 = vunpack.c.h.b16 %v2173
    %v2395 = vunpack.c.l.b16 %v2174
    %v2396 = vunpack.c.h.b16 %v2174
    %v2397 = vunpack.c.l.b16 %v2175
    %v2398 = vunpack.c.h.b16 %v2175
    %v2399 = vunpack.c.l.b16 %v2176
    %v2400 = vunpack.c.h.b16 %v2176
    %v2401 = vunpack.c.l.b16 %v2177
    %v2402 = vunpack.c.h.b16 %v2177
    %v2403 = vunpack.c.l.b16 %v2178
    %v2404 = vunpack.c.h.b16 %v2178
    %v2405 = vunpack.c.l.b16 %v2179
    %v2406 = vunpack.c.h.b16 %v2179
    %v2407 = vunpack.c.l.b16 %v2180
    %v2408 = vunpack.c.h.b16 %v2180
    %v2409 = vunpack.c.l.b16 %v2181
    %v2410 = vunpack.c.h.b16 %v2181
    %v2411 = vunpack.c.l.b16 %v2182
    %v2412 = vunpack.c.h.b16 %v2182
    %v2413 = vunpack.c.l.b16 %v2183
    %v2414 = vunpack.c.h.b16 %v2183
    %v2415 = vunpack.c.l.b16 %v2184
    %v2416 = vunpack.c.h.b16 %v2184
    %v2417 = vunpack.c.l.b16 %v2185
    %v2418 = vunpack.c.h.b16 %v2185
    %v2419 = vunpack.c.l.b16 %v2186
    %v2420 = vunpack.c.h.b16 %v2186
    %v2421 = vunpack.c.l.b16 %v2187
    %v2422 = vunpack.c.h.b16 %v2187
    %v2423 = vunpack.c.l.b16 %v2188
    %v2424 = vunpack.c.h.b16 %v2188
    %v2425 = vunpack.c.l.b16 %v2189
    %v2426 = vunpack.c.h.b16 %v2189
    %v2427 = vunpack.c.l.b16 %v2190
    %v2428 = vunpack.c.h.b16 %v2190
    %v2429 = vunpack.c.l.b16 %v2191
    %v2430 = vunpack.c.h.b16 %v2191
    %v2431 = vunpack.c.l.b16 %v2192
    %v2432 = vunpack.c.h.b16 %v2192
    %v2433 = vunpack.c.l.b16 %v2193
    %v2434 = vunpack.c.h.b16 %v2193
    %v2435 = vunpack.c.l.b16 %v2194
    %v2436 = vunpack.c.h.b16 %v2194
    %v2437 = vunpack.c.l.b16 %v2195
    %v2438 = vunpack.c.h.b16 %v2195
    %v2439 = vunpack.c.l.b16 %v2196
    %v2440 = vunpack.c.h.b16 %v2196
    %v2441 = vunpack.c.l.b16 %v2197
    %v2442 = vunpack.c.h.b16 %v2197
    %v2443 = vunpack.c.l.b16 %v2198
    %v2444 = vunpack.c.h.b16 %v2198
    %v2445 = vunpack.c.l.b16 %v2199
    %v2446 = vunpack.c.h.b16 %v2199
    %v2447 = vunpack.c.l.b16 %v2200
    %v2448 = vunpack.c.h.b16 %v2200
    %v2449 = vunpack.c.l.b16 %v2201
    %v2450 = vunpack.c.h.b16 %v2201
    %v2451 = vunpack.c.l.b16 %v2202
    %v2452 = vunpack.c.h.b16 %v2202
    %v2453 = vunpack.c.l.b16 %v2203
    %v2454 = vunpack.c.h.b16 %v2203
    %v2455 = vunpack.c.l.b16 %v2204
    %v2456 = vunpack.c.h.b16 %v2204
    %v2457 = vunpack.c.l.b16 %v2205
    %v2458 = vunpack.c.h.b16 %v2205
    %v2459 = vunpack.c.l.b16 %v2206
    %v2460 = vunpack.c.h.b16 %v2206
    %v2461 = vunpack.c.l.b16 %v2207
    %v2462 = vunpack.c.h.b16 %v2207
    %v2463 = vunpack.c.l.b16 %v2208
    %v2464 = vunpack.c.h.b16 %v2208
    %v2465 = vunpack.c.l.b16 %v2209
    %v2466 = vunpack.c.h.b16 %v2209
    %v2467 = vunpack.c.l.b16 %v2210
    %v2468 = vunpack.c.h.b16 %v2210
    %v2469 = vunpack.c.l.b16 %v2211
    %v2470 = vunpack.c.h.b16 %v2211
    %v2471 = vunpack.c.l.b16 %v2212
    %v2472 = vunpack.c.h.b16 %v2212
    %v2473 = vunpack.c.l.b16 %v2213
    %v2474 = vunpack.c.h.b16 %v2213
    %v2475 = vunpack.c.l.b16 %v2214
    %v2476 = vunpack.c.h.b16 %v2214
    %v2477 = vunpack.c.l.b16 %v2215
    %v2478 = vunpack.c.h.b16 %v2215
    %v2479 = vunpack.c.l.b16 %v2216
    %v2480 = vunpack.c.h.b16 %v2216
    %v2481 = vunpack.c.l.b16 %v2217
    %v2482 = vunpack.c.h.b16 %v2217
    %v2483 = vunpack.c.l.b16 %v2218
    %v2484 = vunpack.c.h.b16 %v2218
    %v2485 = vunpack.c.l.b16 %v2219
    %v2486 = vunpack.c.h.b16 %v2219
    %v2487 = vunpack.c.l.b16 %v2220
    %v2488 = vunpack.c.h.b16 %v2220
    %v2489 = vunpack.c.l.b16 %v2221
    %v2490 = vunpack.c.h.b16 %v2221
    %v2491 = vunpack.c.l.b16 %v2222
    %v2492 = vunpack.c.h.b16 %v2222
    %v2493 = vunpack.c.l.b16 %v2223
    %v2494 = vunpack.c.h.b16 %v2223
    %v2495 = vunpack.c.l.b16 %v2224
    %v2496 = vunpack.c.h.b16 %v2224
    %v2497 = vpack.c.b16 %v2377, %v2369
    %v2498 = vpack.c.b16 %v2378, %v2370
    %v2499 = vpack.c.b16 %v2379, %v2371
    %v2500 = vpack.c.b16 %v2380, %v2372
    %v2501 = vpack.c.b16 %v2381, %v2373
    %v2502 = vpack.c.b16 %v2382, %v2374
    %v2503 = vpack.c.b16 %v2383, %v2375
    %v2504 = vpack.c.b16 %v2384, %v2376
    %v2505 = vpack.c.b16 %v2393, %v2385
    %v2506 = vpack.c.b16 %v2394, %v2386
    %v2507 = vpack.c.b16 %v2395, %v2387
    %v2508 = vpack.c.b16 %v2396, %v2388
    %v2509 = vpack.c.b16 %v2397, %v2389
    %v2510 = vpack.c.b16 %v2398, %v2390
    %v2511 = vpack.c.b16 %v2399, %v2391
    %v2512 = vpack.c.b16 %v2400, %v2392
    %v2513 = vpack.c.b16 %v2409, %v2401
    %v2514 = vpack.c.b16 %v2410, %v2402
    %v2515 = vpack.c.b16 %v2411, %v2403
    %v2516 = vpack.c.b16 %v2412, %v2404
    %v2517 = vpack.c.b16 %v2413, %v2405
    %v2518 = vpack.c.b16 %v2414, %v2406
    %v2519 = vpack.c.b16 %v2415, %v2407
    %v2520 = vpack.c.b16 %v2416, %v2408
    %v2521 = vpack.c.b16 %v2425, %v2417
    %v2522 = vpack.c.b16 %v2426, %v2418
    %v2523 = vpack.c.b16 %v2427, %v2419
    %v2524 = vpack.c.b16 %v2428, %v2420
    %v2525 = vpack.c.b16 %v2429, %v2421
    %v2526 = vpack.c.b16 %v2430, %v2422
    %v2527 = vpack.c.b16 %v2431, %v2423
    %v2528 = vpack.c.b16 %v2432, %v2424
    %v2529 = vpack.c.b16 %v2441, %v2433
    %v2530 = vpack.c.b16 %v2442, %v2434
    %v2531 = vpack.c.b16 %v2443, %v2435
    %v2532 = vpack.c.b16 %v2444, %v2436
    %v2533 = vpack.c.b16 %v2445, %v2437
    %v2534 = vpack.c.b16 %v2446, %v2438
    %v2535 = vpack.c.b16 %v2447, %v2439
    %v2536 = vpack.c.b16 %v2448, %v2440
    %v2537 = vpack.c.b16 %v2457, %v2449
    %v2538 = vpack.c.b16 %v2458, %v2450
    %v2539 = vpack.c.b16 %v2459, %v2451
    %v2540 = vpack.c.b16 %v2460, %v2452
    %v2541 = vpack.c.b16 %v2461, %v2453
    %v2542 = vpack.c.b16 %v2462, %v2454
    %v2543 = vpack.c.b16 %v2463, %v2455
    %v2544 = vpack.c.b16 %v2464, %v2456
    %v2545 = vpack.c.b16 %v2473, %v2465
    %v2546 = vpack.c.b16 %v2474, %v2466
    %v2547 = vpack.c.b16 %v2475, %v2467
    %v2548 = vpack.c.b16 %v2476, %v2468
    %v2549 = vpack.c.b16 %v2477, %v2469
    %v2550 = vpack.c.b16 %v2478, %v2470
    %v2551 = vpack.c.b16 %v2479, %v2471
    %v2552 = vpack.c.b16 %v2480, %v2472
    %v2553 = vpack.c.b16 %v2489, %v2481
    %v2554 = vpack.c.b16 %v2490, %v2482
    %v2555 = vpack.c.b16 %v2491, %v2483
    %v2556 = vpack.c.b16 %v2492, %v2484
    %v2557 = vpack.c.b16 %v2493, %v2485
    %v2558 = vpack.c.b16 %v2494, %v2486
    %v2559 = vpack.c.b16 %v2495, %v2487
    %v2560 = vpack.c.b16 %v2496, %v2488
    %2625 = vmatpush.bf16.msra.mxu0 %v2553
    %2626 = vmatpush.bf16.msra.mxu0 %v2545
    %2627 = vmatpush.bf16.msra.mxu0 %v2537
    %2628 = vmatpush.bf16.msra.mxu0 %v2529
    %2629 = vmatpush.bf16.msra.mxu0 %v2521
    %2630 = vmatpush.bf16.msra.mxu0 %v2513
    %2631 = vmatpush.bf16.msra.mxu0 %v2505
    %2632 = vmatpush.bf16.msra.mxu0 %v2497
    %2633 = vmatmul.bf16.gmra.mxu0 %v2297
    %v2634 = vpop.f32.mrf.mxu0
    %v2635 = vadd.f32 %v2244, %v2634
    %v2636 = vpop.f32.mrf.mxu0
    %v2637 = vadd.f32 %v2249, %v2636
    %2638 = vmatmul.bf16.gmra.mxu0 %v2298
    %v2639 = vpop.f32.mrf.mxu0
    %v2640 = vadd.f32 %v2254, %v2639
    %v2641 = vpop.f32.mrf.mxu0
    %v2642 = vadd.f32 %v2259, %v2641
    %2643 = vmatmul.bf16.gmra.mxu0 %v2299
    %v2644 = vpop.f32.mrf.mxu0
    %v2645 = vadd.f32 %v2264, %v2644
    %v2646 = vpop.f32.mrf.mxu0
    %v2647 = vadd.f32 %v2269, %v2646
    %2648 = vmatmul.bf16.gmra.mxu0 %v2300
    %v2649 = vpop.f32.mrf.mxu0
    %v2650 = vadd.f32 %v2274, %v2649
    %v2651 = vpop.f32.mrf.mxu0
    %v2652 = vadd.f32 %v2279, %v2651
    %2653 = vdwg.mxu0
    %2654 = vmatpush.bf16.msra.mxu0 %v2554
    %2655 = vmatpush.bf16.msra.mxu0 %v2546
    %2656 = vmatpush.bf16.msra.mxu0 %v2538
    %2657 = vmatpush.bf16.msra.mxu0 %v2530
    %2658 = vmatpush.bf16.msra.mxu0 %v2522
    %2659 = vmatpush.bf16.msra.mxu0 %v2514
    %2660 = vmatpush.bf16.msra.mxu0 %v2506
    %2661 = vmatpush.bf16.msra.mxu0 %v2498
    %2662 = vmatmul.bf16.gmra.mxu0 %v2297
    %v2663 = vpop.f32.mrf.mxu0
    %v2664 = vadd.f32 %v2244, %v2663
    %v2665 = vpop.f32.mrf.mxu0
    %v2666 = vadd.f32 %v2249, %v2665
    %2667 = vmatmul.bf16.gmra.mxu0 %v2298
    %v2668 = vpop.f32.mrf.mxu0
    %v2669 = vadd.f32 %v2254, %v2668
    %v2670 = vpop.f32.mrf.mxu0
    %v2671 = vadd.f32 %v2259, %v2670
    %2672 = vmatmul.bf16.gmra.mxu0 %v2299
    %v2673 = vpop.f32.mrf.mxu0
    %v2674 = vadd.f32 %v2264, %v2673
    %v2675 = vpop.f32.mrf.mxu0
    %v2676 = vadd.f32 %v2269, %v2675
    %2677 = vmatmul.bf16.gmra.mxu0 %v2300
    %v2678 = vpop.f32.mrf.mxu0
    %v2679 = vadd.f32 %v2274, %v2678
    %v2680 = vpop.f32.mrf.mxu0
    %v2681 = vadd.f32 %v2279, %v2680
    %2682 = vdwg.mxu0
    %2683 = vmatpush.bf16.msra.mxu0 %v2555
    %2684 = vmatpush.bf16.msra.mxu0 %v2547
    %2685 = vmatpush.bf16.msra.mxu0 %v2539
    %2686 = vmatpush.bf16.msra.mxu0 %v2531
    %2687 = vmatpush.bf16.msra.mxu0 %v2523
    %2688 = vmatpush.bf16.msra.mxu0 %v2515
    %2689 = vmatpush.bf16.msra.mxu0 %v2507
    %2690 = vmatpush.bf16.msra.mxu0 %v2499
    %2691 = vmatmul.bf16.gmra.mxu0 %v2297
    %v2692 = vpop.f32.mrf.mxu0
    %v2693 = vadd.f32 %v2244, %v2692
    %v2694 = vpop.f32.mrf.mxu0
    %v2695 = vadd.f32 %v2249, %v2694
    %2696 = vmatmul.bf16.gmra.mxu0 %v2298
    %v2697 = vpop.f32.mrf.mxu0
    %v2698 = vadd.f32 %v2254, %v2697
    %v2699 = vpop.f32.mrf.mxu0
    %v2700 = vadd.f32 %v2259, %v2699
    %2701 = vmatmul.bf16.gmra.mxu0 %v2299
    %v2702 = vpop.f32.mrf.mxu0
    %v2703 = vadd.f32 %v2264, %v2702
    %v2704 = vpop.f32.mrf.mxu0
    %v2705 = vadd.f32 %v2269, %v2704
    %2706 = vmatmul.bf16.gmra.mxu0 %v2300
    %v2707 = vpop.f32.mrf.mxu0
    %v2708 = vadd.f32 %v2274, %v2707
    %v2709 = vpop.f32.mrf.mxu0
    %v2710 = vadd.f32 %v2279, %v2709
    %2711 = vdwg.mxu0
    %2712 = vmatpush.bf16.msra.mxu0 %v2556
    %2713 = vmatpush.bf16.msra.mxu0 %v2548
    %2714 = vmatpush.bf16.msra.mxu0 %v2540
    %2715 = vmatpush.bf16.msra.mxu0 %v2532
    %2716 = vmatpush.bf16.msra.mxu0 %v2524
    %2717 = vmatpush.bf16.msra.mxu0 %v2516
    %2718 = vmatpush.bf16.msra.mxu0 %v2508
    %2719 = vmatpush.bf16.msra.mxu0 %v2500
    %2720 = vmatmul.bf16.gmra.mxu0 %v2297
    %v2721 = vpop.f32.mrf.mxu0
    %v2722 = vadd.f32 %v2244, %v2721
    %v2723 = vpop.f32.mrf.mxu0
    %v2724 = vadd.f32 %v2249, %v2723
    %2725 = vmatmul.bf16.gmra.mxu0 %v2298
    %v2726 = vpop.f32.mrf.mxu0
    %v2727 = vadd.f32 %v2254, %v2726
    %v2728 = vpop.f32.mrf.mxu0
    %v2729 = vadd.f32 %v2259, %v2728
    %2730 = vmatmul.bf16.gmra.mxu0 %v2299
    %v2731 = vpop.f32.mrf.mxu0
    %v2732 = vadd.f32 %v2264, %v2731
    %v2733 = vpop.f32.mrf.mxu0
    %v2734 = vadd.f32 %v2269, %v2733
    %2735 = vmatmul.bf16.gmra.mxu0 %v2300
    %v2736 = vpop.f32.mrf.mxu0
    %v2737 = vadd.f32 %v2274, %v2736
    %v2738 = vpop.f32.mrf.mxu0
    %v2739 = vadd.f32 %v2279, %v2738
    %2740 = vdwg.mxu0
    %2741 = vmatpush.bf16.msra.mxu0 %v2557
    %2742 = vmatpush.bf16.msra.mxu0 %v2549
    %2743 = vmatpush.bf16.msra.mxu0 %v2541
    %2744 = vmatpush.bf16.msra.mxu0 %v2533
    %2745 = vmatpush.bf16.msra.mxu0 %v2525
    %2746 = vmatpush.bf16.msra.mxu0 %v2517
    %2747 = vmatpush.bf16.msra.mxu0 %v2509
    %2748 = vmatpush.bf16.msra.mxu0 %v2501
    %2749 = vmatmul.bf16.gmra.mxu0 %v2297
    %v2750 = vpop.f32.mrf.mxu0
    %v2751 = vadd.f32 %v2244, %v2750
    %v2752 = vpop.f32.mrf.mxu0
    %v2753 = vadd.f32 %v2249, %v2752
    %2754 = vmatmul.bf16.gmra.mxu0 %v2298
    %v2755 = vpop.f32.mrf.mxu0
    %v2756 = vadd.f32 %v2254, %v2755
    %v2757 = vpop.f32.mrf.mxu0
    %v2758 = vadd.f32 %v2259, %v2757
    %2759 = vmatmul.bf16.gmra.mxu0 %v2299
    %v2760 = vpop.f32.mrf.mxu0
    %v2761 = vadd.f32 %v2264, %v2760
    %v2762 = vpop.f32.mrf.mxu0
    %v2763 = vadd.f32 %v2269, %v2762
    %2764 = vmatmul.bf16.gmra.mxu0 %v2300
    %v2765 = vpop.f32.mrf.mxu0
    %v2766 = vadd.f32 %v2274, %v2765
    %v2767 = vpop.f32.mrf.mxu0
    %v2768 = vadd.f32 %v2279, %v2767
    %2769 = vdwg.mxu0
    %2770 = vmatpush.bf16.msra.mxu0 %v2558
    %2771 = vmatpush.bf16.msra.mxu0 %v2550
    %2772 = vmatpush.bf16.msra.mxu0 %v2542
    %2773 = vmatpush.bf16.msra.mxu0 %v2534
    %2774 = vmatpush.bf16.msra.mxu0 %v2526
    %2775 = vmatpush.bf16.msra.mxu0 %v2518
    %2776 = vmatpush.bf16.msra.mxu0 %v2510
    %2777 = vmatpush.bf16.msra.mxu0 %v2502
    %2778 = vmatmul.bf16.gmra.mxu0 %v2297
    %v2779 = vpop.f32.mrf.mxu0
    %v2780 = vadd.f32 %v2244, %v2779
    %v2781 = vpop.f32.mrf.mxu0
    %v2782 = vadd.f32 %v2249, %v2781
    %2783 = vmatmul.bf16.gmra.mxu0 %v2298
    %v2784 = vpop.f32.mrf.mxu0
    %v2785 = vadd.f32 %v2254, %v2784
    %v2786 = vpop.f32.mrf.mxu0
    %v2787 = vadd.f32 %v2259, %v2786
    %2788 = vmatmul.bf16.gmra.mxu0 %v2299
    %v2789 = vpop.f32.mrf.mxu0
    %v2790 = vadd.f32 %v2264, %v2789
    %v2791 = vpop.f32.mrf.mxu0
    %v2792 = vadd.f32 %v2269, %v2791
    %2793 = vmatmul.bf16.gmra.mxu0 %v2300
    %v2794 = vpop.f32.mrf.mxu0
    %v2795 = vadd.f32 %v2274, %v2794
    %v2796 = vpop.f32.mrf.mxu0
    %v2797 = vadd.f32 %v2279, %v2796
    %2798 = vdwg.mxu0
    %2799 = vmatpush.bf16.msra.mxu0 %v2559
    %2800 = vmatpush.bf16.msra.mxu0 %v2551
    %2801 = vmatpush.bf16.msra.mxu0 %v2543
    %2802 = vmatpush.bf16.msra.mxu0 %v2535
    %2803 = vmatpush.bf16.msra.mxu0 %v2527
    %2804 = vmatpush.bf16.msra.mxu0 %v2519
    %2805 = vmatpush.bf16.msra.mxu0 %v2511
    %2806 = vmatpush.bf16.msra.mxu0 %v2503
    %2807 = vmatmul.bf16.gmra.mxu0 %v2297
    %v2808 = vpop.f32.mrf.mxu0
    %v2809 = vadd.f32 %v2244, %v2808
    %v2810 = vpop.f32.mrf.mxu0
    %v2811 = vadd.f32 %v2249, %v2810
    %2812 = vmatmul.bf16.gmra.mxu0 %v2298
    %v2813 = vpop.f32.mrf.mxu0
    %v2814 = vadd.f32 %v2254, %v2813
    %v2815 = vpop.f32.mrf.mxu0
    %v2816 = vadd.f32 %v2259, %v2815
    %2817 = vmatmul.bf16.gmra.mxu0 %v2299
    %v2818 = vpop.f32.mrf.mxu0
    %v2819 = vadd.f32 %v2264, %v2818
    %v2820 = vpop.f32.mrf.mxu0
    %v2821 = vadd.f32 %v2269, %v2820
    %2822 = vmatmul.bf16.gmra.mxu0 %v2300
    %v2823 = vpop.f32.mrf.mxu0
    %v2824 = vadd.f32 %v2274, %v2823
    %v2825 = vpop.f32.mrf.mxu0
    %v2826 = vadd.f32 %v2279, %v2825
    %2827 = vdwg.mxu0
    %2828 = vmatpush.bf16.msra.mxu0 %v2560
    %2829 = vmatpush.bf16.msra.mxu0 %v2552
    %2830 = vmatpush.bf16.msra.mxu0 %v2544
    %2831 = vmatpush.bf16.msra.mxu0 %v2536
    %2832 = vmatpush.bf16.msra.mxu0 %v2528
    %2833 = vmatpush.bf16.msra.mxu0 %v2520
    %2834 = vmatpush.bf16.msra.mxu0 %v2512
    %2835 = vmatpush.bf16.msra.mxu0 %v2504
    %2836 = vmatmul.bf16.gmra.mxu0 %v2297
    %v2837 = vpop.f32.mrf.mxu0
    %v2838 = vadd.f32 %v2244, %v2837
    %v2839 = vpop.f32.mrf.mxu0
    %v2840 = vadd.f32 %v2249, %v2839
    %2841 = vmatmul.bf16.gmra.mxu0 %v2298
    %v2842 = vpop.f32.mrf.mxu0
    %v2843 = vadd.f32 %v2254, %v2842
    %v2844 = vpop.f32.mrf.mxu0
    %v2845 = vadd.f32 %v2259, %v2844
    %2846 = vmatmul.bf16.gmra.mxu0 %v2299
    %v2847 = vpop.f32.mrf.mxu0
    %v2848 = vadd.f32 %v2264, %v2847
    %v2849 = vpop.f32.mrf.mxu0
    %v2850 = vadd.f32 %v2269, %v2849
    %2851 = vmatmul.bf16.gmra.mxu0 %v2300
    %v2852 = vpop.f32.mrf.mxu0
    %v2853 = vadd.f32 %v2274, %v2852
    %v2854 = vpop.f32.mrf.mxu0
    %v2855 = vadd.f32 %v2279, %v2854
    %2856 = vdwg.mxu0
    %v2857 = vpack.c.bf16 %v2664, %v2635
    %v2858 = vpack.c.bf16 %v2722, %v2693
    %v2859 = vpack.c.bf16 %v2780, %v2751
    %v2860 = vpack.c.bf16 %v2838, %v2809
    %v2861 = vpack.c.bf16 %v2666, %v2637
    %v2862 = vpack.c.bf16 %v2724, %v2695
    %v2863 = vpack.c.bf16 %v2782, %v2753
    %v2864 = vpack.c.bf16 %v2840, %v2811
    %v2865 = vpack.c.bf16 %v2669, %v2640
    %v2866 = vpack.c.bf16 %v2727, %v2698
    %v2867 = vpack.c.bf16 %v2785, %v2756
    %v2868 = vpack.c.bf16 %v2843, %v2814
    %v2869 = vpack.c.bf16 %v2671, %v2642
    %v2870 = vpack.c.bf16 %v2729, %v2700
    %v2871 = vpack.c.bf16 %v2787, %v2758
    %v2872 = vpack.c.bf16 %v2845, %v2816
    %v2873 = vpack.c.bf16 %v2674, %v2645
    %v2874 = vpack.c.bf16 %v2732, %v2703
    %v2875 = vpack.c.bf16 %v2790, %v2761
    %v2876 = vpack.c.bf16 %v2848, %v2819
    %v2877 = vpack.c.bf16 %v2676, %v2647
    %v2878 = vpack.c.bf16 %v2734, %v2705
    %v2879 = vpack.c.bf16 %v2792, %v2763
    %v2880 = vpack.c.bf16 %v2850, %v2821
    %v2881 = vpack.c.bf16 %v2679, %v2650
    %v2882 = vpack.c.bf16 %v2737, %v2708
    %v2883 = vpack.c.bf16 %v2795, %v2766
    %v2884 = vpack.c.bf16 %v2853, %v2824
    %v2885 = vpack.c.bf16 %v2681, %v2652
    %v2886 = vpack.c.bf16 %v2739, %v2710
    %v2887 = vpack.c.bf16 %v2797, %v2768
    %v2888 = vpack.c.bf16 %v2855, %v2826
    %v2889 = vunpack.c.l.bf16 %v2857
    %v2890 = vunpack.c.h.bf16 %v2857
    %v2891 = vunpack.c.l.bf16 %v2858
    %v2892 = vunpack.c.h.bf16 %v2858
    %v2893 = vunpack.c.l.bf16 %v2859
    %v2894 = vunpack.c.h.bf16 %v2859
    %v2895 = vunpack.c.l.bf16 %v2860
    %v2896 = vunpack.c.h.bf16 %v2860
    %v2897 = vunpack.c.l.bf16 %v2861
    %v2898 = vunpack.c.h.bf16 %v2861
    %v2899 = vunpack.c.l.bf16 %v2862
    %v2900 = vunpack.c.h.bf16 %v2862
    %v2901 = vunpack.c.l.bf16 %v2863
    %v2902 = vunpack.c.h.bf16 %v2863
    %v2903 = vunpack.c.l.bf16 %v2864
    %v2904 = vunpack.c.h.bf16 %v2864
    %v2905 = vunpack.c.l.bf16 %v2865
    %v2906 = vunpack.c.h.bf16 %v2865
    %v2907 = vunpack.c.l.bf16 %v2866
    %v2908 = vunpack.c.h.bf16 %v2866
    %v2909 = vunpack.c.l.bf16 %v2867
    %v2910 = vunpack.c.h.bf16 %v2867
    %v2911 = vunpack.c.l.bf16 %v2868
    %v2912 = vunpack.c.h.bf16 %v2868
    %v2913 = vunpack.c.l.bf16 %v2869
    %v2914 = vunpack.c.h.bf16 %v2869
    %v2915 = vunpack.c.l.bf16 %v2870
    %v2916 = vunpack.c.h.bf16 %v2870
    %v2917 = vunpack.c.l.bf16 %v2871
    %v2918 = vunpack.c.h.bf16 %v2871
    %v2919 = vunpack.c.l.bf16 %v2872
    %v2920 = vunpack.c.h.bf16 %v2872
    %v2921 = vunpack.c.l.bf16 %v2873
    %v2922 = vunpack.c.h.bf16 %v2873
    %v2923 = vunpack.c.l.bf16 %v2874
    %v2924 = vunpack.c.h.bf16 %v2874
    %v2925 = vunpack.c.l.bf16 %v2875
    %v2926 = vunpack.c.h.bf16 %v2875
    %v2927 = vunpack.c.l.bf16 %v2876
    %v2928 = vunpack.c.h.bf16 %v2876
    %v2929 = vunpack.c.l.bf16 %v2877
    %v2930 = vunpack.c.h.bf16 %v2877
    %v2931 = vunpack.c.l.bf16 %v2878
    %v2932 = vunpack.c.h.bf16 %v2878
    %v2933 = vunpack.c.l.bf16 %v2879
    %v2934 = vunpack.c.h.bf16 %v2879
    %v2935 = vunpack.c.l.bf16 %v2880
    %v2936 = vunpack.c.h.bf16 %v2880
    %v2937 = vunpack.c.l.bf16 %v2881
    %v2938 = vunpack.c.h.bf16 %v2881
    %v2939 = vunpack.c.l.bf16 %v2882
    %v2940 = vunpack.c.h.bf16 %v2882
    %v2941 = vunpack.c.l.bf16 %v2883
    %v2942 = vunpack.c.h.bf16 %v2883
    %v2943 = vunpack.c.l.bf16 %v2884
    %v2944 = vunpack.c.h.bf16 %v2884
    %v2945 = vunpack.c.l.bf16 %v2885
    %v2946 = vunpack.c.h.bf16 %v2885
    %v2947 = vunpack.c.l.bf16 %v2886
    %v2948 = vunpack.c.h.bf16 %v2886
    %v2949 = vunpack.c.l.bf16 %v2887
    %v2950 = vunpack.c.h.bf16 %v2887
    %v2951 = vunpack.c.l.bf16 %v2888
    %v2952 = vunpack.c.h.bf16 %v2888
    %vm2953 = vcmp.gt.f32.partialorder %v2889, 0.0
    %vm2954 = vcmp.gt.f32.partialorder %v2890, 0.0
    %vm2955 = vcmp.gt.f32.partialorder %v2891, 0.0
    %vm2956 = vcmp.gt.f32.partialorder %v2892, 0.0
    %vm2957 = vcmp.gt.f32.partialorder %v2893, 0.0
    %vm2958 = vcmp.gt.f32.partialorder %v2894, 0.0
    %vm2959 = vcmp.gt.f32.partialorder %v2895, 0.0
    %vm2960 = vcmp.gt.f32.partialorder %v2896, 0.0
    %vm2961 = vcmp.gt.f32.partialorder %v2897, 0.0
    %vm2962 = vcmp.gt.f32.partialorder %v2898, 0.0
    %vm2963 = vcmp.gt.f32.partialorder %v2899, 0.0
    %vm2964 = vcmp.gt.f32.partialorder %v2900, 0.0
    %vm2965 = vcmp.gt.f32.partialorder %v2901, 0.0
    %vm2966 = vcmp.gt.f32.partialorder %v2902, 0.0
    %vm2967 = vcmp.gt.f32.partialorder %v2903, 0.0
    %vm2968 = vcmp.gt.f32.partialorder %v2904, 0.0
    %vm2969 = vcmp.gt.f32.partialorder %v2905, 0.0
    %vm2970 = vcmp.gt.f32.partialorder %v2906, 0.0
    %vm2971 = vcmp.gt.f32.partialorder %v2907, 0.0
    %vm2972 = vcmp.gt.f32.partialorder %v2908, 0.0
    %vm2973 = vcmp.gt.f32.partialorder %v2909, 0.0
    %vm2974 = vcmp.gt.f32.partialorder %v2910, 0.0
    %vm2975 = vcmp.gt.f32.partialorder %v2911, 0.0
    %vm2976 = vcmp.gt.f32.partialorder %v2912, 0.0
    %vm2977 = vcmp.gt.f32.partialorder %v2913, 0.0
    %vm2978 = vcmp.gt.f32.partialorder %v2914, 0.0
    %vm2979 = vcmp.gt.f32.partialorder %v2915, 0.0
    %vm2980 = vcmp.gt.f32.partialorder %v2916, 0.0
    %vm2981 = vcmp.gt.f32.partialorder %v2917, 0.0
    %vm2982 = vcmp.gt.f32.partialorder %v2918, 0.0
    %vm2983 = vcmp.gt.f32.partialorder %v2919, 0.0
    %vm2984 = vcmp.gt.f32.partialorder %v2920, 0.0
    %vm2985 = vcmp.gt.f32.partialorder %v2921, 0.0
    %vm2986 = vcmp.gt.f32.partialorder %v2922, 0.0
    %vm2987 = vcmp.gt.f32.partialorder %v2923, 0.0
    %vm2988 = vcmp.gt.f32.partialorder %v2924, 0.0
    %vm2989 = vcmp.gt.f32.partialorder %v2925, 0.0
    %vm2990 = vcmp.gt.f32.partialorder %v2926, 0.0
    %vm2991 = vcmp.gt.f32.partialorder %v2927, 0.0
    %vm2992 = vcmp.gt.f32.partialorder %v2928, 0.0
    %vm2993 = vcmp.gt.f32.partialorder %v2929, 0.0
    %vm2994 = vcmp.gt.f32.partialorder %v2930, 0.0
    %vm2995 = vcmp.gt.f32.partialorder %v2931, 0.0
    %vm2996 = vcmp.gt.f32.partialorder %v2932, 0.0
    %vm2997 = vcmp.gt.f32.partialorder %v2933, 0.0
    %vm2998 = vcmp.gt.f32.partialorder %v2934, 0.0
    %vm2999 = vcmp.gt.f32.partialorder %v2935, 0.0
    %vm3000 = vcmp.gt.f32.partialorder %v2936, 0.0
    %vm3001 = vcmp.gt.f32.partialorder %v2937, 0.0
    %vm3002 = vcmp.gt.f32.partialorder %v2938, 0.0
    %vm3003 = vcmp.gt.f32.partialorder %v2939, 0.0
    %vm3004 = vcmp.gt.f32.partialorder %v2940, 0.0
    %vm3005 = vcmp.gt.f32.partialorder %v2941, 0.0
    %vm3006 = vcmp.gt.f32.partialorder %v2942, 0.0
    %vm3007 = vcmp.gt.f32.partialorder %v2943, 0.0
    %vm3008 = vcmp.gt.f32.partialorder %v2944, 0.0
    %vm3009 = vcmp.gt.f32.partialorder %v2945, 0.0
    %vm3010 = vcmp.gt.f32.partialorder %v2946, 0.0
    %vm3011 = vcmp.gt.f32.partialorder %v2947, 0.0
    %vm3012 = vcmp.gt.f32.partialorder %v2948, 0.0
    %vm3013 = vcmp.gt.f32.partialorder %v2949, 0.0
    %vm3014 = vcmp.gt.f32.partialorder %v2950, 0.0
    %vm3015 = vcmp.gt.f32.partialorder %v2951, 0.0
    %vm3016 = vcmp.gt.f32.partialorder %v2952, 0.0
    %v3017 = vmin.f32 %v2889, 0.0
    %v3018 = vmin.f32 %v2890, 0.0
    %v3019 = vmin.f32 %v2891, 0.0
    %v3020 = vmin.f32 %v2892, 0.0
    %v3021 = vmin.f32 %v2893, 0.0
    %v3022 = vmin.f32 %v2894, 0.0
    %v3023 = vmin.f32 %v2895, 0.0
    %v3024 = vmin.f32 %v2896, 0.0
    %v3025 = vmin.f32 %v2897, 0.0
    %v3026 = vmin.f32 %v2898, 0.0
    %v3027 = vmin.f32 %v2899, 0.0
    %v3028 = vmin.f32 %v2900, 0.0
    %v3029 = vmin.f32 %v2901, 0.0
    %v3030 = vmin.f32 %v2902, 0.0
    %v3031 = vmin.f32 %v2903, 0.0
    %v3032 = vmin.f32 %v2904, 0.0
    %v3033 = vmin.f32 %v2905, 0.0
    %v3034 = vmin.f32 %v2906, 0.0
    %v3035 = vmin.f32 %v2907, 0.0
    %v3036 = vmin.f32 %v2908, 0.0
    %v3037 = vmin.f32 %v2909, 0.0
    %v3038 = vmin.f32 %v2910, 0.0
    %v3039 = vmin.f32 %v2911, 0.0
    %v3040 = vmin.f32 %v2912, 0.0
    %v3041 = vmin.f32 %v2913, 0.0
    %v3042 = vmin.f32 %v2914, 0.0
    %v3043 = vmin.f32 %v2915, 0.0
    %v3044 = vmin.f32 %v2916, 0.0
    %v3045 = vmin.f32 %v2917, 0.0
    %v3046 = vmin.f32 %v2918, 0.0
    %v3047 = vmin.f32 %v2919, 0.0
    %v3048 = vmin.f32 %v2920, 0.0
    %v3049 = vmin.f32 %v2921, 0.0
    %v3050 = vmin.f32 %v2922, 0.0
    %v3051 = vmin.f32 %v2923, 0.0
    %v3052 = vmin.f32 %v2924, 0.0
    %v3053 = vmin.f32 %v2925, 0.0
    %v3054 = vmin.f32 %v2926, 0.0
    %v3055 = vmin.f32 %v2927, 0.0
    %v3056 = vmin.f32 %v2928, 0.0
    %v3057 = vmin.f32 %v2929, 0.0
    %v3058 = vmin.f32 %v2930, 0.0
    %v3059 = vmin.f32 %v2931, 0.0
    %v3060 = vmin.f32 %v2932, 0.0
    %v3061 = vmin.f32 %v2933, 0.0
    %v3062 = vmin.f32 %v2934, 0.0
    %v3063 = vmin.f32 %v2935, 0.0
    %v3064 = vmin.f32 %v2936, 0.0
    %v3065 = vmin.f32 %v2937, 0.0
    %v3066 = vmin.f32 %v2938, 0.0
    %v3067 = vmin.f32 %v2939, 0.0
    %v3068 = vmin.f32 %v2940, 0.0
    %v3069 = vmin.f32 %v2941, 0.0
    %v3070 = vmin.f32 %v2942, 0.0
    %v3071 = vmin.f32 %v2943, 0.0
    %v3072 = vmin.f32 %v2944, 0.0
    %v3073 = vmin.f32 %v2945, 0.0
    %v3074 = vmin.f32 %v2946, 0.0
    %v3075 = vmin.f32 %v2947, 0.0
    %v3076 = vmin.f32 %v2948, 0.0
    %v3077 = vmin.f32 %v2949, 0.0
    %v3078 = vmin.f32 %v2950, 0.0
    %v3079 = vmin.f32 %v2951, 0.0
    %v3080 = vmin.f32 %v2952, 0.0
    %v3081 = vpack.c.bf16 %v3018, %v3017
    %v3082 = vpack.c.bf16 %v3020, %v3019
    %v3083 = vpack.c.bf16 %v3022, %v3021
    %v3084 = vpack.c.bf16 %v3024, %v3023
    %v3085 = vpack.c.bf16 %v3026, %v3025
    %v3086 = vpack.c.bf16 %v3028, %v3027
    %v3087 = vpack.c.bf16 %v3030, %v3029
    %v3088 = vpack.c.bf16 %v3032, %v3031
    %v3089 = vpack.c.bf16 %v3034, %v3033
    %v3090 = vpack.c.bf16 %v3036, %v3035
    %v3091 = vpack.c.bf16 %v3038, %v3037
    %v3092 = vpack.c.bf16 %v3040, %v3039
    %v3093 = vpack.c.bf16 %v3042, %v3041
    %v3094 = vpack.c.bf16 %v3044, %v3043
    %v3095 = vpack.c.bf16 %v3046, %v3045
    %v3096 = vpack.c.bf16 %v3048, %v3047
    %v3097 = vpack.c.bf16 %v3050, %v3049
    %v3098 = vpack.c.bf16 %v3052, %v3051
    %v3099 = vpack.c.bf16 %v3054, %v3053
    %v3100 = vpack.c.bf16 %v3056, %v3055
    %v3101 = vpack.c.bf16 %v3058, %v3057
    %v3102 = vpack.c.bf16 %v3060, %v3059
    %v3103 = vpack.c.bf16 %v3062, %v3061
    %v3104 = vpack.c.bf16 %v3064, %v3063
    %v3105 = vpack.c.bf16 %v3066, %v3065
    %v3106 = vpack.c.bf16 %v3068, %v3067
    %v3107 = vpack.c.bf16 %v3070, %v3069
    %v3108 = vpack.c.bf16 %v3072, %v3071
    %v3109 = vpack.c.bf16 %v3074, %v3073
    %v3110 = vpack.c.bf16 %v3076, %v3075
    %v3111 = vpack.c.bf16 %v3078, %v3077
    %v3112 = vpack.c.bf16 %v3080, %v3079
    %v3113 = vunpack.c.l.bf16 %v3081
    %v3114 = vunpack.c.h.bf16 %v3081
    %v3115 = vunpack.c.l.bf16 %v3082
    %v3116 = vunpack.c.h.bf16 %v3082
    %v3117 = vunpack.c.l.bf16 %v3083
    %v3118 = vunpack.c.h.bf16 %v3083
    %v3119 = vunpack.c.l.bf16 %v3084
    %v3120 = vunpack.c.h.bf16 %v3084
    %v3121 = vunpack.c.l.bf16 %v3085
    %v3122 = vunpack.c.h.bf16 %v3085
    %v3123 = vunpack.c.l.bf16 %v3086
    %v3124 = vunpack.c.h.bf16 %v3086
    %v3125 = vunpack.c.l.bf16 %v3087
    %v3126 = vunpack.c.h.bf16 %v3087
    %v3127 = vunpack.c.l.bf16 %v3088
    %v3128 = vunpack.c.h.bf16 %v3088
    %v3129 = vunpack.c.l.bf16 %v3089
    %v3130 = vunpack.c.h.bf16 %v3089
    %v3131 = vunpack.c.l.bf16 %v3090
    %v3132 = vunpack.c.h.bf16 %v3090
    %v3133 = vunpack.c.l.bf16 %v3091
    %v3134 = vunpack.c.h.bf16 %v3091
    %v3135 = vunpack.c.l.bf16 %v3092
    %v3136 = vunpack.c.h.bf16 %v3092
    %v3137 = vunpack.c.l.bf16 %v3093
    %v3138 = vunpack.c.h.bf16 %v3093
    %v3139 = vunpack.c.l.bf16 %v3094
    %v3140 = vunpack.c.h.bf16 %v3094
    %v3141 = vunpack.c.l.bf16 %v3095
    %v3142 = vunpack.c.h.bf16 %v3095
    %v3143 = vunpack.c.l.bf16 %v3096
    %v3144 = vunpack.c.h.bf16 %v3096
    %v3145 = vunpack.c.l.bf16 %v3097
    %v3146 = vunpack.c.h.bf16 %v3097
    %v3147 = vunpack.c.l.bf16 %v3098
    %v3148 = vunpack.c.h.bf16 %v3098
    %v3149 = vunpack.c.l.bf16 %v3099
    %v3150 = vunpack.c.h.bf16 %v3099
    %v3151 = vunpack.c.l.bf16 %v3100
    %v3152 = vunpack.c.h.bf16 %v3100
    %v3153 = vunpack.c.l.bf16 %v3101
    %v3154 = vunpack.c.h.bf16 %v3101
    %v3155 = vunpack.c.l.bf16 %v3102
    %v3156 = vunpack.c.h.bf16 %v3102
    %v3157 = vunpack.c.l.bf16 %v3103
    %v3158 = vunpack.c.h.bf16 %v3103
    %v3159 = vunpack.c.l.bf16 %v3104
    %v3160 = vunpack.c.h.bf16 %v3104
    %v3161 = vunpack.c.l.bf16 %v3105
    %v3162 = vunpack.c.h.bf16 %v3105
    %v3163 = vunpack.c.l.bf16 %v3106
    %v3164 = vunpack.c.h.bf16 %v3106
    %v3165 = vunpack.c.l.bf16 %v3107
    %v3166 = vunpack.c.h.bf16 %v3107
    %v3167 = vunpack.c.l.bf16 %v3108
    %v3168 = vunpack.c.h.bf16 %v3108
    %v3169 = vunpack.c.l.bf16 %v3109
    %v3170 = vunpack.c.h.bf16 %v3109
    %v3171 = vunpack.c.l.bf16 %v3110
    %v3172 = vunpack.c.h.bf16 %v3110
    %v3173 = vunpack.c.l.bf16 %v3111
    %v3174 = vunpack.c.h.bf16 %v3111
    %v3175 = vunpack.c.l.bf16 %v3112
    %v3176 = vunpack.c.h.bf16 %v3112
    %v3177 = vmul.f32 %v3113, 1.442695
    %v3178 = vpow.pop %v3177
    %v3179 = vmul.f32 %v3114, 1.442695
    %v3180 = vpow.pop %v3179
    %v3181 = vmul.f32 %v3115, 1.442695
    %v3182 = vpow.pop %v3181
    %v3183 = vmul.f32 %v3116, 1.442695
    %v3184 = vpow.pop %v3183
    %v3185 = vmul.f32 %v3117, 1.442695
    %v3186 = vpow.pop %v3185
    %v3187 = vmul.f32 %v3118, 1.442695
    %v3188 = vpow.pop %v3187
    %v3189 = vmul.f32 %v3119, 1.442695
    %v3190 = vpow.pop %v3189
    %v3191 = vmul.f32 %v3120, 1.442695
    %v3192 = vpow.pop %v3191
    %v3193 = vmul.f32 %v3121, 1.442695
    %v3194 = vpow.pop %v3193
    %v3195 = vmul.f32 %v3122, 1.442695
    %v3196 = vpow.pop %v3195
    %v3197 = vmul.f32 %v3123, 1.442695
    %v3198 = vpow.pop %v3197
    %v3199 = vmul.f32 %v3124, 1.442695
    %v3200 = vpow.pop %v3199
    %v3201 = vmul.f32 %v3125, 1.442695
    %v3202 = vpow.pop %v3201
    %v3203 = vmul.f32 %v3126, 1.442695
    %v3204 = vpow.pop %v3203
    %v3205 = vmul.f32 %v3127, 1.442695
    %v3206 = vpow.pop %v3205
    %v3207 = vmul.f32 %v3128, 1.442695
    %v3208 = vpow.pop %v3207
    %v3209 = vmul.f32 %v3129, 1.442695
    %v3210 = vpow.pop %v3209
    %v3211 = vmul.f32 %v3130, 1.442695
    %v3212 = vpow.pop %v3211
    %v3213 = vmul.f32 %v3131, 1.442695
    %v3214 = vpow.pop %v3213
    %v3215 = vmul.f32 %v3132, 1.442695
    %v3216 = vpow.pop %v3215
    %v3217 = vmul.f32 %v3133, 1.442695
    %v3218 = vpow.pop %v3217
    %v3219 = vmul.f32 %v3134, 1.442695
    %v3220 = vpow.pop %v3219
    %v3221 = vmul.f32 %v3135, 1.442695
    %v3222 = vpow.pop %v3221
    %v3223 = vmul.f32 %v3136, 1.442695
    %v3224 = vpow.pop %v3223
    %v3225 = vmul.f32 %v3137, 1.442695
    %v3226 = vpow.pop %v3225
    %v3227 = vmul.f32 %v3138, 1.442695
    %v3228 = vpow.pop %v3227
    %v3229 = vmul.f32 %v3139, 1.442695
    %v3230 = vpow.pop %v3229
    %v3231 = vmul.f32 %v3140, 1.442695
    %v3232 = vpow.pop %v3231
    %v3233 = vmul.f32 %v3141, 1.442695
    %v3234 = vpow.pop %v3233
    %v3235 = vmul.f32 %v3142, 1.442695
    %v3236 = vpow.pop %v3235
    %v3237 = vmul.f32 %v3143, 1.442695
    %v3238 = vpow.pop %v3237
    %v3239 = vmul.f32 %v3144, 1.442695
    %v3240 = vpow.pop %v3239
    %v3241 = vmul.f32 %v3145, 1.442695
    %v3242 = vpow.pop %v3241
    %v3243 = vmul.f32 %v3146, 1.442695
    %v3244 = vpow.pop %v3243
    %v3245 = vmul.f32 %v3147, 1.442695
    %v3246 = vpow.pop %v3245
    %v3247 = vmul.f32 %v3148, 1.442695
    %v3248 = vpow.pop %v3247
    %v3249 = vmul.f32 %v3149, 1.442695
    %v3250 = vpow.pop %v3249
    %v3251 = vmul.f32 %v3150, 1.442695
    %v3252 = vpow.pop %v3251
    %v3253 = vmul.f32 %v3151, 1.442695
    %v3254 = vpow.pop %v3253
    %v3255 = vmul.f32 %v3152, 1.442695
    %v3256 = vpow.pop %v3255
    %v3257 = vmul.f32 %v3153, 1.442695
    %v3258 = vpow.pop %v3257
    %v3259 = vmul.f32 %v3154, 1.442695
    %v3260 = vpow.pop %v3259
    %v3261 = vmul.f32 %v3155, 1.442695
    %v3262 = vpow.pop %v3261
    %v3263 = vmul.f32 %v3156, 1.442695
    %v3264 = vpow.pop %v3263
    %v3265 = vmul.f32 %v3157, 1.442695
    %v3266 = vpow.pop %v3265
    %v3267 = vmul.f32 %v3158, 1.442695
    %v3268 = vpow.pop %v3267
    %v3269 = vmul.f32 %v3159, 1.442695
    %v3270 = vpow.pop %v3269
    %v3271 = vmul.f32 %v3160, 1.442695
    %v3272 = vpow.pop %v3271
    %v3273 = vmul.f32 %v3161, 1.442695
    %v3274 = vpow.pop %v3273
    %v3275 = vmul.f32 %v3162, 1.442695
    %v3276 = vpow.pop %v3275
    %v3277 = vmul.f32 %v3163, 1.442695
    %v3278 = vpow.pop %v3277
    %v3279 = vmul.f32 %v3164, 1.442695
    %v3280 = vpow.pop %v3279
    %v3281 = vmul.f32 %v3165, 1.442695
    %v3282 = vpow.pop %v3281
    %v3283 = vmul.f32 %v3166, 1.442695
    %v3284 = vpow.pop %v3283
    %v3285 = vmul.f32 %v3167, 1.442695
    %v3286 = vpow.pop %v3285
    %v3287 = vmul.f32 %v3168, 1.442695
    %v3288 = vpow.pop %v3287
    %v3289 = vmul.f32 %v3169, 1.442695
    %v3290 = vpow.pop %v3289
    %v3291 = vmul.f32 %v3170, 1.442695
    %v3292 = vpow.pop %v3291
    %v3293 = vmul.f32 %v3171, 1.442695
    %v3294 = vpow.pop %v3293
    %v3295 = vmul.f32 %v3172, 1.442695
    %v3296 = vpow.pop %v3295
    %v3297 = vmul.f32 %v3173, 1.442695
    %v3298 = vpow.pop %v3297
    %v3299 = vmul.f32 %v3174, 1.442695
    %v3300 = vpow.pop %v3299
    %v3301 = vmul.f32 %v3175, 1.442695
    %v3302 = vpow.pop %v3301
    %v3303 = vmul.f32 %v3176, 1.442695
    %v3304 = vpow.pop %v3303
    %v3305 = vpack.c.bf16 %v3180, %v3178
    %v3306 = vpack.c.bf16 %v3184, %v3182
    %v3307 = vpack.c.bf16 %v3188, %v3186
    %v3308 = vpack.c.bf16 %v3192, %v3190
    %v3309 = vpack.c.bf16 %v3196, %v3194
    %v3310 = vpack.c.bf16 %v3200, %v3198
    %v3311 = vpack.c.bf16 %v3204, %v3202
    %v3312 = vpack.c.bf16 %v3208, %v3206
    %v3313 = vpack.c.bf16 %v3212, %v3210
    %v3314 = vpack.c.bf16 %v3216, %v3214
    %v3315 = vpack.c.bf16 %v3220, %v3218
    %v3316 = vpack.c.bf16 %v3224, %v3222
    %v3317 = vpack.c.bf16 %v3228, %v3226
    %v3318 = vpack.c.bf16 %v3232, %v3230
    %v3319 = vpack.c.bf16 %v3236, %v3234
    %v3320 = vpack.c.bf16 %v3240, %v3238
    %v3321 = vpack.c.bf16 %v3244, %v3242
    %v3322 = vpack.c.bf16 %v3248, %v3246
    %v3323 = vpack.c.bf16 %v3252, %v3250
    %v3324 = vpack.c.bf16 %v3256, %v3254
    %v3325 = vpack.c.bf16 %v3260, %v3258
    %v3326 = vpack.c.bf16 %v3264, %v3262
    %v3327 = vpack.c.bf16 %v3268, %v3266
    %v3328 = vpack.c.bf16 %v3272, %v3270
    %v3329 = vpack.c.bf16 %v3276, %v3274
    %v3330 = vpack.c.bf16 %v3280, %v3278
    %v3331 = vpack.c.bf16 %v3284, %v3282
    %v3332 = vpack.c.bf16 %v3288, %v3286
    %v3333 = vpack.c.bf16 %v3292, %v3290
    %v3334 = vpack.c.bf16 %v3296, %v3294
    %v3335 = vpack.c.bf16 %v3300, %v3298
    %v3336 = vpack.c.bf16 %v3304, %v3302
    %v3337 = vunpack.c.l.bf16 %v3305
    %v3338 = vunpack.c.h.bf16 %v3305
    %v3339 = vunpack.c.l.bf16 %v3306
    %v3340 = vunpack.c.h.bf16 %v3306
    %v3341 = vunpack.c.l.bf16 %v3307
    %v3342 = vunpack.c.h.bf16 %v3307
    %v3343 = vunpack.c.l.bf16 %v3308
    %v3344 = vunpack.c.h.bf16 %v3308
    %v3345 = vunpack.c.l.bf16 %v3309
    %v3346 = vunpack.c.h.bf16 %v3309
    %v3347 = vunpack.c.l.bf16 %v3310
    %v3348 = vunpack.c.h.bf16 %v3310
    %v3349 = vunpack.c.l.bf16 %v3311
    %v3350 = vunpack.c.h.bf16 %v3311
    %v3351 = vunpack.c.l.bf16 %v3312
    %v3352 = vunpack.c.h.bf16 %v3312
    %v3353 = vunpack.c.l.bf16 %v3313
    %v3354 = vunpack.c.h.bf16 %v3313
    %v3355 = vunpack.c.l.bf16 %v3314
    %v3356 = vunpack.c.h.bf16 %v3314
    %v3357 = vunpack.c.l.bf16 %v3315
    %v3358 = vunpack.c.h.bf16 %v3315
    %v3359 = vunpack.c.l.bf16 %v3316
    %v3360 = vunpack.c.h.bf16 %v3316
    %v3361 = vunpack.c.l.bf16 %v3317
    %v3362 = vunpack.c.h.bf16 %v3317
    %v3363 = vunpack.c.l.bf16 %v3318
    %v3364 = vunpack.c.h.bf16 %v3318
    %v3365 = vunpack.c.l.bf16 %v3319
    %v3366 = vunpack.c.h.bf16 %v3319
    %v3367 = vunpack.c.l.bf16 %v3320
    %v3368 = vunpack.c.h.bf16 %v3320
    %v3369 = vunpack.c.l.bf16 %v3321
    %v3370 = vunpack.c.h.bf16 %v3321
    %v3371 = vunpack.c.l.bf16 %v3322
    %v3372 = vunpack.c.h.bf16 %v3322
    %v3373 = vunpack.c.l.bf16 %v3323
    %v3374 = vunpack.c.h.bf16 %v3323
    %v3375 = vunpack.c.l.bf16 %v3324
    %v3376 = vunpack.c.h.bf16 %v3324
    %v3377 = vunpack.c.l.bf16 %v3325
    %v3378 = vunpack.c.h.bf16 %v3325
    %v3379 = vunpack.c.l.bf16 %v3326
    %v3380 = vunpack.c.h.bf16 %v3326
    %v3381 = vunpack.c.l.bf16 %v3327
    %v3382 = vunpack.c.h.bf16 %v3327
    %v3383 = vunpack.c.l.bf16 %v3328
    %v3384 = vunpack.c.h.bf16 %v3328
    %v3385 = vunpack.c.l.bf16 %v3329
    %v3386 = vunpack.c.h.bf16 %v3329
    %v3387 = vunpack.c.l.bf16 %v3330
    %v3388 = vunpack.c.h.bf16 %v3330
    %v3389 = vunpack.c.l.bf16 %v3331
    %v3390 = vunpack.c.h.bf16 %v3331
    %v3391 = vunpack.c.l.bf16 %v3332
    %v3392 = vunpack.c.h.bf16 %v3332
    %v3393 = vunpack.c.l.bf16 %v3333
    %v3394 = vunpack.c.h.bf16 %v3333
    %v3395 = vunpack.c.l.bf16 %v3334
    %v3396 = vunpack.c.h.bf16 %v3334
    %v3397 = vunpack.c.l.bf16 %v3335
    %v3398 = vunpack.c.h.bf16 %v3335
    %v3399 = vunpack.c.l.bf16 %v3336
    %v3400 = vunpack.c.h.bf16 %v3336
    %v3401 = vsub.f32 %v3337, 1.0
    %v3402 = vsub.f32 %v3338, 1.0
    %v3403 = vsub.f32 %v3339, 1.0
    %v3404 = vsub.f32 %v3340, 1.0
    %v3405 = vsub.f32 %v3341, 1.0
    %v3406 = vsub.f32 %v3342, 1.0
    %v3407 = vsub.f32 %v3343, 1.0
    %v3408 = vsub.f32 %v3344, 1.0
    %v3409 = vsub.f32 %v3345, 1.0
    %v3410 = vsub.f32 %v3346, 1.0
    %v3411 = vsub.f32 %v3347, 1.0
    %v3412 = vsub.f32 %v3348, 1.0
    %v3413 = vsub.f32 %v3349, 1.0
    %v3414 = vsub.f32 %v3350, 1.0
    %v3415 = vsub.f32 %v3351, 1.0
    %v3416 = vsub.f32 %v3352, 1.0
    %v3417 = vsub.f32 %v3353, 1.0
    %v3418 = vsub.f32 %v3354, 1.0
    %v3419 = vsub.f32 %v3355, 1.0
    %v3420 = vsub.f32 %v3356, 1.0
    %v3421 = vsub.f32 %v3357, 1.0
    %v3422 = vsub.f32 %v3358, 1.0
    %v3423 = vsub.f32 %v3359, 1.0
    %v3424 = vsub.f32 %v3360, 1.0
    %v3425 = vsub.f32 %v3361, 1.0
    %v3426 = vsub.f32 %v3362, 1.0
    %v3427 = vsub.f32 %v3363, 1.0
    %v3428 = vsub.f32 %v3364, 1.0
    %v3429 = vsub.f32 %v3365, 1.0
    %v3430 = vsub.f32 %v3366, 1.0
    %v3431 = vsub.f32 %v3367, 1.0
    %v3432 = vsub.f32 %v3368, 1.0
    %v3433 = vsub.f32 %v3369, 1.0
    %v3434 = vsub.f32 %v3370, 1.0
    %v3435 = vsub.f32 %v3371, 1.0
    %v3436 = vsub.f32 %v3372, 1.0
    %v3437 = vsub.f32 %v3373, 1.0
    %v3438 = vsub.f32 %v3374, 1.0
    %v3439 = vsub.f32 %v3375, 1.0
    %v3440 = vsub.f32 %v3376, 1.0
    %v3441 = vsub.f32 %v3377, 1.0
    %v3442 = vsub.f32 %v3378, 1.0
    %v3443 = vsub.f32 %v3379, 1.0
    %v3444 = vsub.f32 %v3380, 1.0
    %v3445 = vsub.f32 %v3381, 1.0
    %v3446 = vsub.f32 %v3382, 1.0
    %v3447 = vsub.f32 %v3383, 1.0
    %v3448 = vsub.f32 %v3384, 1.0
    %v3449 = vsub.f32 %v3385, 1.0
    %v3450 = vsub.f32 %v3386, 1.0
    %v3451 = vsub.f32 %v3387, 1.0
    %v3452 = vsub.f32 %v3388, 1.0
    %v3453 = vsub.f32 %v3389, 1.0
    %v3454 = vsub.f32 %v3390, 1.0
    %v3455 = vsub.f32 %v3391, 1.0
    %v3456 = vsub.f32 %v3392, 1.0
    %v3457 = vsub.f32 %v3393, 1.0
    %v3458 = vsub.f32 %v3394, 1.0
    %v3459 = vsub.f32 %v3395, 1.0
    %v3460 = vsub.f32 %v3396, 1.0
    %v3461 = vsub.f32 %v3397, 1.0
    %v3462 = vsub.f32 %v3398, 1.0
    %v3463 = vsub.f32 %v3399, 1.0
    %v3464 = vsub.f32 %v3400, 1.0
    %v3465 = vpack.c.bf16 %v3402, %v3401
    %v3466 = vpack.c.bf16 %v3404, %v3403
    %v3467 = vpack.c.bf16 %v3406, %v3405
    %v3468 = vpack.c.bf16 %v3408, %v3407
    %v3469 = vpack.c.bf16 %v3410, %v3409
    %v3470 = vpack.c.bf16 %v3412, %v3411
    %v3471 = vpack.c.bf16 %v3414, %v3413
    %v3472 = vpack.c.bf16 %v3416, %v3415
    %v3473 = vpack.c.bf16 %v3418, %v3417
    %v3474 = vpack.c.bf16 %v3420, %v3419
    %v3475 = vpack.c.bf16 %v3422, %v3421
    %v3476 = vpack.c.bf16 %v3424, %v3423
    %v3477 = vpack.c.bf16 %v3426, %v3425
    %v3478 = vpack.c.bf16 %v3428, %v3427
    %v3479 = vpack.c.bf16 %v3430, %v3429
    %v3480 = vpack.c.bf16 %v3432, %v3431
    %v3481 = vpack.c.bf16 %v3434, %v3433
    %v3482 = vpack.c.bf16 %v3436, %v3435
    %v3483 = vpack.c.bf16 %v3438, %v3437
    %v3484 = vpack.c.bf16 %v3440, %v3439
    %v3485 = vpack.c.bf16 %v3442, %v3441
    %v3486 = vpack.c.bf16 %v3444, %v3443
    %v3487 = vpack.c.bf16 %v3446, %v3445
    %v3488 = vpack.c.bf16 %v3448, %v3447
    %v3489 = vpack.c.bf16 %v3450, %v3449
    %v3490 = vpack.c.bf16 %v3452, %v3451
    %v3491 = vpack.c.bf16 %v3454, %v3453
    %v3492 = vpack.c.bf16 %v3456, %v3455
    %v3493 = vpack.c.bf16 %v3458, %v3457
    %v3494 = vpack.c.bf16 %v3460, %v3459
    %v3495 = vpack.c.bf16 %v3462, %v3461
    %v3496 = vpack.c.bf16 %v3464, %v3463
    %vm3497 = vmpackc.low %vm2954, %vm2953
    %vm3498 = vmpackc.low %vm2956, %vm2955
    %vm3499 = vmpackc.low %vm2958, %vm2957
    %vm3500 = vmpackc.low %vm2960, %vm2959
    %vm3501 = vmpackc.low %vm2962, %vm2961
    %vm3502 = vmpackc.low %vm2964, %vm2963
    %vm3503 = vmpackc.low %vm2966, %vm2965
    %vm3504 = vmpackc.low %vm2968, %vm2967
    %vm3505 = vmpackc.low %vm2970, %vm2969
    %vm3506 = vmpackc.low %vm2972, %vm2971
    %vm3507 = vmpackc.low %vm2974, %vm2973
    %vm3508 = vmpackc.low %vm2976, %vm2975
    %vm3509 = vmpackc.low %vm2978, %vm2977
    %vm3510 = vmpackc.low %vm2980, %vm2979
    %vm3511 = vmpackc.low %vm2982, %vm2981
    %vm3512 = vmpackc.low %vm2984, %vm2983
    %vm3513 = vmpackc.low %vm2986, %vm2985
    %vm3514 = vmpackc.low %vm2988, %vm2987
    %vm3515 = vmpackc.low %vm2990, %vm2989
    %vm3516 = vmpackc.low %vm2992, %vm2991
    %vm3517 = vmpackc.low %vm2994, %vm2993
    %vm3518 = vmpackc.low %vm2996, %vm2995
    %vm3519 = vmpackc.low %vm2998, %vm2997
    %vm3520 = vmpackc.low %vm3000, %vm2999
    %vm3521 = vmpackc.low %vm3002, %vm3001
    %vm3522 = vmpackc.low %vm3004, %vm3003
    %vm3523 = vmpackc.low %vm3006, %vm3005
    %vm3524 = vmpackc.low %vm3008, %vm3007
    %vm3525 = vmpackc.low %vm3010, %vm3009
    %vm3526 = vmpackc.low %vm3012, %vm3011
    %vm3527 = vmpackc.low %vm3014, %vm3013
    %vm3528 = vmpackc.low %vm3016, %vm3015
    %v3529 = vsel %vm3497, %v2857, %v3465
    %v3530 = vsel %vm3498, %v2858, %v3466
    %v3531 = vsel %vm3499, %v2859, %v3467
    %v3532 = vsel %vm3500, %v2860, %v3468
    %v3533 = vsel %vm3501, %v2861, %v3469
    %v3534 = vsel %vm3502, %v2862, %v3470
    %v3535 = vsel %vm3503, %v2863, %v3471
    %v3536 = vsel %vm3504, %v2864, %v3472
    %v3537 = vsel %vm3505, %v2865, %v3473
    %v3538 = vsel %vm3506, %v2866, %v3474
    %v3539 = vsel %vm3507, %v2867, %v3475
    %v3540 = vsel %vm3508, %v2868, %v3476
    %v3541 = vsel %vm3509, %v2869, %v3477
    %v3542 = vsel %vm3510, %v2870, %v3478
    %v3543 = vsel %vm3511, %v2871, %v3479
    %v3544 = vsel %vm3512, %v2872, %v3480
    %v3545 = vsel %vm3513, %v2873, %v3481
    %v3546 = vsel %vm3514, %v2874, %v3482
    %v3547 = vsel %vm3515, %v2875, %v3483
    %v3548 = vsel %vm3516, %v2876, %v3484
    %v3549 = vsel %vm3517, %v2877, %v3485
    %v3550 = vsel %vm3518, %v2878, %v3486
    %v3551 = vsel %vm3519, %v2879, %v3487
    %v3552 = vsel %vm3520, %v2880, %v3488
    %v3553 = vsel %vm3521, %v2881, %v3489
    %v3554 = vsel %vm3522, %v2882, %v3490
    %v3555 = vsel %vm3523, %v2883, %v3491
    %v3556 = vsel %vm3524, %v2884, %v3492
    %v3557 = vsel %vm3525, %v2885, %v3493
    %v3558 = vsel %vm3526, %v2886, %v3494
    %v3559 = vsel %vm3527, %v2887, %v3495
    %v3560 = vsel %vm3528, %v2888, %v3496
    %v3561 = vld [vmem:[%s5] sm:$0xf]
    %v3562 = vld [vmem:[%s5 + $0x4] sm:$0xf]
    %v3563 = vld [vmem:[%s5 + $0x8] sm:$0xf]
    %v3564 = vld [vmem:[%s5 + $0xc] sm:$0xf]
    %v3565 = vld [vmem:[%s6] sm:$0xff]
    %v3566 = vld [vmem:[%s6 + $0x8] sm:$0xff]
    %v3567 = vld [vmem:[%s6 + $0x10] sm:$0xff]
    %v3568 = vld [vmem:[%s6 + $0x18] sm:$0xff]
    %3570 = vset.pattern.permute.xlu0 0
    %3571 = vperm.xlu0 %3570, %v3565
    %v3572 = vpop.permute.xlu0 %3571
    %3575 = vset.pattern.permute.xlu0 0
    %3576 = vperm.xlu0 %3575, %v3566
    %v3577 = vpop.permute.xlu0 %3576
    %3580 = vset.pattern.permute.xlu0 0
    %3581 = vperm.xlu0 %3580, %v3567
    %v3582 = vpop.permute.xlu0 %3581
    %3585 = vset.pattern.permute.xlu0 0
    %3586 = vperm.xlu0 %3585, %v3568
    %v3587 = vpop.permute.xlu0 %3586
    %v3593 = vunpack.c.l.b16 %v3561
    %v3594 = vunpack.c.l.b16 %v3562
    %v3595 = vunpack.c.l.b16 %v3563
    %v3596 = vunpack.c.l.b16 %v3564
    %v3597 = vpack.c.b16 %v3594, %v3593
    %v3598 = vpack.c.b16 %v3596, %v3595
    %v3631 = vunpack.c.l.b16 %v3529
    %v3632 = vunpack.c.h.b16 %v3529
    %v3633 = vunpack.c.l.b16 %v3530
    %v3634 = vunpack.c.h.b16 %v3530
    %v3635 = vunpack.c.l.b16 %v3531
    %v3636 = vunpack.c.h.b16 %v3531
    %v3637 = vunpack.c.l.b16 %v3532
    %v3638 = vunpack.c.h.b16 %v3532
    %v3639 = vunpack.c.l.b16 %v3533
    %v3640 = vunpack.c.h.b16 %v3533
    %v3641 = vunpack.c.l.b16 %v3534
    %v3642 = vunpack.c.h.b16 %v3534
    %v3643 = vunpack.c.l.b16 %v3535
    %v3644 = vunpack.c.h.b16 %v3535
    %v3645 = vunpack.c.l.b16 %v3536
    %v3646 = vunpack.c.h.b16 %v3536
    %v3647 = vunpack.c.l.b16 %v3537
    %v3648 = vunpack.c.h.b16 %v3537
    %v3649 = vunpack.c.l.b16 %v3538
    %v3650 = vunpack.c.h.b16 %v3538
    %v3651 = vunpack.c.l.b16 %v3539
    %v3652 = vunpack.c.h.b16 %v3539
    %v3653 = vunpack.c.l.b16 %v3540
    %v3654 = vunpack.c.h.b16 %v3540
    %v3655 = vunpack.c.l.b16 %v3541
    %v3656 = vunpack.c.h.b16 %v3541
    %v3657 = vunpack.c.l.b16 %v3542
    %v3658 = vunpack.c.h.b16 %v3542
    %v3659 = vunpack.c.l.b16 %v3543
    %v3660 = vunpack.c.h.b16 %v3543
    %v3661 = vunpack.c.l.b16 %v3544
    %v3662 = vunpack.c.h.b16 %v3544
    %v3663 = vunpack.c.l.b16 %v3545
    %v3664 = vunpack.c.h.b16 %v3545
    %v3665 = vunpack.c.l.b16 %v3546
    %v3666 = vunpack.c.h.b16 %v3546
    %v3667 = vunpack.c.l.b16 %v3547
    %v3668 = vunpack.c.h.b16 %v3547
    %v3669 = vunpack.c.l.b16 %v3548
    %v3670 = vunpack.c.h.b16 %v3548
    %v3671 = vunpack.c.l.b16 %v3549
    %v3672 = vunpack.c.h.b16 %v3549
    %v3673 = vunpack.c.l.b16 %v3550
    %v3674 = vunpack.c.h.b16 %v3550
    %v3675 = vunpack.c.l.b16 %v3551
    %v3676 = vunpack.c.h.b16 %v3551
    %v3677 = vunpack.c.l.b16 %v3552
    %v3678 = vunpack.c.h.b16 %v3552
    %v3679 = vunpack.c.l.b16 %v3553
    %v3680 = vunpack.c.h.b16 %v3553
    %v3681 = vunpack.c.l.b16 %v3554
    %v3682 = vunpack.c.h.b16 %v3554
    %v3683 = vunpack.c.l.b16 %v3555
    %v3684 = vunpack.c.h.b16 %v3555
    %v3685 = vunpack.c.l.b16 %v3556
    %v3686 = vunpack.c.h.b16 %v3556
    %v3687 = vunpack.c.l.b16 %v3557
    %v3688 = vunpack.c.h.b16 %v3557
    %v3689 = vunpack.c.l.b16 %v3558
    %v3690 = vunpack.c.h.b16 %v3558
    %v3691 = vunpack.c.l.b16 %v3559
    %v3692 = vunpack.c.h.b16 %v3559
    %v3693 = vunpack.c.l.b16 %v3560
    %v3694 = vunpack.c.h.b16 %v3560
    %v3695 = vpack.c.b16 %v3639, %v3631
    %v3696 = vpack.c.b16 %v3640, %v3632
    %v3697 = vpack.c.b16 %v3641, %v3633
    %v3698 = vpack.c.b16 %v3642, %v3634
    %v3699 = vpack.c.b16 %v3643, %v3635
    %v3700 = vpack.c.b16 %v3644, %v3636
    %v3701 = vpack.c.b16 %v3645, %v3637
    %v3702 = vpack.c.b16 %v3646, %v3638
    %v3703 = vpack.c.b16 %v3655, %v3647
    %v3704 = vpack.c.b16 %v3656, %v3648
    %v3705 = vpack.c.b16 %v3657, %v3649
    %v3706 = vpack.c.b16 %v3658, %v3650
    %v3707 = vpack.c.b16 %v3659, %v3651
    %v3708 = vpack.c.b16 %v3660, %v3652
    %v3709 = vpack.c.b16 %v3661, %v3653
    %v3710 = vpack.c.b16 %v3662, %v3654
    %v3711 = vpack.c.b16 %v3671, %v3663
    %v3712 = vpack.c.b16 %v3672, %v3664
    %v3713 = vpack.c.b16 %v3673, %v3665
    %v3714 = vpack.c.b16 %v3674, %v3666
    %v3715 = vpack.c.b16 %v3675, %v3667
    %v3716 = vpack.c.b16 %v3676, %v3668
    %v3717 = vpack.c.b16 %v3677, %v3669
    %v3718 = vpack.c.b16 %v3678, %v3670
    %v3719 = vpack.c.b16 %v3687, %v3679
    %v3720 = vpack.c.b16 %v3688, %v3680
    %v3721 = vpack.c.b16 %v3689, %v3681
    %v3722 = vpack.c.b16 %v3690, %v3682
    %v3723 = vpack.c.b16 %v3691, %v3683
    %v3724 = vpack.c.b16 %v3692, %v3684
    %v3725 = vpack.c.b16 %v3693, %v3685
    %v3726 = vpack.c.b16 %v3694, %v3686
    %v3760 = vsel %vm400, %v3597, 0
    %v3763 = vsel %vm400, %v3598, 0
    %3765 = vmatpush.bf16.msra.mxu0 0
    %3766 = vmatpush.bf16.msra.mxu0 0
    %3767 = vmatpush.bf16.msra.mxu0 0
    %3768 = vmatpush.bf16.msra.mxu0 0
    %3769 = vmatpush.bf16.msra.mxu0 %v3719
    %3770 = vmatpush.bf16.msra.mxu0 %v3711
    %3771 = vmatpush.bf16.msra.mxu0 %v3703
    %3772 = vmatpush.bf16.msra.mxu0 %v3695
    %3773 = vmatmul.bf16.gmra.mxu0 %v3760
    %v3774 = vpop.f32.mrf.mxu0
    %v3775 = vadd.f32 %v3572, %v3774
    %v3776 = vpop.f32.mrf.mxu0
    %v3777 = vadd.f32 %v3577, %v3776
    %3778 = vmatmul.bf16.gmra.mxu0 %v3763
    %v3779 = vpop.f32.mrf.mxu0
    %v3780 = vadd.f32 %v3582, %v3779
    %v3781 = vpop.f32.mrf.mxu0
    %v3782 = vadd.f32 %v3587, %v3781
    %3783 = vdwg.mxu0
    %3784 = vmatpush.bf16.msra.mxu0 0
    %3785 = vmatpush.bf16.msra.mxu0 0
    %3786 = vmatpush.bf16.msra.mxu0 0
    %3787 = vmatpush.bf16.msra.mxu0 0
    %3788 = vmatpush.bf16.msra.mxu0 %v3720
    %3789 = vmatpush.bf16.msra.mxu0 %v3712
    %3790 = vmatpush.bf16.msra.mxu0 %v3704
    %3791 = vmatpush.bf16.msra.mxu0 %v3696
    %3792 = vmatmul.bf16.gmra.mxu0 %v3760
    %v3793 = vpop.f32.mrf.mxu0
    %v3794 = vadd.f32 %v3572, %v3793
    %v3795 = vpop.f32.mrf.mxu0
    %v3796 = vadd.f32 %v3577, %v3795
    %3797 = vmatmul.bf16.gmra.mxu0 %v3763
    %v3798 = vpop.f32.mrf.mxu0
    %v3799 = vadd.f32 %v3582, %v3798
    %v3800 = vpop.f32.mrf.mxu0
    %v3801 = vadd.f32 %v3587, %v3800
    %3802 = vdwg.mxu0
    %3803 = vmatpush.bf16.msra.mxu0 0
    %3804 = vmatpush.bf16.msra.mxu0 0
    %3805 = vmatpush.bf16.msra.mxu0 0
    %3806 = vmatpush.bf16.msra.mxu0 0
    %3807 = vmatpush.bf16.msra.mxu0 %v3721
    %3808 = vmatpush.bf16.msra.mxu0 %v3713
    %3809 = vmatpush.bf16.msra.mxu0 %v3705
    %3810 = vmatpush.bf16.msra.mxu0 %v3697
    %3811 = vmatmul.bf16.gmra.mxu0 %v3760
    %v3812 = vpop.f32.mrf.mxu0
    %v3813 = vadd.f32 %v3572, %v3812
    %v3814 = vpop.f32.mrf.mxu0
    %v3815 = vadd.f32 %v3577, %v3814
    %3816 = vmatmul.bf16.gmra.mxu0 %v3763
    %v3817 = vpop.f32.mrf.mxu0
    %v3818 = vadd.f32 %v3582, %v3817
    %v3819 = vpop.f32.mrf.mxu0
    %v3820 = vadd.f32 %v3587, %v3819
    %3821 = vdwg.mxu0
    %3822 = vmatpush.bf16.msra.mxu0 0
    %3823 = vmatpush.bf16.msra.mxu0 0
    %3824 = vmatpush.bf16.msra.mxu0 0
    %3825 = vmatpush.bf16.msra.mxu0 0
    %3826 = vmatpush.bf16.msra.mxu0 %v3722
    %3827 = vmatpush.bf16.msra.mxu0 %v3714
    %3828 = vmatpush.bf16.msra.mxu0 %v3706
    %3829 = vmatpush.bf16.msra.mxu0 %v3698
    %3830 = vmatmul.bf16.gmra.mxu0 %v3760
    %v3831 = vpop.f32.mrf.mxu0
    %v3832 = vadd.f32 %v3572, %v3831
    %v3833 = vpop.f32.mrf.mxu0
    %v3834 = vadd.f32 %v3577, %v3833
    %3835 = vmatmul.bf16.gmra.mxu0 %v3763
    %v3836 = vpop.f32.mrf.mxu0
    %v3837 = vadd.f32 %v3582, %v3836
    %v3838 = vpop.f32.mrf.mxu0
    %v3839 = vadd.f32 %v3587, %v3838
    %3840 = vdwg.mxu0
    %3841 = vmatpush.bf16.msra.mxu0 0
    %3842 = vmatpush.bf16.msra.mxu0 0
    %3843 = vmatpush.bf16.msra.mxu0 0
    %3844 = vmatpush.bf16.msra.mxu0 0
    %3845 = vmatpush.bf16.msra.mxu0 %v3723
    %3846 = vmatpush.bf16.msra.mxu0 %v3715
    %3847 = vmatpush.bf16.msra.mxu0 %v3707
    %3848 = vmatpush.bf16.msra.mxu0 %v3699
    %3849 = vmatmul.bf16.gmra.mxu0 %v3760
    %v3850 = vpop.f32.mrf.mxu0
    %v3851 = vadd.f32 %v3572, %v3850
    %v3852 = vpop.f32.mrf.mxu0
    %v3853 = vadd.f32 %v3577, %v3852
    %3854 = vmatmul.bf16.gmra.mxu0 %v3763
    %v3855 = vpop.f32.mrf.mxu0
    %v3856 = vadd.f32 %v3582, %v3855
    %v3857 = vpop.f32.mrf.mxu0
    %v3858 = vadd.f32 %v3587, %v3857
    %3859 = vdwg.mxu0
    %3860 = vmatpush.bf16.msra.mxu0 0
    %3861 = vmatpush.bf16.msra.mxu0 0
    %3862 = vmatpush.bf16.msra.mxu0 0
    %3863 = vmatpush.bf16.msra.mxu0 0
    %3864 = vmatpush.bf16.msra.mxu0 %v3724
    %3865 = vmatpush.bf16.msra.mxu0 %v3716
    %3866 = vmatpush.bf16.msra.mxu0 %v3708
    %3867 = vmatpush.bf16.msra.mxu0 %v3700
    %3868 = vmatmul.bf16.gmra.mxu0 %v3760
    %v3869 = vpop.f32.mrf.mxu0
    %v3870 = vadd.f32 %v3572, %v3869
    %v3871 = vpop.f32.mrf.mxu0
    %v3872 = vadd.f32 %v3577, %v3871
    %3873 = vmatmul.bf16.gmra.mxu0 %v3763
    %v3874 = vpop.f32.mrf.mxu0
    %v3875 = vadd.f32 %v3582, %v3874
    %v3876 = vpop.f32.mrf.mxu0
    %v3877 = vadd.f32 %v3587, %v3876
    %3878 = vdwg.mxu0
    %3879 = vmatpush.bf16.msra.mxu0 0
    %3880 = vmatpush.bf16.msra.mxu0 0
    %3881 = vmatpush.bf16.msra.mxu0 0
    %3882 = vmatpush.bf16.msra.mxu0 0
    %3883 = vmatpush.bf16.msra.mxu0 %v3725
    %3884 = vmatpush.bf16.msra.mxu0 %v3717
    %3885 = vmatpush.bf16.msra.mxu0 %v3709
    %3886 = vmatpush.bf16.msra.mxu0 %v3701
    %3887 = vmatmul.bf16.gmra.mxu0 %v3760
    %v3888 = vpop.f32.mrf.mxu0
    %v3889 = vadd.f32 %v3572, %v3888
    %v3890 = vpop.f32.mrf.mxu0
    %v3891 = vadd.f32 %v3577, %v3890
    %3892 = vmatmul.bf16.gmra.mxu0 %v3763
    %v3893 = vpop.f32.mrf.mxu0
    %v3894 = vadd.f32 %v3582, %v3893
    %v3895 = vpop.f32.mrf.mxu0
    %v3896 = vadd.f32 %v3587, %v3895
    %3897 = vdwg.mxu0
    %3898 = vmatpush.bf16.msra.mxu0 0
    %3899 = vmatpush.bf16.msra.mxu0 0
    %3900 = vmatpush.bf16.msra.mxu0 0
    %3901 = vmatpush.bf16.msra.mxu0 0
    %3902 = vmatpush.bf16.msra.mxu0 %v3726
    %3903 = vmatpush.bf16.msra.mxu0 %v3718
    %3904 = vmatpush.bf16.msra.mxu0 %v3710
    %3905 = vmatpush.bf16.msra.mxu0 %v3702
    %3906 = vmatmul.bf16.gmra.mxu0 %v3760
    %v3907 = vpop.f32.mrf.mxu0
    %v3908 = vadd.f32 %v3572, %v3907
    %v3909 = vpop.f32.mrf.mxu0
    %v3910 = vadd.f32 %v3577, %v3909
    %3911 = vmatmul.bf16.gmra.mxu0 %v3763
    %v3912 = vpop.f32.mrf.mxu0
    %v3913 = vadd.f32 %v3582, %v3912
    %v3914 = vpop.f32.mrf.mxu0
    %v3915 = vadd.f32 %v3587, %v3914
    %3916 = vdwg.mxu0
    %v3917 = vpack.c.bf16 %v3777, %v3775
    %v3918 = vpack.c.bf16 %v3796, %v3794
    %v3919 = vpack.c.bf16 %v3815, %v3813
    %v3920 = vpack.c.bf16 %v3834, %v3832
    %v3921 = vpack.c.bf16 %v3853, %v3851
    %v3922 = vpack.c.bf16 %v3872, %v3870
    %v3923 = vpack.c.bf16 %v3891, %v3889
    %v3924 = vpack.c.bf16 %v3910, %v3908
    %v3925 = vpack.c.bf16 %v3782, %v3780
    %v3926 = vpack.c.bf16 %v3801, %v3799
    %v3927 = vpack.c.bf16 %v3820, %v3818
    %v3928 = vpack.c.bf16 %v3839, %v3837
    %v3929 = vpack.c.bf16 %v3858, %v3856
    %v3930 = vpack.c.bf16 %v3877, %v3875
    %v3931 = vpack.c.bf16 %v3896, %v3894
    %v3932 = vpack.c.bf16 %v3915, %v3913
    %v3933 = vld [vmem:[%s7] sm:$0xf]
    %v3934 = vld [vmem:[%s7 + $0x4] sm:$0xf]
    %v3935 = vld [vmem:[%s7 + $0x8] sm:$0xf]
    %v3936 = vld [vmem:[%s7 + $0xc] sm:$0xf]
    %v3937 = vld [vmem:[%s8] sm:$0xff]
    %v3938 = vld [vmem:[%s8 + $0x8] sm:$0xff]
    %v3939 = vld [vmem:[%s8 + $0x10] sm:$0xff]
    %v3940 = vld [vmem:[%s8 + $0x18] sm:$0xff]
    %3942 = vset.pattern.permute.xlu0 0
    %3943 = vperm.xlu0 %3942, %v3937
    %v3944 = vpop.permute.xlu0 %3943
    %3947 = vset.pattern.permute.xlu0 0
    %3948 = vperm.xlu0 %3947, %v3938
    %v3949 = vpop.permute.xlu0 %3948
    %3952 = vset.pattern.permute.xlu0 0
    %3953 = vperm.xlu0 %3952, %v3939
    %v3954 = vpop.permute.xlu0 %3953
    %3957 = vset.pattern.permute.xlu0 0
    %3958 = vperm.xlu0 %3957, %v3940
    %v3959 = vpop.permute.xlu0 %3958
    %v3965 = vunpack.c.l.b16 %v3933
    %v3966 = vunpack.c.l.b16 %v3934
    %v3967 = vunpack.c.l.b16 %v3935
    %v3968 = vunpack.c.l.b16 %v3936
    %v3969 = vpack.c.b16 %v3966, %v3965
    %v3970 = vpack.c.b16 %v3968, %v3967
    %vm3971 = vcmask 261120
    %v3973 = vsel %vm3971, %v3969, 0
    %v3976 = vsel %vm3971, %v3970, 0
    %3978 = vmatpush.bf16.msra.mxu0 0
    %3979 = vmatpush.bf16.msra.mxu0 0
    %3980 = vmatpush.bf16.msra.mxu0 0
    %3981 = vmatpush.bf16.msra.mxu0 0
    %3982 = vmatpush.bf16.msra.mxu0 0
    %3983 = vmatpush.bf16.msra.mxu0 0
    %3984 = vmatpush.bf16.msra.mxu0 %v3925
    %3985 = vmatpush.bf16.msra.mxu0 %v3917
    %3986 = vmatmul.bf16.gmra.mxu0 %v3973
    %v3987 = vpop.f32.mrf.mxu0
    %v3988 = vadd.f32 %v3944, %v3987
    %v3989 = vpop.f32.mrf.mxu0
    %v3990 = vadd.f32 %v3949, %v3989
    %3991 = vmatmul.bf16.gmra.mxu0 %v3976
    %v3992 = vpop.f32.mrf.mxu0
    %v3993 = vadd.f32 %v3954, %v3992
    %v3994 = vpop.f32.mrf.mxu0
    %v3995 = vadd.f32 %v3959, %v3994
    %3996 = vdwg.mxu0
    %3997 = vmatpush.bf16.msra.mxu0 0
    %3998 = vmatpush.bf16.msra.mxu0 0
    %3999 = vmatpush.bf16.msra.mxu0 0
    %4000 = vmatpush.bf16.msra.mxu0 0
    %4001 = vmatpush.bf16.msra.mxu0 0
    %4002 = vmatpush.bf16.msra.mxu0 0
    %4003 = vmatpush.bf16.msra.mxu0 %v3926
    %4004 = vmatpush.bf16.msra.mxu0 %v3918
    %4005 = vmatmul.bf16.gmra.mxu0 %v3973
    %v4006 = vpop.f32.mrf.mxu0
    %v4007 = vadd.f32 %v3944, %v4006
    %v4008 = vpop.f32.mrf.mxu0
    %v4009 = vadd.f32 %v3949, %v4008
    %4010 = vmatmul.bf16.gmra.mxu0 %v3976
    %v4011 = vpop.f32.mrf.mxu0
    %v4012 = vadd.f32 %v3954, %v4011
    %v4013 = vpop.f32.mrf.mxu0
    %v4014 = vadd.f32 %v3959, %v4013
    %4015 = vdwg.mxu0
    %4016 = vmatpush.bf16.msra.mxu0 0
    %4017 = vmatpush.bf16.msra.mxu0 0
    %4018 = vmatpush.bf16.msra.mxu0 0
    %4019 = vmatpush.bf16.msra.mxu0 0
    %4020 = vmatpush.bf16.msra.mxu0 0
    %4021 = vmatpush.bf16.msra.mxu0 0
    %4022 = vmatpush.bf16.msra.mxu0 %v3927
    %4023 = vmatpush.bf16.msra.mxu0 %v3919
    %4024 = vmatmul.bf16.gmra.mxu0 %v3973
    %v4025 = vpop.f32.mrf.mxu0
    %v4026 = vadd.f32 %v3944, %v4025
    %v4027 = vpop.f32.mrf.mxu0
    %v4028 = vadd.f32 %v3949, %v4027
    %4029 = vmatmul.bf16.gmra.mxu0 %v3976
    %v4030 = vpop.f32.mrf.mxu0
    %v4031 = vadd.f32 %v3954, %v4030
    %v4032 = vpop.f32.mrf.mxu0
    %v4033 = vadd.f32 %v3959, %v4032
    %4034 = vdwg.mxu0
    %4035 = vmatpush.bf16.msra.mxu0 0
    %4036 = vmatpush.bf16.msra.mxu0 0
    %4037 = vmatpush.bf16.msra.mxu0 0
    %4038 = vmatpush.bf16.msra.mxu0 0
    %4039 = vmatpush.bf16.msra.mxu0 0
    %4040 = vmatpush.bf16.msra.mxu0 0
    %4041 = vmatpush.bf16.msra.mxu0 %v3928
    %4042 = vmatpush.bf16.msra.mxu0 %v3920
    %4043 = vmatmul.bf16.gmra.mxu0 %v3973
    %v4044 = vpop.f32.mrf.mxu0
    %v4045 = vadd.f32 %v3944, %v4044
    %v4046 = vpop.f32.mrf.mxu0
    %v4047 = vadd.f32 %v3949, %v4046
    %4048 = vmatmul.bf16.gmra.mxu0 %v3976
    %v4049 = vpop.f32.mrf.mxu0
    %v4050 = vadd.f32 %v3954, %v4049
    %v4051 = vpop.f32.mrf.mxu0
    %v4052 = vadd.f32 %v3959, %v4051
    %4053 = vdwg.mxu0
    %4054 = vmatpush.bf16.msra.mxu0 0
    %4055 = vmatpush.bf16.msra.mxu0 0
    %4056 = vmatpush.bf16.msra.mxu0 0
    %4057 = vmatpush.bf16.msra.mxu0 0
    %4058 = vmatpush.bf16.msra.mxu0 0
    %4059 = vmatpush.bf16.msra.mxu0 0
    %4060 = vmatpush.bf16.msra.mxu0 %v3929
    %4061 = vmatpush.bf16.msra.mxu0 %v3921
    %4062 = vmatmul.bf16.gmra.mxu0 %v3973
    %v4063 = vpop.f32.mrf.mxu0
    %v4064 = vadd.f32 %v3944, %v4063
    %v4065 = vpop.f32.mrf.mxu0
    %v4066 = vadd.f32 %v3949, %v4065
    %4067 = vmatmul.bf16.gmra.mxu0 %v3976
    %v4068 = vpop.f32.mrf.mxu0
    %v4069 = vadd.f32 %v3954, %v4068
    %v4070 = vpop.f32.mrf.mxu0
    %v4071 = vadd.f32 %v3959, %v4070
    %4072 = vdwg.mxu0
    %4073 = vmatpush.bf16.msra.mxu0 0
    %4074 = vmatpush.bf16.msra.mxu0 0
    %4075 = vmatpush.bf16.msra.mxu0 0
    %4076 = vmatpush.bf16.msra.mxu0 0
    %4077 = vmatpush.bf16.msra.mxu0 0
    %4078 = vmatpush.bf16.msra.mxu0 0
    %4079 = vmatpush.bf16.msra.mxu0 %v3930
    %4080 = vmatpush.bf16.msra.mxu0 %v3922
    %4081 = vmatmul.bf16.gmra.mxu0 %v3973
    %v4082 = vpop.f32.mrf.mxu0
    %v4083 = vadd.f32 %v3944, %v4082
    %v4084 = vpop.f32.mrf.mxu0
    %v4085 = vadd.f32 %v3949, %v4084
    %4086 = vmatmul.bf16.gmra.mxu0 %v3976
    %v4087 = vpop.f32.mrf.mxu0
    %v4088 = vadd.f32 %v3954, %v4087
    %v4089 = vpop.f32.mrf.mxu0
    %v4090 = vadd.f32 %v3959, %v4089
    %4091 = vdwg.mxu0
    %4092 = vmatpush.bf16.msra.mxu0 0
    %4093 = vmatpush.bf16.msra.mxu0 0
    %4094 = vmatpush.bf16.msra.mxu0 0
    %4095 = vmatpush.bf16.msra.mxu0 0
    %4096 = vmatpush.bf16.msra.mxu0 0
    %4097 = vmatpush.bf16.msra.mxu0 0
    %4098 = vmatpush.bf16.msra.mxu0 %v3931
    %4099 = vmatpush.bf16.msra.mxu0 %v3923
    %4100 = vmatmul.bf16.gmra.mxu0 %v3973
    %v4101 = vpop.f32.mrf.mxu0
    %v4102 = vadd.f32 %v3944, %v4101
    %v4103 = vpop.f32.mrf.mxu0
    %v4104 = vadd.f32 %v3949, %v4103
    %4105 = vmatmul.bf16.gmra.mxu0 %v3976
    %v4106 = vpop.f32.mrf.mxu0
    %v4107 = vadd.f32 %v3954, %v4106
    %v4108 = vpop.f32.mrf.mxu0
    %v4109 = vadd.f32 %v3959, %v4108
    %4110 = vdwg.mxu0
    %4111 = vmatpush.bf16.msra.mxu0 0
    %4112 = vmatpush.bf16.msra.mxu0 0
    %4113 = vmatpush.bf16.msra.mxu0 0
    %4114 = vmatpush.bf16.msra.mxu0 0
    %4115 = vmatpush.bf16.msra.mxu0 0
    %4116 = vmatpush.bf16.msra.mxu0 0
    %4117 = vmatpush.bf16.msra.mxu0 %v3932
    %4118 = vmatpush.bf16.msra.mxu0 %v3924
    %4119 = vmatmul.bf16.gmra.mxu0 %v3973
    %v4120 = vpop.f32.mrf.mxu0
    %v4121 = vadd.f32 %v3944, %v4120
    %v4122 = vpop.f32.mrf.mxu0
    %v4123 = vadd.f32 %v3949, %v4122
    %4124 = vmatmul.bf16.gmra.mxu0 %v3976
    %v4125 = vpop.f32.mrf.mxu0
    %v4126 = vadd.f32 %v3954, %v4125
    %v4127 = vpop.f32.mrf.mxu0
    %v4128 = vadd.f32 %v3959, %v4127
    %4129 = vdwg.mxu0
    %v4130 = vpack.c.bf16 %v4007, %v3988
    %v4131 = vpack.c.bf16 %v4045, %v4026
    %v4132 = vpack.c.bf16 %v4083, %v4064
    %v4133 = vpack.c.bf16 %v4121, %v4102
    %v4134 = vpack.c.bf16 %v4009, %v3990
    %v4135 = vpack.c.bf16 %v4047, %v4028
    %v4136 = vpack.c.bf16 %v4085, %v4066
    %v4137 = vpack.c.bf16 %v4123, %v4104
    %v4138 = vpack.c.bf16 %v4012, %v3993
    %v4139 = vpack.c.bf16 %v4050, %v4031
    %v4140 = vpack.c.bf16 %v4088, %v4069
    %v4141 = vpack.c.bf16 %v4126, %v4107
    %v4142 = vpack.c.bf16 %v4014, %v3995
    %v4143 = vpack.c.bf16 %v4052, %v4033
    %v4144 = vpack.c.bf16 %v4090, %v4071
    %v4145 = vpack.c.bf16 %v4128, %v4109
    %v4146 = vunpack.c.l.bf16 %v4130
    %v4147 = vunpack.c.h.bf16 %v4130
    %v4148 = vunpack.c.l.bf16 %v4131
    %v4149 = vunpack.c.h.bf16 %v4131
    %v4150 = vunpack.c.l.bf16 %v4132
    %v4151 = vunpack.c.h.bf16 %v4132
    %v4152 = vunpack.c.l.bf16 %v4133
    %v4153 = vunpack.c.h.bf16 %v4133
    %v4154 = vunpack.c.l.bf16 %v4134
    %v4155 = vunpack.c.h.bf16 %v4134
    %v4156 = vunpack.c.l.bf16 %v4135
    %v4157 = vunpack.c.h.bf16 %v4135
    %v4158 = vunpack.c.l.bf16 %v4136
    %v4159 = vunpack.c.h.bf16 %v4136
    %v4160 = vunpack.c.l.bf16 %v4137
    %v4161 = vunpack.c.h.bf16 %v4137
    %v4162 = vunpack.c.l.bf16 %v4138
    %v4163 = vunpack.c.h.bf16 %v4138
    %v4164 = vunpack.c.l.bf16 %v4139
    %v4165 = vunpack.c.h.bf16 %v4139
    %v4166 = vunpack.c.l.bf16 %v4140
    %v4167 = vunpack.c.h.bf16 %v4140
    %v4168 = vunpack.c.l.bf16 %v4141
    %v4169 = vunpack.c.h.bf16 %v4141
    %v4170 = vunpack.c.l.bf16 %v4142
    %v4171 = vunpack.c.h.bf16 %v4142
    %v4172 = vunpack.c.l.bf16 %v4143
    %v4173 = vunpack.c.h.bf16 %v4143
    %v4174 = vunpack.c.l.bf16 %v4144
    %v4175 = vunpack.c.h.bf16 %v4144
    %v4176 = vunpack.c.l.bf16 %v4145
    %v4177 = vunpack.c.h.bf16 %v4145
    %vm4178 = vcmp.gt.f32.partialorder %v4146, 0.0
    %vm4179 = vcmp.gt.f32.partialorder %v4147, 0.0
    %vm4180 = vcmp.gt.f32.partialorder %v4148, 0.0
    %vm4181 = vcmp.gt.f32.partialorder %v4149, 0.0
    %vm4182 = vcmp.gt.f32.partialorder %v4150, 0.0
    %vm4183 = vcmp.gt.f32.partialorder %v4151, 0.0
    %vm4184 = vcmp.gt.f32.partialorder %v4152, 0.0
    %vm4185 = vcmp.gt.f32.partialorder %v4153, 0.0
    %vm4186 = vcmp.gt.f32.partialorder %v4154, 0.0
    %vm4187 = vcmp.gt.f32.partialorder %v4155, 0.0
    %vm4188 = vcmp.gt.f32.partialorder %v4156, 0.0
    %vm4189 = vcmp.gt.f32.partialorder %v4157, 0.0
    %vm4190 = vcmp.gt.f32.partialorder %v4158, 0.0
    %vm4191 = vcmp.gt.f32.partialorder %v4159, 0.0
    %vm4192 = vcmp.gt.f32.partialorder %v4160, 0.0
    %vm4193 = vcmp.gt.f32.partialorder %v4161, 0.0
    %vm4194 = vcmp.gt.f32.partialorder %v4162, 0.0
    %vm4195 = vcmp.gt.f32.partialorder %v4163, 0.0
    %vm4196 = vcmp.gt.f32.partialorder %v4164, 0.0
    %vm4197 = vcmp.gt.f32.partialorder %v4165, 0.0
    %vm4198 = vcmp.gt.f32.partialorder %v4166, 0.0
    %vm4199 = vcmp.gt.f32.partialorder %v4167, 0.0
    %vm4200 = vcmp.gt.f32.partialorder %v4168, 0.0
    %vm4201 = vcmp.gt.f32.partialorder %v4169, 0.0
    %vm4202 = vcmp.gt.f32.partialorder %v4170, 0.0
    %vm4203 = vcmp.gt.f32.partialorder %v4171, 0.0
    %vm4204 = vcmp.gt.f32.partialorder %v4172, 0.0
    %vm4205 = vcmp.gt.f32.partialorder %v4173, 0.0
    %vm4206 = vcmp.gt.f32.partialorder %v4174, 0.0
    %vm4207 = vcmp.gt.f32.partialorder %v4175, 0.0
    %vm4208 = vcmp.gt.f32.partialorder %v4176, 0.0
    %vm4209 = vcmp.gt.f32.partialorder %v4177, 0.0
    %v4210 = vmin.f32 %v4146, 0.0
    %v4211 = vmin.f32 %v4147, 0.0
    %v4212 = vmin.f32 %v4148, 0.0
    %v4213 = vmin.f32 %v4149, 0.0
    %v4214 = vmin.f32 %v4150, 0.0
    %v4215 = vmin.f32 %v4151, 0.0
    %v4216 = vmin.f32 %v4152, 0.0
    %v4217 = vmin.f32 %v4153, 0.0
    %v4218 = vmin.f32 %v4154, 0.0
    %v4219 = vmin.f32 %v4155, 0.0
    %v4220 = vmin.f32 %v4156, 0.0
    %v4221 = vmin.f32 %v4157, 0.0
    %v4222 = vmin.f32 %v4158, 0.0
    %v4223 = vmin.f32 %v4159, 0.0
    %v4224 = vmin.f32 %v4160, 0.0
    %v4225 = vmin.f32 %v4161, 0.0
    %v4226 = vmin.f32 %v4162, 0.0
    %v4227 = vmin.f32 %v4163, 0.0
    %v4228 = vmin.f32 %v4164, 0.0
    %v4229 = vmin.f32 %v4165, 0.0
    %v4230 = vmin.f32 %v4166, 0.0
    %v4231 = vmin.f32 %v4167, 0.0
    %v4232 = vmin.f32 %v4168, 0.0
    %v4233 = vmin.f32 %v4169, 0.0
    %v4234 = vmin.f32 %v4170, 0.0
    %v4235 = vmin.f32 %v4171, 0.0
    %v4236 = vmin.f32 %v4172, 0.0
    %v4237 = vmin.f32 %v4173, 0.0
    %v4238 = vmin.f32 %v4174, 0.0
    %v4239 = vmin.f32 %v4175, 0.0
    %v4240 = vmin.f32 %v4176, 0.0
    %v4241 = vmin.f32 %v4177, 0.0
    %v4242 = vpack.c.bf16 %v4211, %v4210
    %v4243 = vpack.c.bf16 %v4213, %v4212
    %v4244 = vpack.c.bf16 %v4215, %v4214
    %v4245 = vpack.c.bf16 %v4217, %v4216
    %v4246 = vpack.c.bf16 %v4219, %v4218
    %v4247 = vpack.c.bf16 %v4221, %v4220
    %v4248 = vpack.c.bf16 %v4223, %v4222
    %v4249 = vpack.c.bf16 %v4225, %v4224
    %v4250 = vpack.c.bf16 %v4227, %v4226
    %v4251 = vpack.c.bf16 %v4229, %v4228
    %v4252 = vpack.c.bf16 %v4231, %v4230
    %v4253 = vpack.c.bf16 %v4233, %v4232
    %v4254 = vpack.c.bf16 %v4235, %v4234
    %v4255 = vpack.c.bf16 %v4237, %v4236
    %v4256 = vpack.c.bf16 %v4239, %v4238
    %v4257 = vpack.c.bf16 %v4241, %v4240
    %v4258 = vunpack.c.l.bf16 %v4242
    %v4259 = vunpack.c.h.bf16 %v4242
    %v4260 = vunpack.c.l.bf16 %v4243
    %v4261 = vunpack.c.h.bf16 %v4243
    %v4262 = vunpack.c.l.bf16 %v4244
    %v4263 = vunpack.c.h.bf16 %v4244
    %v4264 = vunpack.c.l.bf16 %v4245
    %v4265 = vunpack.c.h.bf16 %v4245
    %v4266 = vunpack.c.l.bf16 %v4246
    %v4267 = vunpack.c.h.bf16 %v4246
    %v4268 = vunpack.c.l.bf16 %v4247
    %v4269 = vunpack.c.h.bf16 %v4247
    %v4270 = vunpack.c.l.bf16 %v4248
    %v4271 = vunpack.c.h.bf16 %v4248
    %v4272 = vunpack.c.l.bf16 %v4249
    %v4273 = vunpack.c.h.bf16 %v4249
    %v4274 = vunpack.c.l.bf16 %v4250
    %v4275 = vunpack.c.h.bf16 %v4250
    %v4276 = vunpack.c.l.bf16 %v4251
    %v4277 = vunpack.c.h.bf16 %v4251
    %v4278 = vunpack.c.l.bf16 %v4252
    %v4279 = vunpack.c.h.bf16 %v4252
    %v4280 = vunpack.c.l.bf16 %v4253
    %v4281 = vunpack.c.h.bf16 %v4253
    %v4282 = vunpack.c.l.bf16 %v4254
    %v4283 = vunpack.c.h.bf16 %v4254
    %v4284 = vunpack.c.l.bf16 %v4255
    %v4285 = vunpack.c.h.bf16 %v4255
    %v4286 = vunpack.c.l.bf16 %v4256
    %v4287 = vunpack.c.h.bf16 %v4256
    %v4288 = vunpack.c.l.bf16 %v4257
    %v4289 = vunpack.c.h.bf16 %v4257
    %v4290 = vmul.f32 %v4258, 1.442695
    %v4291 = vpow.pop %v4290
    %v4292 = vmul.f32 %v4259, 1.442695
    %v4293 = vpow.pop %v4292
    %v4294 = vmul.f32 %v4260, 1.442695
    %v4295 = vpow.pop %v4294
    %v4296 = vmul.f32 %v4261, 1.442695
    %v4297 = vpow.pop %v4296
    %v4298 = vmul.f32 %v4262, 1.442695
    %v4299 = vpow.pop %v4298
    %v4300 = vmul.f32 %v4263, 1.442695
    %v4301 = vpow.pop %v4300
    %v4302 = vmul.f32 %v4264, 1.442695
    %v4303 = vpow.pop %v4302
    %v4304 = vmul.f32 %v4265, 1.442695
    %v4305 = vpow.pop %v4304
    %v4306 = vmul.f32 %v4266, 1.442695
    %v4307 = vpow.pop %v4306
    %v4308 = vmul.f32 %v4267, 1.442695
    %v4309 = vpow.pop %v4308
    %v4310 = vmul.f32 %v4268, 1.442695
    %v4311 = vpow.pop %v4310
    %v4312 = vmul.f32 %v4269, 1.442695
    %v4313 = vpow.pop %v4312
    %v4314 = vmul.f32 %v4270, 1.442695
    %v4315 = vpow.pop %v4314
    %v4316 = vmul.f32 %v4271, 1.442695
    %v4317 = vpow.pop %v4316
    %v4318 = vmul.f32 %v4272, 1.442695
    %v4319 = vpow.pop %v4318
    %v4320 = vmul.f32 %v4273, 1.442695
    %v4321 = vpow.pop %v4320
    %v4322 = vmul.f32 %v4274, 1.442695
    %v4323 = vpow.pop %v4322
    %v4324 = vmul.f32 %v4275, 1.442695
    %v4325 = vpow.pop %v4324
    %v4326 = vmul.f32 %v4276, 1.442695
    %v4327 = vpow.pop %v4326
    %v4328 = vmul.f32 %v4277, 1.442695
    %v4329 = vpow.pop %v4328
    %v4330 = vmul.f32 %v4278, 1.442695
    %v4331 = vpow.pop %v4330
    %v4332 = vmul.f32 %v4279, 1.442695
    %v4333 = vpow.pop %v4332
    %v4334 = vmul.f32 %v4280, 1.442695
    %v4335 = vpow.pop %v4334
    %v4336 = vmul.f32 %v4281, 1.442695
    %v4337 = vpow.pop %v4336
    %v4338 = vmul.f32 %v4282, 1.442695
    %v4339 = vpow.pop %v4338
    %v4340 = vmul.f32 %v4283, 1.442695
    %v4341 = vpow.pop %v4340
    %v4342 = vmul.f32 %v4284, 1.442695
    %v4343 = vpow.pop %v4342
    %v4344 = vmul.f32 %v4285, 1.442695
    %v4345 = vpow.pop %v4344
    %v4346 = vmul.f32 %v4286, 1.442695
    %v4347 = vpow.pop %v4346
    %v4348 = vmul.f32 %v4287, 1.442695
    %v4349 = vpow.pop %v4348
    %v4350 = vmul.f32 %v4288, 1.442695
    %v4351 = vpow.pop %v4350
    %v4352 = vmul.f32 %v4289, 1.442695
    %v4353 = vpow.pop %v4352
    %v4354 = vpack.c.bf16 %v4293, %v4291
    %v4355 = vpack.c.bf16 %v4297, %v4295
    %v4356 = vpack.c.bf16 %v4301, %v4299
    %v4357 = vpack.c.bf16 %v4305, %v4303
    %v4358 = vpack.c.bf16 %v4309, %v4307
    %v4359 = vpack.c.bf16 %v4313, %v4311
    %v4360 = vpack.c.bf16 %v4317, %v4315
    %v4361 = vpack.c.bf16 %v4321, %v4319
    %v4362 = vpack.c.bf16 %v4325, %v4323
    %v4363 = vpack.c.bf16 %v4329, %v4327
    %v4364 = vpack.c.bf16 %v4333, %v4331
    %v4365 = vpack.c.bf16 %v4337, %v4335
    %v4366 = vpack.c.bf16 %v4341, %v4339
    %v4367 = vpack.c.bf16 %v4345, %v4343
    %v4368 = vpack.c.bf16 %v4349, %v4347
    %v4369 = vpack.c.bf16 %v4353, %v4351
    %v4370 = vunpack.c.l.bf16 %v4354
    %v4371 = vunpack.c.h.bf16 %v4354
    %v4372 = vunpack.c.l.bf16 %v4355
    %v4373 = vunpack.c.h.bf16 %v4355
    %v4374 = vunpack.c.l.bf16 %v4356
    %v4375 = vunpack.c.h.bf16 %v4356
    %v4376 = vunpack.c.l.bf16 %v4357
    %v4377 = vunpack.c.h.bf16 %v4357
    %v4378 = vunpack.c.l.bf16 %v4358
    %v4379 = vunpack.c.h.bf16 %v4358
    %v4380 = vunpack.c.l.bf16 %v4359
    %v4381 = vunpack.c.h.bf16 %v4359
    %v4382 = vunpack.c.l.bf16 %v4360
    %v4383 = vunpack.c.h.bf16 %v4360
    %v4384 = vunpack.c.l.bf16 %v4361
    %v4385 = vunpack.c.h.bf16 %v4361
    %v4386 = vunpack.c.l.bf16 %v4362
    %v4387 = vunpack.c.h.bf16 %v4362
    %v4388 = vunpack.c.l.bf16 %v4363
    %v4389 = vunpack.c.h.bf16 %v4363
    %v4390 = vunpack.c.l.bf16 %v4364
    %v4391 = vunpack.c.h.bf16 %v4364
    %v4392 = vunpack.c.l.bf16 %v4365
    %v4393 = vunpack.c.h.bf16 %v4365
    %v4394 = vunpack.c.l.bf16 %v4366
    %v4395 = vunpack.c.h.bf16 %v4366
    %v4396 = vunpack.c.l.bf16 %v4367
    %v4397 = vunpack.c.h.bf16 %v4367
    %v4398 = vunpack.c.l.bf16 %v4368
    %v4399 = vunpack.c.h.bf16 %v4368
    %v4400 = vunpack.c.l.bf16 %v4369
    %v4401 = vunpack.c.h.bf16 %v4369
    %v4402 = vsub.f32 %v4370, 1.0
    %v4403 = vsub.f32 %v4371, 1.0
    %v4404 = vsub.f32 %v4372, 1.0
    %v4405 = vsub.f32 %v4373, 1.0
    %v4406 = vsub.f32 %v4374, 1.0
    %v4407 = vsub.f32 %v4375, 1.0
    %v4408 = vsub.f32 %v4376, 1.0
    %v4409 = vsub.f32 %v4377, 1.0
    %v4410 = vsub.f32 %v4378, 1.0
    %v4411 = vsub.f32 %v4379, 1.0
    %v4412 = vsub.f32 %v4380, 1.0
    %v4413 = vsub.f32 %v4381, 1.0
    %v4414 = vsub.f32 %v4382, 1.0
    %v4415 = vsub.f32 %v4383, 1.0
    %v4416 = vsub.f32 %v4384, 1.0
    %v4417 = vsub.f32 %v4385, 1.0
    %v4418 = vsub.f32 %v4386, 1.0
    %v4419 = vsub.f32 %v4387, 1.0
    %v4420 = vsub.f32 %v4388, 1.0
    %v4421 = vsub.f32 %v4389, 1.0
    %v4422 = vsub.f32 %v4390, 1.0
    %v4423 = vsub.f32 %v4391, 1.0
    %v4424 = vsub.f32 %v4392, 1.0
    %v4425 = vsub.f32 %v4393, 1.0
    %v4426 = vsub.f32 %v4394, 1.0
    %v4427 = vsub.f32 %v4395, 1.0
    %v4428 = vsub.f32 %v4396, 1.0
    %v4429 = vsub.f32 %v4397, 1.0
    %v4430 = vsub.f32 %v4398, 1.0
    %v4431 = vsub.f32 %v4399, 1.0
    %v4432 = vsub.f32 %v4400, 1.0
    %v4433 = vsub.f32 %v4401, 1.0
    %v4434 = vpack.c.bf16 %v4403, %v4402
    %v4435 = vpack.c.bf16 %v4405, %v4404
    %v4436 = vpack.c.bf16 %v4407, %v4406
    %v4437 = vpack.c.bf16 %v4409, %v4408
    %v4438 = vpack.c.bf16 %v4411, %v4410
    %v4439 = vpack.c.bf16 %v4413, %v4412
    %v4440 = vpack.c.bf16 %v4415, %v4414
    %v4441 = vpack.c.bf16 %v4417, %v4416
    %v4442 = vpack.c.bf16 %v4419, %v4418
    %v4443 = vpack.c.bf16 %v4421, %v4420
    %v4444 = vpack.c.bf16 %v4423, %v4422
    %v4445 = vpack.c.bf16 %v4425, %v4424
    %v4446 = vpack.c.bf16 %v4427, %v4426
    %v4447 = vpack.c.bf16 %v4429, %v4428
    %v4448 = vpack.c.bf16 %v4431, %v4430
    %v4449 = vpack.c.bf16 %v4433, %v4432
    %vm4450 = vmpackc.low %vm4179, %vm4178
    %vm4451 = vmpackc.low %vm4181, %vm4180
    %vm4452 = vmpackc.low %vm4183, %vm4182
    %vm4453 = vmpackc.low %vm4185, %vm4184
    %vm4454 = vmpackc.low %vm4187, %vm4186
    %vm4455 = vmpackc.low %vm4189, %vm4188
    %vm4456 = vmpackc.low %vm4191, %vm4190
    %vm4457 = vmpackc.low %vm4193, %vm4192
    %vm4458 = vmpackc.low %vm4195, %vm4194
    %vm4459 = vmpackc.low %vm4197, %vm4196
    %vm4460 = vmpackc.low %vm4199, %vm4198
    %vm4461 = vmpackc.low %vm4201, %vm4200
    %vm4462 = vmpackc.low %vm4203, %vm4202
    %vm4463 = vmpackc.low %vm4205, %vm4204
    %vm4464 = vmpackc.low %vm4207, %vm4206
    %vm4465 = vmpackc.low %vm4209, %vm4208
    %v4466 = vsel %vm4450, %v4130, %v4434
    %v4467 = vsel %vm4451, %v4131, %v4435
    %v4468 = vsel %vm4452, %v4132, %v4436
    %v4469 = vsel %vm4453, %v4133, %v4437
    %v4470 = vsel %vm4454, %v4134, %v4438
    %v4471 = vsel %vm4455, %v4135, %v4439
    %v4472 = vsel %vm4456, %v4136, %v4440
    %v4473 = vsel %vm4457, %v4137, %v4441
    %v4474 = vsel %vm4458, %v4138, %v4442
    %v4475 = vsel %vm4459, %v4139, %v4443
    %v4476 = vsel %vm4460, %v4140, %v4444
    %v4477 = vsel %vm4461, %v4141, %v4445
    %v4478 = vsel %vm4462, %v4142, %v4446
    %v4479 = vsel %vm4463, %v4143, %v4447
    %v4480 = vsel %vm4464, %v4144, %v4448
    %v4481 = vsel %vm4465, %v4145, %v4449
    %v4482 = vunpack.c.l.bf16 %v4466
    %v4483 = vunpack.c.h.bf16 %v4466
    %v4484 = vunpack.c.l.bf16 %v4467
    %v4485 = vunpack.c.h.bf16 %v4467
    %v4486 = vunpack.c.l.bf16 %v4468
    %v4487 = vunpack.c.h.bf16 %v4468
    %v4488 = vunpack.c.l.bf16 %v4469
    %v4489 = vunpack.c.h.bf16 %v4469
    %v4490 = vunpack.c.l.bf16 %v4470
    %v4491 = vunpack.c.h.bf16 %v4470
    %v4492 = vunpack.c.l.bf16 %v4471
    %v4493 = vunpack.c.h.bf16 %v4471
    %v4494 = vunpack.c.l.bf16 %v4472
    %v4495 = vunpack.c.h.bf16 %v4472
    %v4496 = vunpack.c.l.bf16 %v4473
    %v4497 = vunpack.c.h.bf16 %v4473
    %v4498 = vunpack.c.l.bf16 %v4474
    %v4499 = vunpack.c.h.bf16 %v4474
    %v4500 = vunpack.c.l.bf16 %v4475
    %v4501 = vunpack.c.h.bf16 %v4475
    %v4502 = vunpack.c.l.bf16 %v4476
    %v4503 = vunpack.c.h.bf16 %v4476
    %v4504 = vunpack.c.l.bf16 %v4477
    %v4505 = vunpack.c.h.bf16 %v4477
    %v4506 = vunpack.c.l.bf16 %v4478
    %v4507 = vunpack.c.h.bf16 %v4478
    %v4508 = vunpack.c.l.bf16 %v4479
    %v4509 = vunpack.c.h.bf16 %v4479
    %v4510 = vunpack.c.l.bf16 %v4480
    %v4511 = vunpack.c.h.bf16 %v4480
    %v4512 = vunpack.c.l.bf16 %v4481
    %v4513 = vunpack.c.h.bf16 %v4481
    %v4514 = vld [vmem:[%s9] sm:$0xff]
    %v4515 = vld [vmem:[%s9 + $0x8] sm:$0xff]
    %v4516 = vld [vmem:[%s9 + $0x10] sm:$0xff]
    %v4517 = vld [vmem:[%s9 + $0x18] sm:$0xff]
    %v4518 = vld [vmem:[%s9 + $0x20] sm:$0xff]
    %v4519 = vld [vmem:[%s9 + $0x28] sm:$0xff]
    %v4520 = vld [vmem:[%s9 + $0x30] sm:$0xff]
    %v4521 = vld [vmem:[%s9 + $0x38] sm:$0xff]
    %v4522 = vld [vmem:[%s9 + $0x40] sm:$0xff]
    %v4523 = vld [vmem:[%s9 + $0x48] sm:$0xff]
    %v4524 = vld [vmem:[%s9 + $0x50] sm:$0xff]
    %v4525 = vld [vmem:[%s9 + $0x58] sm:$0xff]
    %v4526 = vld [vmem:[%s9 + $0x60] sm:$0xff]
    %v4527 = vld [vmem:[%s9 + $0x68] sm:$0xff]
    %v4528 = vld [vmem:[%s9 + $0x70] sm:$0xff]
    %v4529 = vld [vmem:[%s9 + $0x78] sm:$0xff]
    %v4530 = vunpack.c.l.bf16 %v4514
    %v4531 = vunpack.c.h.bf16 %v4514
    %v4532 = vunpack.c.l.bf16 %v4515
    %v4533 = vunpack.c.h.bf16 %v4515
    %v4534 = vunpack.c.l.bf16 %v4516
    %v4535 = vunpack.c.h.bf16 %v4516
    %v4536 = vunpack.c.l.bf16 %v4517
    %v4537 = vunpack.c.h.bf16 %v4517
    %v4538 = vunpack.c.l.bf16 %v4518
    %v4539 = vunpack.c.h.bf16 %v4518
    %v4540 = vunpack.c.l.bf16 %v4519
    %v4541 = vunpack.c.h.bf16 %v4519
    %v4542 = vunpack.c.l.bf16 %v4520
    %v4543 = vunpack.c.h.bf16 %v4520
    %v4544 = vunpack.c.l.bf16 %v4521
    %v4545 = vunpack.c.h.bf16 %v4521
    %v4546 = vunpack.c.l.bf16 %v4522
    %v4547 = vunpack.c.h.bf16 %v4522
    %v4548 = vunpack.c.l.bf16 %v4523
    %v4549 = vunpack.c.h.bf16 %v4523
    %v4550 = vunpack.c.l.bf16 %v4524
    %v4551 = vunpack.c.h.bf16 %v4524
    %v4552 = vunpack.c.l.bf16 %v4525
    %v4553 = vunpack.c.h.bf16 %v4525
    %v4554 = vunpack.c.l.bf16 %v4526
    %v4555 = vunpack.c.h.bf16 %v4526
    %v4556 = vunpack.c.l.bf16 %v4527
    %v4557 = vunpack.c.h.bf16 %v4527
    %v4558 = vunpack.c.l.bf16 %v4528
    %v4559 = vunpack.c.h.bf16 %v4528
    %v4560 = vunpack.c.l.bf16 %v4529
    %v4561 = vunpack.c.h.bf16 %v4529
    %v4562 = vmul.f32 %v4482, %v4530
    %v4563 = vmul.f32 %v4483, %v4531
    %v4564 = vmul.f32 %v4484, %v4532
    %v4565 = vmul.f32 %v4485, %v4533
    %v4566 = vmul.f32 %v4486, %v4534
    %v4567 = vmul.f32 %v4487, %v4535
    %v4568 = vmul.f32 %v4488, %v4536
    %v4569 = vmul.f32 %v4489, %v4537
    %v4570 = vmul.f32 %v4490, %v4538
    %v4571 = vmul.f32 %v4491, %v4539
    %v4572 = vmul.f32 %v4492, %v4540
    %v4573 = vmul.f32 %v4493, %v4541
    %v4574 = vmul.f32 %v4494, %v4542
    %v4575 = vmul.f32 %v4495, %v4543
    %v4576 = vmul.f32 %v4496, %v4544
    %v4577 = vmul.f32 %v4497, %v4545
    %v4578 = vmul.f32 %v4498, %v4546
    %v4579 = vmul.f32 %v4499, %v4547
    %v4580 = vmul.f32 %v4500, %v4548
    %v4581 = vmul.f32 %v4501, %v4549
    %v4582 = vmul.f32 %v4502, %v4550
    %v4583 = vmul.f32 %v4503, %v4551
    %v4584 = vmul.f32 %v4504, %v4552
    %v4585 = vmul.f32 %v4505, %v4553
    %v4586 = vmul.f32 %v4506, %v4554
    %v4587 = vmul.f32 %v4507, %v4555
    %v4588 = vmul.f32 %v4508, %v4556
    %v4589 = vmul.f32 %v4509, %v4557
    %v4590 = vmul.f32 %v4510, %v4558
    %v4591 = vmul.f32 %v4511, %v4559
    %v4592 = vmul.f32 %v4512, %v4560
    %v4593 = vmul.f32 %v4513, %v4561
    %v4594 = vadd.f32 %v4562, %v4570
    %v4595 = vadd.f32 %v4594, %v4578
    %v4596 = vadd.f32 %v4595, %v4586
    %v4597 = vrot.slane %v4596, 4
    %v4598 = vadd.f32 %v4596, %v4597
    %v4599 = vrot.slane %v4598, 2
    %v4600 = vadd.f32 %v4598, %v4599
    %v4601 = vrot.slane %v4600, 1
    %v4602 = vadd.f32 %v4600, %v4601
    %v4603 = vadd.f32 %v4563, %v4571
    %v4604 = vadd.f32 %v4603, %v4579
    %v4605 = vadd.f32 %v4604, %v4587
    %v4606 = vrot.slane %v4605, 4
    %v4607 = vadd.f32 %v4605, %v4606
    %v4608 = vrot.slane %v4607, 2
    %v4609 = vadd.f32 %v4607, %v4608
    %v4610 = vrot.slane %v4609, 1
    %v4611 = vadd.f32 %v4609, %v4610
    %v4612 = vadd.f32 %v4564, %v4572
    %v4613 = vadd.f32 %v4612, %v4580
    %v4614 = vadd.f32 %v4613, %v4588
    %v4615 = vrot.slane %v4614, 4
    %v4616 = vadd.f32 %v4614, %v4615
    %v4617 = vrot.slane %v4616, 2
    %v4618 = vadd.f32 %v4616, %v4617
    %v4619 = vrot.slane %v4618, 1
    %v4620 = vadd.f32 %v4618, %v4619
    %v4621 = vadd.f32 %v4565, %v4573
    %v4622 = vadd.f32 %v4621, %v4581
    %v4623 = vadd.f32 %v4622, %v4589
    %v4624 = vrot.slane %v4623, 4
    %v4625 = vadd.f32 %v4623, %v4624
    %v4626 = vrot.slane %v4625, 2
    %v4627 = vadd.f32 %v4625, %v4626
    %v4628 = vrot.slane %v4627, 1
    %v4629 = vadd.f32 %v4627, %v4628
    %v4630 = vadd.f32 %v4566, %v4574
    %v4631 = vadd.f32 %v4630, %v4582
    %v4632 = vadd.f32 %v4631, %v4590
    %v4633 = vrot.slane %v4632, 4
    %v4634 = vadd.f32 %v4632, %v4633
    %v4635 = vrot.slane %v4634, 2
    %v4636 = vadd.f32 %v4634, %v4635
    %v4637 = vrot.slane %v4636, 1
    %v4638 = vadd.f32 %v4636, %v4637
    %v4639 = vadd.f32 %v4567, %v4575
    %v4640 = vadd.f32 %v4639, %v4583
    %v4641 = vadd.f32 %v4640, %v4591
    %v4642 = vrot.slane %v4641, 4
    %v4643 = vadd.f32 %v4641, %v4642
    %v4644 = vrot.slane %v4643, 2
    %v4645 = vadd.f32 %v4643, %v4644
    %v4646 = vrot.slane %v4645, 1
    %v4647 = vadd.f32 %v4645, %v4646
    %v4648 = vadd.f32 %v4568, %v4576
    %v4649 = vadd.f32 %v4648, %v4584
    %v4650 = vadd.f32 %v4649, %v4592
    %v4651 = vrot.slane %v4650, 4
    %v4652 = vadd.f32 %v4650, %v4651
    %v4653 = vrot.slane %v4652, 2
    %v4654 = vadd.f32 %v4652, %v4653
    %v4655 = vrot.slane %v4654, 1
    %v4656 = vadd.f32 %v4654, %v4655
    %v4657 = vadd.f32 %v4569, %v4577
    %v4658 = vadd.f32 %v4657, %v4585
    %v4659 = vadd.f32 %v4658, %v4593
    %v4660 = vrot.slane %v4659, 4
    %v4661 = vadd.f32 %v4659, %v4660
    %v4662 = vrot.slane %v4661, 2
    %v4663 = vadd.f32 %v4661, %v4662
    %v4664 = vrot.slane %v4663, 1
    %v4665 = vadd.f32 %v4663, %v4664
    %v4666 = vld [vmem:[%s10] sm:$0xff]
    %v4668 = vperm.slane %v4666, 0
    %v4669 = vperm.slane %v4666, 1
    %v4670 = vperm.slane %v4666, 2
    %v4671 = vperm.slane %v4666, 3
    %v4672 = vperm.slane %v4666, 4
    %v4673 = vperm.slane %v4666, 5
    %v4674 = vperm.slane %v4666, 6
    %v4675 = vperm.slane %v4666, 7
    %v4684 = vadd.f32 %v4602, %v4668
    %v4685 = vadd.f32 %v4611, %v4669
    %v4686 = vadd.f32 %v4620, %v4670
    %v4687 = vadd.f32 %v4629, %v4671
    %v4688 = vadd.f32 %v4638, %v4672
    %v4689 = vadd.f32 %v4647, %v4673
    %v4690 = vadd.f32 %v4656, %v4674
    %v4691 = vadd.f32 %v4665, %v4675
    %v4700 = vrot.slane %v4685, 7
    %v4701 = vrot.slane %v4686, 6
    %v4702 = vrot.slane %v4687, 5
    %v4703 = vrot.slane %v4688, 4
    %v4704 = vrot.slane %v4689, 3
    %v4705 = vrot.slane %v4690, 2
    %v4706 = vrot.slane %v4691, 1
    %vm4707 = vcmask 1040384
    %v4708 = vsel %vm4707, %v4684, %v4700
    %vm4709 = vcmask 1042434
    %v4710 = vsel %vm4709, %v4701, %v4702
    %vm4711 = vcmask 1041408
    %v4712 = vsel %vm4711, %v4708, %v4710
    %vm4713 = vcmask 1044484
    %v4714 = vsel %vm4713, %v4703, %v4704
    %vm4715 = vcmask 1046534
    %v4716 = vsel %vm4715, %v4705, %v4706
    %vm4717 = vcmask 1045508
    %v4718 = vsel %vm4717, %v4714, %v4716
    %vm4719 = vcmask 1043456
    %v4720 = vsel %vm4719, %v4712, %v4718
    %4722 = vst [vmem:[#allocation5] sm:$0xff] %v4720
    // Predicated region
    $region50: #{tpu_custom_call.1} parent=1 // pred_check
      _
    $region51: #{tpu_custom_call.1} parent=1 // pred_check_branch
      %4724 = sbr.rel (0) target = $region53
    $region52: #{tpu_custom_call.1} parent=1 // pred_region
      %4726 = vsyncadd [#allocation4], 0
      %s4728 = sshll.u32 [#allocation5], 4
      %s4729 = int_to_ptr.vmem [resolvable:$true] %s4728
      %s4730 = sshll.u32 %s11, 4
      %s4731 = int_to_ptr.hbm [resolvable:$true] %s4730
      %4733 = dma.vmem_to_hbm [thread:$0]  %s4729, 128, %s4731, [#allocation4]
    $region53: #{tpu_custom_call.1} parent=1 // pred_fallthru
      _
    // Predicated region
    $region54: #{tpu_custom_call.1} parent=1 // pred_check
      _
    $region55: #{tpu_custom_call.1} parent=1 // pred_check_branch
      %4735 = sbr.rel (0) target = $region57
    $region56: #{tpu_custom_call.1} parent=1 // pred_region
      %4737 = dma.done [#allocation4], 128
    $region57: #{tpu_custom_call.1} parent=1 // pred_fallthru
      _
    %4738 = vsyncpa [#allocation3], 1
    %4739 = vsyncpa [#allocation4], 1

// kernel: tpu_custom_call.1
$region0: #{tpu_custom_call.1}
  #allocation0 [shape = 'u32[]', space=smem, size = 0x4, offset = 0x4, fixed_abs, tag = 'smem constant byte address 0x4 - core index']
  #allocation1 [shape = 'u32[72,128]{1,0:T(1,128)}', space=vmem, size = 0x9000, scoped, tag = 'internal scratch']
  %s0 = inlined_call_operand.hbm [shape: bf16[64,1024], index: 0, kind: input, shape index: {}]
  %s1 = inlined_call_operand.vmem [shape: bf16[128,64], index: 1, kind: input, shape index: {}]
  %s2 = inlined_call_operand.vmem [shape: f32[128,1], index: 2, kind: input, shape index: {}]
  %s3 = inlined_call_operand.vmem [shape: bf16[64,128], index: 3, kind: input, shape index: {}]
  %s4 = inlined_call_operand.vmem [shape: f32[64,1], index: 4, kind: input, shape index: {}]
  %s5 = inlined_call_operand.vmem [shape: bf16[32,64], index: 5, kind: input, shape index: {}]
  %s6 = inlined_call_operand.vmem [shape: f32[32,1], index: 6, kind: input, shape index: {}]
  %s7 = inlined_call_operand.vmem [shape: bf16[32,32], index: 7, kind: input, shape index: {}]
  %s8 = inlined_call_operand.vmem [shape: f32[32,1], index: 8, kind: input, shape index: {}]
  %s9 = inlined_call_operand.vmem [shape: bf16[32,1024], index: 9, kind: input, shape index: {}]
  %s10 = inlined_call_operand.vmem [shape: f32[1,1024], index: 10, kind: input, shape index: {}]
  %s11 = inlined_call_operand.hbm [shape: f32[1,1024], index: 11, kind: output, shape index: {}]
  %s12 = sld [smem:[#allocation0]]
  $region58: #{tpu_custom_call.1} parent=0
    _
  %s14 = ssub.s32 1, %s12
  %s15 = scalar_select 0, %s14, %s12
  $region1: #{tpu_custom_call.1} parent=0
    #allocation2 [shape = 'u8[131072]{0}', space=vmem, size = 0x20000, scoped, tag = 'input window, operand 0, single buffered']
    #allocation3 [shape = 's32[1]{0}', space=sflag, size = 0x4, scoped, tag = 'scoped memory for tpu_custom_call.1']
    #allocation4 [shape = 's32[1]{0}', space=sflag, size = 0x4, scoped, tag = 'scoped memory for tpu_custom_call.1']
    #allocation5 [shape = 'u8[4096]{0}', space=vmem, size = 0x1000, scoped, tag = 'output window, operand 0, single buffered']
    %16 = vsyncpa [#allocation3], 0
    %17 = vsyncpa [#allocation4], 0
    // Predicated region
    $region2: #{tpu_custom_call.1} parent=1 // pred_check
      _
    $region3: #{tpu_custom_call.1} parent=1 // pred_check_branch
      %19 = sbr.rel (0) target = $region5
    $region4: #{tpu_custom_call.1} parent=1 // pred_region
      %21 = vsyncadd [#allocation3], 0
      %s22 = sshll.u32 %s0, 4
      %s23 = int_to_ptr.hbm [resolvable:$true] %s22
      %s24 = sshll.u32 [#allocation2], 4
      %s25 = int_to_ptr.vmem [resolvable:$true] %s24
      %30 = dma.hbm_to_vmem [thread:$0]  %s23, 4096, %s25, [#allocation3], 512, 512, 32
    $region5: #{tpu_custom_call.1} parent=1 // pred_fallthru
      _
    // Predicated region
    $region6: #{tpu_custom_call.1} parent=1 // pred_check
      _
    $region7: #{tpu_custom_call.1} parent=1 // pred_check_branch
      %32 = sbr.rel (0) target = $region9
    $region8: #{tpu_custom_call.1} parent=1 // pred_region
      _
    $region9: #{tpu_custom_call.1} parent=1 // pred_fallthru
      _
    // Predicated region
    $region10: #{tpu_custom_call.1} parent=1 // pred_check
      _
    $region11: #{tpu_custom_call.1} parent=1 // pred_check_branch
      %34 = sbr.rel (0) target = $region13
    $region12: #{tpu_custom_call.1} parent=1 // pred_region
      _
    $region13: #{tpu_custom_call.1} parent=1 // pred_fallthru
      _
    // Predicated region
    $region14: #{tpu_custom_call.1} parent=1 // pred_check
      _
    $region15: #{tpu_custom_call.1} parent=1 // pred_check_branch
      %36 = sbr.rel (0) target = $region17
    $region16: #{tpu_custom_call.1} parent=1 // pred_region
      _
    $region17: #{tpu_custom_call.1} parent=1 // pred_fallthru
      _
    // Predicated region
    $region18: #{tpu_custom_call.1} parent=1 // pred_check
      _
    $region19: #{tpu_custom_call.1} parent=1 // pred_check_branch
      %38 = sbr.rel (0) target = $region21
    $region20: #{tpu_custom_call.1} parent=1 // pred_region
      _
    $region21: #{tpu_custom_call.1} parent=1 // pred_fallthru
      _
    // Predicated region
    $region22: #{tpu_custom_call.1} parent=1 // pred_check
      _
    $region23: #{tpu_custom_call.1} parent=1 // pred_check_branch
      %40 = sbr.rel (0) target = $region25
    $region24: #{tpu_custom_call.1} parent=1 // pred_region
      _
    $region25: #{tpu_custom_call.1} parent=1 // pred_fallthru
      _
    // Predicated region
    $region26: #{tpu_custom_call.1} parent=1 // pred_check
      _
    $region27: #{tpu_custom_call.1} parent=1 // pred_check_branch
      %42 = sbr.rel (0) target = $region29
    $region28: #{tpu_custom_call.1} parent=1 // pred_region
      _
    $region29: #{tpu_custom_call.1} parent=1 // pred_fallthru
      _
    // Predicated region
    $region30: #{tpu_custom_call.1} parent=1 // pred_check
      _
    $region31: #{tpu_custom_call.1} parent=1 // pred_check_branch
      %44 = sbr.rel (0) target = $region33
    $region32: #{tpu_custom_call.1} parent=1 // pred_region
      _
    $region33: #{tpu_custom_call.1} parent=1 // pred_fallthru
      _
    // Predicated region
    $region34: #{tpu_custom_call.1} parent=1 // pred_check
      _
    $region35: #{tpu_custom_call.1} parent=1 // pred_check_branch
      %46 = sbr.rel (0) target = $region37
    $region36: #{tpu_custom_call.1} parent=1 // pred_region
      _
    $region37: #{tpu_custom_call.1} parent=1 // pred_fallthru
      _
    // Predicated region
    $region38: #{tpu_custom_call.1} parent=1 // pred_check
      _
    $region39: #{tpu_custom_call.1} parent=1 // pred_check_branch
      %48 = sbr.rel (0) target = $region41
    $region40: #{tpu_custom_call.1} parent=1 // pred_region
      _
    $region41: #{tpu_custom_call.1} parent=1 // pred_fallthru
      _
    // Predicated region
    $region42: #{tpu_custom_call.1} parent=1 // pred_check
      _
    $region43: #{tpu_custom_call.1} parent=1 // pred_check_branch
      %50 = sbr.rel (0) target = $region45
    $region44: #{tpu_custom_call.1} parent=1 // pred_region
      _
    $region45: #{tpu_custom_call.1} parent=1 // pred_fallthru
      _
    // Predicated region
    $region46: #{tpu_custom_call.1} parent=1 // pred_check
      _
    $region47: #{tpu_custom_call.1} parent=1 // pred_check_branch
      %52 = sbr.rel (0) target = $region49
    $region48: #{tpu_custom_call.1} parent=1 // pred_region
      %54 = dma.done [#allocation3], 4096
    $region49: #{tpu_custom_call.1} parent=1 // pred_fallthru
      _
    %v56 = vld [vmem:[#allocation2] sm:$0xff]
    %v57 = vld [vmem:[#allocation2 + $0x8] sm:$0xff]
    %v58 = vld [vmem:[#allocation2 + $0x10] sm:$0xff]
    %v59 = vld [vmem:[#allocation2 + $0x18] sm:$0xff]
    %v60 = vld [vmem:[#allocation2 + $0x20] sm:$0xff]
    %v61 = vld [vmem:[#allocation2 + $0x28] sm:$0xff]
    %v62 = vld [vmem:[#allocation2 + $0x30] sm:$0xff]
    %v63 = vld [vmem:[#allocation2 + $0x38] sm:$0xff]
    %v64 = vld [vmem:[#allocation2 + $0x40] sm:$0xff]
    %v65 = vld [vmem:[#allocation2 + $0x48] sm:$0xff]
    %v66 = vld [vmem:[#allocation2 + $0x50] sm:$0xff]
    %v67 = vld [vmem:[#allocation2 + $0x58] sm:$0xff]
    %v68 = vld [vmem:[#allocation2 + $0x60] sm:$0xff]
    %v69 = vld [vmem:[#allocation2 + $0x68] sm:$0xff]
    %v70 = vld [vmem:[#allocation2 + $0x70] sm:$0xff]
    %v71 = vld [vmem:[#allocation2 + $0x78] sm:$0xff]
    %v72 = vld [vmem:[#allocation2 + $0x80] sm:$0xff]
    %v73 = vld [vmem:[#allocation2 + $0x88] sm:$0xff]
    %v74 = vld [vmem:[#allocation2 + $0x90] sm:$0xff]
    %v75 = vld [vmem:[#allocation2 + $0x98] sm:$0xff]
    %v76 = vld [vmem:[#allocation2 + $0xa0] sm:$0xff]
    %v77 = vld [vmem:[#allocation2 + $0xa8] sm:$0xff]
    %v78 = vld [vmem:[#allocation2 + $0xb0] sm:$0xff]
    %v79 = vld [vmem:[#allocation2 + $0xb8] sm:$0xff]
    %v80 = vld [vmem:[#allocation2 + $0xc0] sm:$0xff]
    %v81 = vld [vmem:[#allocation2 + $0xc8] sm:$0xff]
    %v82 = vld [vmem:[#allocation2 + $0xd0] sm:$0xff]
    %v83 = vld [vmem:[#allocation2 + $0xd8] sm:$0xff]
    %v84 = vld [vmem:[#allocation2 + $0xe0] sm:$0xff]
    %v85 = vld [vmem:[#allocation2 + $0xe8] sm:$0xff]
    %v86 = vld [vmem:[#allocation2 + $0xf0] sm:$0xff]
    %v87 = vld [vmem:[#allocation2 + $0xf8] sm:$0xff]
    %v88 = vld [vmem:[%s1] sm:$0xf]
    %v89 = vld [vmem:[%s1 + $0x4] sm:$0xf]
    %v90 = vld [vmem:[%s1 + $0x8] sm:$0xf]
    %v91 = vld [vmem:[%s1 + $0xc] sm:$0xf]
    %v92 = vld [vmem:[%s1 + $0x10] sm:$0xf]
    %v93 = vld [vmem:[%s1 + $0x14] sm:$0xf]
    %v94 = vld [vmem:[%s1 + $0x18] sm:$0xf]
    %v95 = vld [vmem:[%s1 + $0x1c] sm:$0xf]
    %v96 = vld [vmem:[%s1 + $0x20] sm:$0xf]
    %v97 = vld [vmem:[%s1 + $0x24] sm:$0xf]
    %v98 = vld [vmem:[%s1 + $0x28] sm:$0xf]
    %v99 = vld [vmem:[%s1 + $0x2c] sm:$0xf]
    %v100 = vld [vmem:[%s1 + $0x30] sm:$0xf]
    %v101 = vld [vmem:[%s1 + $0x34] sm:$0xf]
    %v102 = vld [vmem:[%s1 + $0x38] sm:$0xf]
    %v103 = vld [vmem:[%s1 + $0x3c] sm:$0xf]
    %v104 = vld [vmem:[%s2] sm:$0xff]
    %v105 = vld [vmem:[%s2 + $0x8] sm:$0xff]
    %v106 = vld [vmem:[%s2 + $0x10] sm:$0xff]
    %v107 = vld [vmem:[%s2 + $0x18] sm:$0xff]
    %v108 = vld [vmem:[%s2 + $0x20] sm:$0xff]
    %v109 = vld [vmem:[%s2 + $0x28] sm:$0xff]
    %v110 = vld [vmem:[%s2 + $0x30] sm:$0xff]
    %v111 = vld [vmem:[%s2 + $0x38] sm:$0xff]
    %v112 = vld [vmem:[%s2 + $0x40] sm:$0xff]
    %v113 = vld [vmem:[%s2 + $0x48] sm:$0xff]
    %v114 = vld [vmem:[%s2 + $0x50] sm:$0xff]
    %v115 = vld [vmem:[%s2 + $0x58] sm:$0xff]
    %v116 = vld [vmem:[%s2 + $0x60] sm:$0xff]
    %v117 = vld [vmem:[%s2 + $0x68] sm:$0xff]
    %v118 = vld [vmem:[%s2 + $0x70] sm:$0xff]
    %v119 = vld [vmem:[%s2 + $0x78] sm:$0xff]
    %121 = vset.pattern.permute.xlu0 0
    %122 = vperm.xlu0 %121, %v104
    %v123 = vpop.permute.xlu0 %122
    %126 = vset.pattern.permute.xlu0 0
    %127 = vperm.xlu0 %126, %v105
    %v128 = vpop.permute.xlu0 %127
    %131 = vset.pattern.permute.xlu0 0
    %132 = vperm.xlu0 %131, %v106
    %v133 = vpop.permute.xlu0 %132
    %136 = vset.pattern.permute.xlu0 0
    %137 = vperm.xlu0 %136, %v107
    %v138 = vpop.permute.xlu0 %137
    %141 = vset.pattern.permute.xlu0 0
    %142 = vperm.xlu0 %141, %v108
    %v143 = vpop.permute.xlu0 %142
    %146 = vset.pattern.permute.xlu0 0
    %147 = vperm.xlu0 %146, %v109
    %v148 = vpop.permute.xlu0 %147
    %151 = vset.pattern.permute.xlu0 0
    %152 = vperm.xlu0 %151, %v110
    %v153 = vpop.permute.xlu0 %152
    %156 = vset.pattern.permute.xlu0 0
    %157 = vperm.xlu0 %156, %v111
    %v158 = vpop.permute.xlu0 %157
    %161 = vset.pattern.permute.xlu0 0
    %162 = vperm.xlu0 %161, %v112
    %v163 = vpop.permute.xlu0 %162
    %166 = vset.pattern.permute.xlu0 0
    %167 = vperm.xlu0 %166, %v113
    %v168 = vpop.permute.xlu0 %167
    %171 = vset.pattern.permute.xlu0 0
    %172 = vperm.xlu0 %171, %v114
    %v173 = vpop.permute.xlu0 %172
    %176 = vset.pattern.permute.xlu0 0
    %177 = vperm.xlu0 %176, %v115
    %v178 = vpop.permute.xlu0 %177
    %181 = vset.pattern.permute.xlu0 0
    %182 = vperm.xlu0 %181, %v116
    %v183 = vpop.permute.xlu0 %182
    %186 = vset.pattern.permute.xlu0 0
    %187 = vperm.xlu0 %186, %v117
    %v188 = vpop.permute.xlu0 %187
    %191 = vset.pattern.permute.xlu0 0
    %192 = vperm.xlu0 %191, %v118
    %v193 = vpop.permute.xlu0 %192
    %196 = vset.pattern.permute.xlu0 0
    %197 = vperm.xlu0 %196, %v119
    %v198 = vpop.permute.xlu0 %197
    %v216 = vunpack.c.l.b16 %v88
    %v217 = vunpack.c.l.b16 %v89
    %v218 = vunpack.c.l.b16 %v90
    %v219 = vunpack.c.l.b16 %v91
    %v220 = vunpack.c.l.b16 %v92
    %v221 = vunpack.c.l.b16 %v93
    %v222 = vunpack.c.l.b16 %v94
    %v223 = vunpack.c.l.b16 %v95
    %v224 = vunpack.c.l.b16 %v96
    %v225 = vunpack.c.l.b16 %v97
    %v226 = vunpack.c.l.b16 %v98
    %v227 = vunpack.c.l.b16 %v99
    %v228 = vunpack.c.l.b16 %v100
    %v229 = vunpack.c.l.b16 %v101
    %v230 = vunpack.c.l.b16 %v102
    %v231 = vunpack.c.l.b16 %v103
    %v232 = vpack.c.b16 %v217, %v216
    %v233 = vpack.c.b16 %v219, %v218
    %v234 = vpack.c.b16 %v221, %v220
    %v235 = vpack.c.b16 %v223, %v222
    %v236 = vpack.c.b16 %v225, %v224
    %v237 = vpack.c.b16 %v227, %v226
    %v238 = vpack.c.b16 %v229, %v228
    %v239 = vpack.c.b16 %v231, %v230
    %v272 = vunpack.c.l.b16 %v56
    %v273 = vunpack.c.h.b16 %v56
    %v274 = vunpack.c.l.b16 %v57
    %v275 = vunpack.c.h.b16 %v57
    %v276 = vunpack.c.l.b16 %v58
    %v277 = vunpack.c.h.b16 %v58
    %v278 = vunpack.c.l.b16 %v59
    %v279 = vunpack.c.h.b16 %v59
    %v280 = vunpack.c.l.b16 %v60
    %v281 = vunpack.c.h.b16 %v60
    %v282 = vunpack.c.l.b16 %v61
    %v283 = vunpack.c.h.b16 %v61
    %v284 = vunpack.c.l.b16 %v62
    %v285 = vunpack.c.h.b16 %v62
    %v286 = vunpack.c.l.b16 %v63
    %v287 = vunpack.c.h.b16 %v63
    %v288 = vunpack.c.l.b16 %v64
    %v289 = vunpack.c.h.b16 %v64
    %v290 = vunpack.c.l.b16 %v65
    %v291 = vunpack.c.h.b16 %v65
    %v292 = vunpack.c.l.b16 %v66
    %v293 = vunpack.c.h.b16 %v66
    %v294 = vunpack.c.l.b16 %v67
    %v295 = vunpack.c.h.b16 %v67
    %v296 = vunpack.c.l.b16 %v68
    %v297 = vunpack.c.h.b16 %v68
    %v298 = vunpack.c.l.b16 %v69
    %v299 = vunpack.c.h.b16 %v69
    %v300 = vunpack.c.l.b16 %v70
    %v301 = vunpack.c.h.b16 %v70
    %v302 = vunpack.c.l.b16 %v71
    %v303 = vunpack.c.h.b16 %v71
    %v304 = vunpack.c.l.b16 %v72
    %v305 = vunpack.c.h.b16 %v72
    %v306 = vunpack.c.l.b16 %v73
    %v307 = vunpack.c.h.b16 %v73
    %v308 = vunpack.c.l.b16 %v74
    %v309 = vunpack.c.h.b16 %v74
    %v310 = vunpack.c.l.b16 %v75
    %v311 = vunpack.c.h.b16 %v75
    %v312 = vunpack.c.l.b16 %v76
    %v313 = vunpack.c.h.b16 %v76
    %v314 = vunpack.c.l.b16 %v77
    %v315 = vunpack.c.h.b16 %v77
    %v316 = vunpack.c.l.b16 %v78
    %v317 = vunpack.c.h.b16 %v78
    %v318 = vunpack.c.l.b16 %v79
    %v319 = vunpack.c.h.b16 %v79
    %v320 = vunpack.c.l.b16 %v80
    %v321 = vunpack.c.h.b16 %v80
    %v322 = vunpack.c.l.b16 %v81
    %v323 = vunpack.c.h.b16 %v81
    %v324 = vunpack.c.l.b16 %v82
    %v325 = vunpack.c.h.b16 %v82
    %v326 = vunpack.c.l.b16 %v83
    %v327 = vunpack.c.h.b16 %v83
    %v328 = vunpack.c.l.b16 %v84
    %v329 = vunpack.c.h.b16 %v84
    %v330 = vunpack.c.l.b16 %v85
    %v331 = vunpack.c.h.b16 %v85
    %v332 = vunpack.c.l.b16 %v86
    %v333 = vunpack.c.h.b16 %v86
    %v334 = vunpack.c.l.b16 %v87
    %v335 = vunpack.c.h.b16 %v87
    %v336 = vpack.c.b16 %v280, %v272
    %v337 = vpack.c.b16 %v281, %v273
    %v338 = vpack.c.b16 %v282, %v274
    %v339 = vpack.c.b16 %v283, %v275
    %v340 = vpack.c.b16 %v284, %v276
    %v341 = vpack.c.b16 %v285, %v277
    %v342 = vpack.c.b16 %v286, %v278
    %v343 = vpack.c.b16 %v287, %v279
    %v344 = vpack.c.b16 %v296, %v288
    %v345 = vpack.c.b16 %v297, %v289
    %v346 = vpack.c.b16 %v298, %v290
    %v347 = vpack.c.b16 %v299, %v291
    %v348 = vpack.c.b16 %v300, %v292
    %v349 = vpack.c.b16 %v301, %v293
    %v350 = vpack.c.b16 %v302, %v294
    %v351 = vpack.c.b16 %v303, %v295
    %v352 = vpack.c.b16 %v312, %v304
    %v353 = vpack.c.b16 %v313, %v305
    %v354 = vpack.c.b16 %v314, %v306
    %v355 = vpack.c.b16 %v315, %v307
    %v356 = vpack.c.b16 %v316, %v308
    %v357 = vpack.c.b16 %v317, %v309
    %v358 = vpack.c.b16 %v318, %v310
    %v359 = vpack.c.b16 %v319, %v311
    %v360 = vpack.c.b16 %v328, %v320
    %v361 = vpack.c.b16 %v329, %v321
    %v362 = vpack.c.b16 %v330, %v322
    %v363 = vpack.c.b16 %v331, %v323
    %v364 = vpack.c.b16 %v332, %v324
    %v365 = vpack.c.b16 %v333, %v325
    %v366 = vpack.c.b16 %v334, %v326
    %v367 = vpack.c.b16 %v335, %v327
    %vm400 = vcmask 523264
    %v402 = vsel %vm400, %v232, 0
    %v405 = vsel %vm400, %v233, 0
    %v408 = vsel %vm400, %v234, 0
    %v411 = vsel %vm400, %v235, 0
    %v414 = vsel %vm400, %v236, 0
    %v417 = vsel %vm400, %v237, 0
    %v420 = vsel %vm400, %v238, 0
    %v423 = vsel %vm400, %v239, 0
    %425 = vmatpush.bf16.msra.mxu0 0
    %426 = vmatpush.bf16.msra.mxu0 0
    %427 = vmatpush.bf16.msra.mxu0 0
    %428 = vmatpush.bf16.msra.mxu0 0
    %429 = vmatpush.bf16.msra.mxu0 %v360
    %430 = vmatpush.bf16.msra.mxu0 %v352
    %431 = vmatpush.bf16.msra.mxu0 %v344
    %432 = vmatpush.bf16.msra.mxu0 %v336
    %433 = vmatmul.bf16.gmra.mxu0 %v402
    %v434 = vpop.f32.mrf.mxu0
    %v435 = vadd.f32 %v123, %v434
    %v436 = vpop.f32.mrf.mxu0
    %v437 = vadd.f32 %v128, %v436
    %438 = vmatmul.bf16.gmra.mxu0 %v405
    %v439 = vpop.f32.mrf.mxu0
    %v440 = vadd.f32 %v133, %v439
    %v441 = vpop.f32.mrf.mxu0
    %v442 = vadd.f32 %v138, %v441
    %443 = vmatmul.bf16.gmra.mxu0 %v408
    %v444 = vpop.f32.mrf.mxu0
    %v445 = vadd.f32 %v143, %v444
    %v446 = vpop.f32.mrf.mxu0
    %v447 = vadd.f32 %v148, %v446
    %448 = vmatmul.bf16.gmra.mxu0 %v411
    %v449 = vpop.f32.mrf.mxu0
    %v450 = vadd.f32 %v153, %v449
    %v451 = vpop.f32.mrf.mxu0
    %v452 = vadd.f32 %v158, %v451
    %453 = vmatmul.bf16.gmra.mxu0 %v414
    %v454 = vpop.f32.mrf.mxu0
    %v455 = vadd.f32 %v163, %v454
    %v456 = vpop.f32.mrf.mxu0
    %v457 = vadd.f32 %v168, %v456
    %458 = vmatmul.bf16.gmra.mxu0 %v417
    %v459 = vpop.f32.mrf.mxu0
    %v460 = vadd.f32 %v173, %v459
    %v461 = vpop.f32.mrf.mxu0
    %v462 = vadd.f32 %v178, %v461
    %463 = vmatmul.bf16.gmra.mxu0 %v420
    %v464 = vpop.f32.mrf.mxu0
    %v465 = vadd.f32 %v183, %v464
    %v466 = vpop.f32.mrf.mxu0
    %v467 = vadd.f32 %v188, %v466
    %468 = vmatmul.bf16.gmra.mxu0 %v423
    %v469 = vpop.f32.mrf.mxu0
    %v470 = vadd.f32 %v193, %v469
    %v471 = vpop.f32.mrf.mxu0
    %v472 = vadd.f32 %v198, %v471
    %473 = vdwg.mxu0
    %474 = vmatpush.bf16.msra.mxu0 0
    %475 = vmatpush.bf16.msra.mxu0 0
    %476 = vmatpush.bf16.msra.mxu0 0
    %477 = vmatpush.bf16.msra.mxu0 0
    %478 = vmatpush.bf16.msra.mxu0 %v361
    %479 = vmatpush.bf16.msra.mxu0 %v353
    %480 = vmatpush.bf16.msra.mxu0 %v345
    %481 = vmatpush.bf16.msra.mxu0 %v337
    %482 = vmatmul.bf16.gmra.mxu0 %v402
    %v483 = vpop.f32.mrf.mxu0
    %v484 = vadd.f32 %v123, %v483
    %v485 = vpop.f32.mrf.mxu0
    %v486 = vadd.f32 %v128, %v485
    %487 = vmatmul.bf16.gmra.mxu0 %v405
    %v488 = vpop.f32.mrf.mxu0
    %v489 = vadd.f32 %v133, %v488
    %v490 = vpop.f32.mrf.mxu0
    %v491 = vadd.f32 %v138, %v490
    %492 = vmatmul.bf16.gmra.mxu0 %v408
    %v493 = vpop.f32.mrf.mxu0
    %v494 = vadd.f32 %v143, %v493
    %v495 = vpop.f32.mrf.mxu0
    %v496 = vadd.f32 %v148, %v495
    %497 = vmatmul.bf16.gmra.mxu0 %v411
    %v498 = vpop.f32.mrf.mxu0
    %v499 = vadd.f32 %v153, %v498
    %v500 = vpop.f32.mrf.mxu0
    %v501 = vadd.f32 %v158, %v500
    %502 = vmatmul.bf16.gmra.mxu0 %v414
    %v503 = vpop.f32.mrf.mxu0
    %v504 = vadd.f32 %v163, %v503
    %v505 = vpop.f32.mrf.mxu0
    %v506 = vadd.f32 %v168, %v505
    %507 = vmatmul.bf16.gmra.mxu0 %v417
    %v508 = vpop.f32.mrf.mxu0
    %v509 = vadd.f32 %v173, %v508
    %v510 = vpop.f32.mrf.mxu0
    %v511 = vadd.f32 %v178, %v510
    %512 = vmatmul.bf16.gmra.mxu0 %v420
    %v513 = vpop.f32.mrf.mxu0
    %v514 = vadd.f32 %v183, %v513
    %v515 = vpop.f32.mrf.mxu0
    %v516 = vadd.f32 %v188, %v515
    %517 = vmatmul.bf16.gmra.mxu0 %v423
    %v518 = vpop.f32.mrf.mxu0
    %v519 = vadd.f32 %v193, %v518
    %v520 = vpop.f32.mrf.mxu0
    %v521 = vadd.f32 %v198, %v520
    %522 = vdwg.mxu0
    %523 = vmatpush.bf16.msra.mxu0 0
    %524 = vmatpush.bf16.msra.mxu0 0
    %525 = vmatpush.bf16.msra.mxu0 0
    %526 = vmatpush.bf16.msra.mxu0 0
    %527 = vmatpush.bf16.msra.mxu0 %v362
    %528 = vmatpush.bf16.msra.mxu0 %v354
    %529 = vmatpush.bf16.msra.mxu0 %v346
    %530 = vmatpush.bf16.msra.mxu0 %v338
    %531 = vmatmul.bf16.gmra.mxu0 %v402
    %v532 = vpop.f32.mrf.mxu0
    %v533 = vadd.f32 %v123, %v532
    %v534 = vpop.f32.mrf.mxu0
    %v535 = vadd.f32 %v128, %v534
    %536 = vmatmul.bf16.gmra.mxu0 %v405
    %v537 = vpop.f32.mrf.mxu0
    %v538 = vadd.f32 %v133, %v537
    %v539 = vpop.f32.mrf.mxu0
    %v540 = vadd.f32 %v138, %v539
    %541 = vmatmul.bf16.gmra.mxu0 %v408
    %v542 = vpop.f32.mrf.mxu0
    %v543 = vadd.f32 %v143, %v542
    %v544 = vpop.f32.mrf.mxu0
    %v545 = vadd.f32 %v148, %v544
    %546 = vmatmul.bf16.gmra.mxu0 %v411
    %v547 = vpop.f32.mrf.mxu0
    %v548 = vadd.f32 %v153, %v547
    %v549 = vpop.f32.mrf.mxu0
    %v550 = vadd.f32 %v158, %v549
    %551 = vmatmul.bf16.gmra.mxu0 %v414
    %v552 = vpop.f32.mrf.mxu0
    %v553 = vadd.f32 %v163, %v552
    %v554 = vpop.f32.mrf.mxu0
    %v555 = vadd.f32 %v168, %v554
    %556 = vmatmul.bf16.gmra.mxu0 %v417
    %v557 = vpop.f32.mrf.mxu0
    %v558 = vadd.f32 %v173, %v557
    %v559 = vpop.f32.mrf.mxu0
    %v560 = vadd.f32 %v178, %v559
    %561 = vmatmul.bf16.gmra.mxu0 %v420
    %v562 = vpop.f32.mrf.mxu0
    %v563 = vadd.f32 %v183, %v562
    %v564 = vpop.f32.mrf.mxu0
    %v565 = vadd.f32 %v188, %v564
    %566 = vmatmul.bf16.gmra.mxu0 %v423
    %v567 = vpop.f32.mrf.mxu0
    %v568 = vadd.f32 %v193, %v567
    %v569 = vpop.f32.mrf.mxu0
    %v570 = vadd.f32 %v198, %v569
    %571 = vdwg.mxu0
    %572 = vmatpush.bf16.msra.mxu0 0
    %573 = vmatpush.bf16.msra.mxu0 0
    %574 = vmatpush.bf16.msra.mxu0 0
    %575 = vmatpush.bf16.msra.mxu0 0
    %576 = vmatpush.bf16.msra.mxu0 %v363
    %577 = vmatpush.bf16.msra.mxu0 %v355
    %578 = vmatpush.bf16.msra.mxu0 %v347
    %579 = vmatpush.bf16.msra.mxu0 %v339
    %580 = vmatmul.bf16.gmra.mxu0 %v402
    %v581 = vpop.f32.mrf.mxu0
    %v582 = vadd.f32 %v123, %v581
    %v583 = vpop.f32.mrf.mxu0
    %v584 = vadd.f32 %v128, %v583
    %585 = vmatmul.bf16.gmra.mxu0 %v405
    %v586 = vpop.f32.mrf.mxu0
    %v587 = vadd.f32 %v133, %v586
    %v588 = vpop.f32.mrf.mxu0
    %v589 = vadd.f32 %v138, %v588
    %590 = vmatmul.bf16.gmra.mxu0 %v408
    %v591 = vpop.f32.mrf.mxu0
    %v592 = vadd.f32 %v143, %v591
    %v593 = vpop.f32.mrf.mxu0
    %v594 = vadd.f32 %v148, %v593
    %595 = vmatmul.bf16.gmra.mxu0 %v411
    %v596 = vpop.f32.mrf.mxu0
    %v597 = vadd.f32 %v153, %v596
    %v598 = vpop.f32.mrf.mxu0
    %v599 = vadd.f32 %v158, %v598
    %600 = vmatmul.bf16.gmra.mxu0 %v414
    %v601 = vpop.f32.mrf.mxu0
    %v602 = vadd.f32 %v163, %v601
    %v603 = vpop.f32.mrf.mxu0
    %v604 = vadd.f32 %v168, %v603
    %605 = vmatmul.bf16.gmra.mxu0 %v417
    %v606 = vpop.f32.mrf.mxu0
    %v607 = vadd.f32 %v173, %v606
    %v608 = vpop.f32.mrf.mxu0
    %v609 = vadd.f32 %v178, %v608
    %610 = vmatmul.bf16.gmra.mxu0 %v420
    %v611 = vpop.f32.mrf.mxu0
    %v612 = vadd.f32 %v183, %v611
    %v613 = vpop.f32.mrf.mxu0
    %v614 = vadd.f32 %v188, %v613
    %615 = vmatmul.bf16.gmra.mxu0 %v423
    %v616 = vpop.f32.mrf.mxu0
    %v617 = vadd.f32 %v193, %v616
    %v618 = vpop.f32.mrf.mxu0
    %v619 = vadd.f32 %v198, %v618
    %620 = vdwg.mxu0
    %621 = vmatpush.bf16.msra.mxu0 0
    %622 = vmatpush.bf16.msra.mxu0 0
    %623 = vmatpush.bf16.msra.mxu0 0
    %624 = vmatpush.bf16.msra.mxu0 0
    %625 = vmatpush.bf16.msra.mxu0 %v364
    %626 = vmatpush.bf16.msra.mxu0 %v356
    %627 = vmatpush.bf16.msra.mxu0 %v348
    %628 = vmatpush.bf16.msra.mxu0 %v340
    %629 = vmatmul.bf16.gmra.mxu0 %v402
    %v630 = vpop.f32.mrf.mxu0
    %v631 = vadd.f32 %v123, %v630
    %v632 = vpop.f32.mrf.mxu0
    %v633 = vadd.f32 %v128, %v632
    %634 = vmatmul.bf16.gmra.mxu0 %v405
    %v635 = vpop.f32.mrf.mxu0
    %v636 = vadd.f32 %v133, %v635
    %v637 = vpop.f32.mrf.mxu0
    %v638 = vadd.f32 %v138, %v637
    %639 = vmatmul.bf16.gmra.mxu0 %v408
    %v640 = vpop.f32.mrf.mxu0
    %v641 = vadd.f32 %v143, %v640
    %v642 = vpop.f32.mrf.mxu0
    %v643 = vadd.f32 %v148, %v642
    %644 = vmatmul.bf16.gmra.mxu0 %v411
    %v645 = vpop.f32.mrf.mxu0
    %v646 = vadd.f32 %v153, %v645
    %v647 = vpop.f32.mrf.mxu0
    %v648 = vadd.f32 %v158, %v647
    %649 = vmatmul.bf16.gmra.mxu0 %v414
    %v650 = vpop.f32.mrf.mxu0
    %v651 = vadd.f32 %v163, %v650
    %v652 = vpop.f32.mrf.mxu0
    %v653 = vadd.f32 %v168, %v652
    %654 = vmatmul.bf16.gmra.mxu0 %v417
    %v655 = vpop.f32.mrf.mxu0
    %v656 = vadd.f32 %v173, %v655
    %v657 = vpop.f32.mrf.mxu0
    %v658 = vadd.f32 %v178, %v657
    %659 = vmatmul.bf16.gmra.mxu0 %v420
    %v660 = vpop.f32.mrf.mxu0
    %v661 = vadd.f32 %v183, %v660
    %v662 = vpop.f32.mrf.mxu0
    %v663 = vadd.f32 %v188, %v662
    %664 = vmatmul.bf16.gmra.mxu0 %v423
    %v665 = vpop.f32.mrf.mxu0
    %v666 = vadd.f32 %v193, %v665
    %v667 = vpop.f32.mrf.mxu0
    %v668 = vadd.f32 %v198, %v667
    %669 = vdwg.mxu0
    %670 = vmatpush.bf16.msra.mxu0 0
    %671 = vmatpush.bf16.msra.mxu0 0
    %672 = vmatpush.bf16.msra.mxu0 0
    %673 = vmatpush.bf16.msra.mxu0 0
    %674 = vmatpush.bf16.msra.mxu0 %v365
    %675 = vmatpush.bf16.msra.mxu0 %v357
    %676 = vmatpush.bf16.msra.mxu0 %v349
    %677 = vmatpush.bf16.msra.mxu0 %v341
    %678 = vmatmul.bf16.gmra.mxu0 %v402
    %v679 = vpop.f32.mrf.mxu0
    %v680 = vadd.f32 %v123, %v679
    %v681 = vpop.f32.mrf.mxu0
    %v682 = vadd.f32 %v128, %v681
    %683 = vmatmul.bf16.gmra.mxu0 %v405
    %v684 = vpop.f32.mrf.mxu0
    %v685 = vadd.f32 %v133, %v684
    %v686 = vpop.f32.mrf.mxu0
    %v687 = vadd.f32 %v138, %v686
    %688 = vmatmul.bf16.gmra.mxu0 %v408
    %v689 = vpop.f32.mrf.mxu0
    %v690 = vadd.f32 %v143, %v689
    %v691 = vpop.f32.mrf.mxu0
    %v692 = vadd.f32 %v148, %v691
    %693 = vmatmul.bf16.gmra.mxu0 %v411
    %v694 = vpop.f32.mrf.mxu0
    %v695 = vadd.f32 %v153, %v694
    %v696 = vpop.f32.mrf.mxu0
    %v697 = vadd.f32 %v158, %v696
    %698 = vmatmul.bf16.gmra.mxu0 %v414
    %v699 = vpop.f32.mrf.mxu0
    %v700 = vadd.f32 %v163, %v699
    %v701 = vpop.f32.mrf.mxu0
    %v702 = vadd.f32 %v168, %v701
    %703 = vmatmul.bf16.gmra.mxu0 %v417
    %v704 = vpop.f32.mrf.mxu0
    %v705 = vadd.f32 %v173, %v704
    %v706 = vpop.f32.mrf.mxu0
    %v707 = vadd.f32 %v178, %v706
    %708 = vmatmul.bf16.gmra.mxu0 %v420
    %v709 = vpop.f32.mrf.mxu0
    %v710 = vadd.f32 %v183, %v709
    %v711 = vpop.f32.mrf.mxu0
    %v712 = vadd.f32 %v188, %v711
    %713 = vmatmul.bf16.gmra.mxu0 %v423
    %v714 = vpop.f32.mrf.mxu0
    %v715 = vadd.f32 %v193, %v714
    %v716 = vpop.f32.mrf.mxu0
    %v717 = vadd.f32 %v198, %v716
    %718 = vdwg.mxu0
    %719 = vmatpush.bf16.msra.mxu0 0
    %720 = vmatpush.bf16.msra.mxu0 0
    %721 = vmatpush.bf16.msra.mxu0 0
    %722 = vmatpush.bf16.msra.mxu0 0
    %723 = vmatpush.bf16.msra.mxu0 %v366
    %724 = vmatpush.bf16.msra.mxu0 %v358
    %725 = vmatpush.bf16.msra.mxu0 %v350
    %726 = vmatpush.bf16.msra.mxu0 %v342
    %727 = vmatmul.bf16.gmra.mxu0 %v402
    %v728 = vpop.f32.mrf.mxu0
    %v729 = vadd.f32 %v123, %v728
    %v730 = vpop.f32.mrf.mxu0
    %v731 = vadd.f32 %v128, %v730
    %732 = vmatmul.bf16.gmra.mxu0 %v405
    %v733 = vpop.f32.mrf.mxu0
    %v734 = vadd.f32 %v133, %v733
    %v735 = vpop.f32.mrf.mxu0
    %v736 = vadd.f32 %v138, %v735
    %737 = vmatmul.bf16.gmra.mxu0 %v408
    %v738 = vpop.f32.mrf.mxu0
    %v739 = vadd.f32 %v143, %v738
    %v740 = vpop.f32.mrf.mxu0
    %v741 = vadd.f32 %v148, %v740
    %742 = vmatmul.bf16.gmra.mxu0 %v411
    %v743 = vpop.f32.mrf.mxu0
    %v744 = vadd.f32 %v153, %v743
    %v745 = vpop.f32.mrf.mxu0
    %v746 = vadd.f32 %v158, %v745
    %747 = vmatmul.bf16.gmra.mxu0 %v414
    %v748 = vpop.f32.mrf.mxu0
    %v749 = vadd.f32 %v163, %v748
    %v750 = vpop.f32.mrf.mxu0
    %v751 = vadd.f32 %v168, %v750
    %752 = vmatmul.bf16.gmra.mxu0 %v417
    %v753 = vpop.f32.mrf.mxu0
    %v754 = vadd.f32 %v173, %v753
    %v755 = vpop.f32.mrf.mxu0
    %v756 = vadd.f32 %v178, %v755
    %757 = vmatmul.bf16.gmra.mxu0 %v420
    %v758 = vpop.f32.mrf.mxu0
    %v759 = vadd.f32 %v183, %v758
    %v760 = vpop.f32.mrf.mxu0
    %v761 = vadd.f32 %v188, %v760
    %762 = vmatmul.bf16.gmra.mxu0 %v423
    %v763 = vpop.f32.mrf.mxu0
    %v764 = vadd.f32 %v193, %v763
    %v765 = vpop.f32.mrf.mxu0
    %v766 = vadd.f32 %v198, %v765
    %767 = vdwg.mxu0
    %768 = vmatpush.bf16.msra.mxu0 0
    %769 = vmatpush.bf16.msra.mxu0 0
    %770 = vmatpush.bf16.msra.mxu0 0
    %771 = vmatpush.bf16.msra.mxu0 0
    %772 = vmatpush.bf16.msra.mxu0 %v367
    %773 = vmatpush.bf16.msra.mxu0 %v359
    %774 = vmatpush.bf16.msra.mxu0 %v351
    %775 = vmatpush.bf16.msra.mxu0 %v343
    %776 = vmatmul.bf16.gmra.mxu0 %v402
    %v777 = vpop.f32.mrf.mxu0
    %v778 = vadd.f32 %v123, %v777
    %v779 = vpop.f32.mrf.mxu0
    %v780 = vadd.f32 %v128, %v779
    %781 = vmatmul.bf16.gmra.mxu0 %v405
    %v782 = vpop.f32.mrf.mxu0
    %v783 = vadd.f32 %v133, %v782
    %v784 = vpop.f32.mrf.mxu0
    %v785 = vadd.f32 %v138, %v784
    %786 = vmatmul.bf16.gmra.mxu0 %v408
    %v787 = vpop.f32.mrf.mxu0
    %v788 = vadd.f32 %v143, %v787
    %v789 = vpop.f32.mrf.mxu0
    %v790 = vadd.f32 %v148, %v789
    %791 = vmatmul.bf16.gmra.mxu0 %v411
    %v792 = vpop.f32.mrf.mxu0
    %v793 = vadd.f32 %v153, %v792
    %v794 = vpop.f32.mrf.mxu0
    %v795 = vadd.f32 %v158, %v794
    %796 = vmatmul.bf16.gmra.mxu0 %v414
    %v797 = vpop.f32.mrf.mxu0
    %v798 = vadd.f32 %v163, %v797
    %v799 = vpop.f32.mrf.mxu0
    %v800 = vadd.f32 %v168, %v799
    %801 = vmatmul.bf16.gmra.mxu0 %v417
    %v802 = vpop.f32.mrf.mxu0
    %v803 = vadd.f32 %v173, %v802
    %v804 = vpop.f32.mrf.mxu0
    %v805 = vadd.f32 %v178, %v804
    %806 = vmatmul.bf16.gmra.mxu0 %v420
    %v807 = vpop.f32.mrf.mxu0
    %v808 = vadd.f32 %v183, %v807
    %v809 = vpop.f32.mrf.mxu0
    %v810 = vadd.f32 %v188, %v809
    %811 = vmatmul.bf16.gmra.mxu0 %v423
    %v812 = vpop.f32.mrf.mxu0
    %v813 = vadd.f32 %v193, %v812
    %v814 = vpop.f32.mrf.mxu0
    %v815 = vadd.f32 %v198, %v814
    %816 = vdwg.mxu0
    %v817 = vpack.c.bf16 %v484, %v435
    %v818 = vpack.c.bf16 %v582, %v533
    %v819 = vpack.c.bf16 %v680, %v631
    %v820 = vpack.c.bf16 %v778, %v729
    %v821 = vpack.c.bf16 %v486, %v437
    %v822 = vpack.c.bf16 %v584, %v535
    %v823 = vpack.c.bf16 %v682, %v633
    %v824 = vpack.c.bf16 %v780, %v731
    %v825 = vpack.c.bf16 %v489, %v440
    %v826 = vpack.c.bf16 %v587, %v538
    %v827 = vpack.c.bf16 %v685, %v636
    %v828 = vpack.c.bf16 %v783, %v734
    %v829 = vpack.c.bf16 %v491, %v442
    %v830 = vpack.c.bf16 %v589, %v540
    %v831 = vpack.c.bf16 %v687, %v638
    %v832 = vpack.c.bf16 %v785, %v736
    %v833 = vpack.c.bf16 %v494, %v445
    %v834 = vpack.c.bf16 %v592, %v543
    %v835 = vpack.c.bf16 %v690, %v641
    %v836 = vpack.c.bf16 %v788, %v739
    %v837 = vpack.c.bf16 %v496, %v447
    %v838 = vpack.c.bf16 %v594, %v545
    %v839 = vpack.c.bf16 %v692, %v643
    %v840 = vpack.c.bf16 %v790, %v741
    %v841 = vpack.c.bf16 %v499, %v450
    %v842 = vpack.c.bf16 %v597, %v548
    %v843 = vpack.c.bf16 %v695, %v646
    %v844 = vpack.c.bf16 %v793, %v744
    %v845 = vpack.c.bf16 %v501, %v452
    %v846 = vpack.c.bf16 %v599, %v550
    %v847 = vpack.c.bf16 %v697, %v648
    %v848 = vpack.c.bf16 %v795, %v746
    %v849 = vpack.c.bf16 %v504, %v455
    %v850 = vpack.c.bf16 %v602, %v553
    %v851 = vpack.c.bf16 %v700, %v651
    %v852 = vpack.c.bf16 %v798, %v749
    %v853 = vpack.c.bf16 %v506, %v457
    %v854 = vpack.c.bf16 %v604, %v555
    %v855 = vpack.c.bf16 %v702, %v653
    %v856 = vpack.c.bf16 %v800, %v751
    %v857 = vpack.c.bf16 %v509, %v460
    %v858 = vpack.c.bf16 %v607, %v558
    %v859 = vpack.c.bf16 %v705, %v656
    %v860 = vpack.c.bf16 %v803, %v754
    %v861 = vpack.c.bf16 %v511, %v462
    %v862 = vpack.c.bf16 %v609, %v560
    %v863 = vpack.c.bf16 %v707, %v658
    %v864 = vpack.c.bf16 %v805, %v756
    %v865 = vpack.c.bf16 %v514, %v465
    %v866 = vpack.c.bf16 %v612, %v563
    %v867 = vpack.c.bf16 %v710, %v661
    %v868 = vpack.c.bf16 %v808, %v759
    %v869 = vpack.c.bf16 %v516, %v467
    %v870 = vpack.c.bf16 %v614, %v565
    %v871 = vpack.c.bf16 %v712, %v663
    %v872 = vpack.c.bf16 %v810, %v761
    %v873 = vpack.c.bf16 %v519, %v470
    %v874 = vpack.c.bf16 %v617, %v568
    %v875 = vpack.c.bf16 %v715, %v666
    %v876 = vpack.c.bf16 %v813, %v764
    %v877 = vpack.c.bf16 %v521, %v472
    %v878 = vpack.c.bf16 %v619, %v570
    %v879 = vpack.c.bf16 %v717, %v668
    %v880 = vpack.c.bf16 %v815, %v766
    %v881 = vunpack.c.l.bf16 %v817
    %v882 = vunpack.c.h.bf16 %v817
    %v883 = vunpack.c.l.bf16 %v818
    %v884 = vunpack.c.h.bf16 %v818
    %v885 = vunpack.c.l.bf16 %v819
    %v886 = vunpack.c.h.bf16 %v819
    %v887 = vunpack.c.l.bf16 %v820
    %v888 = vunpack.c.h.bf16 %v820
    %v889 = vunpack.c.l.bf16 %v821
    %v890 = vunpack.c.h.bf16 %v821
    %v891 = vunpack.c.l.bf16 %v822
    %v892 = vunpack.c.h.bf16 %v822
    %v893 = vunpack.c.l.bf16 %v823
    %v894 = vunpack.c.h.bf16 %v823
    %v895 = vunpack.c.l.bf16 %v824
    %v896 = vunpack.c.h.bf16 %v824
    %v897 = vunpack.c.l.bf16 %v825
    %v898 = vunpack.c.h.bf16 %v825
    %v899 = vunpack.c.l.bf16 %v826
    %v900 = vunpack.c.h.bf16 %v826
    %v901 = vunpack.c.l.bf16 %v827
    %v902 = vunpack.c.h.bf16 %v827
    %v903 = vunpack.c.l.bf16 %v828
    %v904 = vunpack.c.h.bf16 %v828
    %v905 = vunpack.c.l.bf16 %v829
    %v906 = vunpack.c.h.bf16 %v829
    %v907 = vunpack.c.l.bf16 %v830
    %v908 = vunpack.c.h.bf16 %v830
    %v909 = vunpack.c.l.bf16 %v831
    %v910 = vunpack.c.h.bf16 %v831
    %v911 = vunpack.c.l.bf16 %v832
    %v912 = vunpack.c.h.bf16 %v832
    %v913 = vunpack.c.l.bf16 %v833
    %v914 = vunpack.c.h.bf16 %v833
    %v915 = vunpack.c.l.bf16 %v834
    %v916 = vunpack.c.h.bf16 %v834
    %v917 = vunpack.c.l.bf16 %v835
    %v918 = vunpack.c.h.bf16 %v835
    %v919 = vunpack.c.l.bf16 %v836
    %v920 = vunpack.c.h.bf16 %v836
    %v921 = vunpack.c.l.bf16 %v837
    %v922 = vunpack.c.h.bf16 %v837
    %v923 = vunpack.c.l.bf16 %v838
    %v924 = vunpack.c.h.bf16 %v838
    %v925 = vunpack.c.l.bf16 %v839
    %v926 = vunpack.c.h.bf16 %v839
    %v927 = vunpack.c.l.bf16 %v840
    %v928 = vunpack.c.h.bf16 %v840
    %v929 = vunpack.c.l.bf16 %v841
    %v930 = vunpack.c.h.bf16 %v841
    %v931 = vunpack.c.l.bf16 %v842
    %v932 = vunpack.c.h.bf16 %v842
    %v933 = vunpack.c.l.bf16 %v843
    %v934 = vunpack.c.h.bf16 %v843
    %v935 = vunpack.c.l.bf16 %v844
    %v936 = vunpack.c.h.bf16 %v844
    %v937 = vunpack.c.l.bf16 %v845
    %v938 = vunpack.c.h.bf16 %v845
    %v939 = vunpack.c.l.bf16 %v846
    %v940 = vunpack.c.h.bf16 %v846
    %v941 = vunpack.c.l.bf16 %v847
    %v942 = vunpack.c.h.bf16 %v847
    %v943 = vunpack.c.l.bf16 %v848
    %v944 = vunpack.c.h.bf16 %v848
    %v945 = vunpack.c.l.bf16 %v849
    %v946 = vunpack.c.h.bf16 %v849
    %v947 = vunpack.c.l.bf16 %v850
    %v948 = vunpack.c.h.bf16 %v850
    %v949 = vunpack.c.l.bf16 %v851
    %v950 = vunpack.c.h.bf16 %v851
    %v951 = vunpack.c.l.bf16 %v852
    %v952 = vunpack.c.h.bf16 %v852
    %v953 = vunpack.c.l.bf16 %v853
    %v954 = vunpack.c.h.bf16 %v853
    %v955 = vunpack.c.l.bf16 %v854
    %v956 = vunpack.c.h.bf16 %v854
    %v957 = vunpack.c.l.bf16 %v855
    %v958 = vunpack.c.h.bf16 %v855
    %v959 = vunpack.c.l.bf16 %v856
    %v960 = vunpack.c.h.bf16 %v856
    %v961 = vunpack.c.l.bf16 %v857
    %v962 = vunpack.c.h.bf16 %v857
    %v963 = vunpack.c.l.bf16 %v858
    %v964 = vunpack.c.h.bf16 %v858
    %v965 = vunpack.c.l.bf16 %v859
    %v966 = vunpack.c.h.bf16 %v859
    %v967 = vunpack.c.l.bf16 %v860
    %v968 = vunpack.c.h.bf16 %v860
    %v969 = vunpack.c.l.bf16 %v861
    %v970 = vunpack.c.h.bf16 %v861
    %v971 = vunpack.c.l.bf16 %v862
    %v972 = vunpack.c.h.bf16 %v862
    %v973 = vunpack.c.l.bf16 %v863
    %v974 = vunpack.c.h.bf16 %v863
    %v975 = vunpack.c.l.bf16 %v864
    %v976 = vunpack.c.h.bf16 %v864
    %v977 = vunpack.c.l.bf16 %v865
    %v978 = vunpack.c.h.bf16 %v865
    %v979 = vunpack.c.l.bf16 %v866
    %v980 = vunpack.c.h.bf16 %v866
    %v981 = vunpack.c.l.bf16 %v867
    %v982 = vunpack.c.h.bf16 %v867
    %v983 = vunpack.c.l.bf16 %v868
    %v984 = vunpack.c.h.bf16 %v868
    %v985 = vunpack.c.l.bf16 %v869
    %v986 = vunpack.c.h.bf16 %v869
    %v987 = vunpack.c.l.bf16 %v870
    %v988 = vunpack.c.h.bf16 %v870
    %v989 = vunpack.c.l.bf16 %v871
    %v990 = vunpack.c.h.bf16 %v871
    %v991 = vunpack.c.l.bf16 %v872
    %v992 = vunpack.c.h.bf16 %v872
    %v993 = vunpack.c.l.bf16 %v873
    %v994 = vunpack.c.h.bf16 %v873
    %v995 = vunpack.c.l.bf16 %v874
    %v996 = vunpack.c.h.bf16 %v874
    %v997 = vunpack.c.l.bf16 %v875
    %v998 = vunpack.c.h.bf16 %v875
    %v999 = vunpack.c.l.bf16 %v876
    %v1000 = vunpack.c.h.bf16 %v876
    %v1001 = vunpack.c.l.bf16 %v877
    %v1002 = vunpack.c.h.bf16 %v877
    %v1003 = vunpack.c.l.bf16 %v878
    %v1004 = vunpack.c.h.bf16 %v878
    %v1005 = vunpack.c.l.bf16 %v879
    %v1006 = vunpack.c.h.bf16 %v879
    %v1007 = vunpack.c.l.bf16 %v880
    %v1008 = vunpack.c.h.bf16 %v880
    %vm1009 = vcmp.gt.f32.partialorder %v881, 0.0
    %vm1010 = vcmp.gt.f32.partialorder %v882, 0.0
    %vm1011 = vcmp.gt.f32.partialorder %v883, 0.0
    %vm1012 = vcmp.gt.f32.partialorder %v884, 0.0
    %vm1013 = vcmp.gt.f32.partialorder %v885, 0.0
    %vm1014 = vcmp.gt.f32.partialorder %v886, 0.0
    %vm1015 = vcmp.gt.f32.partialorder %v887, 0.0
    %vm1016 = vcmp.gt.f32.partialorder %v888, 0.0
    %vm1017 = vcmp.gt.f32.partialorder %v889, 0.0
    %vm1018 = vcmp.gt.f32.partialorder %v890, 0.0
    %vm1019 = vcmp.gt.f32.partialorder %v891, 0.0
    %vm1020 = vcmp.gt.f32.partialorder %v892, 0.0
    %vm1021 = vcmp.gt.f32.partialorder %v893, 0.0
    %vm1022 = vcmp.gt.f32.partialorder %v894, 0.0
    %vm1023 = vcmp.gt.f32.partialorder %v895, 0.0
    %vm1024 = vcmp.gt.f32.partialorder %v896, 0.0
    %vm1025 = vcmp.gt.f32.partialorder %v897, 0.0
    %vm1026 = vcmp.gt.f32.partialorder %v898, 0.0
    %vm1027 = vcmp.gt.f32.partialorder %v899, 0.0
    %vm1028 = vcmp.gt.f32.partialorder %v900, 0.0
    %vm1029 = vcmp.gt.f32.partialorder %v901, 0.0
    %vm1030 = vcmp.gt.f32.partialorder %v902, 0.0
    %vm1031 = vcmp.gt.f32.partialorder %v903, 0.0
    %vm1032 = vcmp.gt.f32.partialorder %v904, 0.0
    %vm1033 = vcmp.gt.f32.partialorder %v905, 0.0
    %vm1034 = vcmp.gt.f32.partialorder %v906, 0.0
    %vm1035 = vcmp.gt.f32.partialorder %v907, 0.0
    %vm1036 = vcmp.gt.f32.partialorder %v908, 0.0
    %vm1037 = vcmp.gt.f32.partialorder %v909, 0.0
    %vm1038 = vcmp.gt.f32.partialorder %v910, 0.0
    %vm1039 = vcmp.gt.f32.partialorder %v911, 0.0
    %vm1040 = vcmp.gt.f32.partialorder %v912, 0.0
    %vm1041 = vcmp.gt.f32.partialorder %v913, 0.0
    %vm1042 = vcmp.gt.f32.partialorder %v914, 0.0
    %vm1043 = vcmp.gt.f32.partialorder %v915, 0.0
    %vm1044 = vcmp.gt.f32.partialorder %v916, 0.0
    %vm1045 = vcmp.gt.f32.partialorder %v917, 0.0
    %vm1046 = vcmp.gt.f32.partialorder %v918, 0.0
    %vm1047 = vcmp.gt.f32.partialorder %v919, 0.0
    %vm1048 = vcmp.gt.f32.partialorder %v920, 0.0
    %vm1049 = vcmp.gt.f32.partialorder %v921, 0.0
    %vm1050 = vcmp.gt.f32.partialorder %v922, 0.0
    %vm1051 = vcmp.gt.f32.partialorder %v923, 0.0
    %vm1052 = vcmp.gt.f32.partialorder %v924, 0.0
    %vm1053 = vcmp.gt.f32.partialorder %v925, 0.0
    %vm1054 = vcmp.gt.f32.partialorder %v926, 0.0
    %vm1055 = vcmp.gt.f32.partialorder %v927, 0.0
    %vm1056 = vcmp.gt.f32.partialorder %v928, 0.0
    %vm1057 = vcmp.gt.f32.partialorder %v929, 0.0
    %vm1058 = vcmp.gt.f32.partialorder %v930, 0.0
    %vm1059 = vcmp.gt.f32.partialorder %v931, 0.0
    %vm1060 = vcmp.gt.f32.partialorder %v932, 0.0
    %vm1061 = vcmp.gt.f32.partialorder %v933, 0.0
    %vm1062 = vcmp.gt.f32.partialorder %v934, 0.0
    %vm1063 = vcmp.gt.f32.partialorder %v935, 0.0
    %vm1064 = vcmp.gt.f32.partialorder %v936, 0.0
    %vm1065 = vcmp.gt.f32.partialorder %v937, 0.0
    %vm1066 = vcmp.gt.f32.partialorder %v938, 0.0
    %vm1067 = vcmp.gt.f32.partialorder %v939, 0.0
    %vm1068 = vcmp.gt.f32.partialorder %v940, 0.0
    %vm1069 = vcmp.gt.f32.partialorder %v941, 0.0
    %vm1070 = vcmp.gt.f32.partialorder %v942, 0.0
    %vm1071 = vcmp.gt.f32.partialorder %v943, 0.0
    %vm1072 = vcmp.gt.f32.partialorder %v944, 0.0
    %vm1073 = vcmp.gt.f32.partialorder %v945, 0.0
    %vm1074 = vcmp.gt.f32.partialorder %v946, 0.0
    %vm1075 = vcmp.gt.f32.partialorder %v947, 0.0
    %vm1076 = vcmp.gt.f32.partialorder %v948, 0.0
    %vm1077 = vcmp.gt.f32.partialorder %v949, 0.0
    %vm1078 = vcmp.gt.f32.partialorder %v950, 0.0
    %vm1079 = vcmp.gt.f32.partialorder %v951, 0.0
    %vm1080 = vcmp.gt.f32.partialorder %v952, 0.0
    %vm1081 = vcmp.gt.f32.partialorder %v953, 0.0
    %vm1082 = vcmp.gt.f32.partialorder %v954, 0.0
    %vm1083 = vcmp.gt.f32.partialorder %v955, 0.0
    %vm1084 = vcmp.gt.f32.partialorder %v956, 0.0
    %vm1085 = vcmp.gt.f32.partialorder %v957, 0.0
    %vm1086 = vcmp.gt.f32.partialorder %v958, 0.0
    %vm1087 = vcmp.gt.f32.partialorder %v959, 0.0
    %vm1088 = vcmp.gt.f32.partialorder %v960, 0.0
    %vm1089 = vcmp.gt.f32.partialorder %v961, 0.0
    %vm1090 = vcmp.gt.f32.partialorder %v962, 0.0
    %vm1091 = vcmp.gt.f32.partialorder %v963, 0.0
    %vm1092 = vcmp.gt.f32.partialorder %v964, 0.0
    %vm1093 = vcmp.gt.f32.partialorder %v965, 0.0
    %vm1094 = vcmp.gt.f32.partialorder %v966, 0.0
    %vm1095 = vcmp.gt.f32.partialorder %v967, 0.0
    %vm1096 = vcmp.gt.f32.partialorder %v968, 0.0
    %vm1097 = vcmp.gt.f32.partialorder %v969, 0.0
    %vm1098 = vcmp.gt.f32.partialorder %v970, 0.0
    %vm1099 = vcmp.gt.f32.partialorder %v971, 0.0
    %vm1100 = vcmp.gt.f32.partialorder %v972, 0.0
    %vm1101 = vcmp.gt.f32.partialorder %v973, 0.0
    %vm1102 = vcmp.gt.f32.partialorder %v974, 0.0
    %vm1103 = vcmp.gt.f32.partialorder %v975, 0.0
    %vm1104 = vcmp.gt.f32.partialorder %v976, 0.0
    %vm1105 = vcmp.gt.f32.partialorder %v977, 0.0
    %vm1106 = vcmp.gt.f32.partialorder %v978, 0.0
    %vm1107 = vcmp.gt.f32.partialorder %v979, 0.0
    %vm1108 = vcmp.gt.f32.partialorder %v980, 0.0
    %vm1109 = vcmp.gt.f32.partialorder %v981, 0.0
    %vm1110 = vcmp.gt.f32.partialorder %v982, 0.0
    %vm1111 = vcmp.gt.f32.partialorder %v983, 0.0
    %vm1112 = vcmp.gt.f32.partialorder %v984, 0.0
    %vm1113 = vcmp.gt.f32.partialorder %v985, 0.0
    %vm1114 = vcmp.gt.f32.partialorder %v986, 0.0
    %vm1115 = vcmp.gt.f32.partialorder %v987, 0.0
    %vm1116 = vcmp.gt.f32.partialorder %v988, 0.0
    %vm1117 = vcmp.gt.f32.partialorder %v989, 0.0
    %vm1118 = vcmp.gt.f32.partialorder %v990, 0.0
    %vm1119 = vcmp.gt.f32.partialorder %v991, 0.0
    %vm1120 = vcmp.gt.f32.partialorder %v992, 0.0
    %vm1121 = vcmp.gt.f32.partialorder %v993, 0.0
    %vm1122 = vcmp.gt.f32.partialorder %v994, 0.0
    %vm1123 = vcmp.gt.f32.partialorder %v995, 0.0
    %vm1124 = vcmp.gt.f32.partialorder %v996, 0.0
    %vm1125 = vcmp.gt.f32.partialorder %v997, 0.0
    %vm1126 = vcmp.gt.f32.partialorder %v998, 0.0
    %vm1127 = vcmp.gt.f32.partialorder %v999, 0.0
    %vm1128 = vcmp.gt.f32.partialorder %v1000, 0.0
    %vm1129 = vcmp.gt.f32.partialorder %v1001, 0.0
    %vm1130 = vcmp.gt.f32.partialorder %v1002, 0.0
    %vm1131 = vcmp.gt.f32.partialorder %v1003, 0.0
    %vm1132 = vcmp.gt.f32.partialorder %v1004, 0.0
    %vm1133 = vcmp.gt.f32.partialorder %v1005, 0.0
    %vm1134 = vcmp.gt.f32.partialorder %v1006, 0.0
    %vm1135 = vcmp.gt.f32.partialorder %v1007, 0.0
    %vm1136 = vcmp.gt.f32.partialorder %v1008, 0.0
    %v1137 = vmin.f32 %v881, 0.0
    %v1138 = vmin.f32 %v882, 0.0
    %v1139 = vmin.f32 %v883, 0.0
    %v1140 = vmin.f32 %v884, 0.0
    %v1141 = vmin.f32 %v885, 0.0
    %v1142 = vmin.f32 %v886, 0.0
    %v1143 = vmin.f32 %v887, 0.0
    %v1144 = vmin.f32 %v888, 0.0
    %v1145 = vmin.f32 %v889, 0.0
    %v1146 = vmin.f32 %v890, 0.0
    %v1147 = vmin.f32 %v891, 0.0
    %v1148 = vmin.f32 %v892, 0.0
    %v1149 = vmin.f32 %v893, 0.0
    %v1150 = vmin.f32 %v894, 0.0
    %v1151 = vmin.f32 %v895, 0.0
    %v1152 = vmin.f32 %v896, 0.0
    %v1153 = vmin.f32 %v897, 0.0
    %v1154 = vmin.f32 %v898, 0.0
    %v1155 = vmin.f32 %v899, 0.0
    %v1156 = vmin.f32 %v900, 0.0
    %v1157 = vmin.f32 %v901, 0.0
    %v1158 = vmin.f32 %v902, 0.0
    %v1159 = vmin.f32 %v903, 0.0
    %v1160 = vmin.f32 %v904, 0.0
    %v1161 = vmin.f32 %v905, 0.0
    %v1162 = vmin.f32 %v906, 0.0
    %v1163 = vmin.f32 %v907, 0.0
    %v1164 = vmin.f32 %v908, 0.0
    %v1165 = vmin.f32 %v909, 0.0
    %v1166 = vmin.f32 %v910, 0.0
    %v1167 = vmin.f32 %v911, 0.0
    %v1168 = vmin.f32 %v912, 0.0
    %v1169 = vmin.f32 %v913, 0.0
    %v1170 = vmin.f32 %v914, 0.0
    %v1171 = vmin.f32 %v915, 0.0
    %v1172 = vmin.f32 %v916, 0.0
    %v1173 = vmin.f32 %v917, 0.0
    %v1174 = vmin.f32 %v918, 0.0
    %v1175 = vmin.f32 %v919, 0.0
    %v1176 = vmin.f32 %v920, 0.0
    %v1177 = vmin.f32 %v921, 0.0
    %v1178 = vmin.f32 %v922, 0.0
    %v1179 = vmin.f32 %v923, 0.0
    %v1180 = vmin.f32 %v924, 0.0
    %v1181 = vmin.f32 %v925, 0.0
    %v1182 = vmin.f32 %v926, 0.0
    %v1183 = vmin.f32 %v927, 0.0
    %v1184 = vmin.f32 %v928, 0.0
    %v1185 = vmin.f32 %v929, 0.0
    %v1186 = vmin.f32 %v930, 0.0
    %v1187 = vmin.f32 %v931, 0.0
    %v1188 = vmin.f32 %v932, 0.0
    %v1189 = vmin.f32 %v933, 0.0
    %v1190 = vmin.f32 %v934, 0.0
    %v1191 = vmin.f32 %v935, 0.0
    %v1192 = vmin.f32 %v936, 0.0
    %v1193 = vmin.f32 %v937, 0.0
    %v1194 = vmin.f32 %v938, 0.0
    %v1195 = vmin.f32 %v939, 0.0
    %v1196 = vmin.f32 %v940, 0.0
    %v1197 = vmin.f32 %v941, 0.0
    %v1198 = vmin.f32 %v942, 0.0
    %v1199 = vmin.f32 %v943, 0.0
    %v1200 = vmin.f32 %v944, 0.0
    %v1201 = vmin.f32 %v945, 0.0
    %v1202 = vmin.f32 %v946, 0.0
    %v1203 = vmin.f32 %v947, 0.0
    %v1204 = vmin.f32 %v948, 0.0
    %v1205 = vmin.f32 %v949, 0.0
    %v1206 = vmin.f32 %v950, 0.0
    %v1207 = vmin.f32 %v951, 0.0
    %v1208 = vmin.f32 %v952, 0.0
    %v1209 = vmin.f32 %v953, 0.0
    %v1210 = vmin.f32 %v954, 0.0
    %v1211 = vmin.f32 %v955, 0.0
    %v1212 = vmin.f32 %v956, 0.0
    %v1213 = vmin.f32 %v957, 0.0
    %v1214 = vmin.f32 %v958, 0.0
    %v1215 = vmin.f32 %v959, 0.0
    %v1216 = vmin.f32 %v960, 0.0
    %v1217 = vmin.f32 %v961, 0.0
    %v1218 = vmin.f32 %v962, 0.0
    %v1219 = vmin.f32 %v963, 0.0
    %v1220 = vmin.f32 %v964, 0.0
    %v1221 = vmin.f32 %v965, 0.0
    %v1222 = vmin.f32 %v966, 0.0
    %v1223 = vmin.f32 %v967, 0.0
    %v1224 = vmin.f32 %v968, 0.0
    %v1225 = vmin.f32 %v969, 0.0
    %v1226 = vmin.f32 %v970, 0.0
    %v1227 = vmin.f32 %v971, 0.0
    %v1228 = vmin.f32 %v972, 0.0
    %v1229 = vmin.f32 %v973, 0.0
    %v1230 = vmin.f32 %v974, 0.0
    %v1231 = vmin.f32 %v975, 0.0
    %v1232 = vmin.f32 %v976, 0.0
    %v1233 = vmin.f32 %v977, 0.0
    %v1234 = vmin.f32 %v978, 0.0
    %v1235 = vmin.f32 %v979, 0.0
    %v1236 = vmin.f32 %v980, 0.0
    %v1237 = vmin.f32 %v981, 0.0
    %v1238 = vmin.f32 %v982, 0.0
    %v1239 = vmin.f32 %v983, 0.0
    %v1240 = vmin.f32 %v984, 0.0
    %v1241 = vmin.f32 %v985, 0.0
    %v1242 = vmin.f32 %v986, 0.0
    %v1243 = vmin.f32 %v987, 0.0
    %v1244 = vmin.f32 %v988, 0.0
    %v1245 = vmin.f32 %v989, 0.0
    %v1246 = vmin.f32 %v990, 0.0
    %v1247 = vmin.f32 %v991, 0.0
    %v1248 = vmin.f32 %v992, 0.0
    %v1249 = vmin.f32 %v993, 0.0
    %v1250 = vmin.f32 %v994, 0.0
    %v1251 = vmin.f32 %v995, 0.0
    %v1252 = vmin.f32 %v996, 0.0
    %v1253 = vmin.f32 %v997, 0.0
    %v1254 = vmin.f32 %v998, 0.0
    %v1255 = vmin.f32 %v999, 0.0
    %v1256 = vmin.f32 %v1000, 0.0
    %v1257 = vmin.f32 %v1001, 0.0
    %v1258 = vmin.f32 %v1002, 0.0
    %v1259 = vmin.f32 %v1003, 0.0
    %v1260 = vmin.f32 %v1004, 0.0
    %v1261 = vmin.f32 %v1005, 0.0
    %v1262 = vmin.f32 %v1006, 0.0
    %v1263 = vmin.f32 %v1007, 0.0
    %v1264 = vmin.f32 %v1008, 0.0
    %v1265 = vpack.c.bf16 %v1138, %v1137
    %v1266 = vpack.c.bf16 %v1140, %v1139
    %v1267 = vpack.c.bf16 %v1142, %v1141
    %v1268 = vpack.c.bf16 %v1144, %v1143
    %v1269 = vpack.c.bf16 %v1146, %v1145
    %v1270 = vpack.c.bf16 %v1148, %v1147
    %v1271 = vpack.c.bf16 %v1150, %v1149
    %v1272 = vpack.c.bf16 %v1152, %v1151
    %v1273 = vpack.c.bf16 %v1154, %v1153
    %v1274 = vpack.c.bf16 %v1156, %v1155
    %v1275 = vpack.c.bf16 %v1158, %v1157
    %v1276 = vpack.c.bf16 %v1160, %v1159
    %v1277 = vpack.c.bf16 %v1162, %v1161
    %v1278 = vpack.c.bf16 %v1164, %v1163
    %v1279 = vpack.c.bf16 %v1166, %v1165
    %v1280 = vpack.c.bf16 %v1168, %v1167
    %v1281 = vpack.c.bf16 %v1170, %v1169
    %v1282 = vpack.c.bf16 %v1172, %v1171
    %v1283 = vpack.c.bf16 %v1174, %v1173
    %v1284 = vpack.c.bf16 %v1176, %v1175
    %v1285 = vpack.c.bf16 %v1178, %v1177
    %v1286 = vpack.c.bf16 %v1180, %v1179
    %v1287 = vpack.c.bf16 %v1182, %v1181
    %v1288 = vpack.c.bf16 %v1184, %v1183
    %v1289 = vpack.c.bf16 %v1186, %v1185
    %v1290 = vpack.c.bf16 %v1188, %v1187
    %v1291 = vpack.c.bf16 %v1190, %v1189
    %v1292 = vpack.c.bf16 %v1192, %v1191
    %v1293 = vpack.c.bf16 %v1194, %v1193
    %v1294 = vpack.c.bf16 %v1196, %v1195
    %v1295 = vpack.c.bf16 %v1198, %v1197
    %v1296 = vpack.c.bf16 %v1200, %v1199
    %v1297 = vpack.c.bf16 %v1202, %v1201
    %v1298 = vpack.c.bf16 %v1204, %v1203
    %v1299 = vpack.c.bf16 %v1206, %v1205
    %v1300 = vpack.c.bf16 %v1208, %v1207
    %v1301 = vpack.c.bf16 %v1210, %v1209
    %v1302 = vpack.c.bf16 %v1212, %v1211
    %v1303 = vpack.c.bf16 %v1214, %v1213
    %v1304 = vpack.c.bf16 %v1216, %v1215
    %v1305 = vpack.c.bf16 %v1218, %v1217
    %v1306 = vpack.c.bf16 %v1220, %v1219
    %v1307 = vpack.c.bf16 %v1222, %v1221
    %v1308 = vpack.c.bf16 %v1224, %v1223
    %v1309 = vpack.c.bf16 %v1226, %v1225
    %v1310 = vpack.c.bf16 %v1228, %v1227
    %v1311 = vpack.c.bf16 %v1230, %v1229
    %v1312 = vpack.c.bf16 %v1232, %v1231
    %v1313 = vpack.c.bf16 %v1234, %v1233
    %v1314 = vpack.c.bf16 %v1236, %v1235
    %v1315 = vpack.c.bf16 %v1238, %v1237
    %v1316 = vpack.c.bf16 %v1240, %v1239
    %v1317 = vpack.c.bf16 %v1242, %v1241
    %v1318 = vpack.c.bf16 %v1244, %v1243
    %v1319 = vpack.c.bf16 %v1246, %v1245
    %v1320 = vpack.c.bf16 %v1248, %v1247
    %v1321 = vpack.c.bf16 %v1250, %v1249
    %v1322 = vpack.c.bf16 %v1252, %v1251
    %v1323 = vpack.c.bf16 %v1254, %v1253
    %v1324 = vpack.c.bf16 %v1256, %v1255
    %v1325 = vpack.c.bf16 %v1258, %v1257
    %v1326 = vpack.c.bf16 %v1260, %v1259
    %v1327 = vpack.c.bf16 %v1262, %v1261
    %v1328 = vpack.c.bf16 %v1264, %v1263
    %v1329 = vunpack.c.l.bf16 %v1265
    %v1330 = vunpack.c.h.bf16 %v1265
    %v1331 = vunpack.c.l.bf16 %v1266
    %v1332 = vunpack.c.h.bf16 %v1266
    %v1333 = vunpack.c.l.bf16 %v1267
    %v1334 = vunpack.c.h.bf16 %v1267
    %v1335 = vunpack.c.l.bf16 %v1268
    %v1336 = vunpack.c.h.bf16 %v1268
    %v1337 = vunpack.c.l.bf16 %v1269
    %v1338 = vunpack.c.h.bf16 %v1269
    %v1339 = vunpack.c.l.bf16 %v1270
    %v1340 = vunpack.c.h.bf16 %v1270
    %v1341 = vunpack.c.l.bf16 %v1271
    %v1342 = vunpack.c.h.bf16 %v1271
    %v1343 = vunpack.c.l.bf16 %v1272
    %v1344 = vunpack.c.h.bf16 %v1272
    %v1345 = vunpack.c.l.bf16 %v1273
    %v1346 = vunpack.c.h.bf16 %v1273
    %v1347 = vunpack.c.l.bf16 %v1274
    %v1348 = vunpack.c.h.bf16 %v1274
    %v1349 = vunpack.c.l.bf16 %v1275
    %v1350 = vunpack.c.h.bf16 %v1275
    %v1351 = vunpack.c.l.bf16 %v1276
    %v1352 = vunpack.c.h.bf16 %v1276
    %v1353 = vunpack.c.l.bf16 %v1277
    %v1354 = vunpack.c.h.bf16 %v1277
    %v1355 = vunpack.c.l.bf16 %v1278
    %v1356 = vunpack.c.h.bf16 %v1278
    %v1357 = vunpack.c.l.bf16 %v1279
    %v1358 = vunpack.c.h.bf16 %v1279
    %v1359 = vunpack.c.l.bf16 %v1280
    %v1360 = vunpack.c.h.bf16 %v1280
    %v1361 = vunpack.c.l.bf16 %v1281
    %v1362 = vunpack.c.h.bf16 %v1281
    %v1363 = vunpack.c.l.bf16 %v1282
    %v1364 = vunpack.c.h.bf16 %v1282
    %v1365 = vunpack.c.l.bf16 %v1283
    %v1366 = vunpack.c.h.bf16 %v1283
    %v1367 = vunpack.c.l.bf16 %v1284
    %v1368 = vunpack.c.h.bf16 %v1284
    %v1369 = vunpack.c.l.bf16 %v1285
    %v1370 = vunpack.c.h.bf16 %v1285
    %v1371 = vunpack.c.l.bf16 %v1286
    %v1372 = vunpack.c.h.bf16 %v1286
    %v1373 = vunpack.c.l.bf16 %v1287
    %v1374 = vunpack.c.h.bf16 %v1287
    %v1375 = vunpack.c.l.bf16 %v1288
    %v1376 = vunpack.c.h.bf16 %v1288
    %v1377 = vunpack.c.l.bf16 %v1289
    %v1378 = vunpack.c.h.bf16 %v1289
    %v1379 = vunpack.c.l.bf16 %v1290
    %v1380 = vunpack.c.h.bf16 %v1290
    %v1381 = vunpack.c.l.bf16 %v1291
    %v1382 = vunpack.c.h.bf16 %v1291
    %v1383 = vunpack.c.l.bf16 %v1292
    %v1384 = vunpack.c.h.bf16 %v1292
    %v1385 = vunpack.c.l.bf16 %v1293
    %v1386 = vunpack.c.h.bf16 %v1293
    %v1387 = vunpack.c.l.bf16 %v1294
    %v1388 = vunpack.c.h.bf16 %v1294
    %v1389 = vunpack.c.l.bf16 %v1295
    %v1390 = vunpack.c.h.bf16 %v1295
    %v1391 = vunpack.c.l.bf16 %v1296
    %v1392 = vunpack.c.h.bf16 %v1296
    %v1393 = vunpack.c.l.bf16 %v1297
    %v1394 = vunpack.c.h.bf16 %v1297
    %v1395 = vunpack.c.l.bf16 %v1298
    %v1396 = vunpack.c.h.bf16 %v1298
    %v1397 = vunpack.c.l.bf16 %v1299
    %v1398 = vunpack.c.h.bf16 %v1299
    %v1399 = vunpack.c.l.bf16 %v1300
    %v1400 = vunpack.c.h.bf16 %v1300
    %v1401 = vunpack.c.l.bf16 %v1301
    %v1402 = vunpack.c.h.bf16 %v1301
    %v1403 = vunpack.c.l.bf16 %v1302
    %v1404 = vunpack.c.h.bf16 %v1302
    %v1405 = vunpack.c.l.bf16 %v1303
    %v1406 = vunpack.c.h.bf16 %v1303
    %v1407 = vunpack.c.l.bf16 %v1304
    %v1408 = vunpack.c.h.bf16 %v1304
    %v1409 = vunpack.c.l.bf16 %v1305
    %v1410 = vunpack.c.h.bf16 %v1305
    %v1411 = vunpack.c.l.bf16 %v1306
    %v1412 = vunpack.c.h.bf16 %v1306
    %v1413 = vunpack.c.l.bf16 %v1307
    %v1414 = vunpack.c.h.bf16 %v1307
    %v1415 = vunpack.c.l.bf16 %v1308
    %v1416 = vunpack.c.h.bf16 %v1308
    %v1417 = vunpack.c.l.bf16 %v1309
    %v1418 = vunpack.c.h.bf16 %v1309
    %v1419 = vunpack.c.l.bf16 %v1310
    %v1420 = vunpack.c.h.bf16 %v1310
    %v1421 = vunpack.c.l.bf16 %v1311
    %v1422 = vunpack.c.h.bf16 %v1311
    %v1423 = vunpack.c.l.bf16 %v1312
    %v1424 = vunpack.c.h.bf16 %v1312
    %v1425 = vunpack.c.l.bf16 %v1313
    %v1426 = vunpack.c.h.bf16 %v1313
    %v1427 = vunpack.c.l.bf16 %v1314
    %v1428 = vunpack.c.h.bf16 %v1314
    %v1429 = vunpack.c.l.bf16 %v1315
    %v1430 = vunpack.c.h.bf16 %v1315
    %v1431 = vunpack.c.l.bf16 %v1316
    %v1432 = vunpack.c.h.bf16 %v1316
    %v1433 = vunpack.c.l.bf16 %v1317
    %v1434 = vunpack.c.h.bf16 %v1317
    %v1435 = vunpack.c.l.bf16 %v1318
    %v1436 = vunpack.c.h.bf16 %v1318
    %v1437 = vunpack.c.l.bf16 %v1319
    %v1438 = vunpack.c.h.bf16 %v1319
    %v1439 = vunpack.c.l.bf16 %v1320
    %v1440 = vunpack.c.h.bf16 %v1320
    %v1441 = vunpack.c.l.bf16 %v1321
    %v1442 = vunpack.c.h.bf16 %v1321
    %v1443 = vunpack.c.l.bf16 %v1322
    %v1444 = vunpack.c.h.bf16 %v1322
    %v1445 = vunpack.c.l.bf16 %v1323
    %v1446 = vunpack.c.h.bf16 %v1323
    %v1447 = vunpack.c.l.bf16 %v1324
    %v1448 = vunpack.c.h.bf16 %v1324
    %v1449 = vunpack.c.l.bf16 %v1325
    %v1450 = vunpack.c.h.bf16 %v1325
    %v1451 = vunpack.c.l.bf16 %v1326
    %v1452 = vunpack.c.h.bf16 %v1326
    %v1453 = vunpack.c.l.bf16 %v1327
    %v1454 = vunpack.c.h.bf16 %v1327
    %v1455 = vunpack.c.l.bf16 %v1328
    %v1456 = vunpack.c.h.bf16 %v1328
    %v1457 = vmul.f32 %v1329, 1.442695
    %v1458 = vpow.pop %v1457
    %v1459 = vmul.f32 %v1330, 1.442695
    %v1460 = vpow.pop %v1459
    %v1461 = vmul.f32 %v1331, 1.442695
    %v1462 = vpow.pop %v1461
    %v1463 = vmul.f32 %v1332, 1.442695
    %v1464 = vpow.pop %v1463
    %v1465 = vmul.f32 %v1333, 1.442695
    %v1466 = vpow.pop %v1465
    %v1467 = vmul.f32 %v1334, 1.442695
    %v1468 = vpow.pop %v1467
    %v1469 = vmul.f32 %v1335, 1.442695
    %v1470 = vpow.pop %v1469
    %v1471 = vmul.f32 %v1336, 1.442695
    %v1472 = vpow.pop %v1471
    %v1473 = vmul.f32 %v1337, 1.442695
    %v1474 = vpow.pop %v1473
    %v1475 = vmul.f32 %v1338, 1.442695
    %v1476 = vpow.pop %v1475
    %v1477 = vmul.f32 %v1339, 1.442695
    %v1478 = vpow.pop %v1477
    %v1479 = vmul.f32 %v1340, 1.442695
    %v1480 = vpow.pop %v1479
    %v1481 = vmul.f32 %v1341, 1.442695
    %v1482 = vpow.pop %v1481
    %v1483 = vmul.f32 %v1342, 1.442695
    %v1484 = vpow.pop %v1483
    %v1485 = vmul.f32 %v1343, 1.442695
    %v1486 = vpow.pop %v1485
    %v1487 = vmul.f32 %v1344, 1.442695
    %v1488 = vpow.pop %v1487
    %v1489 = vmul.f32 %v1345, 1.442695
    %v1490 = vpow.pop %v1489
    %v1491 = vmul.f32 %v1346, 1.442695
    %v1492 = vpow.pop %v1491
    %v1493 = vmul.f32 %v1347, 1.442695
    %v1494 = vpow.pop %v1493
    %v1495 = vmul.f32 %v1348, 1.442695
    %v1496 = vpow.pop %v1495
    %v1497 = vmul.f32 %v1349, 1.442695
    %v1498 = vpow.pop %v1497
    %v1499 = vmul.f32 %v1350, 1.442695
    %v1500 = vpow.pop %v1499
    %v1501 = vmul.f32 %v1351, 1.442695
    %v1502 = vpow.pop %v1501
    %v1503 = vmul.f32 %v1352, 1.442695
    %v1504 = vpow.pop %v1503
    %v1505 = vmul.f32 %v1353, 1.442695
    %v1506 = vpow.pop %v1505
    %v1507 = vmul.f32 %v1354, 1.442695
    %v1508 = vpow.pop %v1507
    %v1509 = vmul.f32 %v1355, 1.442695
    %v1510 = vpow.pop %v1509
    %v1511 = vmul.f32 %v1356, 1.442695
    %v1512 = vpow.pop %v1511
    %v1513 = vmul.f32 %v1357, 1.442695
    %v1514 = vpow.pop %v1513
    %v1515 = vmul.f32 %v1358, 1.442695
    %v1516 = vpow.pop %v1515
    %v1517 = vmul.f32 %v1359, 1.442695
    %v1518 = vpow.pop %v1517
    %v1519 = vmul.f32 %v1360, 1.442695
    %v1520 = vpow.pop %v1519
    %v1521 = vmul.f32 %v1361, 1.442695
    %v1522 = vpow.pop %v1521
    %v1523 = vmul.f32 %v1362, 1.442695
    %v1524 = vpow.pop %v1523
    %v1525 = vmul.f32 %v1363, 1.442695
    %v1526 = vpow.pop %v1525
    %v1527 = vmul.f32 %v1364, 1.442695
    %v1528 = vpow.pop %v1527
    %v1529 = vmul.f32 %v1365, 1.442695
    %v1530 = vpow.pop %v1529
    %v1531 = vmul.f32 %v1366, 1.442695
    %v1532 = vpow.pop %v1531
    %v1533 = vmul.f32 %v1367, 1.442695
    %v1534 = vpow.pop %v1533
    %v1535 = vmul.f32 %v1368, 1.442695
    %v1536 = vpow.pop %v1535
    %v1537 = vmul.f32 %v1369, 1.442695
    %v1538 = vpow.pop %v1537
    %v1539 = vmul.f32 %v1370, 1.442695
    %v1540 = vpow.pop %v1539
    %v1541 = vmul.f32 %v1371, 1.442695
    %v1542 = vpow.pop %v1541
    %v1543 = vmul.f32 %v1372, 1.442695
    %v1544 = vpow.pop %v1543
    %v1545 = vmul.f32 %v1373, 1.442695
    %v1546 = vpow.pop %v1545
    %v1547 = vmul.f32 %v1374, 1.442695
    %v1548 = vpow.pop %v1547
    %v1549 = vmul.f32 %v1375, 1.442695
    %v1550 = vpow.pop %v1549
    %v1551 = vmul.f32 %v1376, 1.442695
    %v1552 = vpow.pop %v1551
    %v1553 = vmul.f32 %v1377, 1.442695
    %v1554 = vpow.pop %v1553
    %v1555 = vmul.f32 %v1378, 1.442695
    %v1556 = vpow.pop %v1555
    %v1557 = vmul.f32 %v1379, 1.442695
    %v1558 = vpow.pop %v1557
    %v1559 = vmul.f32 %v1380, 1.442695
    %v1560 = vpow.pop %v1559
    %v1561 = vmul.f32 %v1381, 1.442695
    %v1562 = vpow.pop %v1561
    %v1563 = vmul.f32 %v1382, 1.442695
    %v1564 = vpow.pop %v1563
    %v1565 = vmul.f32 %v1383, 1.442695
    %v1566 = vpow.pop %v1565
    %v1567 = vmul.f32 %v1384, 1.442695
    %v1568 = vpow.pop %v1567
    %v1569 = vmul.f32 %v1385, 1.442695
    %v1570 = vpow.pop %v1569
    %v1571 = vmul.f32 %v1386, 1.442695
    %v1572 = vpow.pop %v1571
    %v1573 = vmul.f32 %v1387, 1.442695
    %v1574 = vpow.pop %v1573
    %v1575 = vmul.f32 %v1388, 1.442695
    %v1576 = vpow.pop %v1575
    %v1577 = vmul.f32 %v1389, 1.442695
    %v1578 = vpow.pop %v1577
    %v1579 = vmul.f32 %v1390, 1.442695
    %v1580 = vpow.pop %v1579
    %v1581 = vmul.f32 %v1391, 1.442695
    %v1582 = vpow.pop %v1581
    %v1583 = vmul.f32 %v1392, 1.442695
    %v1584 = vpow.pop %v1583
    %v1585 = vmul.f32 %v1393, 1.442695
    %v1586 = vpow.pop %v1585
    %v1587 = vmul.f32 %v1394, 1.442695
    %v1588 = vpow.pop %v1587
    %v1589 = vmul.f32 %v1395, 1.442695
    %v1590 = vpow.pop %v1589
    %v1591 = vmul.f32 %v1396, 1.442695
    %v1592 = vpow.pop %v1591
    %v1593 = vmul.f32 %v1397, 1.442695
    %v1594 = vpow.pop %v1593
    %v1595 = vmul.f32 %v1398, 1.442695
    %v1596 = vpow.pop %v1595
    %v1597 = vmul.f32 %v1399, 1.442695
    %v1598 = vpow.pop %v1597
    %v1599 = vmul.f32 %v1400, 1.442695
    %v1600 = vpow.pop %v1599
    %v1601 = vmul.f32 %v1401, 1.442695
    %v1602 = vpow.pop %v1601
    %v1603 = vmul.f32 %v1402, 1.442695
    %v1604 = vpow.pop %v1603
    %v1605 = vmul.f32 %v1403, 1.442695
    %v1606 = vpow.pop %v1605
    %v1607 = vmul.f32 %v1404, 1.442695
    %v1608 = vpow.pop %v1607
    %v1609 = vmul.f32 %v1405, 1.442695
    %v1610 = vpow.pop %v1609
    %v1611 = vmul.f32 %v1406, 1.442695
    %v1612 = vpow.pop %v1611
    %v1613 = vmul.f32 %v1407, 1.442695
    %v1614 = vpow.pop %v1613
    %v1615 = vmul.f32 %v1408, 1.442695
    %v1616 = vpow.pop %v1615
    %v1617 = vmul.f32 %v1409, 1.442695
    %v1618 = vpow.pop %v1617
    %v1619 = vmul.f32 %v1410, 1.442695
    %v1620 = vpow.pop %v1619
    %v1621 = vmul.f32 %v1411, 1.442695
    %v1622 = vpow.pop %v1621
    %v1623 = vmul.f32 %v1412, 1.442695
    %v1624 = vpow.pop %v1623
    %v1625 = vmul.f32 %v1413, 1.442695
    %v1626 = vpow.pop %v1625
    %v1627 = vmul.f32 %v1414, 1.442695
    %v1628 = vpow.pop %v1627
    %v1629 = vmul.f32 %v1415, 1.442695
    %v1630 = vpow.pop %v1629
    %v1631 = vmul.f32 %v1416, 1.442695
    %v1632 = vpow.pop %v1631
    %v1633 = vmul.f32 %v1417, 1.442695
    %v1634 = vpow.pop %v1633
    %v1635 = vmul.f32 %v1418, 1.442695
    %v1636 = vpow.pop %v1635
    %v1637 = vmul.f32 %v1419, 1.442695
    %v1638 = vpow.pop %v1637
    %v1639 = vmul.f32 %v1420, 1.442695
    %v1640 = vpow.pop %v1639
    %v1641 = vmul.f32 %v1421, 1.442695
    %v1642 = vpow.pop %v1641
    %v1643 = vmul.f32 %v1422, 1.442695
    %v1644 = vpow.pop %v1643
    %v1645 = vmul.f32 %v1423, 1.442695
    %v1646 = vpow.pop %v1645
    %v1647 = vmul.f32 %v1424, 1.442695
    %v1648 = vpow.pop %v1647
    %v1649 = vmul.f32 %v1425, 1.442695
    %v1650 = vpow.pop %v1649
    %v1651 = vmul.f32 %v1426, 1.442695
    %v1652 = vpow.pop %v1651
    %v1653 = vmul.f32 %v1427, 1.442695
    %v1654 = vpow.pop %v1653
    %v1655 = vmul.f32 %v1428, 1.442695
    %v1656 = vpow.pop %v1655
    %v1657 = vmul.f32 %v1429, 1.442695
    %v1658 = vpow.pop %v1657
    %v1659 = vmul.f32 %v1430, 1.442695
    %v1660 = vpow.pop %v1659
    %v1661 = vmul.f32 %v1431, 1.442695
    %v1662 = vpow.pop %v1661
    %v1663 = vmul.f32 %v1432, 1.442695
    %v1664 = vpow.pop %v1663
    %v1665 = vmul.f32 %v1433, 1.442695
    %v1666 = vpow.pop %v1665
    %v1667 = vmul.f32 %v1434, 1.442695
    %v1668 = vpow.pop %v1667
    %v1669 = vmul.f32 %v1435, 1.442695
    %v1670 = vpow.pop %v1669
    %v1671 = vmul.f32 %v1436, 1.442695
    %v1672 = vpow.pop %v1671
    %v1673 = vmul.f32 %v1437, 1.442695
    %v1674 = vpow.pop %v1673
    %v1675 = vmul.f32 %v1438, 1.442695
    %v1676 = vpow.pop %v1675
    %v1677 = vmul.f32 %v1439, 1.442695
    %v1678 = vpow.pop %v1677
    %v1679 = vmul.f32 %v1440, 1.442695
    %v1680 = vpow.pop %v1679
    %v1681 = vmul.f32 %v1441, 1.442695
    %v1682 = vpow.pop %v1681
    %v1683 = vmul.f32 %v1442, 1.442695
    %v1684 = vpow.pop %v1683
    %v1685 = vmul.f32 %v1443, 1.442695
    %v1686 = vpow.pop %v1685
    %v1687 = vmul.f32 %v1444, 1.442695
    %v1688 = vpow.pop %v1687
    %v1689 = vmul.f32 %v1445, 1.442695
    %v1690 = vpow.pop %v1689
    %v1691 = vmul.f32 %v1446, 1.442695
    %v1692 = vpow.pop %v1691
    %v1693 = vmul.f32 %v1447, 1.442695
    %v1694 = vpow.pop %v1693
    %v1695 = vmul.f32 %v1448, 1.442695
    %v1696 = vpow.pop %v1695
    %v1697 = vmul.f32 %v1449, 1.442695
    %v1698 = vpow.pop %v1697
    %v1699 = vmul.f32 %v1450, 1.442695
    %v1700 = vpow.pop %v1699
    %v1701 = vmul.f32 %v1451, 1.442695
    %v1702 = vpow.pop %v1701
    %v1703 = vmul.f32 %v1452, 1.442695
    %v1704 = vpow.pop %v1703
    %v1705 = vmul.f32 %v1453, 1.442695
    %v1706 = vpow.pop %v1705
    %v1707 = vmul.f32 %v1454, 1.442695
    %v1708 = vpow.pop %v1707
    %v1709 = vmul.f32 %v1455, 1.442695
    %v1710 = vpow.pop %v1709
    %v1711 = vmul.f32 %v1456, 1.442695
    %v1712 = vpow.pop %v1711
    %v1713 = vpack.c.bf16 %v1460, %v1458
    %v1714 = vpack.c.bf16 %v1464, %v1462
    %v1715 = vpack.c.bf16 %v1468, %v1466
    %v1716 = vpack.c.bf16 %v1472, %v1470
    %v1717 = vpack.c.bf16 %v1476, %v1474
    %v1718 = vpack.c.bf16 %v1480, %v1478
    %v1719 = vpack.c.bf16 %v1484, %v1482
    %v1720 = vpack.c.bf16 %v1488, %v1486
    %v1721 = vpack.c.bf16 %v1492, %v1490
    %v1722 = vpack.c.bf16 %v1496, %v1494
    %v1723 = vpack.c.bf16 %v1500, %v1498
    %v1724 = vpack.c.bf16 %v1504, %v1502
    %v1725 = vpack.c.bf16 %v1508, %v1506
    %v1726 = vpack.c.bf16 %v1512, %v1510
    %v1727 = vpack.c.bf16 %v1516, %v1514
    %v1728 = vpack.c.bf16 %v1520, %v1518
    %v1729 = vpack.c.bf16 %v1524, %v1522
    %v1730 = vpack.c.bf16 %v1528, %v1526
    %v1731 = vpack.c.bf16 %v1532, %v1530
    %v1732 = vpack.c.bf16 %v1536, %v1534
    %v1733 = vpack.c.bf16 %v1540, %v1538
    %v1734 = vpack.c.bf16 %v1544, %v1542
    %v1735 = vpack.c.bf16 %v1548, %v1546
    %v1736 = vpack.c.bf16 %v1552, %v1550
    %v1737 = vpack.c.bf16 %v1556, %v1554
    %v1738 = vpack.c.bf16 %v1560, %v1558
    %v1739 = vpack.c.bf16 %v1564, %v1562
    %v1740 = vpack.c.bf16 %v1568, %v1566
    %v1741 = vpack.c.bf16 %v1572, %v1570
    %v1742 = vpack.c.bf16 %v1576, %v1574
    %v1743 = vpack.c.bf16 %v1580, %v1578
    %v1744 = vpack.c.bf16 %v1584, %v1582
    %v1745 = vpack.c.bf16 %v1588, %v1586
    %v1746 = vpack.c.bf16 %v1592, %v1590
    %v1747 = vpack.c.bf16 %v1596, %v1594
    %v1748 = vpack.c.bf16 %v1600, %v1598
    %v1749 = vpack.c.bf16 %v1604, %v1602
    %v1750 = vpack.c.bf16 %v1608, %v1606
    %v1751 = vpack.c.bf16 %v1612, %v1610
    %v1752 = vpack.c.bf16 %v1616, %v1614
    %v1753 = vpack.c.bf16 %v1620, %v1618
    %v1754 = vpack.c.bf16 %v1624, %v1622
    %v1755 = vpack.c.bf16 %v1628, %v1626
    %v1756 = vpack.c.bf16 %v1632, %v1630
    %v1757 = vpack.c.bf16 %v1636, %v1634
    %v1758 = vpack.c.bf16 %v1640, %v1638
    %v1759 = vpack.c.bf16 %v1644, %v1642
    %v1760 = vpack.c.bf16 %v1648, %v1646
    %v1761 = vpack.c.bf16 %v1652, %v1650
    %v1762 = vpack.c.bf16 %v1656, %v1654
    %v1763 = vpack.c.bf16 %v1660, %v1658
    %v1764 = vpack.c.bf16 %v1664, %v1662
    %v1765 = vpack.c.bf16 %v1668, %v1666
    %v1766 = vpack.c.bf16 %v1672, %v1670
    %v1767 = vpack.c.bf16 %v1676, %v1674
    %v1768 = vpack.c.bf16 %v1680, %v1678
    %v1769 = vpack.c.bf16 %v1684, %v1682
    %v1770 = vpack.c.bf16 %v1688, %v1686
    %v1771 = vpack.c.bf16 %v1692, %v1690
    %v1772 = vpack.c.bf16 %v1696, %v1694
    %v1773 = vpack.c.bf16 %v1700, %v1698
    %v1774 = vpack.c.bf16 %v1704, %v1702
    %v1775 = vpack.c.bf16 %v1708, %v1706
    %v1776 = vpack.c.bf16 %v1712, %v1710
    %v1777 = vunpack.c.l.bf16 %v1713
    %v1778 = vunpack.c.h.bf16 %v1713
    %v1779 = vunpack.c.l.bf16 %v1714
    %v1780 = vunpack.c.h.bf16 %v1714
    %v1781 = vunpack.c.l.bf16 %v1715
    %v1782 = vunpack.c.h.bf16 %v1715
    %v1783 = vunpack.c.l.bf16 %v1716
    %v1784 = vunpack.c.h.bf16 %v1716
    %v1785 = vunpack.c.l.bf16 %v1717
    %v1786 = vunpack.c.h.bf16 %v1717
    %v1787 = vunpack.c.l.bf16 %v1718
    %v1788 = vunpack.c.h.bf16 %v1718
    %v1789 = vunpack.c.l.bf16 %v1719
    %v1790 = vunpack.c.h.bf16 %v1719
    %v1791 = vunpack.c.l.bf16 %v1720
    %v1792 = vunpack.c.h.bf16 %v1720
    %v1793 = vunpack.c.l.bf16 %v1721
    %v1794 = vunpack.c.h.bf16 %v1721
    %v1795 = vunpack.c.l.bf16 %v1722
    %v1796 = vunpack.c.h.bf16 %v1722
    %v1797 = vunpack.c.l.bf16 %v1723
    %v1798 = vunpack.c.h.bf16 %v1723
    %v1799 = vunpack.c.l.bf16 %v1724
    %v1800 = vunpack.c.h.bf16 %v1724
    %v1801 = vunpack.c.l.bf16 %v1725
    %v1802 = vunpack.c.h.bf16 %v1725
    %v1803 = vunpack.c.l.bf16 %v1726
    %v1804 = vunpack.c.h.bf16 %v1726
    %v1805 = vunpack.c.l.bf16 %v1727
    %v1806 = vunpack.c.h.bf16 %v1727
    %v1807 = vunpack.c.l.bf16 %v1728
    %v1808 = vunpack.c.h.bf16 %v1728
    %v1809 = vunpack.c.l.bf16 %v1729
    %v1810 = vunpack.c.h.bf16 %v1729
    %v1811 = vunpack.c.l.bf16 %v1730
    %v1812 = vunpack.c.h.bf16 %v1730
    %v1813 = vunpack.c.l.bf16 %v1731
    %v1814 = vunpack.c.h.bf16 %v1731
    %v1815 = vunpack.c.l.bf16 %v1732
    %v1816 = vunpack.c.h.bf16 %v1732
    %v1817 = vunpack.c.l.bf16 %v1733
    %v1818 = vunpack.c.h.bf16 %v1733
    %v1819 = vunpack.c.l.bf16 %v1734
    %v1820 = vunpack.c.h.bf16 %v1734
    %v1821 = vunpack.c.l.bf16 %v1735
    %v1822 = vunpack.c.h.bf16 %v1735
    %v1823 = vunpack.c.l.bf16 %v1736
    %v1824 = vunpack.c.h.bf16 %v1736
    %v1825 = vunpack.c.l.bf16 %v1737
    %v1826 = vunpack.c.h.bf16 %v1737
    %v1827 = vunpack.c.l.bf16 %v1738
    %v1828 = vunpack.c.h.bf16 %v1738
    %v1829 = vunpack.c.l.bf16 %v1739
    %v1830 = vunpack.c.h.bf16 %v1739
    %v1831 = vunpack.c.l.bf16 %v1740
    %v1832 = vunpack.c.h.bf16 %v1740
    %v1833 = vunpack.c.l.bf16 %v1741
    %v1834 = vunpack.c.h.bf16 %v1741
    %v1835 = vunpack.c.l.bf16 %v1742
    %v1836 = vunpack.c.h.bf16 %v1742
    %v1837 = vunpack.c.l.bf16 %v1743
    %v1838 = vunpack.c.h.bf16 %v1743
    %v1839 = vunpack.c.l.bf16 %v1744
    %v1840 = vunpack.c.h.bf16 %v1744
    %v1841 = vunpack.c.l.bf16 %v1745
    %v1842 = vunpack.c.h.bf16 %v1745
    %v1843 = vunpack.c.l.bf16 %v1746
    %v1844 = vunpack.c.h.bf16 %v1746
    %v1845 = vunpack.c.l.bf16 %v1747
    %v1846 = vunpack.c.h.bf16 %v1747
    %v1847 = vunpack.c.l.bf16 %v1748
    %v1848 = vunpack.c.h.bf16 %v1748
    %v1849 = vunpack.c.l.bf16 %v1749
    %v1850 = vunpack.c.h.bf16 %v1749
    %v1851 = vunpack.c.l.bf16 %v1750
    %v1852 = vunpack.c.h.bf16 %v1750
    %v1853 = vunpack.c.l.bf16 %v1751
    %v1854 = vunpack.c.h.bf16 %v1751
    %v1855 = vunpack.c.l.bf16 %v1752
    %v1856 = vunpack.c.h.bf16 %v1752
    %v1857 = vunpack.c.l.bf16 %v1753
    %v1858 = vunpack.c.h.bf16 %v1753
    %v1859 = vunpack.c.l.bf16 %v1754
    %v1860 = vunpack.c.h.bf16 %v1754
    %v1861 = vunpack.c.l.bf16 %v1755
    %v1862 = vunpack.c.h.bf16 %v1755
    %v1863 = vunpack.c.l.bf16 %v1756
    %v1864 = vunpack.c.h.bf16 %v1756
    %v1865 = vunpack.c.l.bf16 %v1757
    %v1866 = vunpack.c.h.bf16 %v1757
    %v1867 = vunpack.c.l.bf16 %v1758
    %v1868 = vunpack.c.h.bf16 %v1758
    %v1869 = vunpack.c.l.bf16 %v1759
    %v1870 = vunpack.c.h.bf16 %v1759
    %v1871 = vunpack.c.l.bf16 %v1760
    %v1872 = vunpack.c.h.bf16 %v1760
    %v1873 = vunpack.c.l.bf16 %v1761
    %v1874 = vunpack.c.h.bf16 %v1761
    %v1875 = vunpack.c.l.bf16 %v1762
    %v1876 = vunpack.c.h.bf16 %v1762
    %v1877 = vunpack.c.l.bf16 %v1763
    %v1878 = vunpack.c.h.bf16 %v1763
    %v1879 = vunpack.c.l.bf16 %v1764
    %v1880 = vunpack.c.h.bf16 %v1764
    %v1881 = vunpack.c.l.bf16 %v1765
    %v1882 = vunpack.c.h.bf16 %v1765
    %v1883 = vunpack.c.l.bf16 %v1766
    %v1884 = vunpack.c.h.bf16 %v1766
    %v1885 = vunpack.c.l.bf16 %v1767
    %v1886 = vunpack.c.h.bf16 %v1767
    %v1887 = vunpack.c.l.bf16 %v1768
    %v1888 = vunpack.c.h.bf16 %v1768
    %v1889 = vunpack.c.l.bf16 %v1769
    %v1890 = vunpack.c.h.bf16 %v1769
    %v1891 = vunpack.c.l.bf16 %v1770
    %v1892 = vunpack.c.h.bf16 %v1770
    %v1893 = vunpack.c.l.bf16 %v1771
    %v1894 = vunpack.c.h.bf16 %v1771
    %v1895 = vunpack.c.l.bf16 %v1772
    %v1896 = vunpack.c.h.bf16 %v1772
    %v1897 = vunpack.c.l.bf16 %v1773
    %v1898 = vunpack.c.h.bf16 %v1773
    %v1899 = vunpack.c.l.bf16 %v1774
    %v1900 = vunpack.c.h.bf16 %v1774
    %v1901 = vunpack.c.l.bf16 %v1775
    %v1902 = vunpack.c.h.bf16 %v1775
    %v1903 = vunpack.c.l.bf16 %v1776
    %v1904 = vunpack.c.h.bf16 %v1776
    %v1905 = vsub.f32 %v1777, 1.0
    %v1906 = vsub.f32 %v1778, 1.0
    %v1907 = vsub.f32 %v1779, 1.0
    %v1908 = vsub.f32 %v1780, 1.0
    %v1909 = vsub.f32 %v1781, 1.0
    %v1910 = vsub.f32 %v1782, 1.0
    %v1911 = vsub.f32 %v1783, 1.0
    %v1912 = vsub.f32 %v1784, 1.0
    %v1913 = vsub.f32 %v1785, 1.0
    %v1914 = vsub.f32 %v1786, 1.0
    %v1915 = vsub.f32 %v1787, 1.0
    %v1916 = vsub.f32 %v1788, 1.0
    %v1917 = vsub.f32 %v1789, 1.0
    %v1918 = vsub.f32 %v1790, 1.0
    %v1919 = vsub.f32 %v1791, 1.0
    %v1920 = vsub.f32 %v1792, 1.0
    %v1921 = vsub.f32 %v1793, 1.0
    %v1922 = vsub.f32 %v1794, 1.0
    %v1923 = vsub.f32 %v1795, 1.0
    %v1924 = vsub.f32 %v1796, 1.0
    %v1925 = vsub.f32 %v1797, 1.0
    %v1926 = vsub.f32 %v1798, 1.0
    %v1927 = vsub.f32 %v1799, 1.0
    %v1928 = vsub.f32 %v1800, 1.0
    %v1929 = vsub.f32 %v1801, 1.0
    %v1930 = vsub.f32 %v1802, 1.0
    %v1931 = vsub.f32 %v1803, 1.0
    %v1932 = vsub.f32 %v1804, 1.0
    %v1933 = vsub.f32 %v1805, 1.0
    %v1934 = vsub.f32 %v1806, 1.0
    %v1935 = vsub.f32 %v1807, 1.0
    %v1936 = vsub.f32 %v1808, 1.0
    %v1937 = vsub.f32 %v1809, 1.0
    %v1938 = vsub.f32 %v1810, 1.0
    %v1939 = vsub.f32 %v1811, 1.0
    %v1940 = vsub.f32 %v1812, 1.0
    %v1941 = vsub.f32 %v1813, 1.0
    %v1942 = vsub.f32 %v1814, 1.0
    %v1943 = vsub.f32 %v1815, 1.0
    %v1944 = vsub.f32 %v1816, 1.0
    %v1945 = vsub.f32 %v1817, 1.0
    %v1946 = vsub.f32 %v1818, 1.0
    %v1947 = vsub.f32 %v1819, 1.0
    %v1948 = vsub.f32 %v1820, 1.0
    %v1949 = vsub.f32 %v1821, 1.0
    %v1950 = vsub.f32 %v1822, 1.0
    %v1951 = vsub.f32 %v1823, 1.0
    %v1952 = vsub.f32 %v1824, 1.0
    %v1953 = vsub.f32 %v1825, 1.0
    %v1954 = vsub.f32 %v1826, 1.0
    %v1955 = vsub.f32 %v1827, 1.0
    %v1956 = vsub.f32 %v1828, 1.0
    %v1957 = vsub.f32 %v1829, 1.0
    %v1958 = vsub.f32 %v1830, 1.0
    %v1959 = vsub.f32 %v1831, 1.0
    %v1960 = vsub.f32 %v1832, 1.0
    %v1961 = vsub.f32 %v1833, 1.0
    %v1962 = vsub.f32 %v1834, 1.0
    %v1963 = vsub.f32 %v1835, 1.0
    %v1964 = vsub.f32 %v1836, 1.0
    %v1965 = vsub.f32 %v1837, 1.0
    %v1966 = vsub.f32 %v1838, 1.0
    %v1967 = vsub.f32 %v1839, 1.0
    %v1968 = vsub.f32 %v1840, 1.0
    %v1969 = vsub.f32 %v1841, 1.0
    %v1970 = vsub.f32 %v1842, 1.0
    %v1971 = vsub.f32 %v1843, 1.0
    %v1972 = vsub.f32 %v1844, 1.0
    %v1973 = vsub.f32 %v1845, 1.0
    %v1974 = vsub.f32 %v1846, 1.0
    %v1975 = vsub.f32 %v1847, 1.0
    %v1976 = vsub.f32 %v1848, 1.0
    %v1977 = vsub.f32 %v1849, 1.0
    %v1978 = vsub.f32 %v1850, 1.0
    %v1979 = vsub.f32 %v1851, 1.0
    %v1980 = vsub.f32 %v1852, 1.0
    %v1981 = vsub.f32 %v1853, 1.0
    %v1982 = vsub.f32 %v1854, 1.0
    %v1983 = vsub.f32 %v1855, 1.0
    %v1984 = vsub.f32 %v1856, 1.0
    %v1985 = vsub.f32 %v1857, 1.0
    %v1986 = vsub.f32 %v1858, 1.0
    %v1987 = vsub.f32 %v1859, 1.0
    %v1988 = vsub.f32 %v1860, 1.0
    %v1989 = vsub.f32 %v1861, 1.0
    %v1990 = vsub.f32 %v1862, 1.0
    %v1991 = vsub.f32 %v1863, 1.0
    %v1992 = vsub.f32 %v1864, 1.0
    %v1993 = vsub.f32 %v1865, 1.0
    %v1994 = vsub.f32 %v1866, 1.0
    %v1995 = vsub.f32 %v1867, 1.0
    %v1996 = vsub.f32 %v1868, 1.0
    %v1997 = vsub.f32 %v1869, 1.0
    %v1998 = vsub.f32 %v1870, 1.0
    %v1999 = vsub.f32 %v1871, 1.0
    %v2000 = vsub.f32 %v1872, 1.0
    %v2001 = vsub.f32 %v1873, 1.0
    %v2002 = vsub.f32 %v1874, 1.0
    %v2003 = vsub.f32 %v1875, 1.0
    %v2004 = vsub.f32 %v1876, 1.0
    %v2005 = vsub.f32 %v1877, 1.0
    %v2006 = vsub.f32 %v1878, 1.0
    %v2007 = vsub.f32 %v1879, 1.0
    %v2008 = vsub.f32 %v1880, 1.0
    %v2009 = vsub.f32 %v1881, 1.0
    %v2010 = vsub.f32 %v1882, 1.0
    %v2011 = vsub.f32 %v1883, 1.0
    %v2012 = vsub.f32 %v1884, 1.0
    %v2013 = vsub.f32 %v1885, 1.0
    %v2014 = vsub.f32 %v1886, 1.0
    %v2015 = vsub.f32 %v1887, 1.0
    %v2016 = vsub.f32 %v1888, 1.0
    %v2017 = vsub.f32 %v1889, 1.0
    %v2018 = vsub.f32 %v1890, 1.0
    %v2019 = vsub.f32 %v1891, 1.0
    %v2020 = vsub.f32 %v1892, 1.0
    %v2021 = vsub.f32 %v1893, 1.0
    %v2022 = vsub.f32 %v1894, 1.0
    %v2023 = vsub.f32 %v1895, 1.0
    %v2024 = vsub.f32 %v1896, 1.0
    %v2025 = vsub.f32 %v1897, 1.0
    %v2026 = vsub.f32 %v1898, 1.0
    %v2027 = vsub.f32 %v1899, 1.0
    %v2028 = vsub.f32 %v1900, 1.0
    %v2029 = vsub.f32 %v1901, 1.0
    %v2030 = vsub.f32 %v1902, 1.0
    %v2031 = vsub.f32 %v1903, 1.0
    %v2032 = vsub.f32 %v1904, 1.0
    %v2033 = vpack.c.bf16 %v1906, %v1905
    %v2034 = vpack.c.bf16 %v1908, %v1907
    %v2035 = vpack.c.bf16 %v1910, %v1909
    %v2036 = vpack.c.bf16 %v1912, %v1911
    %v2037 = vpack.c.bf16 %v1914, %v1913
    %v2038 = vpack.c.bf16 %v1916, %v1915
    %v2039 = vpack.c.bf16 %v1918, %v1917
    %v2040 = vpack.c.bf16 %v1920, %v1919
    %v2041 = vpack.c.bf16 %v1922, %v1921
    %v2042 = vpack.c.bf16 %v1924, %v1923
    %v2043 = vpack.c.bf16 %v1926, %v1925
    %v2044 = vpack.c.bf16 %v1928, %v1927
    %v2045 = vpack.c.bf16 %v1930, %v1929
    %v2046 = vpack.c.bf16 %v1932, %v1931
    %v2047 = vpack.c.bf16 %v1934, %v1933
    %v2048 = vpack.c.bf16 %v1936, %v1935
    %v2049 = vpack.c.bf16 %v1938, %v1937
    %v2050 = vpack.c.bf16 %v1940, %v1939
    %v2051 = vpack.c.bf16 %v1942, %v1941
    %v2052 = vpack.c.bf16 %v1944, %v1943
    %v2053 = vpack.c.bf16 %v1946, %v1945
    %v2054 = vpack.c.bf16 %v1948, %v1947
    %v2055 = vpack.c.bf16 %v1950, %v1949
    %v2056 = vpack.c.bf16 %v1952, %v1951
    %v2057 = vpack.c.bf16 %v1954, %v1953
    %v2058 = vpack.c.bf16 %v1956, %v1955
    %v2059 = vpack.c.bf16 %v1958, %v1957
    %v2060 = vpack.c.bf16 %v1960, %v1959
    %v2061 = vpack.c.bf16 %v1962, %v1961
    %v2062 = vpack.c.bf16 %v1964, %v1963
    %v2063 = vpack.c.bf16 %v1966, %v1965
    %v2064 = vpack.c.bf16 %v1968, %v1967
    %v2065 = vpack.c.bf16 %v1970, %v1969
    %v2066 = vpack.c.bf16 %v1972, %v1971
    %v2067 = vpack.c.bf16 %v1974, %v1973
    %v2068 = vpack.c.bf16 %v1976, %v1975
    %v2069 = vpack.c.bf16 %v1978, %v1977
    %v2070 = vpack.c.bf16 %v1980, %v1979
    %v2071 = vpack.c.bf16 %v1982, %v1981
    %v2072 = vpack.c.bf16 %v1984, %v1983
    %v2073 = vpack.c.bf16 %v1986, %v1985
    %v2074 = vpack.c.bf16 %v1988, %v1987
    %v2075 = vpack.c.bf16 %v1990, %v1989
    %v2076 = vpack.c.bf16 %v1992, %v1991
    %v2077 = vpack.c.bf16 %v1994, %v1993
    %v2078 = vpack.c.bf16 %v1996, %v1995
    %v2079 = vpack.c.bf16 %v1998, %v1997
    %v2080 = vpack.c.bf16 %v2000, %v1999
    %v2081 = vpack.c.bf16 %v2002, %v2001
    %v2082 = vpack.c.bf16 %v2004, %v2003
    %v2083 = vpack.c.bf16 %v2006, %v2005
    %v2084 = vpack.c.bf16 %v2008, %v2007
    %v2085 = vpack.c.bf16 %v2010, %v2009
    %v2086 = vpack.c.bf16 %v2012, %v2011
    %v2087 = vpack.c.bf16 %v2014, %v2013
    %v2088 = vpack.c.bf16 %v2016, %v2015
    %v2089 = vpack.c.bf16 %v2018, %v2017
    %v2090 = vpack.c.bf16 %v2020, %v2019
    %v2091 = vpack.c.bf16 %v2022, %v2021
    %v2092 = vpack.c.bf16 %v2024, %v2023
    %v2093 = vpack.c.bf16 %v2026, %v2025
    %v2094 = vpack.c.bf16 %v2028, %v2027
    %v2095 = vpack.c.bf16 %v2030, %v2029
    %v2096 = vpack.c.bf16 %v2032, %v2031
    %vm2097 = vmpackc.low %vm1010, %vm1009
    %vm2098 = vmpackc.low %vm1012, %vm1011
    %vm2099 = vmpackc.low %vm1014, %vm1013
    %vm2100 = vmpackc.low %vm1016, %vm1015
    %vm2101 = vmpackc.low %vm1018, %vm1017
    %vm2102 = vmpackc.low %vm1020, %vm1019
    %vm2103 = vmpackc.low %vm1022, %vm1021
    %vm2104 = vmpackc.low %vm1024, %vm1023
    %vm2105 = vmpackc.low %vm1026, %vm1025
    %vm2106 = vmpackc.low %vm1028, %vm1027
    %vm2107 = vmpackc.low %vm1030, %vm1029
    %vm2108 = vmpackc.low %vm1032, %vm1031
    %vm2109 = vmpackc.low %vm1034, %vm1033
    %vm2110 = vmpackc.low %vm1036, %vm1035
    %vm2111 = vmpackc.low %vm1038, %vm1037
    %vm2112 = vmpackc.low %vm1040, %vm1039
    %vm2113 = vmpackc.low %vm1042, %vm1041
    %vm2114 = vmpackc.low %vm1044, %vm1043
    %vm2115 = vmpackc.low %vm1046, %vm1045
    %vm2116 = vmpackc.low %vm1048, %vm1047
    %vm2117 = vmpackc.low %vm1050, %vm1049
    %vm2118 = vmpackc.low %vm1052, %vm1051
    %vm2119 = vmpackc.low %vm1054, %vm1053
    %vm2120 = vmpackc.low %vm1056, %vm1055
    %vm2121 = vmpackc.low %vm1058, %vm1057
    %vm2122 = vmpackc.low %vm1060, %vm1059
    %vm2123 = vmpackc.low %vm1062, %vm1061
    %vm2124 = vmpackc.low %vm1064, %vm1063
    %vm2125 = vmpackc.low %vm1066, %vm1065
    %vm2126 = vmpackc.low %vm1068, %vm1067
    %vm2127 = vmpackc.low %vm1070, %vm1069
    %vm2128 = vmpackc.low %vm1072, %vm1071
    %vm2129 = vmpackc.low %vm1074, %vm1073
    %vm2130 = vmpackc.low %vm1076, %vm1075
    %vm2131 = vmpackc.low %vm1078, %vm1077
    %vm2132 = vmpackc.low %vm1080, %vm1079
    %vm2133 = vmpackc.low %vm1082, %vm1081
    %vm2134 = vmpackc.low %vm1084, %vm1083
    %vm2135 = vmpackc.low %vm1086, %vm1085
    %vm2136 = vmpackc.low %vm1088, %vm1087
    %vm2137 = vmpackc.low %vm1090, %vm1089
    %vm2138 = vmpackc.low %vm1092, %vm1091
    %vm2139 = vmpackc.low %vm1094, %vm1093
    %vm2140 = vmpackc.low %vm1096, %vm1095
    %vm2141 = vmpackc.low %vm1098, %vm1097
    %vm2142 = vmpackc.low %vm1100, %vm1099
    %vm2143 = vmpackc.low %vm1102, %vm1101
    %vm2144 = vmpackc.low %vm1104, %vm1103
    %vm2145 = vmpackc.low %vm1106, %vm1105
    %vm2146 = vmpackc.low %vm1108, %vm1107
    %vm2147 = vmpackc.low %vm1110, %vm1109
    %vm2148 = vmpackc.low %vm1112, %vm1111
    %vm2149 = vmpackc.low %vm1114, %vm1113
    %vm2150 = vmpackc.low %vm1116, %vm1115
    %vm2151 = vmpackc.low %vm1118, %vm1117
    %vm2152 = vmpackc.low %vm1120, %vm1119
    %vm2153 = vmpackc.low %vm1122, %vm1121
    %vm2154 = vmpackc.low %vm1124, %vm1123
    %vm2155 = vmpackc.low %vm1126, %vm1125
    %vm2156 = vmpackc.low %vm1128, %vm1127
    %vm2157 = vmpackc.low %vm1130, %vm1129
    %vm2158 = vmpackc.low %vm1132, %vm1131
    %vm2159 = vmpackc.low %vm1134, %vm1133
    %vm2160 = vmpackc.low %vm1136, %vm1135
    %v2161 = vsel %vm2097, %v817, %v2033
    %v2162 = vsel %vm2098, %v818, %v2034
    %v2163 = vsel %vm2099, %v819, %v2035
    %v2164 = vsel %vm2100, %v820, %v2036
    %v2165 = vsel %vm2101, %v821, %v2037
    %v2166 = vsel %vm2102, %v822, %v2038
    %v2167 = vsel %vm2103, %v823, %v2039
    %v2168 = vsel %vm2104, %v824, %v2040
    %v2169 = vsel %vm2105, %v825, %v2041
    %v2170 = vsel %vm2106, %v826, %v2042
    %v2171 = vsel %vm2107, %v827, %v2043
    %v2172 = vsel %vm2108, %v828, %v2044
    %v2173 = vsel %vm2109, %v829, %v2045
    %v2174 = vsel %vm2110, %v830, %v2046
    %v2175 = vsel %vm2111, %v831, %v2047
    %v2176 = vsel %vm2112, %v832, %v2048
    %v2177 = vsel %vm2113, %v833, %v2049
    %v2178 = vsel %vm2114, %v834, %v2050
    %v2179 = vsel %vm2115, %v835, %v2051
    %v2180 = vsel %vm2116, %v836, %v2052
    %v2181 = vsel %vm2117, %v837, %v2053
    %v2182 = vsel %vm2118, %v838, %v2054
    %v2183 = vsel %vm2119, %v839, %v2055
    %v2184 = vsel %vm2120, %v840, %v2056
    %v2185 = vsel %vm2121, %v841, %v2057
    %v2186 = vsel %vm2122, %v842, %v2058
    %v2187 = vsel %vm2123, %v843, %v2059
    %v2188 = vsel %vm2124, %v844, %v2060
    %v2189 = vsel %vm2125, %v845, %v2061
    %v2190 = vsel %vm2126, %v846, %v2062
    %v2191 = vsel %vm2127, %v847, %v2063
    %v2192 = vsel %vm2128, %v848, %v2064
    %v2193 = vsel %vm2129, %v849, %v2065
    %v2194 = vsel %vm2130, %v850, %v2066
    %v2195 = vsel %vm2131, %v851, %v2067
    %v2196 = vsel %vm2132, %v852, %v2068
    %v2197 = vsel %vm2133, %v853, %v2069
    %v2198 = vsel %vm2134, %v854, %v2070
    %v2199 = vsel %vm2135, %v855, %v2071
    %v2200 = vsel %vm2136, %v856, %v2072
    %v2201 = vsel %vm2137, %v857, %v2073
    %v2202 = vsel %vm2138, %v858, %v2074
    %v2203 = vsel %vm2139, %v859, %v2075
    %v2204 = vsel %vm2140, %v860, %v2076
    %v2205 = vsel %vm2141, %v861, %v2077
    %v2206 = vsel %vm2142, %v862, %v2078
    %v2207 = vsel %vm2143, %v863, %v2079
    %v2208 = vsel %vm2144, %v864, %v2080
    %v2209 = vsel %vm2145, %v865, %v2081
    %v2210 = vsel %vm2146, %v866, %v2082
    %v2211 = vsel %vm2147, %v867, %v2083
    %v2212 = vsel %vm2148, %v868, %v2084
    %v2213 = vsel %vm2149, %v869, %v2085
    %v2214 = vsel %vm2150, %v870, %v2086
    %v2215 = vsel %vm2151, %v871, %v2087
    %v2216 = vsel %vm2152, %v872, %v2088
    %v2217 = vsel %vm2153, %v873, %v2089
    %v2218 = vsel %vm2154, %v874, %v2090
    %v2219 = vsel %vm2155, %v875, %v2091
    %v2220 = vsel %vm2156, %v876, %v2092
    %v2221 = vsel %vm2157, %v877, %v2093
    %v2222 = vsel %vm2158, %v878, %v2094
    %v2223 = vsel %vm2159, %v879, %v2095
    %v2224 = vsel %vm2160, %v880, %v2096
    %v2225 = vld [vmem:[%s3] sm:$0xf]
    %v2226 = vld [vmem:[%s3 + $0x4] sm:$0xf]
    %v2227 = vld [vmem:[%s3 + $0x8] sm:$0xf]
    %v2228 = vld [vmem:[%s3 + $0xc] sm:$0xf]
    %v2229 = vld [vmem:[%s3 + $0x10] sm:$0xf]
    %v2230 = vld [vmem:[%s3 + $0x14] sm:$0xf]
    %v2231 = vld [vmem:[%s3 + $0x18] sm:$0xf]
    %v2232 = vld [vmem:[%s3 + $0x1c] sm:$0xf]
    %v2233 = vld [vmem:[%s4] sm:$0xff]
    %v2234 = vld [vmem:[%s4 + $0x8] sm:$0xff]
    %v2235 = vld [vmem:[%s4 + $0x10] sm:$0xff]
    %v2236 = vld [vmem:[%s4 + $0x18] sm:$0xff]
    %v2237 = vld [vmem:[%s4 + $0x20] sm:$0xff]
    %v2238 = vld [vmem:[%s4 + $0x28] sm:$0xff]
    %v2239 = vld [vmem:[%s4 + $0x30] sm:$0xff]
    %v2240 = vld [vmem:[%s4 + $0x38] sm:$0xff]
    %2242 = vset.pattern.permute.xlu0 0
    %2243 = vperm.xlu0 %2242, %v2233
    %v2244 = vpop.permute.xlu0 %2243
    %2247 = vset.pattern.permute.xlu0 0
    %2248 = vperm.xlu0 %2247, %v2234
    %v2249 = vpop.permute.xlu0 %2248
    %2252 = vset.pattern.permute.xlu0 0
    %2253 = vperm.xlu0 %2252, %v2235
    %v2254 = vpop.permute.xlu0 %2253
    %2257 = vset.pattern.permute.xlu0 0
    %2258 = vperm.xlu0 %2257, %v2236
    %v2259 = vpop.permute.xlu0 %2258
    %2262 = vset.pattern.permute.xlu0 0
    %2263 = vperm.xlu0 %2262, %v2237
    %v2264 = vpop.permute.xlu0 %2263
    %2267 = vset.pattern.permute.xlu0 0
    %2268 = vperm.xlu0 %2267, %v2238
    %v2269 = vpop.permute.xlu0 %2268
    %2272 = vset.pattern.permute.xlu0 0
    %2273 = vperm.xlu0 %2272, %v2239
    %v2274 = vpop.permute.xlu0 %2273
    %2277 = vset.pattern.permute.xlu0 0
    %2278 = vperm.xlu0 %2277, %v2240
    %v2279 = vpop.permute.xlu0 %2278
    %v2289 = vunpack.c.l.b16 %v2225
    %v2290 = vunpack.c.l.b16 %v2226
    %v2291 = vunpack.c.l.b16 %v2227
    %v2292 = vunpack.c.l.b16 %v2228
    %v2293 = vunpack.c.l.b16 %v2229
    %v2294 = vunpack.c.l.b16 %v2230
    %v2295 = vunpack.c.l.b16 %v2231
    %v2296 = vunpack.c.l.b16 %v2232
    %v2297 = vpack.c.b16 %v2290, %v2289
    %v2298 = vpack.c.b16 %v2292, %v2291
    %v2299 = vpack.c.b16 %v2294, %v2293
    %v2300 = vpack.c.b16 %v2296, %v2295
    %v2369 = vunpack.c.l.b16 %v2161
    %v2370 = vunpack.c.h.b16 %v2161
    %v2371 = vunpack.c.l.b16 %v2162
    %v2372 = vunpack.c.h.b16 %v2162
    %v2373 = vunpack.c.l.b16 %v2163
    %v2374 = vunpack.c.h.b16 %v2163
    %v2375 = vunpack.c.l.b16 %v2164
    %v2376 = vunpack.c.h.b16 %v2164
    %v2377 = vunpack.c.l.b16 %v2165
    %v2378 = vunpack.c.h.b16 %v2165
    %v2379 = vunpack.c.l.b16 %v2166
    %v2380 = vunpack.c.h.b16 %v2166
    %v2381 = vunpack.c.l.b16 %v2167
    %v2382 = vunpack.c.h.b16 %v2167
    %v2383 = vunpack.c.l.b16 %v2168
    %v2384 = vunpack.c.h.b16 %v2168
    %v2385 = vunpack.c.l.b16 %v2169
    %v2386 = vunpack.c.h.b16 %v2169
    %v2387 = vunpack.c.l.b16 %v2170
    %v2388 = vunpack.c.h.b16 %v2170
    %v2389 = vunpack.c.l.b16 %v2171
    %v2390 = vunpack.c.h.b16 %v2171
    %v2391 = vunpack.c.l.b16 %v2172
    %v2392 = vunpack.c.h.b16 %v2172
    %v2393 = vunpack.c.l.b16 %v2173
    %v2394 = vunpack.c.h.b16 %v2173
    %v2395 = vunpack.c.l.b16 %v2174
    %v2396 = vunpack.c.h.b16 %v2174
    %v2397 = vunpack.c.l.b16 %v2175
    %v2398 = vunpack.c.h.b16 %v2175
    %v2399 = vunpack.c.l.b16 %v2176
    %v2400 = vunpack.c.h.b16 %v2176
    %v2401 = vunpack.c.l.b16 %v2177
    %v2402 = vunpack.c.h.b16 %v2177
    %v2403 = vunpack.c.l.b16 %v2178
    %v2404 = vunpack.c.h.b16 %v2178
    %v2405 = vunpack.c.l.b16 %v2179
    %v2406 = vunpack.c.h.b16 %v2179
    %v2407 = vunpack.c.l.b16 %v2180
    %v2408 = vunpack.c.h.b16 %v2180
    %v2409 = vunpack.c.l.b16 %v2181
    %v2410 = vunpack.c.h.b16 %v2181
    %v2411 = vunpack.c.l.b16 %v2182
    %v2412 = vunpack.c.h.b16 %v2182
    %v2413 = vunpack.c.l.b16 %v2183
    %v2414 = vunpack.c.h.b16 %v2183
    %v2415 = vunpack.c.l.b16 %v2184
    %v2416 = vunpack.c.h.b16 %v2184
    %v2417 = vunpack.c.l.b16 %v2185
    %v2418 = vunpack.c.h.b16 %v2185
    %v2419 = vunpack.c.l.b16 %v2186
    %v2420 = vunpack.c.h.b16 %v2186
    %v2421 = vunpack.c.l.b16 %v2187
    %v2422 = vunpack.c.h.b16 %v2187
    %v2423 = vunpack.c.l.b16 %v2188
    %v2424 = vunpack.c.h.b16 %v2188
    %v2425 = vunpack.c.l.b16 %v2189
    %v2426 = vunpack.c.h.b16 %v2189
    %v2427 = vunpack.c.l.b16 %v2190
    %v2428 = vunpack.c.h.b16 %v2190
    %v2429 = vunpack.c.l.b16 %v2191
    %v2430 = vunpack.c.h.b16 %v2191
    %v2431 = vunpack.c.l.b16 %v2192
    %v2432 = vunpack.c.h.b16 %v2192
    %v2433 = vunpack.c.l.b16 %v2193
    %v2434 = vunpack.c.h.b16 %v2193
    %v2435 = vunpack.c.l.b16 %v2194
    %v2436 = vunpack.c.h.b16 %v2194
    %v2437 = vunpack.c.l.b16 %v2195
    %v2438 = vunpack.c.h.b16 %v2195
    %v2439 = vunpack.c.l.b16 %v2196
    %v2440 = vunpack.c.h.b16 %v2196
    %v2441 = vunpack.c.l.b16 %v2197
    %v2442 = vunpack.c.h.b16 %v2197
    %v2443 = vunpack.c.l.b16 %v2198
    %v2444 = vunpack.c.h.b16 %v2198
    %v2445 = vunpack.c.l.b16 %v2199
    %v2446 = vunpack.c.h.b16 %v2199
    %v2447 = vunpack.c.l.b16 %v2200
    %v2448 = vunpack.c.h.b16 %v2200
    %v2449 = vunpack.c.l.b16 %v2201
    %v2450 = vunpack.c.h.b16 %v2201
    %v2451 = vunpack.c.l.b16 %v2202
    %v2452 = vunpack.c.h.b16 %v2202
    %v2453 = vunpack.c.l.b16 %v2203
    %v2454 = vunpack.c.h.b16 %v2203
    %v2455 = vunpack.c.l.b16 %v2204
    %v2456 = vunpack.c.h.b16 %v2204
    %v2457 = vunpack.c.l.b16 %v2205
    %v2458 = vunpack.c.h.b16 %v2205
    %v2459 = vunpack.c.l.b16 %v2206
    %v2460 = vunpack.c.h.b16 %v2206
    %v2461 = vunpack.c.l.b16 %v2207
    %v2462 = vunpack.c.h.b16 %v2207
    %v2463 = vunpack.c.l.b16 %v2208
    %v2464 = vunpack.c.h.b16 %v2208
    %v2465 = vunpack.c.l.b16 %v2209
    %v2466 = vunpack.c.h.b16 %v2209
    %v2467 = vunpack.c.l.b16 %v2210
    %v2468 = vunpack.c.h.b16 %v2210
    %v2469 = vunpack.c.l.b16 %v2211
    %v2470 = vunpack.c.h.b16 %v2211
    %v2471 = vunpack.c.l.b16 %v2212
    %v2472 = vunpack.c.h.b16 %v2212
    %v2473 = vunpack.c.l.b16 %v2213
    %v2474 = vunpack.c.h.b16 %v2213
    %v2475 = vunpack.c.l.b16 %v2214
    %v2476 = vunpack.c.h.b16 %v2214
    %v2477 = vunpack.c.l.b16 %v2215
    %v2478 = vunpack.c.h.b16 %v2215
    %v2479 = vunpack.c.l.b16 %v2216
    %v2480 = vunpack.c.h.b16 %v2216
    %v2481 = vunpack.c.l.b16 %v2217
    %v2482 = vunpack.c.h.b16 %v2217
    %v2483 = vunpack.c.l.b16 %v2218
    %v2484 = vunpack.c.h.b16 %v2218
    %v2485 = vunpack.c.l.b16 %v2219
    %v2486 = vunpack.c.h.b16 %v2219
    %v2487 = vunpack.c.l.b16 %v2220
    %v2488 = vunpack.c.h.b16 %v2220
    %v2489 = vunpack.c.l.b16 %v2221
    %v2490 = vunpack.c.h.b16 %v2221
    %v2491 = vunpack.c.l.b16 %v2222
    %v2492 = vunpack.c.h.b16 %v2222
    %v2493 = vunpack.c.l.b16 %v2223
    %v2494 = vunpack.c.h.b16 %v2223
    %v2495 = vunpack.c.l.b16 %v2224
    %v2496 = vunpack.c.h.b16 %v2224
    %v2497 = vpack.c.b16 %v2377, %v2369
    %v2498 = vpack.c.b16 %v2378, %v2370
    %v2499 = vpack.c.b16 %v2379, %v2371
    %v2500 = vpack.c.b16 %v2380, %v2372
    %v2501 = vpack.c.b16 %v2381, %v2373
    %v2502 = vpack.c.b16 %v2382, %v2374
    %v2503 = vpack.c.b16 %v2383, %v2375
    %v2504 = vpack.c.b16 %v2384, %v2376
    %v2505 = vpack.c.b16 %v2393, %v2385
    %v2506 = vpack.c.b16 %v2394, %v2386
    %v2507 = vpack.c.b16 %v2395, %v2387
    %v2508 = vpack.c.b16 %v2396, %v2388
    %v2509 = vpack.c.b16 %v2397, %v2389
    %v2510 = vpack.c.b16 %v2398, %v2390
    %v2511 = vpack.c.b16 %v2399, %v2391
    %v2512 = vpack.c.b16 %v2400, %v2392
    %v2513 = vpack.c.b16 %v2409, %v2401
    %v2514 = vpack.c.b16 %v2410, %v2402
    %v2515 = vpack.c.b16 %v2411, %v2403
    %v2516 = vpack.c.b16 %v2412, %v2404
    %v2517 = vpack.c.b16 %v2413, %v2405
    %v2518 = vpack.c.b16 %v2414, %v2406
    %v2519 = vpack.c.b16 %v2415, %v2407
    %v2520 = vpack.c.b16 %v2416, %v2408
    %v2521 = vpack.c.b16 %v2425, %v2417
    %v2522 = vpack.c.b16 %v2426, %v2418
    %v2523 = vpack.c.b16 %v2427, %v2419
    %v2524 = vpack.c.b16 %v2428, %v2420
    %v2525 = vpack.c.b16 %v2429, %v2421
    %v2526 = vpack.c.b16 %v2430, %v2422
    %v2527 = vpack.c.b16 %v2431, %v2423
    %v2528 = vpack.c.b16 %v2432, %v2424
    %v2529 = vpack.c.b16 %v2441, %v2433
    %v2530 = vpack.c.b16 %v2442, %v2434
    %v2531 = vpack.c.b16 %v2443, %v2435
    %v2532 = vpack.c.b16 %v2444, %v2436
    %v2533 = vpack.c.b16 %v2445, %v2437
    %v2534 = vpack.c.b16 %v2446, %v2438
    %v2535 = vpack.c.b16 %v2447, %v2439
    %v2536 = vpack.c.b16 %v2448, %v2440
    %v2537 = vpack.c.b16 %v2457, %v2449
    %v2538 = vpack.c.b16 %v2458, %v2450
    %v2539 = vpack.c.b16 %v2459, %v2451
    %v2540 = vpack.c.b16 %v2460, %v2452
    %v2541 = vpack.c.b16 %v2461, %v2453
    %v2542 = vpack.c.b16 %v2462, %v2454
    %v2543 = vpack.c.b16 %v2463, %v2455
    %v2544 = vpack.c.b16 %v2464, %v2456
    %v2545 = vpack.c.b16 %v2473, %v2465
    %v2546 = vpack.c.b16 %v2474, %v2466
    %v2547 = vpack.c.b16 %v2475, %v2467
    %v2548 = vpack.c.b16 %v2476, %v2468
    %v2549 = vpack.c.b16 %v2477, %v2469
    %v2550 = vpack.c.b16 %v2478, %v2470
    %v2551 = vpack.c.b16 %v2479, %v2471
    %v2552 = vpack.c.b16 %v2480, %v2472
    %v2553 = vpack.c.b16 %v2489, %v2481
    %v2554 = vpack.c.b16 %v2490, %v2482
    %v2555 = vpack.c.b16 %v2491, %v2483
    %v2556 = vpack.c.b16 %v2492, %v2484
    %v2557 = vpack.c.b16 %v2493, %v2485
    %v2558 = vpack.c.b16 %v2494, %v2486
    %v2559 = vpack.c.b16 %v2495, %v2487
    %v2560 = vpack.c.b16 %v2496, %v2488
    %2625 = vmatpush.bf16.msra.mxu0 %v2553
    %2626 = vmatpush.bf16.msra.mxu0 %v2545
    %2627 = vmatpush.bf16.msra.mxu0 %v2537
    %2628 = vmatpush.bf16.msra.mxu0 %v2529
    %2629 = vmatpush.bf16.msra.mxu0 %v2521
    %2630 = vmatpush.bf16.msra.mxu0 %v2513
    %2631 = vmatpush.bf16.msra.mxu0 %v2505
    %2632 = vmatpush.bf16.msra.mxu0 %v2497
    %2633 = vmatmul.bf16.gmra.mxu0 %v2297
    %v2634 = vpop.f32.mrf.mxu0
    %v2635 = vadd.f32 %v2244, %v2634
    %v2636 = vpop.f32.mrf.mxu0
    %v2637 = vadd.f32 %v2249, %v2636
    %2638 = vmatmul.bf16.gmra.mxu0 %v2298
    %v2639 = vpop.f32.mrf.mxu0
    %v2640 = vadd.f32 %v2254, %v2639
    %v2641 = vpop.f32.mrf.mxu0
    %v2642 = vadd.f32 %v2259, %v2641
    %2643 = vmatmul.bf16.gmra.mxu0 %v2299
    %v2644 = vpop.f32.mrf.mxu0
    %v2645 = vadd.f32 %v2264, %v2644
    %v2646 = vpop.f32.mrf.mxu0
    %v2647 = vadd.f32 %v2269, %v2646
    %2648 = vmatmul.bf16.gmra.mxu0 %v2300
    %v2649 = vpop.f32.mrf.mxu0
    %v2650 = vadd.f32 %v2274, %v2649
    %v2651 = vpop.f32.mrf.mxu0
    %v2652 = vadd.f32 %v2279, %v2651
    %2653 = vdwg.mxu0
    %2654 = vmatpush.bf16.msra.mxu0 %v2554
    %2655 = vmatpush.bf16.msra.mxu0 %v2546
    %2656 = vmatpush.bf16.msra.mxu0 %v2538
    %2657 = vmatpush.bf16.msra.mxu0 %v2530
    %2658 = vmatpush.bf16.msra.mxu0 %v2522
    %2659 = vmatpush.bf16.msra.mxu0 %v2514
    %2660 = vmatpush.bf16.msra.mxu0 %v2506
    %2661 = vmatpush.bf16.msra.mxu0 %v2498
    %2662 = vmatmul.bf16.gmra.mxu0 %v2297
    %v2663 = vpop.f32.mrf.mxu0
    %v2664 = vadd.f32 %v2244, %v2663
    %v2665 = vpop.f32.mrf.mxu0
    %v2666 = vadd.f32 %v2249, %v2665
    %2667 = vmatmul.bf16.gmra.mxu0 %v2298
    %v2668 = vpop.f32.mrf.mxu0
    %v2669 = vadd.f32 %v2254, %v2668
    %v2670 = vpop.f32.mrf.mxu0
    %v2671 = vadd.f32 %v2259, %v2670
    %2672 = vmatmul.bf16.gmra.mxu0 %v2299
    %v2673 = vpop.f32.mrf.mxu0
    %v2674 = vadd.f32 %v2264, %v2673
    %v2675 = vpop.f32.mrf.mxu0
    %v2676 = vadd.f32 %v2269, %v2675
    %2677 = vmatmul.bf16.gmra.mxu0 %v2300
    %v2678 = vpop.f32.mrf.mxu0
    %v2679 = vadd.f32 %v2274, %v2678
    %v2680 = vpop.f32.mrf.mxu0
    %v2681 = vadd.f32 %v2279, %v2680
    %2682 = vdwg.mxu0
    %2683 = vmatpush.bf16.msra.mxu0 %v2555
    %2684 = vmatpush.bf16.msra.mxu0 %v2547
    %2685 = vmatpush.bf16.msra.mxu0 %v2539
    %2686 = vmatpush.bf16.msra.mxu0 %v2531
    %2687 = vmatpush.bf16.msra.mxu0 %v2523
    %2688 = vmatpush.bf16.msra.mxu0 %v2515
    %2689 = vmatpush.bf16.msra.mxu0 %v2507
    %2690 = vmatpush.bf16.msra.mxu0 %v2499
    %2691 = vmatmul.bf16.gmra.mxu0 %v2297
    %v2692 = vpop.f32.mrf.mxu0
    %v2693 = vadd.f32 %v2244, %v2692
    %v2694 = vpop.f32.mrf.mxu0
    %v2695 = vadd.f32 %v2249, %v2694
    %2696 = vmatmul.bf16.gmra.mxu0 %v2298
    %v2697 = vpop.f32.mrf.mxu0
    %v2698 = vadd.f32 %v2254, %v2697
    %v2699 = vpop.f32.mrf.mxu0
    %v2700 = vadd.f32 %v2259, %v2699
    %2701 = vmatmul.bf16.gmra.mxu0 %v2299
    %v2702 = vpop.f32.mrf.mxu0
    %v2703 = vadd.f32 %v2264, %v2702
    %v2704 = vpop.f32.mrf.mxu0
    %v2705 = vadd.f32 %v2269, %v2704
    %2706 = vmatmul.bf16.gmra.mxu0 %v2300
    %v2707 = vpop.f32.mrf.mxu0
    %v2708 = vadd.f32 %v2274, %v2707
    %v2709 = vpop.f32.mrf.mxu0
    %v2710 = vadd.f32 %v2279, %v2709
    %2711 = vdwg.mxu0
    %2712 = vmatpush.bf16.msra.mxu0 %v2556
    %2713 = vmatpush.bf16.msra.mxu0 %v2548
    %2714 = vmatpush.bf16.msra.mxu0 %v2540
    %2715 = vmatpush.bf16.msra.mxu0 %v2532
    %2716 = vmatpush.bf16.msra.mxu0 %v2524
    %2717 = vmatpush.bf16.msra.mxu0 %v2516
    %2718 = vmatpush.bf16.msra.mxu0 %v2508
    %2719 = vmatpush.bf16.msra.mxu0 %v2500
    %2720 = vmatmul.bf16.gmra.mxu0 %v2297
    %v2721 = vpop.f32.mrf.mxu0
    %v2722 = vadd.f32 %v2244, %v2721
    %v2723 = vpop.f32.mrf.mxu0
    %v2724 = vadd.f32 %v2249, %v2723
    %2725 = vmatmul.bf16.gmra.mxu0 %v2298
    %v2726 = vpop.f32.mrf.mxu0
    %v2727 = vadd.f32 %v2254, %v2726
    %v2728 = vpop.f32.mrf.mxu0
    %v2729 = vadd.f32 %v2259, %v2728
    %2730 = vmatmul.bf16.gmra.mxu0 %v2299
    %v2731 = vpop.f32.mrf.mxu0
    %v2732 = vadd.f32 %v2264, %v2731
    %v2733 = vpop.f32.mrf.mxu0
    %v2734 = vadd.f32 %v2269, %v2733
    %2735 = vmatmul.bf16.gmra.mxu0 %v2300
    %v2736 = vpop.f32.mrf.mxu0
    %v2737 = vadd.f32 %v2274, %v2736
    %v2738 = vpop.f32.mrf.mxu0
    %v2739 = vadd.f32 %v2279, %v2738
    %2740 = vdwg.mxu0
    %2741 = vmatpush.bf16.msra.mxu0 %v2557
    %2742 = vmatpush.bf16.msra.mxu0 %v2549
    %2743 = vmatpush.bf16.msra.mxu0 %v2541
    %2744 = vmatpush.bf16.msra.mxu0 %v2533
    %2745 = vmatpush.bf16.msra.mxu0 %v2525
    %2746 = vmatpush.bf16.msra.mxu0 %v2517
    %2747 = vmatpush.bf16.msra.mxu0 %v2509
    %2748 = vmatpush.bf16.msra.mxu0 %v2501
    %2749 = vmatmul.bf16.gmra.mxu0 %v2297
    %v2750 = vpop.f32.mrf.mxu0
    %v2751 = vadd.f32 %v2244, %v2750
    %v2752 = vpop.f32.mrf.mxu0
    %v2753 = vadd.f32 %v2249, %v2752
    %2754 = vmatmul.bf16.gmra.mxu0 %v2298
    %v2755 = vpop.f32.mrf.mxu0
    %v2756 = vadd.f32 %v2254, %v2755
    %v2757 = vpop.f32.mrf.mxu0
    %v2758 = vadd.f32 %v2259, %v2757
    %2759 = vmatmul.bf16.gmra.mxu0 %v2299
    %v2760 = vpop.f32.mrf.mxu0
    %v2761 = vadd.f32 %v2264, %v2760
    %v2762 = vpop.f32.mrf.mxu0
    %v2763 = vadd.f32 %v2269, %v2762
    %2764 = vmatmul.bf16.gmra.mxu0 %v2300
    %v2765 = vpop.f32.mrf.mxu0
    %v2766 = vadd.f32 %v2274, %v2765
    %v2767 = vpop.f32.mrf.mxu0
    %v2768 = vadd.f32 %v2279, %v2767
    %2769 = vdwg.mxu0
    %2770 = vmatpush.bf16.msra.mxu0 %v2558
    %2771 = vmatpush.bf16.msra.mxu0 %v2550
    %2772 = vmatpush.bf16.msra.mxu0 %v2542
    %2773 = vmatpush.bf16.msra.mxu0 %v2534
    %2774 = vmatpush.bf16.msra.mxu0 %v2526
    %2775 = vmatpush.bf16.msra.mxu0 %v2518
    %2776 = vmatpush.bf16.msra.mxu0 %v2510
    %2777 = vmatpush.bf16.msra.mxu0 %v2502
    %2778 = vmatmul.bf16.gmra.mxu0 %v2297
    %v2779 = vpop.f32.mrf.mxu0
    %v2780 = vadd.f32 %v2244, %v2779
    %v2781 = vpop.f32.mrf.mxu0
    %v2782 = vadd.f32 %v2249, %v2781
    %2783 = vmatmul.bf16.gmra.mxu0 %v2298
    %v2784 = vpop.f32.mrf.mxu0
    %v2785 = vadd.f32 %v2254, %v2784
    %v2786 = vpop.f32.mrf.mxu0
    %v2787 = vadd.f32 %v2259, %v2786
    %2788 = vmatmul.bf16.gmra.mxu0 %v2299
    %v2789 = vpop.f32.mrf.mxu0
    %v2790 = vadd.f32 %v2264, %v2789
    %v2791 = vpop.f32.mrf.mxu0
    %v2792 = vadd.f32 %v2269, %v2791
    %2793 = vmatmul.bf16.gmra.mxu0 %v2300
    %v2794 = vpop.f32.mrf.mxu0
    %v2795 = vadd.f32 %v2274, %v2794
    %v2796 = vpop.f32.mrf.mxu0
    %v2797 = vadd.f32 %v2279, %v2796
    %2798 = vdwg.mxu0
    %2799 = vmatpush.bf16.msra.mxu0 %v2559
    %2800 = vmatpush.bf16.msra.mxu0 %v2551
    %2801 = vmatpush.bf16.msra.mxu0 %v2543
    %2802 = vmatpush.bf16.msra.mxu0 %v2535
    %2803 = vmatpush.bf16.msra.mxu0 %v2527
    %2804 = vmatpush.bf16.msra.mxu0 %v2519
    %2805 = vmatpush.bf16.msra.mxu0 %v2511
    %2806 = vmatpush.bf16.msra.mxu0 %v2503
    %2807 = vmatmul.bf16.gmra.mxu0 %v2297
    %v2808 = vpop.f32.mrf.mxu0
    %v2809 = vadd.f32 %v2244, %v2808
    %v2810 = vpop.f32.mrf.mxu0
    %v2811 = vadd.f32 %v2249, %v2810
    %2812 = vmatmul.bf16.gmra.mxu0 %v2298
    %v2813 = vpop.f32.mrf.mxu0
    %v2814 = vadd.f32 %v2254, %v2813
    %v2815 = vpop.f32.mrf.mxu0
    %v2816 = vadd.f32 %v2259, %v2815
    %2817 = vmatmul.bf16.gmra.mxu0 %v2299
    %v2818 = vpop.f32.mrf.mxu0
    %v2819 = vadd.f32 %v2264, %v2818
    %v2820 = vpop.f32.mrf.mxu0
    %v2821 = vadd.f32 %v2269, %v2820
    %2822 = vmatmul.bf16.gmra.mxu0 %v2300
    %v2823 = vpop.f32.mrf.mxu0
    %v2824 = vadd.f32 %v2274, %v2823
    %v2825 = vpop.f32.mrf.mxu0
    %v2826 = vadd.f32 %v2279, %v2825
    %2827 = vdwg.mxu0
    %2828 = vmatpush.bf16.msra.mxu0 %v2560
    %2829 = vmatpush.bf16.msra.mxu0 %v2552
    %2830 = vmatpush.bf16.msra.mxu0 %v2544
    %2831 = vmatpush.bf16.msra.mxu0 %v2536
    %2832 = vmatpush.bf16.msra.mxu0 %v2528
    %2833 = vmatpush.bf16.msra.mxu0 %v2520
    %2834 = vmatpush.bf16.msra.mxu0 %v2512
    %2835 = vmatpush.bf16.msra.mxu0 %v2504
    %2836 = vmatmul.bf16.gmra.mxu0 %v2297
    %v2837 = vpop.f32.mrf.mxu0
    %v2838 = vadd.f32 %v2244, %v2837
    %v2839 = vpop.f32.mrf.mxu0
    %v2840 = vadd.f32 %v2249, %v2839
    %2841 = vmatmul.bf16.gmra.mxu0 %v2298
    %v2842 = vpop.f32.mrf.mxu0
    %v2843 = vadd.f32 %v2254, %v2842
    %v2844 = vpop.f32.mrf.mxu0
    %v2845 = vadd.f32 %v2259, %v2844
    %2846 = vmatmul.bf16.gmra.mxu0 %v2299
    %v2847 = vpop.f32.mrf.mxu0
    %v2848 = vadd.f32 %v2264, %v2847
    %v2849 = vpop.f32.mrf.mxu0
    %v2850 = vadd.f32 %v2269, %v2849
    %2851 = vmatmul.bf16.gmra.mxu0 %v2300
    %v2852 = vpop.f32.mrf.mxu0
    %v2853 = vadd.f32 %v2274, %v2852
    %v2854 = vpop.f32.mrf.mxu0
    %v2855 = vadd.f32 %v2279, %v2854
    %2856 = vdwg.mxu0
    %v2857 = vpack.c.bf16 %v2664, %v2635
    %v2858 = vpack.c.bf16 %v2722, %v2693
    %v2859 = vpack.c.bf16 %v2780, %v2751
    %v2860 = vpack.c.bf16 %v2838, %v2809
    %v2861 = vpack.c.bf16 %v2666, %v2637
    %v2862 = vpack.c.bf16 %v2724, %v2695
    %v2863 = vpack.c.bf16 %v2782, %v2753
    %v2864 = vpack.c.bf16 %v2840, %v2811
    %v2865 = vpack.c.bf16 %v2669, %v2640
    %v2866 = vpack.c.bf16 %v2727, %v2698
    %v2867 = vpack.c.bf16 %v2785, %v2756
    %v2868 = vpack.c.bf16 %v2843, %v2814
    %v2869 = vpack.c.bf16 %v2671, %v2642
    %v2870 = vpack.c.bf16 %v2729, %v2700
    %v2871 = vpack.c.bf16 %v2787, %v2758
    %v2872 = vpack.c.bf16 %v2845, %v2816
    %v2873 = vpack.c.bf16 %v2674, %v2645
    %v2874 = vpack.c.bf16 %v2732, %v2703
    %v2875 = vpack.c.bf16 %v2790, %v2761
    %v2876 = vpack.c.bf16 %v2848, %v2819
    %v2877 = vpack.c.bf16 %v2676, %v2647
    %v2878 = vpack.c.bf16 %v2734, %v2705
    %v2879 = vpack.c.bf16 %v2792, %v2763
    %v2880 = vpack.c.bf16 %v2850, %v2821
    %v2881 = vpack.c.bf16 %v2679, %v2650
    %v2882 = vpack.c.bf16 %v2737, %v2708
    %v2883 = vpack.c.bf16 %v2795, %v2766
    %v2884 = vpack.c.bf16 %v2853, %v2824
    %v2885 = vpack.c.bf16 %v2681, %v2652
    %v2886 = vpack.c.bf16 %v2739, %v2710
    %v2887 = vpack.c.bf16 %v2797, %v2768
    %v2888 = vpack.c.bf16 %v2855, %v2826
    %v2889 = vunpack.c.l.bf16 %v2857
    %v2890 = vunpack.c.h.bf16 %v2857
    %v2891 = vunpack.c.l.bf16 %v2858
    %v2892 = vunpack.c.h.bf16 %v2858
    %v2893 = vunpack.c.l.bf16 %v2859
    %v2894 = vunpack.c.h.bf16 %v2859
    %v2895 = vunpack.c.l.bf16 %v2860
    %v2896 = vunpack.c.h.bf16 %v2860
    %v2897 = vunpack.c.l.bf16 %v2861
    %v2898 = vunpack.c.h.bf16 %v2861
    %v2899 = vunpack.c.l.bf16 %v2862
    %v2900 = vunpack.c.h.bf16 %v2862
    %v2901 = vunpack.c.l.bf16 %v2863
    %v2902 = vunpack.c.h.bf16 %v2863
    %v2903 = vunpack.c.l.bf16 %v2864
    %v2904 = vunpack.c.h.bf16 %v2864
    %v2905 = vunpack.c.l.bf16 %v2865
    %v2906 = vunpack.c.h.bf16 %v2865
    %v2907 = vunpack.c.l.bf16 %v2866
    %v2908 = vunpack.c.h.bf16 %v2866
    %v2909 = vunpack.c.l.bf16 %v2867
    %v2910 = vunpack.c.h.bf16 %v2867
    %v2911 = vunpack.c.l.bf16 %v2868
    %v2912 = vunpack.c.h.bf16 %v2868
    %v2913 = vunpack.c.l.bf16 %v2869
    %v2914 = vunpack.c.h.bf16 %v2869
    %v2915 = vunpack.c.l.bf16 %v2870
    %v2916 = vunpack.c.h.bf16 %v2870
    %v2917 = vunpack.c.l.bf16 %v2871
    %v2918 = vunpack.c.h.bf16 %v2871
    %v2919 = vunpack.c.l.bf16 %v2872
    %v2920 = vunpack.c.h.bf16 %v2872
    %v2921 = vunpack.c.l.bf16 %v2873
    %v2922 = vunpack.c.h.bf16 %v2873
    %v2923 = vunpack.c.l.bf16 %v2874
    %v2924 = vunpack.c.h.bf16 %v2874
    %v2925 = vunpack.c.l.bf16 %v2875
    %v2926 = vunpack.c.h.bf16 %v2875
    %v2927 = vunpack.c.l.bf16 %v2876
    %v2928 = vunpack.c.h.bf16 %v2876
    %v2929 = vunpack.c.l.bf16 %v2877
    %v2930 = vunpack.c.h.bf16 %v2877
    %v2931 = vunpack.c.l.bf16 %v2878
    %v2932 = vunpack.c.h.bf16 %v2878
    %v2933 = vunpack.c.l.bf16 %v2879
    %v2934 = vunpack.c.h.bf16 %v2879
    %v2935 = vunpack.c.l.bf16 %v2880
    %v2936 = vunpack.c.h.bf16 %v2880
    %v2937 = vunpack.c.l.bf16 %v2881
    %v2938 = vunpack.c.h.bf16 %v2881
    %v2939 = vunpack.c.l.bf16 %v2882
    %v2940 = vunpack.c.h.bf16 %v2882
    %v2941 = vunpack.c.l.bf16 %v2883
    %v2942 = vunpack.c.h.bf16 %v2883
    %v2943 = vunpack.c.l.bf16 %v2884
    %v2944 = vunpack.c.h.bf16 %v2884
    %v2945 = vunpack.c.l.bf16 %v2885
    %v2946 = vunpack.c.h.bf16 %v2885
    %v2947 = vunpack.c.l.bf16 %v2886
    %v2948 = vunpack.c.h.bf16 %v2886
    %v2949 = vunpack.c.l.bf16 %v2887
    %v2950 = vunpack.c.h.bf16 %v2887
    %v2951 = vunpack.c.l.bf16 %v2888
    %v2952 = vunpack.c.h.bf16 %v2888
    %vm2953 = vcmp.gt.f32.partialorder %v2889, 0.0
    %vm2954 = vcmp.gt.f32.partialorder %v2890, 0.0
    %vm2955 = vcmp.gt.f32.partialorder %v2891, 0.0
    %vm2956 = vcmp.gt.f32.partialorder %v2892, 0.0
    %vm2957 = vcmp.gt.f32.partialorder %v2893, 0.0
    %vm2958 = vcmp.gt.f32.partialorder %v2894, 0.0
    %vm2959 = vcmp.gt.f32.partialorder %v2895, 0.0
    %vm2960 = vcmp.gt.f32.partialorder %v2896, 0.0
    %vm2961 = vcmp.gt.f32.partialorder %v2897, 0.0
    %vm2962 = vcmp.gt.f32.partialorder %v2898, 0.0
    %vm2963 = vcmp.gt.f32.partialorder %v2899, 0.0
    %vm2964 = vcmp.gt.f32.partialorder %v2900, 0.0
    %vm2965 = vcmp.gt.f32.partialorder %v2901, 0.0
    %vm2966 = vcmp.gt.f32.partialorder %v2902, 0.0
    %vm2967 = vcmp.gt.f32.partialorder %v2903, 0.0
    %vm2968 = vcmp.gt.f32.partialorder %v2904, 0.0
    %vm2969 = vcmp.gt.f32.partialorder %v2905, 0.0
    %vm2970 = vcmp.gt.f32.partialorder %v2906, 0.0
    %vm2971 = vcmp.gt.f32.partialorder %v2907, 0.0
    %vm2972 = vcmp.gt.f32.partialorder %v2908, 0.0
    %vm2973 = vcmp.gt.f32.partialorder %v2909, 0.0
    %vm2974 = vcmp.gt.f32.partialorder %v2910, 0.0
    %vm2975 = vcmp.gt.f32.partialorder %v2911, 0.0
    %vm2976 = vcmp.gt.f32.partialorder %v2912, 0.0
    %vm2977 = vcmp.gt.f32.partialorder %v2913, 0.0
    %vm2978 = vcmp.gt.f32.partialorder %v2914, 0.0
    %vm2979 = vcmp.gt.f32.partialorder %v2915, 0.0
    %vm2980 = vcmp.gt.f32.partialorder %v2916, 0.0
    %vm2981 = vcmp.gt.f32.partialorder %v2917, 0.0
    %vm2982 = vcmp.gt.f32.partialorder %v2918, 0.0
    %vm2983 = vcmp.gt.f32.partialorder %v2919, 0.0
    %vm2984 = vcmp.gt.f32.partialorder %v2920, 0.0
    %vm2985 = vcmp.gt.f32.partialorder %v2921, 0.0
    %vm2986 = vcmp.gt.f32.partialorder %v2922, 0.0
    %vm2987 = vcmp.gt.f32.partialorder %v2923, 0.0
    %vm2988 = vcmp.gt.f32.partialorder %v2924, 0.0
    %vm2989 = vcmp.gt.f32.partialorder %v2925, 0.0
    %vm2990 = vcmp.gt.f32.partialorder %v2926, 0.0
    %vm2991 = vcmp.gt.f32.partialorder %v2927, 0.0
    %vm2992 = vcmp.gt.f32.partialorder %v2928, 0.0
    %vm2993 = vcmp.gt.f32.partialorder %v2929, 0.0
    %vm2994 = vcmp.gt.f32.partialorder %v2930, 0.0
    %vm2995 = vcmp.gt.f32.partialorder %v2931, 0.0
    %vm2996 = vcmp.gt.f32.partialorder %v2932, 0.0
    %vm2997 = vcmp.gt.f32.partialorder %v2933, 0.0
    %vm2998 = vcmp.gt.f32.partialorder %v2934, 0.0
    %vm2999 = vcmp.gt.f32.partialorder %v2935, 0.0
    %vm3000 = vcmp.gt.f32.partialorder %v2936, 0.0
    %vm3001 = vcmp.gt.f32.partialorder %v2937, 0.0
    %vm3002 = vcmp.gt.f32.partialorder %v2938, 0.0
    %vm3003 = vcmp.gt.f32.partialorder %v2939, 0.0
    %vm3004 = vcmp.gt.f32.partialorder %v2940, 0.0
    %vm3005 = vcmp.gt.f32.partialorder %v2941, 0.0
    %vm3006 = vcmp.gt.f32.partialorder %v2942, 0.0
    %vm3007 = vcmp.gt.f32.partialorder %v2943, 0.0
    %vm3008 = vcmp.gt.f32.partialorder %v2944, 0.0
    %vm3009 = vcmp.gt.f32.partialorder %v2945, 0.0
    %vm3010 = vcmp.gt.f32.partialorder %v2946, 0.0
    %vm3011 = vcmp.gt.f32.partialorder %v2947, 0.0
    %vm3012 = vcmp.gt.f32.partialorder %v2948, 0.0
    %vm3013 = vcmp.gt.f32.partialorder %v2949, 0.0
    %vm3014 = vcmp.gt.f32.partialorder %v2950, 0.0
    %vm3015 = vcmp.gt.f32.partialorder %v2951, 0.0
    %vm3016 = vcmp.gt.f32.partialorder %v2952, 0.0
    %v3017 = vmin.f32 %v2889, 0.0
    %v3018 = vmin.f32 %v2890, 0.0
    %v3019 = vmin.f32 %v2891, 0.0
    %v3020 = vmin.f32 %v2892, 0.0
    %v3021 = vmin.f32 %v2893, 0.0
    %v3022 = vmin.f32 %v2894, 0.0
    %v3023 = vmin.f32 %v2895, 0.0
    %v3024 = vmin.f32 %v2896, 0.0
    %v3025 = vmin.f32 %v2897, 0.0
    %v3026 = vmin.f32 %v2898, 0.0
    %v3027 = vmin.f32 %v2899, 0.0
    %v3028 = vmin.f32 %v2900, 0.0
    %v3029 = vmin.f32 %v2901, 0.0
    %v3030 = vmin.f32 %v2902, 0.0
    %v3031 = vmin.f32 %v2903, 0.0
    %v3032 = vmin.f32 %v2904, 0.0
    %v3033 = vmin.f32 %v2905, 0.0
    %v3034 = vmin.f32 %v2906, 0.0
    %v3035 = vmin.f32 %v2907, 0.0
    %v3036 = vmin.f32 %v2908, 0.0
    %v3037 = vmin.f32 %v2909, 0.0
    %v3038 = vmin.f32 %v2910, 0.0
    %v3039 = vmin.f32 %v2911, 0.0
    %v3040 = vmin.f32 %v2912, 0.0
    %v3041 = vmin.f32 %v2913, 0.0
    %v3042 = vmin.f32 %v2914, 0.0
    %v3043 = vmin.f32 %v2915, 0.0
    %v3044 = vmin.f32 %v2916, 0.0
    %v3045 = vmin.f32 %v2917, 0.0
    %v3046 = vmin.f32 %v2918, 0.0
    %v3047 = vmin.f32 %v2919, 0.0
    %v3048 = vmin.f32 %v2920, 0.0
    %v3049 = vmin.f32 %v2921, 0.0
    %v3050 = vmin.f32 %v2922, 0.0
    %v3051 = vmin.f32 %v2923, 0.0
    %v3052 = vmin.f32 %v2924, 0.0
    %v3053 = vmin.f32 %v2925, 0.0
    %v3054 = vmin.f32 %v2926, 0.0
    %v3055 = vmin.f32 %v2927, 0.0
    %v3056 = vmin.f32 %v2928, 0.0
    %v3057 = vmin.f32 %v2929, 0.0
    %v3058 = vmin.f32 %v2930, 0.0
    %v3059 = vmin.f32 %v2931, 0.0
    %v3060 = vmin.f32 %v2932, 0.0
    %v3061 = vmin.f32 %v2933, 0.0
    %v3062 = vmin.f32 %v2934, 0.0
    %v3063 = vmin.f32 %v2935, 0.0
    %v3064 = vmin.f32 %v2936, 0.0
    %v3065 = vmin.f32 %v2937, 0.0
    %v3066 = vmin.f32 %v2938, 0.0
    %v3067 = vmin.f32 %v2939, 0.0
    %v3068 = vmin.f32 %v2940, 0.0
    %v3069 = vmin.f32 %v2941, 0.0
    %v3070 = vmin.f32 %v2942, 0.0
    %v3071 = vmin.f32 %v2943, 0.0
    %v3072 = vmin.f32 %v2944, 0.0
    %v3073 = vmin.f32 %v2945, 0.0
    %v3074 = vmin.f32 %v2946, 0.0
    %v3075 = vmin.f32 %v2947, 0.0
    %v3076 = vmin.f32 %v2948, 0.0
    %v3077 = vmin.f32 %v2949, 0.0
    %v3078 = vmin.f32 %v2950, 0.0
    %v3079 = vmin.f32 %v2951, 0.0
    %v3080 = vmin.f32 %v2952, 0.0
    %v3081 = vpack.c.bf16 %v3018, %v3017
    %v3082 = vpack.c.bf16 %v3020, %v3019
    %v3083 = vpack.c.bf16 %v3022, %v3021
    %v3084 = vpack.c.bf16 %v3024, %v3023
    %v3085 = vpack.c.bf16 %v3026, %v3025
    %v3086 = vpack.c.bf16 %v3028, %v3027
    %v3087 = vpack.c.bf16 %v3030, %v3029
    %v3088 = vpack.c.bf16 %v3032, %v3031
    %v3089 = vpack.c.bf16 %v3034, %v3033
    %v3090 = vpack.c.bf16 %v3036, %v3035
    %v3091 = vpack.c.bf16 %v3038, %v3037
    %v3092 = vpack.c.bf16 %v3040, %v3039
    %v3093 = vpack.c.bf16 %v3042, %v3041
    %v3094 = vpack.c.bf16 %v3044, %v3043
    %v3095 = vpack.c.bf16 %v3046, %v3045
    %v3096 = vpack.c.bf16 %v3048, %v3047
    %v3097 = vpack.c.bf16 %v3050, %v3049
    %v3098 = vpack.c.bf16 %v3052, %v3051
    %v3099 = vpack.c.bf16 %v3054, %v3053
    %v3100 = vpack.c.bf16 %v3056, %v3055
    %v3101 = vpack.c.bf16 %v3058, %v3057
    %v3102 = vpack.c.bf16 %v3060, %v3059
    %v3103 = vpack.c.bf16 %v3062, %v3061
    %v3104 = vpack.c.bf16 %v3064, %v3063
    %v3105 = vpack.c.bf16 %v3066, %v3065
    %v3106 = vpack.c.bf16 %v3068, %v3067
    %v3107 = vpack.c.bf16 %v3070, %v3069
    %v3108 = vpack.c.bf16 %v3072, %v3071
    %v3109 = vpack.c.bf16 %v3074, %v3073
    %v3110 = vpack.c.bf16 %v3076, %v3075
    %v3111 = vpack.c.bf16 %v3078, %v3077
    %v3112 = vpack.c.bf16 %v3080, %v3079
    %v3113 = vunpack.c.l.bf16 %v3081
    %v3114 = vunpack.c.h.bf16 %v3081
    %v3115 = vunpack.c.l.bf16 %v3082
    %v3116 = vunpack.c.h.bf16 %v3082
    %v3117 = vunpack.c.l.bf16 %v3083
    %v3118 = vunpack.c.h.bf16 %v3083
    %v3119 = vunpack.c.l.bf16 %v3084
    %v3120 = vunpack.c.h.bf16 %v3084
    %v3121 = vunpack.c.l.bf16 %v3085
    %v3122 = vunpack.c.h.bf16 %v3085
    %v3123 = vunpack.c.l.bf16 %v3086
    %v3124 = vunpack.c.h.bf16 %v3086
    %v3125 = vunpack.c.l.bf16 %v3087
    %v3126 = vunpack.c.h.bf16 %v3087
    %v3127 = vunpack.c.l.bf16 %v3088
    %v3128 = vunpack.c.h.bf16 %v3088
    %v3129 = vunpack.c.l.bf16 %v3089
    %v3130 = vunpack.c.h.bf16 %v3089
    %v3131 = vunpack.c.l.bf16 %v3090
    %v3132 = vunpack.c.h.bf16 %v3090
    %v3133 = vunpack.c.l.bf16 %v3091
    %v3134 = vunpack.c.h.bf16 %v3091
    %v3135 = vunpack.c.l.bf16 %v3092
    %v3136 = vunpack.c.h.bf16 %v3092
    %v3137 = vunpack.c.l.bf16 %v3093
    %v3138 = vunpack.c.h.bf16 %v3093
    %v3139 = vunpack.c.l.bf16 %v3094
    %v3140 = vunpack.c.h.bf16 %v3094
    %v3141 = vunpack.c.l.bf16 %v3095
    %v3142 = vunpack.c.h.bf16 %v3095
    %v3143 = vunpack.c.l.bf16 %v3096
    %v3144 = vunpack.c.h.bf16 %v3096
    %v3145 = vunpack.c.l.bf16 %v3097
    %v3146 = vunpack.c.h.bf16 %v3097
    %v3147 = vunpack.c.l.bf16 %v3098
    %v3148 = vunpack.c.h.bf16 %v3098
    %v3149 = vunpack.c.l.bf16 %v3099
    %v3150 = vunpack.c.h.bf16 %v3099
    %v3151 = vunpack.c.l.bf16 %v3100
    %v3152 = vunpack.c.h.bf16 %v3100
    %v3153 = vunpack.c.l.bf16 %v3101
    %v3154 = vunpack.c.h.bf16 %v3101
    %v3155 = vunpack.c.l.bf16 %v3102
    %v3156 = vunpack.c.h.bf16 %v3102
    %v3157 = vunpack.c.l.bf16 %v3103
    %v3158 = vunpack.c.h.bf16 %v3103
    %v3159 = vunpack.c.l.bf16 %v3104
    %v3160 = vunpack.c.h.bf16 %v3104
    %v3161 = vunpack.c.l.bf16 %v3105
    %v3162 = vunpack.c.h.bf16 %v3105
    %v3163 = vunpack.c.l.bf16 %v3106
    %v3164 = vunpack.c.h.bf16 %v3106
    %v3165 = vunpack.c.l.bf16 %v3107
    %v3166 = vunpack.c.h.bf16 %v3107
    %v3167 = vunpack.c.l.bf16 %v3108
    %v3168 = vunpack.c.h.bf16 %v3108
    %v3169 = vunpack.c.l.bf16 %v3109
    %v3170 = vunpack.c.h.bf16 %v3109
    %v3171 = vunpack.c.l.bf16 %v3110
    %v3172 = vunpack.c.h.bf16 %v3110
    %v3173 = vunpack.c.l.bf16 %v3111
    %v3174 = vunpack.c.h.bf16 %v3111
    %v3175 = vunpack.c.l.bf16 %v3112
    %v3176 = vunpack.c.h.bf16 %v3112
    %v3177 = vmul.f32 %v3113, 1.442695
    %v3178 = vpow.pop %v3177
    %v3179 = vmul.f32 %v3114, 1.442695
    %v3180 = vpow.pop %v3179
    %v3181 = vmul.f32 %v3115, 1.442695
    %v3182 = vpow.pop %v3181
    %v3183 = vmul.f32 %v3116, 1.442695
    %v3184 = vpow.pop %v3183
    %v3185 = vmul.f32 %v3117, 1.442695
    %v3186 = vpow.pop %v3185
    %v3187 = vmul.f32 %v3118, 1.442695
    %v3188 = vpow.pop %v3187
    %v3189 = vmul.f32 %v3119, 1.442695
    %v3190 = vpow.pop %v3189
    %v3191 = vmul.f32 %v3120, 1.442695
    %v3192 = vpow.pop %v3191
    %v3193 = vmul.f32 %v3121, 1.442695
    %v3194 = vpow.pop %v3193
    %v3195 = vmul.f32 %v3122, 1.442695
    %v3196 = vpow.pop %v3195
    %v3197 = vmul.f32 %v3123, 1.442695
    %v3198 = vpow.pop %v3197
    %v3199 = vmul.f32 %v3124, 1.442695
    %v3200 = vpow.pop %v3199
    %v3201 = vmul.f32 %v3125, 1.442695
    %v3202 = vpow.pop %v3201
    %v3203 = vmul.f32 %v3126, 1.442695
    %v3204 = vpow.pop %v3203
    %v3205 = vmul.f32 %v3127, 1.442695
    %v3206 = vpow.pop %v3205
    %v3207 = vmul.f32 %v3128, 1.442695
    %v3208 = vpow.pop %v3207
    %v3209 = vmul.f32 %v3129, 1.442695
    %v3210 = vpow.pop %v3209
    %v3211 = vmul.f32 %v3130, 1.442695
    %v3212 = vpow.pop %v3211
    %v3213 = vmul.f32 %v3131, 1.442695
    %v3214 = vpow.pop %v3213
    %v3215 = vmul.f32 %v3132, 1.442695
    %v3216 = vpow.pop %v3215
    %v3217 = vmul.f32 %v3133, 1.442695
    %v3218 = vpow.pop %v3217
    %v3219 = vmul.f32 %v3134, 1.442695
    %v3220 = vpow.pop %v3219
    %v3221 = vmul.f32 %v3135, 1.442695
    %v3222 = vpow.pop %v3221
    %v3223 = vmul.f32 %v3136, 1.442695
    %v3224 = vpow.pop %v3223
    %v3225 = vmul.f32 %v3137, 1.442695
    %v3226 = vpow.pop %v3225
    %v3227 = vmul.f32 %v3138, 1.442695
    %v3228 = vpow.pop %v3227
    %v3229 = vmul.f32 %v3139, 1.442695
    %v3230 = vpow.pop %v3229
    %v3231 = vmul.f32 %v3140, 1.442695
    %v3232 = vpow.pop %v3231
    %v3233 = vmul.f32 %v3141, 1.442695
    %v3234 = vpow.pop %v3233
    %v3235 = vmul.f32 %v3142, 1.442695
    %v3236 = vpow.pop %v3235
    %v3237 = vmul.f32 %v3143, 1.442695
    %v3238 = vpow.pop %v3237
    %v3239 = vmul.f32 %v3144, 1.442695
    %v3240 = vpow.pop %v3239
    %v3241 = vmul.f32 %v3145, 1.442695
    %v3242 = vpow.pop %v3241
    %v3243 = vmul.f32 %v3146, 1.442695
    %v3244 = vpow.pop %v3243
    %v3245 = vmul.f32 %v3147, 1.442695
    %v3246 = vpow.pop %v3245
    %v3247 = vmul.f32 %v3148, 1.442695
    %v3248 = vpow.pop %v3247
    %v3249 = vmul.f32 %v3149, 1.442695
    %v3250 = vpow.pop %v3249
    %v3251 = vmul.f32 %v3150, 1.442695
    %v3252 = vpow.pop %v3251
    %v3253 = vmul.f32 %v3151, 1.442695
    %v3254 = vpow.pop %v3253
    %v3255 = vmul.f32 %v3152, 1.442695
    %v3256 = vpow.pop %v3255
    %v3257 = vmul.f32 %v3153, 1.442695
    %v3258 = vpow.pop %v3257
    %v3259 = vmul.f32 %v3154, 1.442695
    %v3260 = vpow.pop %v3259
    %v3261 = vmul.f32 %v3155, 1.442695
    %v3262 = vpow.pop %v3261
    %v3263 = vmul.f32 %v3156, 1.442695
    %v3264 = vpow.pop %v3263
    %v3265 = vmul.f32 %v3157, 1.442695
    %v3266 = vpow.pop %v3265
    %v3267 = vmul.f32 %v3158, 1.442695
    %v3268 = vpow.pop %v3267
    %v3269 = vmul.f32 %v3159, 1.442695
    %v3270 = vpow.pop %v3269
    %v3271 = vmul.f32 %v3160, 1.442695
    %v3272 = vpow.pop %v3271
    %v3273 = vmul.f32 %v3161, 1.442695
    %v3274 = vpow.pop %v3273
    %v3275 = vmul.f32 %v3162, 1.442695
    %v3276 = vpow.pop %v3275
    %v3277 = vmul.f32 %v3163, 1.442695
    %v3278 = vpow.pop %v3277
    %v3279 = vmul.f32 %v3164, 1.442695
    %v3280 = vpow.pop %v3279
    %v3281 = vmul.f32 %v3165, 1.442695
    %v3282 = vpow.pop %v3281
    %v3283 = vmul.f32 %v3166, 1.442695
    %v3284 = vpow.pop %v3283
    %v3285 = vmul.f32 %v3167, 1.442695
    %v3286 = vpow.pop %v3285
    %v3287 = vmul.f32 %v3168, 1.442695
    %v3288 = vpow.pop %v3287
    %v3289 = vmul.f32 %v3169, 1.442695
    %v3290 = vpow.pop %v3289
    %v3291 = vmul.f32 %v3170, 1.442695
    %v3292 = vpow.pop %v3291
    %v3293 = vmul.f32 %v3171, 1.442695
    %v3294 = vpow.pop %v3293
    %v3295 = vmul.f32 %v3172, 1.442695
    %v3296 = vpow.pop %v3295
    %v3297 = vmul.f32 %v3173, 1.442695
    %v3298 = vpow.pop %v3297
    %v3299 = vmul.f32 %v3174, 1.442695
    %v3300 = vpow.pop %v3299
    %v3301 = vmul.f32 %v3175, 1.442695
    %v3302 = vpow.pop %v3301
    %v3303 = vmul.f32 %v3176, 1.442695
    %v3304 = vpow.pop %v3303
    %v3305 = vpack.c.bf16 %v3180, %v3178
    %v3306 = vpack.c.bf16 %v3184, %v3182
    %v3307 = vpack.c.bf16 %v3188, %v3186
    %v3308 = vpack.c.bf16 %v3192, %v3190
    %v3309 = vpack.c.bf16 %v3196, %v3194
    %v3310 = vpack.c.bf16 %v3200, %v3198
    %v3311 = vpack.c.bf16 %v3204, %v3202
    %v3312 = vpack.c.bf16 %v3208, %v3206
    %v3313 = vpack.c.bf16 %v3212, %v3210
    %v3314 = vpack.c.bf16 %v3216, %v3214
    %v3315 = vpack.c.bf16 %v3220, %v3218
    %v3316 = vpack.c.bf16 %v3224, %v3222
    %v3317 = vpack.c.bf16 %v3228, %v3226
    %v3318 = vpack.c.bf16 %v3232, %v3230
    %v3319 = vpack.c.bf16 %v3236, %v3234
    %v3320 = vpack.c.bf16 %v3240, %v3238
    %v3321 = vpack.c.bf16 %v3244, %v3242
    %v3322 = vpack.c.bf16 %v3248, %v3246
    %v3323 = vpack.c.bf16 %v3252, %v3250
    %v3324 = vpack.c.bf16 %v3256, %v3254
    %v3325 = vpack.c.bf16 %v3260, %v3258
    %v3326 = vpack.c.bf16 %v3264, %v3262
    %v3327 = vpack.c.bf16 %v3268, %v3266
    %v3328 = vpack.c.bf16 %v3272, %v3270
    %v3329 = vpack.c.bf16 %v3276, %v3274
    %v3330 = vpack.c.bf16 %v3280, %v3278
    %v3331 = vpack.c.bf16 %v3284, %v3282
    %v3332 = vpack.c.bf16 %v3288, %v3286
    %v3333 = vpack.c.bf16 %v3292, %v3290
    %v3334 = vpack.c.bf16 %v3296, %v3294
    %v3335 = vpack.c.bf16 %v3300, %v3298
    %v3336 = vpack.c.bf16 %v3304, %v3302
    %v3337 = vunpack.c.l.bf16 %v3305
    %v3338 = vunpack.c.h.bf16 %v3305
    %v3339 = vunpack.c.l.bf16 %v3306
    %v3340 = vunpack.c.h.bf16 %v3306
    %v3341 = vunpack.c.l.bf16 %v3307
    %v3342 = vunpack.c.h.bf16 %v3307
    %v3343 = vunpack.c.l.bf16 %v3308
    %v3344 = vunpack.c.h.bf16 %v3308
    %v3345 = vunpack.c.l.bf16 %v3309
    %v3346 = vunpack.c.h.bf16 %v3309
    %v3347 = vunpack.c.l.bf16 %v3310
    %v3348 = vunpack.c.h.bf16 %v3310
    %v3349 = vunpack.c.l.bf16 %v3311
    %v3350 = vunpack.c.h.bf16 %v3311
    %v3351 = vunpack.c.l.bf16 %v3312
    %v3352 = vunpack.c.h.bf16 %v3312
    %v3353 = vunpack.c.l.bf16 %v3313
    %v3354 = vunpack.c.h.bf16 %v3313
    %v3355 = vunpack.c.l.bf16 %v3314
    %v3356 = vunpack.c.h.bf16 %v3314
    %v3357 = vunpack.c.l.bf16 %v3315
    %v3358 = vunpack.c.h.bf16 %v3315
    %v3359 = vunpack.c.l.bf16 %v3316
    %v3360 = vunpack.c.h.bf16 %v3316
    %v3361 = vunpack.c.l.bf16 %v3317
    %v3362 = vunpack.c.h.bf16 %v3317
    %v3363 = vunpack.c.l.bf16 %v3318
    %v3364 = vunpack.c.h.bf16 %v3318
    %v3365 = vunpack.c.l.bf16 %v3319
    %v3366 = vunpack.c.h.bf16 %v3319
    %v3367 = vunpack.c.l.bf16 %v3320
    %v3368 = vunpack.c.h.bf16 %v3320
    %v3369 = vunpack.c.l.bf16 %v3321
    %v3370 = vunpack.c.h.bf16 %v3321
    %v3371 = vunpack.c.l.bf16 %v3322
    %v3372 = vunpack.c.h.bf16 %v3322
    %v3373 = vunpack.c.l.bf16 %v3323
    %v3374 = vunpack.c.h.bf16 %v3323
    %v3375 = vunpack.c.l.bf16 %v3324
    %v3376 = vunpack.c.h.bf16 %v3324
    %v3377 = vunpack.c.l.bf16 %v3325
    %v3378 = vunpack.c.h.bf16 %v3325
    %v3379 = vunpack.c.l.bf16 %v3326
    %v3380 = vunpack.c.h.bf16 %v3326
    %v3381 = vunpack.c.l.bf16 %v3327
    %v3382 = vunpack.c.h.bf16 %v3327
    %v3383 = vunpack.c.l.bf16 %v3328
    %v3384 = vunpack.c.h.bf16 %v3328
    %v3385 = vunpack.c.l.bf16 %v3329
    %v3386 = vunpack.c.h.bf16 %v3329
    %v3387 = vunpack.c.l.bf16 %v3330
    %v3388 = vunpack.c.h.bf16 %v3330
    %v3389 = vunpack.c.l.bf16 %v3331
    %v3390 = vunpack.c.h.bf16 %v3331
    %v3391 = vunpack.c.l.bf16 %v3332
    %v3392 = vunpack.c.h.bf16 %v3332
    %v3393 = vunpack.c.l.bf16 %v3333
    %v3394 = vunpack.c.h.bf16 %v3333
    %v3395 = vunpack.c.l.bf16 %v3334
    %v3396 = vunpack.c.h.bf16 %v3334
    %v3397 = vunpack.c.l.bf16 %v3335
    %v3398 = vunpack.c.h.bf16 %v3335
    %v3399 = vunpack.c.l.bf16 %v3336
    %v3400 = vunpack.c.h.bf16 %v3336
    %v3401 = vsub.f32 %v3337, 1.0
    %v3402 = vsub.f32 %v3338, 1.0
    %v3403 = vsub.f32 %v3339, 1.0
    %v3404 = vsub.f32 %v3340, 1.0
    %v3405 = vsub.f32 %v3341, 1.0
    %v3406 = vsub.f32 %v3342, 1.0
    %v3407 = vsub.f32 %v3343, 1.0
    %v3408 = vsub.f32 %v3344, 1.0
    %v3409 = vsub.f32 %v3345, 1.0
    %v3410 = vsub.f32 %v3346, 1.0
    %v3411 = vsub.f32 %v3347, 1.0
    %v3412 = vsub.f32 %v3348, 1.0
    %v3413 = vsub.f32 %v3349, 1.0
    %v3414 = vsub.f32 %v3350, 1.0
    %v3415 = vsub.f32 %v3351, 1.0
    %v3416 = vsub.f32 %v3352, 1.0
    %v3417 = vsub.f32 %v3353, 1.0
    %v3418 = vsub.f32 %v3354, 1.0
    %v3419 = vsub.f32 %v3355, 1.0
    %v3420 = vsub.f32 %v3356, 1.0
    %v3421 = vsub.f32 %v3357, 1.0
    %v3422 = vsub.f32 %v3358, 1.0
    %v3423 = vsub.f32 %v3359, 1.0
    %v3424 = vsub.f32 %v3360, 1.0
    %v3425 = vsub.f32 %v3361, 1.0
    %v3426 = vsub.f32 %v3362, 1.0
    %v3427 = vsub.f32 %v3363, 1.0
    %v3428 = vsub.f32 %v3364, 1.0
    %v3429 = vsub.f32 %v3365, 1.0
    %v3430 = vsub.f32 %v3366, 1.0
    %v3431 = vsub.f32 %v3367, 1.0
    %v3432 = vsub.f32 %v3368, 1.0
    %v3433 = vsub.f32 %v3369, 1.0
    %v3434 = vsub.f32 %v3370, 1.0
    %v3435 = vsub.f32 %v3371, 1.0
    %v3436 = vsub.f32 %v3372, 1.0
    %v3437 = vsub.f32 %v3373, 1.0
    %v3438 = vsub.f32 %v3374, 1.0
    %v3439 = vsub.f32 %v3375, 1.0
    %v3440 = vsub.f32 %v3376, 1.0
    %v3441 = vsub.f32 %v3377, 1.0
    %v3442 = vsub.f32 %v3378, 1.0
    %v3443 = vsub.f32 %v3379, 1.0
    %v3444 = vsub.f32 %v3380, 1.0
    %v3445 = vsub.f32 %v3381, 1.0
    %v3446 = vsub.f32 %v3382, 1.0
    %v3447 = vsub.f32 %v3383, 1.0
    %v3448 = vsub.f32 %v3384, 1.0
    %v3449 = vsub.f32 %v3385, 1.0
    %v3450 = vsub.f32 %v3386, 1.0
    %v3451 = vsub.f32 %v3387, 1.0
    %v3452 = vsub.f32 %v3388, 1.0
    %v3453 = vsub.f32 %v3389, 1.0
    %v3454 = vsub.f32 %v3390, 1.0
    %v3455 = vsub.f32 %v3391, 1.0
    %v3456 = vsub.f32 %v3392, 1.0
    %v3457 = vsub.f32 %v3393, 1.0
    %v3458 = vsub.f32 %v3394, 1.0
    %v3459 = vsub.f32 %v3395, 1.0
    %v3460 = vsub.f32 %v3396, 1.0
    %v3461 = vsub.f32 %v3397, 1.0
    %v3462 = vsub.f32 %v3398, 1.0
    %v3463 = vsub.f32 %v3399, 1.0
    %v3464 = vsub.f32 %v3400, 1.0
    %v3465 = vpack.c.bf16 %v3402, %v3401
    %v3466 = vpack.c.bf16 %v3404, %v3403
    %v3467 = vpack.c.bf16 %v3406, %v3405
    %v3468 = vpack.c.bf16 %v3408, %v3407
    %v3469 = vpack.c.bf16 %v3410, %v3409
    %v3470 = vpack.c.bf16 %v3412, %v3411
    %v3471 = vpack.c.bf16 %v3414, %v3413
    %v3472 = vpack.c.bf16 %v3416, %v3415
    %v3473 = vpack.c.bf16 %v3418, %v3417
    %v3474 = vpack.c.bf16 %v3420, %v3419
    %v3475 = vpack.c.bf16 %v3422, %v3421
    %v3476 = vpack.c.bf16 %v3424, %v3423
    %v3477 = vpack.c.bf16 %v3426, %v3425
    %v3478 = vpack.c.bf16 %v3428, %v3427
    %v3479 = vpack.c.bf16 %v3430, %v3429
    %v3480 = vpack.c.bf16 %v3432, %v3431
    %v3481 = vpack.c.bf16 %v3434, %v3433
    %v3482 = vpack.c.bf16 %v3436, %v3435
    %v3483 = vpack.c.bf16 %v3438, %v3437
    %v3484 = vpack.c.bf16 %v3440, %v3439
    %v3485 = vpack.c.bf16 %v3442, %v3441
    %v3486 = vpack.c.bf16 %v3444, %v3443
    %v3487 = vpack.c.bf16 %v3446, %v3445
    %v3488 = vpack.c.bf16 %v3448, %v3447
    %v3489 = vpack.c.bf16 %v3450, %v3449
    %v3490 = vpack.c.bf16 %v3452, %v3451
    %v3491 = vpack.c.bf16 %v3454, %v3453
    %v3492 = vpack.c.bf16 %v3456, %v3455
    %v3493 = vpack.c.bf16 %v3458, %v3457
    %v3494 = vpack.c.bf16 %v3460, %v3459
    %v3495 = vpack.c.bf16 %v3462, %v3461
    %v3496 = vpack.c.bf16 %v3464, %v3463
    %vm3497 = vmpackc.low %vm2954, %vm2953
    %vm3498 = vmpackc.low %vm2956, %vm2955
    %vm3499 = vmpackc.low %vm2958, %vm2957
    %vm3500 = vmpackc.low %vm2960, %vm2959
    %vm3501 = vmpackc.low %vm2962, %vm2961
    %vm3502 = vmpackc.low %vm2964, %vm2963
    %vm3503 = vmpackc.low %vm2966, %vm2965
    %vm3504 = vmpackc.low %vm2968, %vm2967
    %vm3505 = vmpackc.low %vm2970, %vm2969
    %vm3506 = vmpackc.low %vm2972, %vm2971
    %vm3507 = vmpackc.low %vm2974, %vm2973
    %vm3508 = vmpackc.low %vm2976, %vm2975
    %vm3509 = vmpackc.low %vm2978, %vm2977
    %vm3510 = vmpackc.low %vm2980, %vm2979
    %vm3511 = vmpackc.low %vm2982, %vm2981
    %vm3512 = vmpackc.low %vm2984, %vm2983
    %vm3513 = vmpackc.low %vm2986, %vm2985
    %vm3514 = vmpackc.low %vm2988, %vm2987
    %vm3515 = vmpackc.low %vm2990, %vm2989
    %vm3516 = vmpackc.low %vm2992, %vm2991
    %vm3517 = vmpackc.low %vm2994, %vm2993
    %vm3518 = vmpackc.low %vm2996, %vm2995
    %vm3519 = vmpackc.low %vm2998, %vm2997
    %vm3520 = vmpackc.low %vm3000, %vm2999
    %vm3521 = vmpackc.low %vm3002, %vm3001
    %vm3522 = vmpackc.low %vm3004, %vm3003
    %vm3523 = vmpackc.low %vm3006, %vm3005
    %vm3524 = vmpackc.low %vm3008, %vm3007
    %vm3525 = vmpackc.low %vm3010, %vm3009
    %vm3526 = vmpackc.low %vm3012, %vm3011
    %vm3527 = vmpackc.low %vm3014, %vm3013
    %vm3528 = vmpackc.low %vm3016, %vm3015
    %v3529 = vsel %vm3497, %v2857, %v3465
    %v3530 = vsel %vm3498, %v2858, %v3466
    %v3531 = vsel %vm3499, %v2859, %v3467
    %v3532 = vsel %vm3500, %v2860, %v3468
    %v3533 = vsel %vm3501, %v2861, %v3469
    %v3534 = vsel %vm3502, %v2862, %v3470
    %v3535 = vsel %vm3503, %v2863, %v3471
    %v3536 = vsel %vm3504, %v2864, %v3472
    %v3537 = vsel %vm3505, %v2865, %v3473
    %v3538 = vsel %vm3506, %v2866, %v3474
    %v3539 = vsel %vm3507, %v2867, %v3475
    %v3540 = vsel %vm3508, %v2868, %v3476
    %v3541 = vsel %vm3509, %v2869, %v3477
    %v3542 = vsel %vm3510, %v2870, %v3478
    %v3543 = vsel %vm3511, %v2871, %v3479
    %v3544 = vsel %vm3512, %v2872, %v3480
    %v3545 = vsel %vm3513, %v2873, %v3481
    %v3546 = vsel %vm3514, %v2874, %v3482
    %v3547 = vsel %vm3515, %v2875, %v3483
    %v3548 = vsel %vm3516, %v2876, %v3484
    %v3549 = vsel %vm3517, %v2877, %v3485
    %v3550 = vsel %vm3518, %v2878, %v3486
    %v3551 = vsel %vm3519, %v2879, %v3487
    %v3552 = vsel %vm3520, %v2880, %v3488
    %v3553 = vsel %vm3521, %v2881, %v3489
    %v3554 = vsel %vm3522, %v2882, %v3490
    %v3555 = vsel %vm3523, %v2883, %v3491
    %v3556 = vsel %vm3524, %v2884, %v3492
    %v3557 = vsel %vm3525, %v2885, %v3493
    %v3558 = vsel %vm3526, %v2886, %v3494
    %v3559 = vsel %vm3527, %v2887, %v3495
    %v3560 = vsel %vm3528, %v2888, %v3496
    %v3561 = vld [vmem:[%s5] sm:$0xf]
    %v3562 = vld [vmem:[%s5 + $0x4] sm:$0xf]
    %v3563 = vld [vmem:[%s5 + $0x8] sm:$0xf]
    %v3564 = vld [vmem:[%s5 + $0xc] sm:$0xf]
    %v3565 = vld [vmem:[%s6] sm:$0xff]
    %v3566 = vld [vmem:[%s6 + $0x8] sm:$0xff]
    %v3567 = vld [vmem:[%s6 + $0x10] sm:$0xff]
    %v3568 = vld [vmem:[%s6 + $0x18] sm:$0xff]
    %3570 = vset.pattern.permute.xlu0 0
    %3571 = vperm.xlu0 %3570, %v3565
    %v3572 = vpop.permute.xlu0 %3571
    %3575 = vset.pattern.permute.xlu0 0
    %3576 = vperm.xlu0 %3575, %v3566
    %v3577 = vpop.permute.xlu0 %3576
    %3580 = vset.pattern.permute.xlu0 0
    %3581 = vperm.xlu0 %3580, %v3567
    %v3582 = vpop.permute.xlu0 %3581
    %3585 = vset.pattern.permute.xlu0 0
    %3586 = vperm.xlu0 %3585, %v3568
    %v3587 = vpop.permute.xlu0 %3586
    %v3593 = vunpack.c.l.b16 %v3561
    %v3594 = vunpack.c.l.b16 %v3562
    %v3595 = vunpack.c.l.b16 %v3563
    %v3596 = vunpack.c.l.b16 %v3564
    %v3597 = vpack.c.b16 %v3594, %v3593
    %v3598 = vpack.c.b16 %v3596, %v3595
    %v3631 = vunpack.c.l.b16 %v3529
    %v3632 = vunpack.c.h.b16 %v3529
    %v3633 = vunpack.c.l.b16 %v3530
    %v3634 = vunpack.c.h.b16 %v3530
    %v3635 = vunpack.c.l.b16 %v3531
    %v3636 = vunpack.c.h.b16 %v3531
    %v3637 = vunpack.c.l.b16 %v3532
    %v3638 = vunpack.c.h.b16 %v3532
    %v3639 = vunpack.c.l.b16 %v3533
    %v3640 = vunpack.c.h.b16 %v3533
    %v3641 = vunpack.c.l.b16 %v3534
    %v3642 = vunpack.c.h.b16 %v3534
    %v3643 = vunpack.c.l.b16 %v3535
    %v3644 = vunpack.c.h.b16 %v3535
    %v3645 = vunpack.c.l.b16 %v3536
    %v3646 = vunpack.c.h.b16 %v3536
    %v3647 = vunpack.c.l.b16 %v3537
    %v3648 = vunpack.c.h.b16 %v3537
    %v3649 = vunpack.c.l.b16 %v3538
    %v3650 = vunpack.c.h.b16 %v3538
    %v3651 = vunpack.c.l.b16 %v3539
    %v3652 = vunpack.c.h.b16 %v3539
    %v3653 = vunpack.c.l.b16 %v3540
    %v3654 = vunpack.c.h.b16 %v3540
    %v3655 = vunpack.c.l.b16 %v3541
    %v3656 = vunpack.c.h.b16 %v3541
    %v3657 = vunpack.c.l.b16 %v3542
    %v3658 = vunpack.c.h.b16 %v3542
    %v3659 = vunpack.c.l.b16 %v3543
    %v3660 = vunpack.c.h.b16 %v3543
    %v3661 = vunpack.c.l.b16 %v3544
    %v3662 = vunpack.c.h.b16 %v3544
    %v3663 = vunpack.c.l.b16 %v3545
    %v3664 = vunpack.c.h.b16 %v3545
    %v3665 = vunpack.c.l.b16 %v3546
    %v3666 = vunpack.c.h.b16 %v3546
    %v3667 = vunpack.c.l.b16 %v3547
    %v3668 = vunpack.c.h.b16 %v3547
    %v3669 = vunpack.c.l.b16 %v3548
    %v3670 = vunpack.c.h.b16 %v3548
    %v3671 = vunpack.c.l.b16 %v3549
    %v3672 = vunpack.c.h.b16 %v3549
    %v3673 = vunpack.c.l.b16 %v3550
    %v3674 = vunpack.c.h.b16 %v3550
    %v3675 = vunpack.c.l.b16 %v3551
    %v3676 = vunpack.c.h.b16 %v3551
    %v3677 = vunpack.c.l.b16 %v3552
    %v3678 = vunpack.c.h.b16 %v3552
    %v3679 = vunpack.c.l.b16 %v3553
    %v3680 = vunpack.c.h.b16 %v3553
    %v3681 = vunpack.c.l.b16 %v3554
    %v3682 = vunpack.c.h.b16 %v3554
    %v3683 = vunpack.c.l.b16 %v3555
    %v3684 = vunpack.c.h.b16 %v3555
    %v3685 = vunpack.c.l.b16 %v3556
    %v3686 = vunpack.c.h.b16 %v3556
    %v3687 = vunpack.c.l.b16 %v3557
    %v3688 = vunpack.c.h.b16 %v3557
    %v3689 = vunpack.c.l.b16 %v3558
    %v3690 = vunpack.c.h.b16 %v3558
    %v3691 = vunpack.c.l.b16 %v3559
    %v3692 = vunpack.c.h.b16 %v3559
    %v3693 = vunpack.c.l.b16 %v3560
    %v3694 = vunpack.c.h.b16 %v3560
    %v3695 = vpack.c.b16 %v3639, %v3631
    %v3696 = vpack.c.b16 %v3640, %v3632
    %v3697 = vpack.c.b16 %v3641, %v3633
    %v3698 = vpack.c.b16 %v3642, %v3634
    %v3699 = vpack.c.b16 %v3643, %v3635
    %v3700 = vpack.c.b16 %v3644, %v3636
    %v3701 = vpack.c.b16 %v3645, %v3637
    %v3702 = vpack.c.b16 %v3646, %v3638
    %v3703 = vpack.c.b16 %v3655, %v3647
    %v3704 = vpack.c.b16 %v3656, %v3648
    %v3705 = vpack.c.b16 %v3657, %v3649
    %v3706 = vpack.c.b16 %v3658, %v3650
    %v3707 = vpack.c.b16 %v3659, %v3651
    %v3708 = vpack.c.b16 %v3660, %v3652
    %v3709 = vpack.c.b16 %v3661, %v3653
    %v3710 = vpack.c.b16 %v3662, %v3654
    %v3711 = vpack.c.b16 %v3671, %v3663
    %v3712 = vpack.c.b16 %v3672, %v3664
    %v3713 = vpack.c.b16 %v3673, %v3665
    %v3714 = vpack.c.b16 %v3674, %v3666
    %v3715 = vpack.c.b16 %v3675, %v3667
    %v3716 = vpack.c.b16 %v3676, %v3668
    %v3717 = vpack.c.b16 %v3677, %v3669
    %v3718 = vpack.c.b16 %v3678, %v3670
    %v3719 = vpack.c.b16 %v3687, %v3679
    %v3720 = vpack.c.b16 %v3688, %v3680
    %v3721 = vpack.c.b16 %v3689, %v3681
    %v3722 = vpack.c.b16 %v3690, %v3682
    %v3723 = vpack.c.b16 %v3691, %v3683
    %v3724 = vpack.c.b16 %v3692, %v3684
    %v3725 = vpack.c.b16 %v3693, %v3685
    %v3726 = vpack.c.b16 %v3694, %v3686
    %v3760 = vsel %vm400, %v3597, 0
    %v3763 = vsel %vm400, %v3598, 0
    %3765 = vmatpush.bf16.msra.mxu0 0
    %3766 = vmatpush.bf16.msra.mxu0 0
    %3767 = vmatpush.bf16.msra.mxu0 0
    %3768 = vmatpush.bf16.msra.mxu0 0
    %3769 = vmatpush.bf16.msra.mxu0 %v3719
    %3770 = vmatpush.bf16.msra.mxu0 %v3711
    %3771 = vmatpush.bf16.msra.mxu0 %v3703
    %3772 = vmatpush.bf16.msra.mxu0 %v3695
    %3773 = vmatmul.bf16.gmra.mxu0 %v3760
    %v3774 = vpop.f32.mrf.mxu0
    %v3775 = vadd.f32 %v3572, %v3774
    %v3776 = vpop.f32.mrf.mxu0
    %v3777 = vadd.f32 %v3577, %v3776
    %3778 = vmatmul.bf16.gmra.mxu0 %v3763
    %v3779 = vpop.f32.mrf.mxu0
    %v3780 = vadd.f32 %v3582, %v3779
    %v3781 = vpop.f32.mrf.mxu0
    %v3782 = vadd.f32 %v3587, %v3781
    %3783 = vdwg.mxu0
    %3784 = vmatpush.bf16.msra.mxu0 0
    %3785 = vmatpush.bf16.msra.mxu0 0
    %3786 = vmatpush.bf16.msra.mxu0 0
    %3787 = vmatpush.bf16.msra.mxu0 0
    %3788 = vmatpush.bf16.msra.mxu0 %v3720
    %3789 = vmatpush.bf16.msra.mxu0 %v3712
    %3790 = vmatpush.bf16.msra.mxu0 %v3704
    %3791 = vmatpush.bf16.msra.mxu0 %v3696
    %3792 = vmatmul.bf16.gmra.mxu0 %v3760
    %v3793 = vpop.f32.mrf.mxu0
    %v3794 = vadd.f32 %v3572, %v3793
    %v3795 = vpop.f32.mrf.mxu0
    %v3796 = vadd.f32 %v3577, %v3795
    %3797 = vmatmul.bf16.gmra.mxu0 %v3763
    %v3798 = vpop.f32.mrf.mxu0
    %v3799 = vadd.f32 %v3582, %v3798
    %v3800 = vpop.f32.mrf.mxu0
    %v3801 = vadd.f32 %v3587, %v3800
    %3802 = vdwg.mxu0
    %3803 = vmatpush.bf16.msra.mxu0 0
    %3804 = vmatpush.bf16.msra.mxu0 0
    %3805 = vmatpush.bf16.msra.mxu0 0
    %3806 = vmatpush.bf16.msra.mxu0 0
    %3807 = vmatpush.bf16.msra.mxu0 %v3721
    %3808 = vmatpush.bf16.msra.mxu0 %v3713
    %3809 = vmatpush.bf16.msra.mxu0 %v3705
    %3810 = vmatpush.bf16.msra.mxu0 %v3697
    %3811 = vmatmul.bf16.gmra.mxu0 %v3760
    %v3812 = vpop.f32.mrf.mxu0
    %v3813 = vadd.f32 %v3572, %v3812
    %v3814 = vpop.f32.mrf.mxu0
    %v3815 = vadd.f32 %v3577, %v3814
    %3816 = vmatmul.bf16.gmra.mxu0 %v3763
    %v3817 = vpop.f32.mrf.mxu0
    %v3818 = vadd.f32 %v3582, %v3817
    %v3819 = vpop.f32.mrf.mxu0
    %v3820 = vadd.f32 %v3587, %v3819
    %3821 = vdwg.mxu0
    %3822 = vmatpush.bf16.msra.mxu0 0
    %3823 = vmatpush.bf16.msra.mxu0 0
    %3824 = vmatpush.bf16.msra.mxu0 0
    %3825 = vmatpush.bf16.msra.mxu0 0
    %3826 = vmatpush.bf16.msra.mxu0 %v3722
    %3827 = vmatpush.bf16.msra.mxu0 %v3714
    %3828 = vmatpush.bf16.msra.mxu0 %v3706
    %3829 = vmatpush.bf16.msra.mxu0 %v3698
    %3830 = vmatmul.bf16.gmra.mxu0 %v3760
    %v3831 = vpop.f32.mrf.mxu0
    %v3832 = vadd.f32 %v3572, %v3831
    %v3833 = vpop.f32.mrf.mxu0
    %v3834 = vadd.f32 %v3577, %v3833
    %3835 = vmatmul.bf16.gmra.mxu0 %v3763
    %v3836 = vpop.f32.mrf.mxu0
    %v3837 = vadd.f32 %v3582, %v3836
    %v3838 = vpop.f32.mrf.mxu0
    %v3839 = vadd.f32 %v3587, %v3838
    %3840 = vdwg.mxu0
    %3841 = vmatpush.bf16.msra.mxu0 0
    %3842 = vmatpush.bf16.msra.mxu0 0
    %3843 = vmatpush.bf16.msra.mxu0 0
    %3844 = vmatpush.bf16.msra.mxu0 0
    %3845 = vmatpush.bf16.msra.mxu0 %v3723
    %3846 = vmatpush.bf16.msra.mxu0 %v3715
    %3847 = vmatpush.bf16.msra.mxu0 %v3707
    %3848 = vmatpush.bf16.msra.mxu0 %v3699
    %3849 = vmatmul.bf16.gmra.mxu0 %v3760
    %v3850 = vpop.f32.mrf.mxu0
    %v3851 = vadd.f32 %v3572, %v3850
    %v3852 = vpop.f32.mrf.mxu0
    %v3853 = vadd.f32 %v3577, %v3852
    %3854 = vmatmul.bf16.gmra.mxu0 %v3763
    %v3855 = vpop.f32.mrf.mxu0
    %v3856 = vadd.f32 %v3582, %v3855
    %v3857 = vpop.f32.mrf.mxu0
    %v3858 = vadd.f32 %v3587, %v3857
    %3859 = vdwg.mxu0
    %3860 = vmatpush.bf16.msra.mxu0 0
    %3861 = vmatpush.bf16.msra.mxu0 0
    %3862 = vmatpush.bf16.msra.mxu0 0
    %3863 = vmatpush.bf16.msra.mxu0 0
    %3864 = vmatpush.bf16.msra.mxu0 %v3724
    %3865 = vmatpush.bf16.msra.mxu0 %v3716
    %3866 = vmatpush.bf16.msra.mxu0 %v3708
    %3867 = vmatpush.bf16.msra.mxu0 %v3700
    %3868 = vmatmul.bf16.gmra.mxu0 %v3760
    %v3869 = vpop.f32.mrf.mxu0
    %v3870 = vadd.f32 %v3572, %v3869
    %v3871 = vpop.f32.mrf.mxu0
    %v3872 = vadd.f32 %v3577, %v3871
    %3873 = vmatmul.bf16.gmra.mxu0 %v3763
    %v3874 = vpop.f32.mrf.mxu0
    %v3875 = vadd.f32 %v3582, %v3874
    %v3876 = vpop.f32.mrf.mxu0
    %v3877 = vadd.f32 %v3587, %v3876
    %3878 = vdwg.mxu0
    %3879 = vmatpush.bf16.msra.mxu0 0
    %3880 = vmatpush.bf16.msra.mxu0 0
    %3881 = vmatpush.bf16.msra.mxu0 0
    %3882 = vmatpush.bf16.msra.mxu0 0
    %3883 = vmatpush.bf16.msra.mxu0 %v3725
    %3884 = vmatpush.bf16.msra.mxu0 %v3717
    %3885 = vmatpush.bf16.msra.mxu0 %v3709
    %3886 = vmatpush.bf16.msra.mxu0 %v3701
    %3887 = vmatmul.bf16.gmra.mxu0 %v3760
    %v3888 = vpop.f32.mrf.mxu0
    %v3889 = vadd.f32 %v3572, %v3888
    %v3890 = vpop.f32.mrf.mxu0
    %v3891 = vadd.f32 %v3577, %v3890
    %3892 = vmatmul.bf16.gmra.mxu0 %v3763
    %v3893 = vpop.f32.mrf.mxu0
    %v3894 = vadd.f32 %v3582, %v3893
    %v3895 = vpop.f32.mrf.mxu0
    %v3896 = vadd.f32 %v3587, %v3895
    %3897 = vdwg.mxu0
    %3898 = vmatpush.bf16.msra.mxu0 0
    %3899 = vmatpush.bf16.msra.mxu0 0
    %3900 = vmatpush.bf16.msra.mxu0 0
    %3901 = vmatpush.bf16.msra.mxu0 0
    %3902 = vmatpush.bf16.msra.mxu0 %v3726
    %3903 = vmatpush.bf16.msra.mxu0 %v3718
    %3904 = vmatpush.bf16.msra.mxu0 %v3710
    %3905 = vmatpush.bf16.msra.mxu0 %v3702
    %3906 = vmatmul.bf16.gmra.mxu0 %v3760
    %v3907 = vpop.f32.mrf.mxu0
    %v3908 = vadd.f32 %v3572, %v3907
    %v3909 = vpop.f32.mrf.mxu0
    %v3910 = vadd.f32 %v3577, %v3909
    %3911 = vmatmul.bf16.gmra.mxu0 %v3763
    %v3912 = vpop.f32.mrf.mxu0
    %v3913 = vadd.f32 %v3582, %v3912
    %v3914 = vpop.f32.mrf.mxu0
    %v3915 = vadd.f32 %v3587, %v3914
    %3916 = vdwg.mxu0
    %v3917 = vpack.c.bf16 %v3777, %v3775
    %v3918 = vpack.c.bf16 %v3796, %v3794
    %v3919 = vpack.c.bf16 %v3815, %v3813
    %v3920 = vpack.c.bf16 %v3834, %v3832
    %v3921 = vpack.c.bf16 %v3853, %v3851
    %v3922 = vpack.c.bf16 %v3872, %v3870
    %v3923 = vpack.c.bf16 %v3891, %v3889
    %v3924 = vpack.c.bf16 %v3910, %v3908
    %v3925 = vpack.c.bf16 %v3782, %v3780
    %v3926 = vpack.c.bf16 %v3801, %v3799
    %v3927 = vpack.c.bf16 %v3820, %v3818
    %v3928 = vpack.c.bf16 %v3839, %v3837
    %v3929 = vpack.c.bf16 %v3858, %v3856
    %v3930 = vpack.c.bf16 %v3877, %v3875
    %v3931 = vpack.c.bf16 %v3896, %v3894
    %v3932 = vpack.c.bf16 %v3915, %v3913
    %v3933 = vld [vmem:[%s7] sm:$0xf]
    %v3934 = vld [vmem:[%s7 + $0x4] sm:$0xf]
    %v3935 = vld [vmem:[%s7 + $0x8] sm:$0xf]
    %v3936 = vld [vmem:[%s7 + $0xc] sm:$0xf]
    %v3937 = vld [vmem:[%s8] sm:$0xff]
    %v3938 = vld [vmem:[%s8 + $0x8] sm:$0xff]
    %v3939 = vld [vmem:[%s8 + $0x10] sm:$0xff]
    %v3940 = vld [vmem:[%s8 + $0x18] sm:$0xff]
    %3942 = vset.pattern.permute.xlu0 0
    %3943 = vperm.xlu0 %3942, %v3937
    %v3944 = vpop.permute.xlu0 %3943
    %3947 = vset.pattern.permute.xlu0 0
    %3948 = vperm.xlu0 %3947, %v3938
    %v3949 = vpop.permute.xlu0 %3948
    %3952 = vset.pattern.permute.xlu0 0
    %3953 = vperm.xlu0 %3952, %v3939
    %v3954 = vpop.permute.xlu0 %3953
    %3957 = vset.pattern.permute.xlu0 0
    %3958 = vperm.xlu0 %3957, %v3940
    %v3959 = vpop.permute.xlu0 %3958
    %v3965 = vunpack.c.l.b16 %v3933
    %v3966 = vunpack.c.l.b16 %v3934
    %v3967 = vunpack.c.l.b16 %v3935
    %v3968 = vunpack.c.l.b16 %v3936
    %v3969 = vpack.c.b16 %v3966, %v3965
    %v3970 = vpack.c.b16 %v3968, %v3967
    %vm3971 = vcmask 261120
    %v3973 = vsel %vm3971, %v3969, 0
    %v3976 = vsel %vm3971, %v3970, 0
    %3978 = vmatpush.bf16.msra.mxu0 0
    %3979 = vmatpush.bf16.msra.mxu0 0
    %3980 = vmatpush.bf16.msra.mxu0 0
    %3981 = vmatpush.bf16.msra.mxu0 0
    %3982 = vmatpush.bf16.msra.mxu0 0
    %3983 = vmatpush.bf16.msra.mxu0 0
    %3984 = vmatpush.bf16.msra.mxu0 %v3925
    %3985 = vmatpush.bf16.msra.mxu0 %v3917
    %3986 = vmatmul.bf16.gmra.mxu0 %v3973
    %v3987 = vpop.f32.mrf.mxu0
    %v3988 = vadd.f32 %v3944, %v3987
    %v3989 = vpop.f32.mrf.mxu0
    %v3990 = vadd.f32 %v3949, %v3989
    %3991 = vmatmul.bf16.gmra.mxu0 %v3976
    %v3992 = vpop.f32.mrf.mxu0
    %v3993 = vadd.f32 %v3954, %v3992
    %v3994 = vpop.f32.mrf.mxu0
    %v3995 = vadd.f32 %v3959, %v3994
    %3996 = vdwg.mxu0
    %3997 = vmatpush.bf16.msra.mxu0 0
    %3998 = vmatpush.bf16.msra.mxu0 0
    %3999 = vmatpush.bf16.msra.mxu0 0
    %4000 = vmatpush.bf16.msra.mxu0 0
    %4001 = vmatpush.bf16.msra.mxu0 0
    %4002 = vmatpush.bf16.msra.mxu0 0
    %4003 = vmatpush.bf16.msra.mxu0 %v3926
    %4004 = vmatpush.bf16.msra.mxu0 %v3918
    %4005 = vmatmul.bf16.gmra.mxu0 %v3973
    %v4006 = vpop.f32.mrf.mxu0
    %v4007 = vadd.f32 %v3944, %v4006
    %v4008 = vpop.f32.mrf.mxu0
    %v4009 = vadd.f32 %v3949, %v4008
    %4010 = vmatmul.bf16.gmra.mxu0 %v3976
    %v4011 = vpop.f32.mrf.mxu0
    %v4012 = vadd.f32 %v3954, %v4011
    %v4013 = vpop.f32.mrf.mxu0
    %v4014 = vadd.f32 %v3959, %v4013
    %4015 = vdwg.mxu0
    %4016 = vmatpush.bf16.msra.mxu0 0
    %4017 = vmatpush.bf16.msra.mxu0 0
    %4018 = vmatpush.bf16.msra.mxu0 0
    %4019 = vmatpush.bf16.msra.mxu0 0
    %4020 = vmatpush.bf16.msra.mxu0 0
    %4021 = vmatpush.bf16.msra.mxu0 0
    %4022 = vmatpush.bf16.msra.mxu0 %v3927
    %4023 = vmatpush.bf16.msra.mxu0 %v3919
    %4024 = vmatmul.bf16.gmra.mxu0 %v3973
    %v4025 = vpop.f32.mrf.mxu0
    %v4026 = vadd.f32 %v3944, %v4025
    %v4027 = vpop.f32.mrf.mxu0
    %v4028 = vadd.f32 %v3949, %v4027
    %4029 = vmatmul.bf16.gmra.mxu0 %v3976
    %v4030 = vpop.f32.mrf.mxu0
    %v4031 = vadd.f32 %v3954, %v4030
    %v4032 = vpop.f32.mrf.mxu0
    %v4033 = vadd.f32 %v3959, %v4032
    %4034 = vdwg.mxu0
    %4035 = vmatpush.bf16.msra.mxu0 0
    %4036 = vmatpush.bf16.msra.mxu0 0
    %4037 = vmatpush.bf16.msra.mxu0 0
    %4038 = vmatpush.bf16.msra.mxu0 0
    %4039 = vmatpush.bf16.msra.mxu0 0
    %4040 = vmatpush.bf16.msra.mxu0 0
    %4041 = vmatpush.bf16.msra.mxu0 %v3928
    %4042 = vmatpush.bf16.msra.mxu0 %v3920
    %4043 = vmatmul.bf16.gmra.mxu0 %v3973
    %v4044 = vpop.f32.mrf.mxu0
    %v4045 = vadd.f32 %v3944, %v4044
    %v4046 = vpop.f32.mrf.mxu0
    %v4047 = vadd.f32 %v3949, %v4046
    %4048 = vmatmul.bf16.gmra.mxu0 %v3976
    %v4049 = vpop.f32.mrf.mxu0
    %v4050 = vadd.f32 %v3954, %v4049
    %v4051 = vpop.f32.mrf.mxu0
    %v4052 = vadd.f32 %v3959, %v4051
    %4053 = vdwg.mxu0
    %4054 = vmatpush.bf16.msra.mxu0 0
    %4055 = vmatpush.bf16.msra.mxu0 0
    %4056 = vmatpush.bf16.msra.mxu0 0
    %4057 = vmatpush.bf16.msra.mxu0 0
    %4058 = vmatpush.bf16.msra.mxu0 0
    %4059 = vmatpush.bf16.msra.mxu0 0
    %4060 = vmatpush.bf16.msra.mxu0 %v3929
    %4061 = vmatpush.bf16.msra.mxu0 %v3921
    %4062 = vmatmul.bf16.gmra.mxu0 %v3973
    %v4063 = vpop.f32.mrf.mxu0
    %v4064 = vadd.f32 %v3944, %v4063
    %v4065 = vpop.f32.mrf.mxu0
    %v4066 = vadd.f32 %v3949, %v4065
    %4067 = vmatmul.bf16.gmra.mxu0 %v3976
    %v4068 = vpop.f32.mrf.mxu0
    %v4069 = vadd.f32 %v3954, %v4068
    %v4070 = vpop.f32.mrf.mxu0
    %v4071 = vadd.f32 %v3959, %v4070
    %4072 = vdwg.mxu0
    %4073 = vmatpush.bf16.msra.mxu0 0
    %4074 = vmatpush.bf16.msra.mxu0 0
    %4075 = vmatpush.bf16.msra.mxu0 0
    %4076 = vmatpush.bf16.msra.mxu0 0
    %4077 = vmatpush.bf16.msra.mxu0 0
    %4078 = vmatpush.bf16.msra.mxu0 0
    %4079 = vmatpush.bf16.msra.mxu0 %v3930
    %4080 = vmatpush.bf16.msra.mxu0 %v3922
    %4081 = vmatmul.bf16.gmra.mxu0 %v3973
    %v4082 = vpop.f32.mrf.mxu0
    %v4083 = vadd.f32 %v3944, %v4082
    %v4084 = vpop.f32.mrf.mxu0
    %v4085 = vadd.f32 %v3949, %v4084
    %4086 = vmatmul.bf16.gmra.mxu0 %v3976
    %v4087 = vpop.f32.mrf.mxu0
    %v4088 = vadd.f32 %v3954, %v4087
    %v4089 = vpop.f32.mrf.mxu0
    %v4090 = vadd.f32 %v3959, %v4089
    %4091 = vdwg.mxu0
    %4092 = vmatpush.bf16.msra.mxu0 0
    %4093 = vmatpush.bf16.msra.mxu0 0
    %4094 = vmatpush.bf16.msra.mxu0 0
    %4095 = vmatpush.bf16.msra.mxu0 0
    %4096 = vmatpush.bf16.msra.mxu0 0
    %4097 = vmatpush.bf16.msra.mxu0 0
    %4098 = vmatpush.bf16.msra.mxu0 %v3931
    %4099 = vmatpush.bf16.msra.mxu0 %v3923
    %4100 = vmatmul.bf16.gmra.mxu0 %v3973
    %v4101 = vpop.f32.mrf.mxu0
    %v4102 = vadd.f32 %v3944, %v4101
    %v4103 = vpop.f32.mrf.mxu0
    %v4104 = vadd.f32 %v3949, %v4103
    %4105 = vmatmul.bf16.gmra.mxu0 %v3976
    %v4106 = vpop.f32.mrf.mxu0
    %v4107 = vadd.f32 %v3954, %v4106
    %v4108 = vpop.f32.mrf.mxu0
    %v4109 = vadd.f32 %v3959, %v4108
    %4110 = vdwg.mxu0
    %4111 = vmatpush.bf16.msra.mxu0 0
    %4112 = vmatpush.bf16.msra.mxu0 0
    %4113 = vmatpush.bf16.msra.mxu0 0
    %4114 = vmatpush.bf16.msra.mxu0 0
    %4115 = vmatpush.bf16.msra.mxu0 0
    %4116 = vmatpush.bf16.msra.mxu0 0
    %4117 = vmatpush.bf16.msra.mxu0 %v3932
    %4118 = vmatpush.bf16.msra.mxu0 %v3924
    %4119 = vmatmul.bf16.gmra.mxu0 %v3973
    %v4120 = vpop.f32.mrf.mxu0
    %v4121 = vadd.f32 %v3944, %v4120
    %v4122 = vpop.f32.mrf.mxu0
    %v4123 = vadd.f32 %v3949, %v4122
    %4124 = vmatmul.bf16.gmra.mxu0 %v3976
    %v4125 = vpop.f32.mrf.mxu0
    %v4126 = vadd.f32 %v3954, %v4125
    %v4127 = vpop.f32.mrf.mxu0
    %v4128 = vadd.f32 %v3959, %v4127
    %4129 = vdwg.mxu0
    %v4130 = vpack.c.bf16 %v4007, %v3988
    %v4131 = vpack.c.bf16 %v4045, %v4026
    %v4132 = vpack.c.bf16 %v4083, %v4064
    %v4133 = vpack.c.bf16 %v4121, %v4102
    %v4134 = vpack.c.bf16 %v4009, %v3990
    %v4135 = vpack.c.bf16 %v4047, %v4028
    %v4136 = vpack.c.bf16 %v4085, %v4066
    %v4137 = vpack.c.bf16 %v4123, %v4104
    %v4138 = vpack.c.bf16 %v4012, %v3993
    %v4139 = vpack.c.bf16 %v4050, %v4031
    %v4140 = vpack.c.bf16 %v4088, %v4069
    %v4141 = vpack.c.bf16 %v4126, %v4107
    %v4142 = vpack.c.bf16 %v4014, %v3995
    %v4143 = vpack.c.bf16 %v4052, %v4033
    %v4144 = vpack.c.bf16 %v4090, %v4071
    %v4145 = vpack.c.bf16 %v4128, %v4109
    %v4146 = vunpack.c.l.bf16 %v4130
    %v4147 = vunpack.c.h.bf16 %v4130
    %v4148 = vunpack.c.l.bf16 %v4131
    %v4149 = vunpack.c.h.bf16 %v4131
    %v4150 = vunpack.c.l.bf16 %v4132
    %v4151 = vunpack.c.h.bf16 %v4132
    %v4152 = vunpack.c.l.bf16 %v4133
    %v4153 = vunpack.c.h.bf16 %v4133
    %v4154 = vunpack.c.l.bf16 %v4134
    %v4155 = vunpack.c.h.bf16 %v4134
    %v4156 = vunpack.c.l.bf16 %v4135
    %v4157 = vunpack.c.h.bf16 %v4135
    %v4158 = vunpack.c.l.bf16 %v4136
    %v4159 = vunpack.c.h.bf16 %v4136
    %v4160 = vunpack.c.l.bf16 %v4137
    %v4161 = vunpack.c.h.bf16 %v4137
    %v4162 = vunpack.c.l.bf16 %v4138
    %v4163 = vunpack.c.h.bf16 %v4138
    %v4164 = vunpack.c.l.bf16 %v4139
    %v4165 = vunpack.c.h.bf16 %v4139
    %v4166 = vunpack.c.l.bf16 %v4140
    %v4167 = vunpack.c.h.bf16 %v4140
    %v4168 = vunpack.c.l.bf16 %v4141
    %v4169 = vunpack.c.h.bf16 %v4141
    %v4170 = vunpack.c.l.bf16 %v4142
    %v4171 = vunpack.c.h.bf16 %v4142
    %v4172 = vunpack.c.l.bf16 %v4143
    %v4173 = vunpack.c.h.bf16 %v4143
    %v4174 = vunpack.c.l.bf16 %v4144
    %v4175 = vunpack.c.h.bf16 %v4144
    %v4176 = vunpack.c.l.bf16 %v4145
    %v4177 = vunpack.c.h.bf16 %v4145
    %vm4178 = vcmp.gt.f32.partialorder %v4146, 0.0
    %vm4179 = vcmp.gt.f32.partialorder %v4147, 0.0
    %vm4180 = vcmp.gt.f32.partialorder %v4148, 0.0
    %vm4181 = vcmp.gt.f32.partialorder %v4149, 0.0
    %vm4182 = vcmp.gt.f32.partialorder %v4150, 0.0
    %vm4183 = vcmp.gt.f32.partialorder %v4151, 0.0
    %vm4184 = vcmp.gt.f32.partialorder %v4152, 0.0
    %vm4185 = vcmp.gt.f32.partialorder %v4153, 0.0
    %vm4186 = vcmp.gt.f32.partialorder %v4154, 0.0
    %vm4187 = vcmp.gt.f32.partialorder %v4155, 0.0
    %vm4188 = vcmp.gt.f32.partialorder %v4156, 0.0
    %vm4189 = vcmp.gt.f32.partialorder %v4157, 0.0
    %vm4190 = vcmp.gt.f32.partialorder %v4158, 0.0
    %vm4191 = vcmp.gt.f32.partialorder %v4159, 0.0
    %vm4192 = vcmp.gt.f32.partialorder %v4160, 0.0
    %vm4193 = vcmp.gt.f32.partialorder %v4161, 0.0
    %vm4194 = vcmp.gt.f32.partialorder %v4162, 0.0
    %vm4195 = vcmp.gt.f32.partialorder %v4163, 0.0
    %vm4196 = vcmp.gt.f32.partialorder %v4164, 0.0
    %vm4197 = vcmp.gt.f32.partialorder %v4165, 0.0
    %vm4198 = vcmp.gt.f32.partialorder %v4166, 0.0
    %vm4199 = vcmp.gt.f32.partialorder %v4167, 0.0
    %vm4200 = vcmp.gt.f32.partialorder %v4168, 0.0
    %vm4201 = vcmp.gt.f32.partialorder %v4169, 0.0
    %vm4202 = vcmp.gt.f32.partialorder %v4170, 0.0
    %vm4203 = vcmp.gt.f32.partialorder %v4171, 0.0
    %vm4204 = vcmp.gt.f32.partialorder %v4172, 0.0
    %vm4205 = vcmp.gt.f32.partialorder %v4173, 0.0
    %vm4206 = vcmp.gt.f32.partialorder %v4174, 0.0
    %vm4207 = vcmp.gt.f32.partialorder %v4175, 0.0
    %vm4208 = vcmp.gt.f32.partialorder %v4176, 0.0
    %vm4209 = vcmp.gt.f32.partialorder %v4177, 0.0
    %v4210 = vmin.f32 %v4146, 0.0
    %v4211 = vmin.f32 %v4147, 0.0
    %v4212 = vmin.f32 %v4148, 0.0
    %v4213 = vmin.f32 %v4149, 0.0
    %v4214 = vmin.f32 %v4150, 0.0
    %v4215 = vmin.f32 %v4151, 0.0
    %v4216 = vmin.f32 %v4152, 0.0
    %v4217 = vmin.f32 %v4153, 0.0
    %v4218 = vmin.f32 %v4154, 0.0
    %v4219 = vmin.f32 %v4155, 0.0
    %v4220 = vmin.f32 %v4156, 0.0
    %v4221 = vmin.f32 %v4157, 0.0
    %v4222 = vmin.f32 %v4158, 0.0
    %v4223 = vmin.f32 %v4159, 0.0
    %v4224 = vmin.f32 %v4160, 0.0
    %v4225 = vmin.f32 %v4161, 0.0
    %v4226 = vmin.f32 %v4162, 0.0
    %v4227 = vmin.f32 %v4163, 0.0
    %v4228 = vmin.f32 %v4164, 0.0
    %v4229 = vmin.f32 %v4165, 0.0
    %v4230 = vmin.f32 %v4166, 0.0
    %v4231 = vmin.f32 %v4167, 0.0
    %v4232 = vmin.f32 %v4168, 0.0
    %v4233 = vmin.f32 %v4169, 0.0
    %v4234 = vmin.f32 %v4170, 0.0
    %v4235 = vmin.f32 %v4171, 0.0
    %v4236 = vmin.f32 %v4172, 0.0
    %v4237 = vmin.f32 %v4173, 0.0
    %v4238 = vmin.f32 %v4174, 0.0
    %v4239 = vmin.f32 %v4175, 0.0
    %v4240 = vmin.f32 %v4176, 0.0
    %v4241 = vmin.f32 %v4177, 0.0
    %v4242 = vpack.c.bf16 %v4211, %v4210
    %v4243 = vpack.c.bf16 %v4213, %v4212
    %v4244 = vpack.c.bf16 %v4215, %v4214
    %v4245 = vpack.c.bf16 %v4217, %v4216
    %v4246 = vpack.c.bf16 %v4219, %v4218
    %v4247 = vpack.c.bf16 %v4221, %v4220
    %v4248 = vpack.c.bf16 %v4223, %v4222
    %v4249 = vpack.c.bf16 %v4225, %v4224
    %v4250 = vpack.c.bf16 %v4227, %v4226
    %v4251 = vpack.c.bf16 %v4229, %v4228
    %v4252 = vpack.c.bf16 %v4231, %v4230
    %v4253 = vpack.c.bf16 %v4233, %v4232
    %v4254 = vpack.c.bf16 %v4235, %v4234
    %v4255 = vpack.c.bf16 %v4237, %v4236
    %v4256 = vpack.c.bf16 %v4239, %v4238
    %v4257 = vpack.c.bf16 %v4241, %v4240
    %v4258 = vunpack.c.l.bf16 %v4242
    %v4259 = vunpack.c.h.bf16 %v4242
    %v4260 = vunpack.c.l.bf16 %v4243
    %v4261 = vunpack.c.h.bf16 %v4243
    %v4262 = vunpack.c.l.bf16 %v4244
    %v4263 = vunpack.c.h.bf16 %v4244
    %v4264 = vunpack.c.l.bf16 %v4245
    %v4265 = vunpack.c.h.bf16 %v4245
    %v4266 = vunpack.c.l.bf16 %v4246
    %v4267 = vunpack.c.h.bf16 %v4246
    %v4268 = vunpack.c.l.bf16 %v4247
    %v4269 = vunpack.c.h.bf16 %v4247
    %v4270 = vunpack.c.l.bf16 %v4248
    %v4271 = vunpack.c.h.bf16 %v4248
    %v4272 = vunpack.c.l.bf16 %v4249
    %v4273 = vunpack.c.h.bf16 %v4249
    %v4274 = vunpack.c.l.bf16 %v4250
    %v4275 = vunpack.c.h.bf16 %v4250
    %v4276 = vunpack.c.l.bf16 %v4251
    %v4277 = vunpack.c.h.bf16 %v4251
    %v4278 = vunpack.c.l.bf16 %v4252
    %v4279 = vunpack.c.h.bf16 %v4252
    %v4280 = vunpack.c.l.bf16 %v4253
    %v4281 = vunpack.c.h.bf16 %v4253
    %v4282 = vunpack.c.l.bf16 %v4254
    %v4283 = vunpack.c.h.bf16 %v4254
    %v4284 = vunpack.c.l.bf16 %v4255
    %v4285 = vunpack.c.h.bf16 %v4255
    %v4286 = vunpack.c.l.bf16 %v4256
    %v4287 = vunpack.c.h.bf16 %v4256
    %v4288 = vunpack.c.l.bf16 %v4257
    %v4289 = vunpack.c.h.bf16 %v4257
    %v4290 = vmul.f32 %v4258, 1.442695
    %v4291 = vpow.pop %v4290
    %v4292 = vmul.f32 %v4259, 1.442695
    %v4293 = vpow.pop %v4292
    %v4294 = vmul.f32 %v4260, 1.442695
    %v4295 = vpow.pop %v4294
    %v4296 = vmul.f32 %v4261, 1.442695
    %v4297 = vpow.pop %v4296
    %v4298 = vmul.f32 %v4262, 1.442695
    %v4299 = vpow.pop %v4298
    %v4300 = vmul.f32 %v4263, 1.442695
    %v4301 = vpow.pop %v4300
    %v4302 = vmul.f32 %v4264, 1.442695
    %v4303 = vpow.pop %v4302
    %v4304 = vmul.f32 %v4265, 1.442695
    %v4305 = vpow.pop %v4304
    %v4306 = vmul.f32 %v4266, 1.442695
    %v4307 = vpow.pop %v4306
    %v4308 = vmul.f32 %v4267, 1.442695
    %v4309 = vpow.pop %v4308
    %v4310 = vmul.f32 %v4268, 1.442695
    %v4311 = vpow.pop %v4310
    %v4312 = vmul.f32 %v4269, 1.442695
    %v4313 = vpow.pop %v4312
    %v4314 = vmul.f32 %v4270, 1.442695
    %v4315 = vpow.pop %v4314
    %v4316 = vmul.f32 %v4271, 1.442695
    %v4317 = vpow.pop %v4316
    %v4318 = vmul.f32 %v4272, 1.442695
    %v4319 = vpow.pop %v4318
    %v4320 = vmul.f32 %v4273, 1.442695
    %v4321 = vpow.pop %v4320
    %v4322 = vmul.f32 %v4274, 1.442695
    %v4323 = vpow.pop %v4322
    %v4324 = vmul.f32 %v4275, 1.442695
    %v4325 = vpow.pop %v4324
    %v4326 = vmul.f32 %v4276, 1.442695
    %v4327 = vpow.pop %v4326
    %v4328 = vmul.f32 %v4277, 1.442695
    %v4329 = vpow.pop %v4328
    %v4330 = vmul.f32 %v4278, 1.442695
    %v4331 = vpow.pop %v4330
    %v4332 = vmul.f32 %v4279, 1.442695
    %v4333 = vpow.pop %v4332
    %v4334 = vmul.f32 %v4280, 1.442695
    %v4335 = vpow.pop %v4334
    %v4336 = vmul.f32 %v4281, 1.442695
    %v4337 = vpow.pop %v4336
    %v4338 = vmul.f32 %v4282, 1.442695
    %v4339 = vpow.pop %v4338
    %v4340 = vmul.f32 %v4283, 1.442695
    %v4341 = vpow.pop %v4340
    %v4342 = vmul.f32 %v4284, 1.442695
    %v4343 = vpow.pop %v4342
    %v4344 = vmul.f32 %v4285, 1.442695
    %v4345 = vpow.pop %v4344
    %v4346 = vmul.f32 %v4286, 1.442695
    %v4347 = vpow.pop %v4346
    %v4348 = vmul.f32 %v4287, 1.442695
    %v4349 = vpow.pop %v4348
    %v4350 = vmul.f32 %v4288, 1.442695
    %v4351 = vpow.pop %v4350
    %v4352 = vmul.f32 %v4289, 1.442695
    %v4353 = vpow.pop %v4352
    %v4354 = vpack.c.bf16 %v4293, %v4291
    %v4355 = vpack.c.bf16 %v4297, %v4295
    %v4356 = vpack.c.bf16 %v4301, %v4299
    %v4357 = vpack.c.bf16 %v4305, %v4303
    %v4358 = vpack.c.bf16 %v4309, %v4307
    %v4359 = vpack.c.bf16 %v4313, %v4311
    %v4360 = vpack.c.bf16 %v4317, %v4315
    %v4361 = vpack.c.bf16 %v4321, %v4319
    %v4362 = vpack.c.bf16 %v4325, %v4323
    %v4363 = vpack.c.bf16 %v4329, %v4327
    %v4364 = vpack.c.bf16 %v4333, %v4331
    %v4365 = vpack.c.bf16 %v4337, %v4335
    %v4366 = vpack.c.bf16 %v4341, %v4339
    %v4367 = vpack.c.bf16 %v4345, %v4343
    %v4368 = vpack.c.bf16 %v4349, %v4347
    %v4369 = vpack.c.bf16 %v4353, %v4351
    %v4370 = vunpack.c.l.bf16 %v4354
    %v4371 = vunpack.c.h.bf16 %v4354
    %v4372 = vunpack.c.l.bf16 %v4355
    %v4373 = vunpack.c.h.bf16 %v4355
    %v4374 = vunpack.c.l.bf16 %v4356
    %v4375 = vunpack.c.h.bf16 %v4356
    %v4376 = vunpack.c.l.bf16 %v4357
    %v4377 = vunpack.c.h.bf16 %v4357
    %v4378 = vunpack.c.l.bf16 %v4358
    %v4379 = vunpack.c.h.bf16 %v4358
    %v4380 = vunpack.c.l.bf16 %v4359
    %v4381 = vunpack.c.h.bf16 %v4359
    %v4382 = vunpack.c.l.bf16 %v4360
    %v4383 = vunpack.c.h.bf16 %v4360
    %v4384 = vunpack.c.l.bf16 %v4361
    %v4385 = vunpack.c.h.bf16 %v4361
    %v4386 = vunpack.c.l.bf16 %v4362
    %v4387 = vunpack.c.h.bf16 %v4362
    %v4388 = vunpack.c.l.bf16 %v4363
    %v4389 = vunpack.c.h.bf16 %v4363
    %v4390 = vunpack.c.l.bf16 %v4364
    %v4391 = vunpack.c.h.bf16 %v4364
    %v4392 = vunpack.c.l.bf16 %v4365
    %v4393 = vunpack.c.h.bf16 %v4365
    %v4394 = vunpack.c.l.bf16 %v4366
    %v4395 = vunpack.c.h.bf16 %v4366
    %v4396 = vunpack.c.l.bf16 %v4367
    %v4397 = vunpack.c.h.bf16 %v4367
    %v4398 = vunpack.c.l.bf16 %v4368
    %v4399 = vunpack.c.h.bf16 %v4368
    %v4400 = vunpack.c.l.bf16 %v4369
    %v4401 = vunpack.c.h.bf16 %v4369
    %v4402 = vsub.f32 %v4370, 1.0
    %v4403 = vsub.f32 %v4371, 1.0
    %v4404 = vsub.f32 %v4372, 1.0
    %v4405 = vsub.f32 %v4373, 1.0
    %v4406 = vsub.f32 %v4374, 1.0
    %v4407 = vsub.f32 %v4375, 1.0
    %v4408 = vsub.f32 %v4376, 1.0
    %v4409 = vsub.f32 %v4377, 1.0
    %v4410 = vsub.f32 %v4378, 1.0
    %v4411 = vsub.f32 %v4379, 1.0
    %v4412 = vsub.f32 %v4380, 1.0
    %v4413 = vsub.f32 %v4381, 1.0
    %v4414 = vsub.f32 %v4382, 1.0
    %v4415 = vsub.f32 %v4383, 1.0
    %v4416 = vsub.f32 %v4384, 1.0
    %v4417 = vsub.f32 %v4385, 1.0
    %v4418 = vsub.f32 %v4386, 1.0
    %v4419 = vsub.f32 %v4387, 1.0
    %v4420 = vsub.f32 %v4388, 1.0
    %v4421 = vsub.f32 %v4389, 1.0
    %v4422 = vsub.f32 %v4390, 1.0
    %v4423 = vsub.f32 %v4391, 1.0
    %v4424 = vsub.f32 %v4392, 1.0
    %v4425 = vsub.f32 %v4393, 1.0
    %v4426 = vsub.f32 %v4394, 1.0
    %v4427 = vsub.f32 %v4395, 1.0
    %v4428 = vsub.f32 %v4396, 1.0
    %v4429 = vsub.f32 %v4397, 1.0
    %v4430 = vsub.f32 %v4398, 1.0
    %v4431 = vsub.f32 %v4399, 1.0
    %v4432 = vsub.f32 %v4400, 1.0
    %v4433 = vsub.f32 %v4401, 1.0
    %v4434 = vpack.c.bf16 %v4403, %v4402
    %v4435 = vpack.c.bf16 %v4405, %v4404
    %v4436 = vpack.c.bf16 %v4407, %v4406
    %v4437 = vpack.c.bf16 %v4409, %v4408
    %v4438 = vpack.c.bf16 %v4411, %v4410
    %v4439 = vpack.c.bf16 %v4413, %v4412
    %v4440 = vpack.c.bf16 %v4415, %v4414
    %v4441 = vpack.c.bf16 %v4417, %v4416
    %v4442 = vpack.c.bf16 %v4419, %v4418
    %v4443 = vpack.c.bf16 %v4421, %v4420
    %v4444 = vpack.c.bf16 %v4423, %v4422
    %v4445 = vpack.c.bf16 %v4425, %v4424
    %v4446 = vpack.c.bf16 %v4427, %v4426
    %v4447 = vpack.c.bf16 %v4429, %v4428
    %v4448 = vpack.c.bf16 %v4431, %v4430
    %v4449 = vpack.c.bf16 %v4433, %v4432
    %vm4450 = vmpackc.low %vm4179, %vm4178
    %vm4451 = vmpackc.low %vm4181, %vm4180
    %vm4452 = vmpackc.low %vm4183, %vm4182
    %vm4453 = vmpackc.low %vm4185, %vm4184
    %vm4454 = vmpackc.low %vm4187, %vm4186
    %vm4455 = vmpackc.low %vm4189, %vm4188
    %vm4456 = vmpackc.low %vm4191, %vm4190
    %vm4457 = vmpackc.low %vm4193, %vm4192
    %vm4458 = vmpackc.low %vm4195, %vm4194
    %vm4459 = vmpackc.low %vm4197, %vm4196
    %vm4460 = vmpackc.low %vm4199, %vm4198
    %vm4461 = vmpackc.low %vm4201, %vm4200
    %vm4462 = vmpackc.low %vm4203, %vm4202
    %vm4463 = vmpackc.low %vm4205, %vm4204
    %vm4464 = vmpackc.low %vm4207, %vm4206
    %vm4465 = vmpackc.low %vm4209, %vm4208
    %v4466 = vsel %vm4450, %v4130, %v4434
    %v4467 = vsel %vm4451, %v4131, %v4435
    %v4468 = vsel %vm4452, %v4132, %v4436
    %v4469 = vsel %vm4453, %v4133, %v4437
    %v4470 = vsel %vm4454, %v4134, %v4438
    %v4471 = vsel %vm4455, %v4135, %v4439
    %v4472 = vsel %vm4456, %v4136, %v4440
    %v4473 = vsel %vm4457, %v4137, %v4441
    %v4474 = vsel %vm4458, %v4138, %v4442
    %v4475 = vsel %vm4459, %v4139, %v4443
    %v4476 = vsel %vm4460, %v4140, %v4444
    %v4477 = vsel %vm4461, %v4141, %v4445
    %v4478 = vsel %vm4462, %v4142, %v4446
    %v4479 = vsel %vm4463, %v4143, %v4447
    %v4480 = vsel %vm4464, %v4144, %v4448
    %v4481 = vsel %vm4465, %v4145, %v4449
    %v4482 = vunpack.c.l.bf16 %v4466
    %v4483 = vunpack.c.h.bf16 %v4466
    %v4484 = vunpack.c.l.bf16 %v4467
    %v4485 = vunpack.c.h.bf16 %v4467
    %v4486 = vunpack.c.l.bf16 %v4468
    %v4487 = vunpack.c.h.bf16 %v4468
    %v4488 = vunpack.c.l.bf16 %v4469
    %v4489 = vunpack.c.h.bf16 %v4469
    %v4490 = vunpack.c.l.bf16 %v4470
    %v4491 = vunpack.c.h.bf16 %v4470
    %v4492 = vunpack.c.l.bf16 %v4471
    %v4493 = vunpack.c.h.bf16 %v4471
    %v4494 = vunpack.c.l.bf16 %v4472
    %v4495 = vunpack.c.h.bf16 %v4472
    %v4496 = vunpack.c.l.bf16 %v4473
    %v4497 = vunpack.c.h.bf16 %v4473
    %v4498 = vunpack.c.l.bf16 %v4474
    %v4499 = vunpack.c.h.bf16 %v4474
    %v4500 = vunpack.c.l.bf16 %v4475
    %v4501 = vunpack.c.h.bf16 %v4475
    %v4502 = vunpack.c.l.bf16 %v4476
    %v4503 = vunpack.c.h.bf16 %v4476
    %v4504 = vunpack.c.l.bf16 %v4477
    %v4505 = vunpack.c.h.bf16 %v4477
    %v4506 = vunpack.c.l.bf16 %v4478
    %v4507 = vunpack.c.h.bf16 %v4478
    %v4508 = vunpack.c.l.bf16 %v4479
    %v4509 = vunpack.c.h.bf16 %v4479
    %v4510 = vunpack.c.l.bf16 %v4480
    %v4511 = vunpack.c.h.bf16 %v4480
    %v4512 = vunpack.c.l.bf16 %v4481
    %v4513 = vunpack.c.h.bf16 %v4481
    %v4514 = vld [vmem:[%s9] sm:$0xff]
    %v4515 = vld [vmem:[%s9 + $0x8] sm:$0xff]
    %v4516 = vld [vmem:[%s9 + $0x10] sm:$0xff]
    %v4517 = vld [vmem:[%s9 + $0x18] sm:$0xff]
    %v4518 = vld [vmem:[%s9 + $0x20] sm:$0xff]
    %v4519 = vld [vmem:[%s9 + $0x28] sm:$0xff]
    %v4520 = vld [vmem:[%s9 + $0x30] sm:$0xff]
    %v4521 = vld [vmem:[%s9 + $0x38] sm:$0xff]
    %v4522 = vld [vmem:[%s9 + $0x40] sm:$0xff]
    %v4523 = vld [vmem:[%s9 + $0x48] sm:$0xff]
    %v4524 = vld [vmem:[%s9 + $0x50] sm:$0xff]
    %v4525 = vld [vmem:[%s9 + $0x58] sm:$0xff]
    %v4526 = vld [vmem:[%s9 + $0x60] sm:$0xff]
    %v4527 = vld [vmem:[%s9 + $0x68] sm:$0xff]
    %v4528 = vld [vmem:[%s9 + $0x70] sm:$0xff]
    %v4529 = vld [vmem:[%s9 + $0x78] sm:$0xff]
    %v4530 = vunpack.c.l.bf16 %v4514
    %v4531 = vunpack.c.h.bf16 %v4514
    %v4532 = vunpack.c.l.bf16 %v4515
    %v4533 = vunpack.c.h.bf16 %v4515
    %v4534 = vunpack.c.l.bf16 %v4516
    %v4535 = vunpack.c.h.bf16 %v4516
    %v4536 = vunpack.c.l.bf16 %v4517
    %v4537 = vunpack.c.h.bf16 %v4517
    %v4538 = vunpack.c.l.bf16 %v4518
    %v4539 = vunpack.c.h.bf16 %v4518
    %v4540 = vunpack.c.l.bf16 %v4519
    %v4541 = vunpack.c.h.bf16 %v4519
    %v4542 = vunpack.c.l.bf16 %v4520
    %v4543 = vunpack.c.h.bf16 %v4520
    %v4544 = vunpack.c.l.bf16 %v4521
    %v4545 = vunpack.c.h.bf16 %v4521
    %v4546 = vunpack.c.l.bf16 %v4522
    %v4547 = vunpack.c.h.bf16 %v4522
    %v4548 = vunpack.c.l.bf16 %v4523
    %v4549 = vunpack.c.h.bf16 %v4523
    %v4550 = vunpack.c.l.bf16 %v4524
    %v4551 = vunpack.c.h.bf16 %v4524
    %v4552 = vunpack.c.l.bf16 %v4525
    %v4553 = vunpack.c.h.bf16 %v4525
    %v4554 = vunpack.c.l.bf16 %v4526
    %v4555 = vunpack.c.h.bf16 %v4526
    %v4556 = vunpack.c.l.bf16 %v4527
    %v4557 = vunpack.c.h.bf16 %v4527
    %v4558 = vunpack.c.l.bf16 %v4528
    %v4559 = vunpack.c.h.bf16 %v4528
    %v4560 = vunpack.c.l.bf16 %v4529
    %v4561 = vunpack.c.h.bf16 %v4529
    %v4562 = vmul.f32 %v4482, %v4530
    %v4563 = vmul.f32 %v4483, %v4531
    %v4564 = vmul.f32 %v4484, %v4532
    %v4565 = vmul.f32 %v4485, %v4533
    %v4566 = vmul.f32 %v4486, %v4534
    %v4567 = vmul.f32 %v4487, %v4535
    %v4568 = vmul.f32 %v4488, %v4536
    %v4569 = vmul.f32 %v4489, %v4537
    %v4570 = vmul.f32 %v4490, %v4538
    %v4571 = vmul.f32 %v4491, %v4539
    %v4572 = vmul.f32 %v4492, %v4540
    %v4573 = vmul.f32 %v4493, %v4541
    %v4574 = vmul.f32 %v4494, %v4542
    %v4575 = vmul.f32 %v4495, %v4543
    %v4576 = vmul.f32 %v4496, %v4544
    %v4577 = vmul.f32 %v4497, %v4545
    %v4578 = vmul.f32 %v4498, %v4546
    %v4579 = vmul.f32 %v4499, %v4547
    %v4580 = vmul.f32 %v4500, %v4548
    %v4581 = vmul.f32 %v4501, %v4549
    %v4582 = vmul.f32 %v4502, %v4550
    %v4583 = vmul.f32 %v4503, %v4551
    %v4584 = vmul.f32 %v4504, %v4552
    %v4585 = vmul.f32 %v4505, %v4553
    %v4586 = vmul.f32 %v4506, %v4554
    %v4587 = vmul.f32 %v4507, %v4555
    %v4588 = vmul.f32 %v4508, %v4556
    %v4589 = vmul.f32 %v4509, %v4557
    %v4590 = vmul.f32 %v4510, %v4558
    %v4591 = vmul.f32 %v4511, %v4559
    %v4592 = vmul.f32 %v4512, %v4560
    %v4593 = vmul.f32 %v4513, %v4561
    %v4594 = vadd.f32 %v4562, %v4570
    %v4595 = vadd.f32 %v4594, %v4578
    %v4596 = vadd.f32 %v4595, %v4586
    %v4597 = vrot.slane %v4596, 4
    %v4598 = vadd.f32 %v4596, %v4597
    %v4599 = vrot.slane %v4598, 2
    %v4600 = vadd.f32 %v4598, %v4599
    %v4601 = vrot.slane %v4600, 1
    %v4602 = vadd.f32 %v4600, %v4601
    %v4603 = vadd.f32 %v4563, %v4571
    %v4604 = vadd.f32 %v4603, %v4579
    %v4605 = vadd.f32 %v4604, %v4587
    %v4606 = vrot.slane %v4605, 4
    %v4607 = vadd.f32 %v4605, %v4606
    %v4608 = vrot.slane %v4607, 2
    %v4609 = vadd.f32 %v4607, %v4608
    %v4610 = vrot.slane %v4609, 1
    %v4611 = vadd.f32 %v4609, %v4610
    %v4612 = vadd.f32 %v4564, %v4572
    %v4613 = vadd.f32 %v4612, %v4580
    %v4614 = vadd.f32 %v4613, %v4588
    %v4615 = vrot.slane %v4614, 4
    %v4616 = vadd.f32 %v4614, %v4615
    %v4617 = vrot.slane %v4616, 2
    %v4618 = vadd.f32 %v4616, %v4617
    %v4619 = vrot.slane %v4618, 1
    %v4620 = vadd.f32 %v4618, %v4619
    %v4621 = vadd.f32 %v4565, %v4573
    %v4622 = vadd.f32 %v4621, %v4581
    %v4623 = vadd.f32 %v4622, %v4589
    %v4624 = vrot.slane %v4623, 4
    %v4625 = vadd.f32 %v4623, %v4624
    %v4626 = vrot.slane %v4625, 2
    %v4627 = vadd.f32 %v4625, %v4626
    %v4628 = vrot.slane %v4627, 1
    %v4629 = vadd.f32 %v4627, %v4628
    %v4630 = vadd.f32 %v4566, %v4574
    %v4631 = vadd.f32 %v4630, %v4582
    %v4632 = vadd.f32 %v4631, %v4590
    %v4633 = vrot.slane %v4632, 4
    %v4634 = vadd.f32 %v4632, %v4633
    %v4635 = vrot.slane %v4634, 2
    %v4636 = vadd.f32 %v4634, %v4635
    %v4637 = vrot.slane %v4636, 1
    %v4638 = vadd.f32 %v4636, %v4637
    %v4639 = vadd.f32 %v4567, %v4575
    %v4640 = vadd.f32 %v4639, %v4583
    %v4641 = vadd.f32 %v4640, %v4591
    %v4642 = vrot.slane %v4641, 4
    %v4643 = vadd.f32 %v4641, %v4642
    %v4644 = vrot.slane %v4643, 2
    %v4645 = vadd.f32 %v4643, %v4644
    %v4646 = vrot.slane %v4645, 1
    %v4647 = vadd.f32 %v4645, %v4646
    %v4648 = vadd.f32 %v4568, %v4576
    %v4649 = vadd.f32 %v4648, %v4584
    %v4650 = vadd.f32 %v4649, %v4592
    %v4651 = vrot.slane %v4650, 4
    %v4652 = vadd.f32 %v4650, %v4651
    %v4653 = vrot.slane %v4652, 2
    %v4654 = vadd.f32 %v4652, %v4653
    %v4655 = vrot.slane %v4654, 1
    %v4656 = vadd.f32 %v4654, %v4655
    %v4657 = vadd.f32 %v4569, %v4577
    %v4658 = vadd.f32 %v4657, %v4585
    %v4659 = vadd.f32 %v4658, %v4593
    %v4660 = vrot.slane %v4659, 4
    %v4661 = vadd.f32 %v4659, %v4660
    %v4662 = vrot.slane %v4661, 2
    %v4663 = vadd.f32 %v4661, %v4662
    %v4664 = vrot.slane %v4663, 1
    %v4665 = vadd.f32 %v4663, %v4664
    %v4666 = vld [vmem:[%s10] sm:$0xff]
    %v4668 = vperm.slane %v4666, 0
    %v4669 = vperm.slane %v4666, 1
    %v4670 = vperm.slane %v4666, 2
    %v4671 = vperm.slane %v4666, 3
    %v4672 = vperm.slane %v4666, 4
    %v4673 = vperm.slane %v4666, 5
    %v4674 = vperm.slane %v4666, 6
    %v4675 = vperm.slane %v4666, 7
    %v4684 = vadd.f32 %v4602, %v4668
    %v4685 = vadd.f32 %v4611, %v4669
    %v4686 = vadd.f32 %v4620, %v4670
    %v4687 = vadd.f32 %v4629, %v4671
    %v4688 = vadd.f32 %v4638, %v4672
    %v4689 = vadd.f32 %v4647, %v4673
    %v4690 = vadd.f32 %v4656, %v4674
    %v4691 = vadd.f32 %v4665, %v4675
    %v4700 = vrot.slane %v4685, 7
    %v4701 = vrot.slane %v4686, 6
    %v4702 = vrot.slane %v4687, 5
    %v4703 = vrot.slane %v4688, 4
    %v4704 = vrot.slane %v4689, 3
    %v4705 = vrot.slane %v4690, 2
    %v4706 = vrot.slane %v4691, 1
    %vm4707 = vcmask 1040384
    %v4708 = vsel %vm4707, %v4684, %v4700
    %vm4709 = vcmask 1042434
    %v4710 = vsel %vm4709, %v4701, %v4702
    %vm4711 = vcmask 1041408
    %v4712 = vsel %vm4711, %v4708, %v4710
    %vm4713 = vcmask 1044484
    %v4714 = vsel %vm4713, %v4703, %v4704
    %vm4715 = vcmask 1046534
    %v4716 = vsel %vm4715, %v4705, %v4706
    %vm4717 = vcmask 1045508
    %v4718 = vsel %vm4717, %v4714, %v4716
    %vm4719 = vcmask 1043456
    %v4720 = vsel %vm4719, %v4712, %v4718
    %4722 = vst [vmem:[#allocation5] sm:$0xff] %v4720
    // Predicated region
    $region50: #{tpu_custom_call.1} parent=1 // pred_check
      _
    $region51: #{tpu_custom_call.1} parent=1 // pred_check_branch
      %4724 = sbr.rel (0) target = $region53
    $region52: #{tpu_custom_call.1} parent=1 // pred_region
      %4726 = vsyncadd [#allocation4], 0
      %s4728 = sshll.u32 [#allocation5], 4
      %s4729 = int_to_ptr.vmem [resolvable:$true] %s4728
      %s4730 = sshll.u32 %s11, 4
      %s4731 = int_to_ptr.hbm [resolvable:$true] %s4730
      %4733 = dma.vmem_to_hbm [thread:$0]  %s4729, 128, %s4731, [#allocation4]
    $region53: #{tpu_custom_call.1} parent=1 // pred_fallthru
      _
    // Predicated region
    $region54: #{tpu_custom_call.1} parent=1 // pred_check
      _
    $region55: #{tpu_custom_call.1} parent=1 // pred_check_branch
      %4735 = sbr.rel (0) target = $region57
    $region56: #{tpu_custom_call.1} parent=1 // pred_region
      %4737 = dma.done [#allocation4], 128
    $region57: #{tpu_custom_call.1} parent=1 // pred_fallthru
      _
    %4738 = vsyncpa [#allocation3], 1
    %4739 = vsyncpa [#allocation4], 1

</llo_original>
